<compile_context>
chip_gen: v7x
topology: tpu7x:2x2x1
jax: 0.10.0
libtpu: 0.0.40
codegen_flags: <defaults>
</compile_context>

<pallas_src>
import jax
import jax.numpy as jnp
import numpy as np
from jax.experimental import pallas as pl
from jax.experimental.pallas import tpu as pltpu

_EPS = 1e-5  # PyTorch BatchNorm2d default


# ----------------------------- Pallas kernel --------------------------------

def _encoder_block_kernel(x_ref, w1_ref, sh1_ref, w2_ref, sh2_ref,
                          o_ref, p_ref, xpad_ref, ypad_ref):
    """Fused conv1+bn1+relu -> conv2+bn2+relu -> 2x2 maxpool for one batch tile.

    x_ref   : (B, H, W, Cin)       unpadded NHWC input tile
    w1_ref  : (3, 3, Cin, Cout)    HWIO conv1 weights, BN1 scale pre-folded
    sh1_ref : (1, Cout)            folded conv1-bias + BN1 shift
    w2_ref  : (3, 3, Cout, Cout)   HWIO conv2 weights, BN2 scale pre-folded
    sh2_ref : (1, Cout)            folded conv2-bias + BN2 shift
    o_ref   : (B, H, W, Cout)      conv_block output
    p_ref   : (B, H/2, W/2, Cout)  max-pooled output
    xpad_ref: (B, H+2, W+2, Cin)   VMEM scratch (halo-padded input)
    ypad_ref: (B, H+2, W+2, Cout)  VMEM scratch (halo-padded stage-1 activation)
    """
    B, H, W, _ = x_ref.shape
    Cout = o_ref.shape[3]

    def conv3x3_bn_relu(pad_ref, interior, w_ref, sh_ref):
        cin = pad_ref.shape[3]
        # Halo handled in VMEM: zero the buffer, copy the interior.  No HBM
        # padded copy is ever materialized.
        pad_ref[...] = jnp.zeros_like(pad_ref)
        pad_ref[:, pl.ds(1, H), pl.ds(1, W), :] = interior
        xp = pad_ref[...]
        acc = jnp.zeros((B * H * W, Cout), jnp.float32)
        # 3x3 conv as 9 shifted (B*H*W, Cin) x (Cin, Cout) MXU matmuls with
        # f32 accumulation.  BN scale is already folded into w, so the
        # epilogue is only a per-channel shift + ReLU.
        for dh in range(3):
            for dw in range(3):
                tap = xp[:, dh:dh + H, dw:dw + W, :].reshape(B * H * W, cin)
                acc = acc + jnp.dot(tap, w_ref[dh, dw],
                                    preferred_element_type=jnp.float32)
        return jnp.maximum(acc + sh_ref[...], 0.0)          # (B*H*W, Cout)

    # Stage 1 (result stays in VMEM) and stage 2 (fused).
    y1 = conv3x3_bn_relu(xpad_ref, x_ref[...], w1_ref, sh1_ref)
    y2 = conv3x3_bn_relu(ypad_ref, y1.reshape(B, H, W, Cout), w2_ref, sh2_ref)

    y2 = y2.reshape(B, H, W, Cout)
    o_ref[...] = y2

    # Fused 2x2 max-pool: reduce rows, then cols; channel (lane) dim stays last.
    pr = y2.reshape(B, H // 2, 2, W, Cout).max(axis=2)       # (B, H/2, W,   C)
    p_ref[...] = pr.reshape(B, H // 2, W // 2, 2, Cout).max(axis=3)


# ------------------------------ JAX wrapper ----------------------------------

def _fold_bn_into_conv(w_oihw, conv_bias, gamma, beta, mean, var):
    """Fold conv bias + eval-mode BatchNorm into (scaled weights, shift)."""
    scale = gamma / jnp.sqrt(var + _EPS)                     # (Cout,)
    shift = beta + scale * (conv_bias - mean)                # (Cout,)
    w_hwio = jnp.transpose(w_oihw, (2, 3, 1, 0))             # OIHW -> HWIO
    w_folded = (w_hwio * scale).astype(jnp.float32)          # per-out-channel scale
    return w_folded, shift.reshape(1, -1).astype(jnp.float32)


def _pick_batch_tile(n):
    """Batch images per grid step; keep >=2 steps so v7x megacore can shard."""
    for bt in (8, 4, 2):
        if n % bt == 0 and n // bt >= 2:
            return bt
    return 1


def encoder_block_forward(x_nchw, params):
    """encoder_block.forward.  x_nchw: (N, Cin, H, W).  Returns (x, p) in NCHW."""
    x_nhwc = jnp.transpose(x_nchw, (0, 2, 3, 1)).astype(jnp.float32)
    N, H, W, Cin = x_nhwc.shape
    Cout = params["w1_oihw"].shape[0]
    Hp, Wp = H // 2, W // 2

    w1, sh1 = _fold_bn_into_conv(params["w1_oihw"], params["b1"],
                                 params["gamma1"], params["beta1"],
                                 params["mean1"], params["var1"])
    w2, sh2 = _fold_bn_into_conv(params["w2_oihw"], params["b2"],
                                 params["gamma2"], params["beta2"],
                                 params["mean2"], params["var2"])

    bt = _pick_batch_tile(N)
    grid = (N // bt,)

    # TODO(synk): training-mode Dropout2d (stochastic channel masking) is not
    # implemented; eval-mode identity is used (dropout1 output is unused anyway).
    x_out, p_out = pl.pallas_call(
        _encoder_block_kernel,
        out_shape=(
            jax.ShapeDtypeStruct((N, H, W, Cout), jnp.float32),
            jax.ShapeDtypeStruct((N, Hp, Wp, Cout), jnp.float32),
        ),
        grid=grid,
        in_specs=[
            pl.BlockSpec((bt, H, W, Cin), lambda b: (b, 0, 0, 0)),
            pl.BlockSpec((3, 3, Cin, Cout), lambda b: (0, 0, 0, 0)),
            pl.BlockSpec((1, Cout), lambda b: (0, 0)),
            pl.BlockSpec((3, 3, Cout, Cout), lambda b: (0, 0, 0, 0)),
            pl.BlockSpec((1, Cout), lambda b: (0, 0)),
        ],
        out_specs=(
            pl.BlockSpec((bt, H, W, Cout), lambda b: (b, 0, 0, 0)),
            pl.BlockSpec((bt, Hp, Wp, Cout), lambda b: (b, 0, 0, 0)),
        ),
        scratch_shapes=[
            pltpu.VMEM((bt, H + 2, W + 2, Cin), jnp.float32),
            pltpu.VMEM((bt, H + 2, W + 2, Cout), jnp.float32),
        ],
        compiler_params=pltpu.CompilerParams(
            dimension_semantics=("parallel",)),
    )(x_nhwc, w1, sh1, w2, sh2)

    return (jnp.transpose(x_out, (0, 3, 1, 2)),
            jnp.transpose(p_out, (0, 3, 1, 2)))


# ------------------------------ reference ------------------------------------

def _ref_forward(x_nchw, params):
    def fold(prefix):
        scale = params[f"gamma{prefix}"] / jnp.sqrt(params[f"var{prefix}"] + _EPS)
        shift = params[f"beta{prefix}"] + scale * (params[f"b{prefix}"]
                                                   - params[f"mean{prefix}"])
        return scale, shift

    def stage(x_nhwc, w_oihw, scale, shift):
        w_hwio = jnp.transpose(w_oihw, (2, 3, 1, 0))
        y = jax.lax.conv_general_dilated(
            x_nhwc, w_hwio, window_strides=(1, 1), padding="SAME",
            dimension_numbers=("NHWC", "HWIO", "NHWC"))
        y = y * scale.reshape(1, 1, 1, -1) + shift.reshape(1, 1, 1, -1)
        return jnp.maximum(y, 0.0)

    x_nhwc = jnp.transpose(x_nchw, (0, 2, 3, 1)).astype(jnp.float32)
    s1, sh1 = fold(1)
    s2, sh2 = fold(2)
    y1 = stage(x_nhwc, params["w1_oihw"], s1, sh1)
    y2 = stage(y1, params["w2_oihw"], s2, sh2)
    N, H, W, C = y2.shape
    p = y2.reshape(N, H // 2, 2, W // 2, 2, C).max(axis=(2, 4))
    return (jnp.transpose(y2, (0, 3, 1, 2)), jnp.transpose(p, (0, 3, 1, 2)))


# --------------------------------- main ---------------------------------------

if __name__ == "__main__":
    N, Cin, H, W = 2, 4, 16, 16
    Cout = 8

    key = jax.random.PRNGKey(0)
    ks = jax.random.split(key, 13)
    x = jax.random.normal(ks[0], (N, Cin, H, W), jnp.float32)

    params = {
        # conv1: Conv2d(in_c, out_c, 3, padding=1) -> weight OIHW + bias
        "w1_oihw": 0.2 * jax.random.normal(ks[1], (Cout, Cin, 3, 3), jnp.float32),
        "b1":      0.1 * jax.random.normal(ks[2], (Cout,), jnp.float32),
        "gamma1":  1.0 + 0.1 * jax.random.normal(ks[3], (Cout,), jnp.float32),
        "beta1":   0.1 * jax.random.normal(ks[4], (Cout,), jnp.float32),
        "mean1":   0.1 * jax.random.normal(ks[5], (Cout,), jnp.float32),
        "var1":    1.0 + 0.1 * jnp.abs(jax.random.normal(ks[6], (Cout,), jnp.float32)),
        # conv2: Conv2d(out_c, out_c, 3, padding=1)
        "w2_oihw": 0.2 * jax.random.normal(ks[7], (Cout, Cout, 3, 3), jnp.float32),
        "b2":      0.1 * jax.random.normal(ks[8], (Cout,), jnp.float32),
        "gamma2":  1.0 + 0.1 * jax.random.normal(ks[9], (Cout,), jnp.float32),
        "beta2":   0.1 * jax.random.normal(ks[10], (Cout,), jnp.float32),
        "mean2":   0.1 * jax.random.normal(ks[11], (Cout,), jnp.float32),
        "var2":    1.0 + 0.1 * jnp.abs(jax.random.normal(ks[12], (Cout,), jnp.float32)),
    }

    fwd = jax.jit(encoder_block_forward)
    x_out, p_out = fwd(x, params)
    jax.block_until_ready((x_out, p_out))

    x_ref, p_ref = _ref_forward(x, params)
    np.testing.assert_allclose(np.asarray(x_out), np.asarray(x_ref),
                               rtol=1e-4, atol=1e-4)
    np.testing.assert_allclose(np.asarray(p_out), np.asarray(p_ref),
                               rtol=1e-4, atol=1e-4)
    assert x_out.shape == (N, Cout, H, W)
    assert p_out.shape == (N, Cout, H // 2, W // 2)

    print("KERNEL_OK")
</pallas_src>

<mosaic_0001>
module attributes {stable_mosaic.version = 11 : i64} {
  func.func @_encoder_block_kernel(%arg0: i32, %arg1: memref<1x16x16x4xf32, #tpu.memory_space<vmem>>, %arg2: memref<3x3x4x8xf32, #tpu.memory_space<vmem>>, %arg3: memref<1x8xf32, #tpu.memory_space<vmem>>, %arg4: memref<3x3x8x8xf32, #tpu.memory_space<vmem>>, %arg5: memref<1x8xf32, #tpu.memory_space<vmem>>, %arg6: memref<1x16x16x8xf32, #tpu.memory_space<vmem>>, %arg7: memref<1x8x8x8xf32, #tpu.memory_space<vmem>>, %arg8: memref<1x18x18x4xf32, #tpu.memory_space<vmem>>, %arg9: memref<1x18x18x8xf32, #tpu.memory_space<vmem>>) attributes {dimension_semantics = [#tpu.dimension_semantics<parallel>], iteration_bounds = array<i64: 2>, scalar_prefetch = 0 : i64, scratch_operands = 2 : i64, tpu.core_type = #tpu.core_type<tc>, window_params = [{transform_indices = @transform_0, window_bounds = array<i64: 1, 16, 16, 4>}, {pipeline_mode = #tpu.pipeline_mode<synchronous>, transform_indices = @transform_1, window_bounds = array<i64: 3, 3, 4, 8>}, {pipeline_mode = #tpu.pipeline_mode<synchronous>, transform_indices = @transform_2, window_bounds = array<i64: 1, 8>}, {pipeline_mode = #tpu.pipeline_mode<synchronous>, transform_indices = @transform_3, window_bounds = array<i64: 3, 3, 8, 8>}, {pipeline_mode = #tpu.pipeline_mode<synchronous>, transform_indices = @transform_4, window_bounds = array<i64: 1, 8>}, {transform_indices = @transform_5, window_bounds = array<i64: 1, 16, 16, 8>}, {transform_indices = @transform_6, window_bounds = array<i64: 1, 8, 8, 8>}]} {
    %c0 = arith.constant 0 : index
    %c0_0 = arith.constant 0 : index
    %c0_1 = arith.constant 0 : index
    %c0_2 = arith.constant 0 : index
    %0 = vector.load %arg1[%c0, %c0_0, %c0_1, %c0_2] : memref<1x16x16x4xf32, #tpu.memory_space<vmem>>, vector<1x16x16x4xf32>
    %cst = arith.constant 0.000000e+00 : f32
    %1 = vector.broadcast %cst : f32 to vector<1x18x18x4xf32>
    %c0_3 = arith.constant 0 : index
    %c0_4 = arith.constant 0 : index
    %c0_5 = arith.constant 0 : index
    %c0_6 = arith.constant 0 : index
    %2 = vector.load %arg8[%c0_3, %c0_4, %c0_5, %c0_6] : memref<1x18x18x4xf32, #tpu.memory_space<vmem>>, vector<1x18x18x4xf32>
    tpu.vector_store %arg8[%c0_3, %c0_4, %c0_5, %c0_6], %1 {strides = array<i32>} : memref<1x18x18x4xf32, #tpu.memory_space<vmem>>, vector<1x18x18x4xf32>,
    %c0_7 = arith.constant 0 : index
    %c1 = arith.constant 1 : index
    %c1_8 = arith.constant 1 : index
    %c0_9 = arith.constant 0 : index
    %3 = vector.load %arg8[%c0_7, %c1, %c1_8, %c0_9] : memref<1x18x18x4xf32, #tpu.memory_space<vmem>>, vector<1x16x16x4xf32>
    tpu.vector_store %arg8[%c0_7, %c1, %c1_8, %c0_9], %0 {strides = array<i32>} : memref<1x18x18x4xf32, #tpu.memory_space<vmem>>, vector<1x16x16x4xf32>,
    %c0_10 = arith.constant 0 : index
    %c0_11 = arith.constant 0 : index
    %c0_12 = arith.constant 0 : index
    %c0_13 = arith.constant 0 : index
    %4 = vector.load %arg8[%c0_10, %c0_11, %c0_12, %c0_13] : memref<1x18x18x4xf32, #tpu.memory_space<vmem>>, vector<1x18x18x4xf32>
    %cst_14 = arith.constant 0.000000e+00 : f32
    %5 = vector.broadcast %cst_14 : f32 to vector<256x8xf32>
    %6 = vector.extract_strided_slice %4 {offsets = [0, 0, 0, 0], sizes = [1, 16, 16, 4], strides = [1, 1, 1, 1]} : vector<1x18x18x4xf32> to vector<1x16x16x4xf32>
    %7 = vector.shape_cast %6 : vector<1x16x16x4xf32> to vector<256x4xf32>
    %c0_15 = arith.constant 0 : index
    %c0_16 = arith.constant 0 : index
    %c0_17 = arith.constant 0 : index
    %c0_18 = arith.constant 0 : index
    %8 = vector.load %arg2[%c0_15, %c0_16, %c0_17, %c0_18] : memref<3x3x4x8xf32, #tpu.memory_space<vmem>>, vector<1x1x4x8xf32>
    %9 = vector.shape_cast %8 : vector<1x1x4x8xf32> to vector<4x8xf32>
    %cst_19 = arith.constant dense<0.000000e+00> : vector<256x8xf32>
    %10 = tpu.matmul %7, %9, %cst_19 {dimension_numbers = #tpu.dot_dimension_numbers<[1], [0], [0], [1], [0, 0, 1, 1], [], []>} : vector<256x4xf32>, vector<4x8xf32>, vector<256x8xf32> -> vector<256x8xf32>
    %11 = arith.addf %5, %10 : vector<256x8xf32>
    %12 = vector.extract_strided_slice %4 {offsets = [0, 0, 1, 0], sizes = [1, 16, 16, 4], strides = [1, 1, 1, 1]} : vector<1x18x18x4xf32> to vector<1x16x16x4xf32>
    %13 = vector.shape_cast %12 : vector<1x16x16x4xf32> to vector<256x4xf32>
    %c0_20 = arith.constant 0 : index
    %c1_21 = arith.constant 1 : index
    %c0_22 = arith.constant 0 : index
    %c0_23 = arith.constant 0 : index
    %14 = vector.load %arg2[%c0_20, %c1_21, %c0_22, %c0_23] : memref<3x3x4x8xf32, #tpu.memory_space<vmem>>, vector<1x1x4x8xf32>
    %15 = vector.shape_cast %14 : vector<1x1x4x8xf32> to vector<4x8xf32>
    %cst_24 = arith.constant dense<0.000000e+00> : vector<256x8xf32>
    %16 = tpu.matmul %13, %15, %cst_24 {dimension_numbers = #tpu.dot_dimension_numbers<[1], [0], [0], [1], [0, 0, 1, 1], [], []>} : vector<256x4xf32>, vector<4x8xf32>, vector<256x8xf32> -> vector<256x8xf32>
    %17 = arith.addf %11, %16 : vector<256x8xf32>
    %18 = vector.extract_strided_slice %4 {offsets = [0, 0, 2, 0], sizes = [1, 16, 16, 4], strides = [1, 1, 1, 1]} : vector<1x18x18x4xf32> to vector<1x16x16x4xf32>
    %19 = vector.shape_cast %18 : vector<1x16x16x4xf32> to vector<256x4xf32>
    %c0_25 = arith.constant 0 : index
    %c2 = arith.constant 2 : index
    %c0_26 = arith.constant 0 : index
    %c0_27 = arith.constant 0 : index
    %20 = vector.load %arg2[%c0_25, %c2, %c0_26, %c0_27] : memref<3x3x4x8xf32, #tpu.memory_space<vmem>>, vector<1x1x4x8xf32>
    %21 = vector.shape_cast %20 : vector<1x1x4x8xf32> to vector<4x8xf32>
    %cst_28 = arith.constant dense<0.000000e+00> : vector<256x8xf32>
    %22 = tpu.matmul %19, %21, %cst_28 {dimension_numbers = #tpu.dot_dimension_numbers<[1], [0], [0], [1], [0, 0, 1, 1], [], []>} : vector<256x4xf32>, vector<4x8xf32>, vector<256x8xf32> -> vector<256x8xf32>
    %23 = arith.addf %17, %22 : vector<256x8xf32>
    %24 = vector.extract_strided_slice %4 {offsets = [0, 1, 0, 0], sizes = [1, 16, 16, 4], strides = [1, 1, 1, 1]} : vector<1x18x18x4xf32> to vector<1x16x16x4xf32>
    %25 = vector.shape_cast %24 : vector<1x16x16x4xf32> to vector<256x4xf32>
    %c1_29 = arith.constant 1 : index
    %c0_30 = arith.constant 0 : index
    %c0_31 = arith.constant 0 : index
    %c0_32 = arith.constant 0 : index
    %26 = vector.load %arg2[%c1_29, %c0_30, %c0_31, %c0_32] : memref<3x3x4x8xf32, #tpu.memory_space<vmem>>, vector<1x1x4x8xf32>
    %27 = vector.shape_cast %26 : vector<1x1x4x8xf32> to vector<4x8xf32>
    %cst_33 = arith.constant dense<0.000000e+00> : vector<256x8xf32>
    %28 = tpu.matmul %25, %27, %cst_33 {dimension_numbers = #tpu.dot_dimension_numbers<[1], [0], [0], [1], [0, 0, 1, 1], [], []>} : vector<256x4xf32>, vector<4x8xf32>, vector<256x8xf32> -> vector<256x8xf32>
    %29 = arith.addf %23, %28 : vector<256x8xf32>
    %30 = vector.extract_strided_slice %4 {offsets = [0, 1, 1, 0], sizes = [1, 16, 16, 4], strides = [1, 1, 1, 1]} : vector<1x18x18x4xf32> to vector<1x16x16x4xf32>
    %31 = vector.shape_cast %30 : vector<1x16x16x4xf32> to vector<256x4xf32>
    %c1_34 = arith.constant 1 : index
    %c1_35 = arith.constant 1 : index
    %c0_36 = arith.constant 0 : index
    %c0_37 = arith.constant 0 : index
    %32 = vector.load %arg2[%c1_34, %c1_35, %c0_36, %c0_37] : memref<3x3x4x8xf32, #tpu.memory_space<vmem>>, vector<1x1x4x8xf32>
    %33 = vector.shape_cast %32 : vector<1x1x4x8xf32> to vector<4x8xf32>
    %cst_38 = arith.constant dense<0.000000e+00> : vector<256x8xf32>
    %34 = tpu.matmul %31, %33, %cst_38 {dimension_numbers = #tpu.dot_dimension_numbers<[1], [0], [0], [1], [0, 0, 1, 1], [], []>} : vector<256x4xf32>, vector<4x8xf32>, vector<256x8xf32> -> vector<256x8xf32>
    %35 = arith.addf %29, %34 : vector<256x8xf32>
    %36 = vector.extract_strided_slice %4 {offsets = [0, 1, 2, 0], sizes = [1, 16, 16, 4], strides = [1, 1, 1, 1]} : vector<1x18x18x4xf32> to vector<1x16x16x4xf32>
    %37 = vector.shape_cast %36 : vector<1x16x16x4xf32> to vector<256x4xf32>
    %c1_39 = arith.constant 1 : index
    %c2_40 = arith.constant 2 : index
    %c0_41 = arith.constant 0 : index
    %c0_42 = arith.constant 0 : index
    %38 = vector.load %arg2[%c1_39, %c2_40, %c0_41, %c0_42] : memref<3x3x4x8xf32, #tpu.memory_space<vmem>>, vector<1x1x4x8xf32>
    %39 = vector.shape_cast %38 : vector<1x1x4x8xf32> to vector<4x8xf32>
    %cst_43 = arith.constant dense<0.000000e+00> : vector<256x8xf32>
    %40 = tpu.matmul %37, %39, %cst_43 {dimension_numbers = #tpu.dot_dimension_numbers<[1], [0], [0], [1], [0, 0, 1, 1], [], []>} : vector<256x4xf32>, vector<4x8xf32>, vector<256x8xf32> -> vector<256x8xf32>
    %41 = arith.addf %35, %40 : vector<256x8xf32>
    %42 = vector.extract_strided_slice %4 {offsets = [0, 2, 0, 0], sizes = [1, 16, 16, 4], strides = [1, 1, 1, 1]} : vector<1x18x18x4xf32> to vector<1x16x16x4xf32>
    %43 = vector.shape_cast %42 : vector<1x16x16x4xf32> to vector<256x4xf32>
    %c2_44 = arith.constant 2 : index
    %c0_45 = arith.constant 0 : index
    %c0_46 = arith.constant 0 : index
    %c0_47 = arith.constant 0 : index
    %44 = vector.load %arg2[%c2_44, %c0_45, %c0_46, %c0_47] : memref<3x3x4x8xf32, #tpu.memory_space<vmem>>, vector<1x1x4x8xf32>
    %45 = vector.shape_cast %44 : vector<1x1x4x8xf32> to vector<4x8xf32>
    %cst_48 = arith.constant dense<0.000000e+00> : vector<256x8xf32>
    %46 = tpu.matmul %43, %45, %cst_48 {dimension_numbers = #tpu.dot_dimension_numbers<[1], [0], [0], [1], [0, 0, 1, 1], [], []>} : vector<256x4xf32>, vector<4x8xf32>, vector<256x8xf32> -> vector<256x8xf32>
    %47 = arith.addf %41, %46 : vector<256x8xf32>
    %48 = vector.extract_strided_slice %4 {offsets = [0, 2, 1, 0], sizes = [1, 16, 16, 4], strides = [1, 1, 1, 1]} : vector<1x18x18x4xf32> to vector<1x16x16x4xf32>
    %49 = vector.shape_cast %48 : vector<1x16x16x4xf32> to vector<256x4xf32>
    %c2_49 = arith.constant 2 : index
    %c1_50 = arith.constant 1 : index
    %c0_51 = arith.constant 0 : index
    %c0_52 = arith.constant 0 : index
    %50 = vector.load %arg2[%c2_49, %c1_50, %c0_51, %c0_52] : memref<3x3x4x8xf32, #tpu.memory_space<vmem>>, vector<1x1x4x8xf32>
    %51 = vector.shape_cast %50 : vector<1x1x4x8xf32> to vector<4x8xf32>
    %cst_53 = arith.constant dense<0.000000e+00> : vector<256x8xf32>
    %52 = tpu.matmul %49, %51, %cst_53 {dimension_numbers = #tpu.dot_dimension_numbers<[1], [0], [0], [1], [0, 0, 1, 1], [], []>} : vector<256x4xf32>, vector<4x8xf32>, vector<256x8xf32> -> vector<256x8xf32>
    %53 = arith.addf %47, %52 : vector<256x8xf32>
    %54 = vector.extract_strided_slice %4 {offsets = [0, 2, 2, 0], sizes = [1, 16, 16, 4], strides = [1, 1, 1, 1]} : vector<1x18x18x4xf32> to vector<1x16x16x4xf32>
    %55 = vector.shape_cast %54 : vector<1x16x16x4xf32> to vector<256x4xf32>
    %c2_54 = arith.constant 2 : index
    %c2_55 = arith.constant 2 : index
    %c0_56 = arith.constant 0 : index
    %c0_57 = arith.constant 0 : index
    %56 = vector.load %arg2[%c2_54, %c2_55, %c0_56, %c0_57] : memref<3x3x4x8xf32, #tpu.memory_space<vmem>>, vector<1x1x4x8xf32>
    %57 = vector.shape_cast %56 : vector<1x1x4x8xf32> to vector<4x8xf32>
    %cst_58 = arith.constant dense<0.000000e+00> : vector<256x8xf32>
    %58 = tpu.matmul %55, %57, %cst_58 {dimension_numbers = #tpu.dot_dimension_numbers<[1], [0], [0], [1], [0, 0, 1, 1], [], []>} : vector<256x4xf32>, vector<4x8xf32>, vector<256x8xf32> -> vector<256x8xf32>
    %59 = arith.addf %53, %58 : vector<256x8xf32>
    %c0_59 = arith.constant 0 : index
    %c0_60 = arith.constant 0 : index
    %60 = vector.load %arg3[%c0_59, %c0_60] : memref<1x8xf32, #tpu.memory_space<vmem>>, vector<1x8xf32>
    %61 = vector.broadcast %60 : vector<1x8xf32> to vector<256x8xf32>
    %62 = arith.addf %59, %61 : vector<256x8xf32>
    %cst_61 = arith.constant 0.000000e+00 : f32
    %63 = vector.broadcast %cst_61 : f32 to vector<256x8xf32>
    %64 = arith.maximumf %62, %63 : vector<256x8xf32>
    %65 = vector.shape_cast %64 : vector<256x8xf32> to vector<1x16x16x8xf32>
    %cst_62 = arith.constant 0.000000e+00 : f32
    %66 = vector.broadcast %cst_62 : f32 to vector<1x18x18x8xf32>
    %c0_63 = arith.constant 0 : index
    %c0_64 = arith.constant 0 : index
    %c0_65 = arith.constant 0 : index
    %c0_66 = arith.constant 0 : index
    %67 = vector.load %arg9[%c0_63, %c0_64, %c0_65, %c0_66] : memref<1x18x18x8xf32, #tpu.memory_space<vmem>>, vector<1x18x18x8xf32>
    tpu.vector_store %arg9[%c0_63, %c0_64, %c0_65, %c0_66], %66 {strides = array<i32>} : memref<1x18x18x8xf32, #tpu.memory_space<vmem>>, vector<1x18x18x8xf32>,
    %c0_67 = arith.constant 0 : index
    %c1_68 = arith.constant 1 : index
    %c1_69 = arith.constant 1 : index
    %c0_70 = arith.constant 0 : index
    %68 = vector.load %arg9[%c0_67, %c1_68, %c1_69, %c0_70] : memref<1x18x18x8xf32, #tpu.memory_space<vmem>>, vector<1x16x16x8xf32>
    tpu.vector_store %arg9[%c0_67, %c1_68, %c1_69, %c0_70], %65 {strides = array<i32>} : memref<1x18x18x8xf32, #tpu.memory_space<vmem>>, vector<1x16x16x8xf32>,
    %c0_71 = arith.constant 0 : index
    %c0_72 = arith.constant 0 : index
    %c0_73 = arith.constant 0 : index
    %c0_74 = arith.constant 0 : index
    %69 = vector.load %arg9[%c0_71, %c0_72, %c0_73, %c0_74] : memref<1x18x18x8xf32, #tpu.memory_space<vmem>>, vector<1x18x18x8xf32>
    %cst_75 = arith.constant 0.000000e+00 : f32
    %70 = vector.broadcast %cst_75 : f32 to vector<256x8xf32>
    %71 = vector.extract_strided_slice %69 {offsets = [0, 0, 0, 0], sizes = [1, 16, 16, 8], strides = [1, 1, 1, 1]} : vector<1x18x18x8xf32> to vector<1x16x16x8xf32>
    %72 = vector.shape_cast %71 : vector<1x16x16x8xf32> to vector<256x8xf32>
    %c0_76 = arith.constant 0 : index
    %c0_77 = arith.constant 0 : index
    %c0_78 = arith.constant 0 : index
    %c0_79 = arith.constant 0 : index
    %73 = vector.load %arg4[%c0_76, %c0_77, %c0_78, %c0_79] : memref<3x3x8x8xf32, #tpu.memory_space<vmem>>, vector<1x1x8x8xf32>
    %74 = vector.shape_cast %73 : vector<1x1x8x8xf32> to vector<8x8xf32>
    %cst_80 = arith.constant dense<0.000000e+00> : vector<256x8xf32>
    %75 = tpu.matmul %72, %74, %cst_80 {dimension_numbers = #tpu.dot_dimension_numbers<[1], [0], [0], [1], [0, 0, 1, 1], [], []>} : vector<256x8xf32>, vector<8x8xf32>, vector<256x8xf32> -> vector<256x8xf32>
    %76 = arith.addf %70, %75 : vector<256x8xf32>
    %77 = vector.extract_strided_slice %69 {offsets = [0, 0, 1, 0], sizes = [1, 16, 16, 8], strides = [1, 1, 1, 1]} : vector<1x18x18x8xf32> to vector<1x16x16x8xf32>
    %78 = vector.shape_cast %77 : vector<1x16x16x8xf32> to vector<256x8xf32>
    %c0_81 = arith.constant 0 : index
    %c1_82 = arith.constant 1 : index
    %c0_83 = arith.constant 0 : index
    %c0_84 = arith.constant 0 : index
    %79 = vector.load %arg4[%c0_81, %c1_82, %c0_83, %c0_84] : memref<3x3x8x8xf32, #tpu.memory_space<vmem>>, vector<1x1x8x8xf32>
    %80 = vector.shape_cast %79 : vector<1x1x8x8xf32> to vector<8x8xf32>
    %cst_85 = arith.constant dense<0.000000e+00> : vector<256x8xf32>
    %81 = tpu.matmul %78, %80, %cst_85 {dimension_numbers = #tpu.dot_dimension_numbers<[1], [0], [0], [1], [0, 0, 1, 1], [], []>} : vector<256x8xf32>, vector<8x8xf32>, vector<256x8xf32> -> vector<256x8xf32>
    %82 = arith.addf %76, %81 : vector<256x8xf32>
    %83 = vector.extract_strided_slice %69 {offsets = [0, 0, 2, 0], sizes = [1, 16, 16, 8], strides = [1, 1, 1, 1]} : vector<1x18x18x8xf32> to vector<1x16x16x8xf32>
    %84 = vector.shape_cast %83 : vector<1x16x16x8xf32> to vector<256x8xf32>
    %c0_86 = arith.constant 0 : index
    %c2_87 = arith.constant 2 : index
    %c0_88 = arith.constant 0 : index
    %c0_89 = arith.constant 0 : index
    %85 = vector.load %arg4[%c0_86, %c2_87, %c0_88, %c0_89] : memref<3x3x8x8xf32, #tpu.memory_space<vmem>>, vector<1x1x8x8xf32>
    %86 = vector.shape_cast %85 : vector<1x1x8x8xf32> to vector<8x8xf32>
    %cst_90 = arith.constant dense<0.000000e+00> : vector<256x8xf32>
    %87 = tpu.matmul %84, %86, %cst_90 {dimension_numbers = #tpu.dot_dimension_numbers<[1], [0], [0], [1], [0, 0, 1, 1], [], []>} : vector<256x8xf32>, vector<8x8xf32>, vector<256x8xf32> -> vector<256x8xf32>
    %88 = arith.addf %82, %87 : vector<256x8xf32>
    %89 = vector.extract_strided_slice %69 {offsets = [0, 1, 0, 0], sizes = [1, 16, 16, 8], strides = [1, 1, 1, 1]} : vector<1x18x18x8xf32> to vector<1x16x16x8xf32>
    %90 = vector.shape_cast %89 : vector<1x16x16x8xf32> to vector<256x8xf32>
    %c1_91 = arith.constant 1 : index
    %c0_92 = arith.constant 0 : index
    %c0_93 = arith.constant 0 : index
    %c0_94 = arith.constant 0 : index
    %91 = vector.load %arg4[%c1_91, %c0_92, %c0_93, %c0_94] : memref<3x3x8x8xf32, #tpu.memory_space<vmem>>, vector<1x1x8x8xf32>
    %92 = vector.shape_cast %91 : vector<1x1x8x8xf32> to vector<8x8xf32>
    %cst_95 = arith.constant dense<0.000000e+00> : vector<256x8xf32>
    %93 = tpu.matmul %90, %92, %cst_95 {dimension_numbers = #tpu.dot_dimension_numbers<[1], [0], [0], [1], [0, 0, 1, 1], [], []>} : vector<256x8xf32>, vector<8x8xf32>, vector<256x8xf32> -> vector<256x8xf32>
    %94 = arith.addf %88, %93 : vector<256x8xf32>
    %95 = vector.extract_strided_slice %69 {offsets = [0, 1, 1, 0], sizes = [1, 16, 16, 8], strides = [1, 1, 1, 1]} : vector<1x18x18x8xf32> to vector<1x16x16x8xf32>
    %96 = vector.shape_cast %95 : vector<1x16x16x8xf32> to vector<256x8xf32>
    %c1_96 = arith.constant 1 : index
    %c1_97 = arith.constant 1 : index
    %c0_98 = arith.constant 0 : index
    %c0_99 = arith.constant 0 : index
    %97 = vector.load %arg4[%c1_96, %c1_97, %c0_98, %c0_99] : memref<3x3x8x8xf32, #tpu.memory_space<vmem>>, vector<1x1x8x8xf32>
    %98 = vector.shape_cast %97 : vector<1x1x8x8xf32> to vector<8x8xf32>
    %cst_100 = arith.constant dense<0.000000e+00> : vector<256x8xf32>
    %99 = tpu.matmul %96, %98, %cst_100 {dimension_numbers = #tpu.dot_dimension_numbers<[1], [0], [0], [1], [0, 0, 1, 1], [], []>} : vector<256x8xf32>, vector<8x8xf32>, vector<256x8xf32> -> vector<256x8xf32>
    %100 = arith.addf %94, %99 : vector<256x8xf32>
    %101 = vector.extract_strided_slice %69 {offsets = [0, 1, 2, 0], sizes = [1, 16, 16, 8], strides = [1, 1, 1, 1]} : vector<1x18x18x8xf32> to vector<1x16x16x8xf32>
    %102 = vector.shape_cast %101 : vector<1x16x16x8xf32> to vector<256x8xf32>
    %c1_101 = arith.constant 1 : index
    %c2_102 = arith.constant 2 : index
    %c0_103 = arith.constant 0 : index
    %c0_104 = arith.constant 0 : index
    %103 = vector.load %arg4[%c1_101, %c2_102, %c0_103, %c0_104] : memref<3x3x8x8xf32, #tpu.memory_space<vmem>>, vector<1x1x8x8xf32>
    %104 = vector.shape_cast %103 : vector<1x1x8x8xf32> to vector<8x8xf32>
    %cst_105 = arith.constant dense<0.000000e+00> : vector<256x8xf32>
    %105 = tpu.matmul %102, %104, %cst_105 {dimension_numbers = #tpu.dot_dimension_numbers<[1], [0], [0], [1], [0, 0, 1, 1], [], []>} : vector<256x8xf32>, vector<8x8xf32>, vector<256x8xf32> -> vector<256x8xf32>
    %106 = arith.addf %100, %105 : vector<256x8xf32>
    %107 = vector.extract_strided_slice %69 {offsets = [0, 2, 0, 0], sizes = [1, 16, 16, 8], strides = [1, 1, 1, 1]} : vector<1x18x18x8xf32> to vector<1x16x16x8xf32>
    %108 = vector.shape_cast %107 : vector<1x16x16x8xf32> to vector<256x8xf32>
    %c2_106 = arith.constant 2 : index
    %c0_107 = arith.constant 0 : index
    %c0_108 = arith.constant 0 : index
    %c0_109 = arith.constant 0 : index
    %109 = vector.load %arg4[%c2_106, %c0_107, %c0_108, %c0_109] : memref<3x3x8x8xf32, #tpu.memory_space<vmem>>, vector<1x1x8x8xf32>
    %110 = vector.shape_cast %109 : vector<1x1x8x8xf32> to vector<8x8xf32>
    %cst_110 = arith.constant dense<0.000000e+00> : vector<256x8xf32>
    %111 = tpu.matmul %108, %110, %cst_110 {dimension_numbers = #tpu.dot_dimension_numbers<[1], [0], [0], [1], [0, 0, 1, 1], [], []>} : vector<256x8xf32>, vector<8x8xf32>, vector<256x8xf32> -> vector<256x8xf32>
    %112 = arith.addf %106, %111 : vector<256x8xf32>
    %113 = vector.extract_strided_slice %69 {offsets = [0, 2, 1, 0], sizes = [1, 16, 16, 8], strides = [1, 1, 1, 1]} : vector<1x18x18x8xf32> to vector<1x16x16x8xf32>
    %114 = vector.shape_cast %113 : vector<1x16x16x8xf32> to vector<256x8xf32>
    %c2_111 = arith.constant 2 : index
    %c1_112 = arith.constant 1 : index
    %c0_113 = arith.constant 0 : index
    %c0_114 = arith.constant 0 : index
    %115 = vector.load %arg4[%c2_111, %c1_112, %c0_113, %c0_114] : memref<3x3x8x8xf32, #tpu.memory_space<vmem>>, vector<1x1x8x8xf32>
    %116 = vector.shape_cast %115 : vector<1x1x8x8xf32> to vector<8x8xf32>
    %cst_115 = arith.constant dense<0.000000e+00> : vector<256x8xf32>
    %117 = tpu.matmul %114, %116, %cst_115 {dimension_numbers = #tpu.dot_dimension_numbers<[1], [0], [0], [1], [0, 0, 1, 1], [], []>} : vector<256x8xf32>, vector<8x8xf32>, vector<256x8xf32> -> vector<256x8xf32>
    %118 = arith.addf %112, %117 : vector<256x8xf32>
    %119 = vector.extract_strided_slice %69 {offsets = [0, 2, 2, 0], sizes = [1, 16, 16, 8], strides = [1, 1, 1, 1]} : vector<1x18x18x8xf32> to vector<1x16x16x8xf32>
    %120 = vector.shape_cast %119 : vector<1x16x16x8xf32> to vector<256x8xf32>
    %c2_116 = arith.constant 2 : index
    %c2_117 = arith.constant 2 : index
    %c0_118 = arith.constant 0 : index
    %c0_119 = arith.constant 0 : index
    %121 = vector.load %arg4[%c2_116, %c2_117, %c0_118, %c0_119] : memref<3x3x8x8xf32, #tpu.memory_space<vmem>>, vector<1x1x8x8xf32>
    %122 = vector.shape_cast %121 : vector<1x1x8x8xf32> to vector<8x8xf32>
    %cst_120 = arith.constant dense<0.000000e+00> : vector<256x8xf32>
    %123 = tpu.matmul %120, %122, %cst_120 {dimension_numbers = #tpu.dot_dimension_numbers<[1], [0], [0], [1], [0, 0, 1, 1], [], []>} : vector<256x8xf32>, vector<8x8xf32>, vector<256x8xf32> -> vector<256x8xf32>
    %124 = arith.addf %118, %123 : vector<256x8xf32>
    %c0_121 = arith.constant 0 : index
    %c0_122 = arith.constant 0 : index
    %125 = vector.load %arg5[%c0_121, %c0_122] : memref<1x8xf32, #tpu.memory_space<vmem>>, vector<1x8xf32>
    %126 = vector.broadcast %125 : vector<1x8xf32> to vector<256x8xf32>
    %127 = arith.addf %124, %126 : vector<256x8xf32>
    %cst_123 = arith.constant 0.000000e+00 : f32
    %128 = vector.broadcast %cst_123 : f32 to vector<256x8xf32>
    %129 = arith.maximumf %127, %128 : vector<256x8xf32>
    %130 = vector.shape_cast %129 : vector<256x8xf32> to vector<1x16x16x8xf32>
    %c0_124 = arith.constant 0 : index
    %c0_125 = arith.constant 0 : index
    %c0_126 = arith.constant 0 : index
    %c0_127 = arith.constant 0 : index
    %131 = vector.load %arg6[%c0_124, %c0_125, %c0_126, %c0_127] : memref<1x16x16x8xf32, #tpu.memory_space<vmem>>, vector<1x16x16x8xf32>
    tpu.vector_store %arg6[%c0_124, %c0_125, %c0_126, %c0_127], %130 {strides = array<i32>} : memref<1x16x16x8xf32, #tpu.memory_space<vmem>>, vector<1x16x16x8xf32>,
    %132 = vector.shape_cast %130 : vector<1x16x16x8xf32> to vector<1x8x2x16x8xf32>
    %cst_128 = arith.constant dense<0xFF800000> : vector<1x8x16x8xf32>
    %133 = vector.multi_reduction <maximumf>, %132, %cst_128 [2] : vector<1x8x2x16x8xf32> to vector<1x8x16x8xf32>
    %134 = vector.shape_cast %133 : vector<1x8x16x8xf32> to vector<1x8x8x2x8xf32>
    %cst_129 = arith.constant dense<0xFF800000> : vector<1x8x8x8xf32>
    %135 = vector.multi_reduction <maximumf>, %134, %cst_129 [3] : vector<1x8x8x2x8xf32> to vector<1x8x8x8xf32>
    %c0_130 = arith.constant 0 : index
    %c0_131 = arith.constant 0 : index
    %c0_132 = arith.constant 0 : index
    %c0_133 = arith.constant 0 : index
    %136 = vector.load %arg7[%c0_130, %c0_131, %c0_132, %c0_133] : memref<1x8x8x8xf32, #tpu.memory_space<vmem>>, vector<1x8x8x8xf32>
    tpu.vector_store %arg7[%c0_130, %c0_131, %c0_132, %c0_133], %135 {strides = array<i32>} : memref<1x8x8x8xf32, #tpu.memory_space<vmem>>, vector<1x8x8x8xf32>,
    return
  }
  func.func @transform_0(%arg0: i32) -> (i32, i32, i32, i32) {
    %c0_i32 = arith.constant 0 : i32
    %c0_i32_0 = arith.constant 0 : i32
    %c0_i32_1 = arith.constant 0 : i32
    %c0_i32_2 = arith.constant 0 : i32
    return %arg0, %c0_i32, %c0_i32_0, %c0_i32_1 : i32, i32, i32, i32
  }
  func.func @transform_1(%arg0: i32) -> (i32, i32, i32, i32) {
    %c0_i32 = arith.constant 0 : i32
    %c0_i32_0 = arith.constant 0 : i32
    %c0_i32_1 = arith.constant 0 : i32
    %c0_i32_2 = arith.constant 0 : i32
    %c0_i32_3 = arith.constant 0 : i32
    return %c0_i32, %c0_i32_0, %c0_i32_1, %c0_i32_2 : i32, i32, i32, i32
  }
  func.func @transform_2(%arg0: i32) -> (i32, i32) {
    %c0_i32 = arith.constant 0 : i32
    %c0_i32_0 = arith.constant 0 : i32
    %c0_i32_1 = arith.constant 0 : i32
    return %c0_i32, %c0_i32_0 : i32, i32
  }
  func.func @transform_3(%arg0: i32) -> (i32, i32, i32, i32) {
    %c0_i32 = arith.constant 0 : i32
    %c0_i32_0 = arith.constant 0 : i32
    %c0_i32_1 = arith.constant 0 : i32
    %c0_i32_2 = arith.constant 0 : i32
    %c0_i32_3 = arith.constant 0 : i32
    return %c0_i32, %c0_i32_0, %c0_i32_1, %c0_i32_2 : i32, i32, i32, i32
  }
  func.func @transform_4(%arg0: i32) -> (i32, i32) {
    %c0_i32 = arith.constant 0 : i32
    %c0_i32_0 = arith.constant 0 : i32
    %c0_i32_1 = arith.constant 0 : i32
    return %c0_i32, %c0_i32_0 : i32, i32
  }
  func.func @transform_5(%arg0: i32) -> (i32, i32, i32, i32) {
    %c0_i32 = arith.constant 0 : i32
    %c0_i32_0 = arith.constant 0 : i32
    %c0_i32_1 = arith.constant 0 : i32
    %c0_i32_2 = arith.constant 0 : i32
    return %arg0, %c0_i32, %c0_i32_0, %c0_i32_1 : i32, i32, i32, i32
  }
  func.func @transform_6(%arg0: i32) -> (i32, i32, i32, i32) {
    %c0_i32 = arith.constant 0 : i32
    %c0_i32_0 = arith.constant 0 : i32
    %c0_i32_1 = arith.constant 0 : i32
    %c0_i32_2 = arith.constant 0 : i32
    return %arg0, %c0_i32, %c0_i32_0, %c0_i32_1 : i32, i32, i32, i32
  }
}

</mosaic_0001>

<llo_original>
// kernel: encoder_block_forward.1
$region0: #{encoder_block_forward.1}
  #allocation0 [shape = 'u32[]', space=smem, size = 0x4, offset = 0x4, fixed_abs, tag = 'smem constant byte address 0x4 - core index']
  #allocation1 [shape = 'u32[144,128]{1,0:T(1,128)}', space=vmem, size = 0x12000, scoped, tag = 'internal scratch']
  #allocation2 [shape = 'f32[1,18,18,4]{3,2,1,0:T(8,128)}', space=vmem, size = 0x36000, scoped, tag = 'scratch operand']
  #allocation3 [shape = 'f32[1,18,18,8]{3,2,1,0:T(8,128)}', space=vmem, size = 0x36000, scoped, tag = 'scratch operand']
  %s0 = inlined_call_operand.vmem [shape: f32[2,16,16,4], index: 0, kind: input, shape index: {}]
  %s1 = inlined_call_operand.vmem [shape: f32[3,3,4,8], index: 1, kind: input, shape index: {}]
  %s2 = inlined_call_operand.vmem [shape: f32[1,8], index: 2, kind: input, shape index: {}]
  %s3 = inlined_call_operand.vmem [shape: f32[3,3,8,8], index: 3, kind: input, shape index: {}]
  %s4 = inlined_call_operand.vmem [shape: f32[1,8], index: 4, kind: input, shape index: {}]
  %s5 = inlined_call_operand.vmem [shape: f32[2,16,16,8], index: 5, kind: output, shape index: {0}]
  %s6 = inlined_call_operand.vmem [shape: f32[2,8,8,8], index: 6, kind: output, shape index: {1}]
  %7 = xla_tuple %s5, %s6
  %s8 = sld [smem:[#allocation0]]
  $region61: #{encoder_block_forward.1} parent=0
    _
  %s10 = ssub.s32 1, %s8
  %s11 = scalar_select 0, %s10, %s8
  loop: start=0, step=1, limit=4
  $region2: #{encoder_block_forward.1} parent=0 // loop_pre_header
    _
  $region3: #{encoder_block_forward.1} parent=0 // loop_header
    %s13 = sphi 0, %s17
    %p14 = scmp.ge.s32.totalorder %s13, 4
    %s23 = sphi 0, %s25
    %s26 = sphi 0, %s23
    %s27 = sphi 0, %s26
    %s43 = sphi 0, %s27
    %s47 = sphi 0, %s47
    %s49 = sphi 0, %s47
    %s50 = sphi 0, %s49
    %s64 = sphi 0, %s50
    %s68 = sphi 0, %s68
    %s70 = sphi 0, %s68
    %s71 = sphi 0, %s70
    %s85 = sphi 0, %s71
    %s89 = sphi 0, %s89
    %s91 = sphi 0, %s89
    %s92 = sphi 0, %s91
    %s106 = sphi 0, %s92
    %s110 = sphi 0, %s110
    %s112 = sphi 0, %s110
    %s113 = sphi 0, %s112
    %s127 = sphi 0, %s113
    %s133 = sphi 0, %s135
    %s136 = sphi 0, %s133
    %s137 = sphi 0, %s136
    %s153 = sphi 0, %s137
    %s159 = sphi 0, %s161
    %s162 = sphi 0, %s159
    %s163 = sphi 0, %s162
    %s179 = sphi 0, %s163
  $region4: #{encoder_block_forward.1} parent=0 // loop_header_branch
    %16 = sbr.rel (%p14) target = $region8
  $region5: #{encoder_block_forward.1} parent=0 // loop_body
    %s18 = ssub.s32 %s13, 1
    %s19 = ssub.s32 %s13, 2
    %s20 = sadd.s32 %s13, 1
    %s21 = ssub.s32 %s13, %s20
    %p22 = scmp.eq.s32.totalorder %s21, 0
    %s24 = sadd.s32 %s23, 1
    %s25 = scalar_select %p22, %s23, %s24
    %p28 = pneg %p22
    %p29 = scmp.eq.s32.totalorder %s13, 1
    %p30 = por %p28, %p29
    %p31 = scmp.ne.s32.totalorder %s23, %s26
    %p32 = scmp.eq.s32.totalorder %s13, 0
    %p33 = por %p31, %p32
    %p34 = scmp.ne.s32.totalorder %s23, %s26
    %p35 = scmp.eq.s32.totalorder %s18, 1
    %p36 = por %p34, %p35
    %p37 = scmp.ne.s32.totalorder %s26, %s27
    %p38 = scmp.eq.s32.totalorder %s18, 0
    %p39 = por %p37, %p38
    %p40 = scmp.ne.s32.totalorder %s26, %s27
    %p41 = scmp.eq.s32.totalorder %s19, 1
    %p42 = por %p40, %p41
    %p44 = scmp.ne.s32.totalorder %s27, %s43
    %p45 = scmp.eq.s32.totalorder %s19, 0
    %p46 = por %p44, %p45
    %s48 = sadd.s32 %s47, 1
    %p51 = scmp.eq.s32.totalorder %s13, 1
    %p52 = scmp.ne.s32.totalorder %s47, %s49
    %p53 = scmp.eq.s32.totalorder %s13, 0
    %p54 = por %p52, %p53
    %p55 = scmp.ne.s32.totalorder %s47, %s49
    %p56 = scmp.eq.s32.totalorder %s18, 1
    %p57 = por %p55, %p56
    %p58 = scmp.ne.s32.totalorder %s49, %s50
    %p59 = scmp.eq.s32.totalorder %s18, 0
    %p60 = por %p58, %p59
    %p61 = scmp.ne.s32.totalorder %s49, %s50
    %p62 = scmp.eq.s32.totalorder %s19, 1
    %p63 = por %p61, %p62
    %p65 = scmp.ne.s32.totalorder %s50, %s64
    %p66 = scmp.eq.s32.totalorder %s19, 0
    %p67 = por %p65, %p66
    %s69 = sadd.s32 %s68, 1
    %p72 = scmp.eq.s32.totalorder %s13, 1
    %p73 = scmp.ne.s32.totalorder %s68, %s70
    %p74 = scmp.eq.s32.totalorder %s13, 0
    %p75 = por %p73, %p74
    %p76 = scmp.ne.s32.totalorder %s68, %s70
    %p77 = scmp.eq.s32.totalorder %s18, 1
    %p78 = por %p76, %p77
    %p79 = scmp.ne.s32.totalorder %s70, %s71
    %p80 = scmp.eq.s32.totalorder %s18, 0
    %p81 = por %p79, %p80
    %p82 = scmp.ne.s32.totalorder %s70, %s71
    %p83 = scmp.eq.s32.totalorder %s19, 1
    %p84 = por %p82, %p83
    %p86 = scmp.ne.s32.totalorder %s71, %s85
    %p87 = scmp.eq.s32.totalorder %s19, 0
    %p88 = por %p86, %p87
    %s90 = sadd.s32 %s89, 1
    %p93 = scmp.eq.s32.totalorder %s13, 1
    %p94 = scmp.ne.s32.totalorder %s89, %s91
    %p95 = scmp.eq.s32.totalorder %s13, 0
    %p96 = por %p94, %p95
    %p97 = scmp.ne.s32.totalorder %s89, %s91
    %p98 = scmp.eq.s32.totalorder %s18, 1
    %p99 = por %p97, %p98
    %p100 = scmp.ne.s32.totalorder %s91, %s92
    %p101 = scmp.eq.s32.totalorder %s18, 0
    %p102 = por %p100, %p101
    %p103 = scmp.ne.s32.totalorder %s91, %s92
    %p104 = scmp.eq.s32.totalorder %s19, 1
    %p105 = por %p103, %p104
    %p107 = scmp.ne.s32.totalorder %s92, %s106
    %p108 = scmp.eq.s32.totalorder %s19, 0
    %p109 = por %p107, %p108
    %s111 = sadd.s32 %s110, 1
    %p114 = scmp.eq.s32.totalorder %s13, 1
    %p115 = scmp.ne.s32.totalorder %s110, %s112
    %p116 = scmp.eq.s32.totalorder %s13, 0
    %p117 = por %p115, %p116
    %p118 = scmp.ne.s32.totalorder %s110, %s112
    %p119 = scmp.eq.s32.totalorder %s18, 1
    %p120 = por %p118, %p119
    %p121 = scmp.ne.s32.totalorder %s112, %s113
    %p122 = scmp.eq.s32.totalorder %s18, 0
    %p123 = por %p121, %p122
    %p124 = scmp.ne.s32.totalorder %s112, %s113
    %p125 = scmp.eq.s32.totalorder %s19, 1
    %p126 = por %p124, %p125
    %p128 = scmp.ne.s32.totalorder %s113, %s127
    %p129 = scmp.eq.s32.totalorder %s19, 0
    %p130 = por %p128, %p129
    %s131 = ssub.s32 %s13, %s20
    %p132 = scmp.eq.s32.totalorder %s131, 0
    %s134 = sadd.s32 %s133, 1
    %s135 = scalar_select %p132, %s133, %s134
    %p138 = pneg %p132
    %p139 = scmp.eq.s32.totalorder %s13, 1
    %p140 = por %p138, %p139
    %p141 = scmp.ne.s32.totalorder %s133, %s136
    %p142 = scmp.eq.s32.totalorder %s13, 0
    %p143 = por %p141, %p142
    %p144 = scmp.ne.s32.totalorder %s133, %s136
    %p145 = scmp.eq.s32.totalorder %s18, 1
    %p146 = por %p144, %p145
    %p147 = scmp.ne.s32.totalorder %s136, %s137
    %p148 = scmp.eq.s32.totalorder %s18, 0
    %p149 = por %p147, %p148
    %p150 = scmp.ne.s32.totalorder %s136, %s137
    %p151 = scmp.eq.s32.totalorder %s19, 1
    %p152 = por %p150, %p151
    %p154 = scmp.ne.s32.totalorder %s137, %s153
    %p155 = scmp.eq.s32.totalorder %s19, 0
    %p156 = por %p154, %p155
    %s157 = ssub.s32 %s13, %s20
    %p158 = scmp.eq.s32.totalorder %s157, 0
    %s160 = sadd.s32 %s159, 1
    %s161 = scalar_select %p158, %s159, %s160
    %p164 = pneg %p158
    %p165 = scmp.eq.s32.totalorder %s13, 1
    %p166 = por %p164, %p165
    %p167 = scmp.ne.s32.totalorder %s159, %s162
    %p168 = scmp.eq.s32.totalorder %s13, 0
    %p169 = por %p167, %p168
    %p170 = scmp.ne.s32.totalorder %s159, %s162
    %p171 = scmp.eq.s32.totalorder %s18, 1
    %p172 = por %p170, %p171
    %p173 = scmp.ne.s32.totalorder %s162, %s163
    %p174 = scmp.eq.s32.totalorder %s18, 0
    %p175 = por %p173, %p174
    %p176 = scmp.ne.s32.totalorder %s162, %s163
    %p177 = scmp.eq.s32.totalorder %s19, 1
    %p178 = por %p176, %p177
    %p180 = scmp.ne.s32.totalorder %s163, %s179
    %p181 = scmp.eq.s32.totalorder %s19, 0
    %p182 = por %p180, %p181
    %p183 = scmp.le.s32.totalorder 1, %s13
    %p184 = scmp.lt.s32.totalorder %s13, 3
    %p185 = pnand %p183, %p184
    %p186 = pneg %p185
    // Predicated region
    $region9: #{encoder_block_forward.1} parent=5 // pred_check
      _
    $region10: #{encoder_block_forward.1} parent=5 // pred_check_branch
      %188 = sbr.rel (%p185) target = $region12
    $region11: #{encoder_block_forward.1} parent=5 // pred_region
      %s189 = ssub.s32 %s13, 1
      // Predicated region
      $region13: #{encoder_block_forward.1} parent=11 // pred_check
        %p190 = pneg %p60
      $region14: #{encoder_block_forward.1} parent=11 // pred_check_branch
        %192 = sbr.rel (%p190) target = $region16
      $region15: #{encoder_block_forward.1} parent=11 // pred_region
        _
      $region16: #{encoder_block_forward.1} parent=11 // pred_fallthru
        _
      // Predicated region
      $region17: #{encoder_block_forward.1} parent=11 // pred_check
        %p193 = pneg %p81
      $region18: #{encoder_block_forward.1} parent=11 // pred_check_branch
        %195 = sbr.rel (%p193) target = $region20
      $region19: #{encoder_block_forward.1} parent=11 // pred_region
        _
      $region20: #{encoder_block_forward.1} parent=11 // pred_fallthru
        _
      // Predicated region
      $region21: #{encoder_block_forward.1} parent=11 // pred_check
        %p196 = pneg %p102
      $region22: #{encoder_block_forward.1} parent=11 // pred_check_branch
        %198 = sbr.rel (%p196) target = $region24
      $region23: #{encoder_block_forward.1} parent=11 // pred_region
        _
      $region24: #{encoder_block_forward.1} parent=11 // pred_fallthru
        _
      // Predicated region
      $region25: #{encoder_block_forward.1} parent=11 // pred_check
        %p199 = pneg %p123
      $region26: #{encoder_block_forward.1} parent=11 // pred_check_branch
        %201 = sbr.rel (%p199) target = $region28
      $region27: #{encoder_block_forward.1} parent=11 // pred_region
        _
      $region28: #{encoder_block_forward.1} parent=11 // pred_fallthru
        _
    $region12: #{encoder_block_forward.1} parent=5 // pred_fallthru
      _
    %p202 = scmp.lt.s32.totalorder %s13, 2
    // Predicated region
    $region29: #{encoder_block_forward.1} parent=5 // pred_check
      %p203 = pneg %p202
    $region30: #{encoder_block_forward.1} parent=5 // pred_check_branch
      %205 = sbr.rel (%p203) target = $region32
    $region31: #{encoder_block_forward.1} parent=5 // pred_region
      // Predicated region
      $region33: #{encoder_block_forward.1} parent=31 // pred_check
        %p206 = pneg %p33
      $region34: #{encoder_block_forward.1} parent=31 // pred_check_branch
        %208 = sbr.rel (%p206) target = $region36
      $region35: #{encoder_block_forward.1} parent=31 // pred_region
        %p209 = scmp.lt.s32.totalorder %s13, 1
        %s210 = scalar_select %p209, %s13, 1
        %s211 = smul.addr %s210, 32
        %s212 = smul.addr %s211, 8
        %s213 = scalar_lea.vmem %s0, %s212
      $region36: #{encoder_block_forward.1} parent=31 // pred_fallthru
        _
    $region32: #{encoder_block_forward.1} parent=5 // pred_fallthru
      _
    %p214 = scmp.le.s32.totalorder 1, %s13
    %p215 = scmp.lt.s32.totalorder %s13, 3
    %p216 = pnand %p214, %p215
    %p217 = pneg %p216
    // Predicated region
    $region37: #{encoder_block_forward.1} parent=5 // pred_check
      _
    $region38: #{encoder_block_forward.1} parent=5 // pred_check_branch
      %219 = sbr.rel (%p216) target = $region40
    $region39: #{encoder_block_forward.1} parent=5 // pred_region
      %s220 = ssub.s32 %s13, 1
      %p221 = scmp.lt.s32.totalorder %s18, 1
      %s222 = scalar_select %p221, %s18, 1
      %s223 = smul.addr %s222, 32
      %s224 = smul.addr %s223, 8
      %s225 = scalar_lea.vmem %s0, %s224
      %p226 = pneg %p39
      %p227 = pneg %p36
      %p228 = pneg %p60
      %p229 = pneg %p57
      %p230 = pneg %p81
      %p231 = pneg %p78
      %p232 = pneg %p102
      %p233 = pneg %p99
      %p234 = pneg %p123
      %p235 = pneg %p120
      %p236 = pneg %p149
      %p237 = pneg %p146
      %p238 = scmp.lt.s32.totalorder %s18, 1
      %s239 = scalar_select %p238, %s18, 1
      %s240 = smul.addr %s239, 32
      %s241 = smul.addr %s240, 8
      %s242 = scalar_lea.vmem %s5, %s241
      %p243 = pneg %p175
      %p244 = pneg %p172
      %p245 = scmp.lt.s32.totalorder %s18, 1
      %s246 = scalar_select %p245, %s18, 1
      %s247 = smul.addr %s246, 8
      %s248 = smul.addr %s247, 8
      %s249 = scalar_lea.vmem %s6, %s248
      %p250 = scmp.lt.s32.totalorder %s18, 1
      %s251 = scalar_select %p250, %s18, 1
      %s252 = smul.addr %s251, 32
      %s253 = smul.addr %s252, 8
      %s254 = scalar_lea.vmem %s0, %s253
      %p255 = scmp.lt.s32.totalorder %s18, 1
      %s256 = scalar_select %p255, %s18, 1
      %s257 = smul.addr %s256, 32
      %s258 = smul.addr %s257, 8
      %s259 = scalar_lea.vmem %s5, %s258
      %p260 = scmp.lt.s32.totalorder %s18, 1
      %s261 = scalar_select %p260, %s18, 1
      %s262 = smul.addr %s261, 8
      %s263 = smul.addr %s262, 8
      %s264 = scalar_lea.vmem %s6, %s263
      %v265 = vld [vmem:[%s254] sm:$0xff]
      %v266 = vld [vmem:[%s254 + $0x8] sm:$0xff]
      %v267 = vld [vmem:[%s254 + $0x10] sm:$0xff]
      %v268 = vld [vmem:[%s254 + $0x18] sm:$0xff]
      %v269 = vld [vmem:[%s254 + $0x20] sm:$0xff]
      %v270 = vld [vmem:[%s254 + $0x28] sm:$0xff]
      %v271 = vld [vmem:[%s254 + $0x30] sm:$0xff]
      %v272 = vld [vmem:[%s254 + $0x38] sm:$0xff]
      %v273 = vld [vmem:[%s254 + $0x40] sm:$0xff]
      %v274 = vld [vmem:[%s254 + $0x48] sm:$0xff]
      %v275 = vld [vmem:[%s254 + $0x50] sm:$0xff]
      %v276 = vld [vmem:[%s254 + $0x58] sm:$0xff]
      %v277 = vld [vmem:[%s254 + $0x60] sm:$0xff]
      %v278 = vld [vmem:[%s254 + $0x68] sm:$0xff]
      %v279 = vld [vmem:[%s254 + $0x70] sm:$0xff]
      %v280 = vld [vmem:[%s254 + $0x78] sm:$0xff]
      %v281 = vld [vmem:[%s254 + $0x80] sm:$0xff]
      %v282 = vld [vmem:[%s254 + $0x88] sm:$0xff]
      %v283 = vld [vmem:[%s254 + $0x90] sm:$0xff]
      %v284 = vld [vmem:[%s254 + $0x98] sm:$0xff]
      %v285 = vld [vmem:[%s254 + $0xa0] sm:$0xff]
      %v286 = vld [vmem:[%s254 + $0xa8] sm:$0xff]
      %v287 = vld [vmem:[%s254 + $0xb0] sm:$0xff]
      %v288 = vld [vmem:[%s254 + $0xb8] sm:$0xff]
      %v289 = vld [vmem:[%s254 + $0xc0] sm:$0xff]
      %v290 = vld [vmem:[%s254 + $0xc8] sm:$0xff]
      %v291 = vld [vmem:[%s254 + $0xd0] sm:$0xff]
      %v292 = vld [vmem:[%s254 + $0xd8] sm:$0xff]
      %v293 = vld [vmem:[%s254 + $0xe0] sm:$0xff]
      %v294 = vld [vmem:[%s254 + $0xe8] sm:$0xff]
      %v295 = vld [vmem:[%s254 + $0xf0] sm:$0xff]
      %v296 = vld [vmem:[%s254 + $0xf8] sm:$0xff]
      %vm297 = vcmask 31744
      %298 = vst.msk [vmem:[#allocation2] sm:$0xff] %vm297, 0.0
      %299 = vst.msk [vmem:[#allocation2 + $0x8] sm:$0xff] %vm297, 0.0
      %vm300 = vcmask 25600
      %301 = vst.msk [vmem:[#allocation2 + $0x10] sm:$0x3] %vm300, 0.0
      %302 = vst.msk [vmem:[#allocation2 + $0x18] sm:$0xff] %vm297, 0.0
      %303 = vst.msk [vmem:[#allocation2 + $0x20] sm:$0xff] %vm297, 0.0
      %304 = vst.msk [vmem:[#allocation2 + $0x28] sm:$0x3] %vm300, 0.0
      %305 = vst.msk [vmem:[#allocation2 + $0x30] sm:$0xff] %vm297, 0.0
      %306 = vst.msk [vmem:[#allocation2 + $0x38] sm:$0xff] %vm297, 0.0
      %307 = vst.msk [vmem:[#allocation2 + $0x40] sm:$0x3] %vm300, 0.0
      %308 = vst.msk [vmem:[#allocation2 + $0x48] sm:$0xff] %vm297, 0.0
      %309 = vst.msk [vmem:[#allocation2 + $0x50] sm:$0xff] %vm297, 0.0
      %310 = vst.msk [vmem:[#allocation2 + $0x58] sm:$0x3] %vm300, 0.0
      %311 = vst.msk [vmem:[#allocation2 + $0x60] sm:$0xff] %vm297, 0.0
      %312 = vst.msk [vmem:[#allocation2 + $0x68] sm:$0xff] %vm297, 0.0
      %313 = vst.msk [vmem:[#allocation2 + $0x70] sm:$0x3] %vm300, 0.0
      %314 = vst.msk [vmem:[#allocation2 + $0x78] sm:$0xff] %vm297, 0.0
      %315 = vst.msk [vmem:[#allocation2 + $0x80] sm:$0xff] %vm297, 0.0
      %316 = vst.msk [vmem:[#allocation2 + $0x88] sm:$0x3] %vm300, 0.0
      %317 = vst.msk [vmem:[#allocation2 + $0x90] sm:$0xff] %vm297, 0.0
      %318 = vst.msk [vmem:[#allocation2 + $0x98] sm:$0xff] %vm297, 0.0
      %319 = vst.msk [vmem:[#allocation2 + $0xa0] sm:$0x3] %vm300, 0.0
      %320 = vst.msk [vmem:[#allocation2 + $0xa8] sm:$0xff] %vm297, 0.0
      %321 = vst.msk [vmem:[#allocation2 + $0xb0] sm:$0xff] %vm297, 0.0
      %322 = vst.msk [vmem:[#allocation2 + $0xb8] sm:$0x3] %vm300, 0.0
      %323 = vst.msk [vmem:[#allocation2 + $0xc0] sm:$0xff] %vm297, 0.0
      %324 = vst.msk [vmem:[#allocation2 + $0xc8] sm:$0xff] %vm297, 0.0
      %325 = vst.msk [vmem:[#allocation2 + $0xd0] sm:$0x3] %vm300, 0.0
      %326 = vst.msk [vmem:[#allocation2 + $0xd8] sm:$0xff] %vm297, 0.0
      %327 = vst.msk [vmem:[#allocation2 + $0xe0] sm:$0xff] %vm297, 0.0
      %328 = vst.msk [vmem:[#allocation2 + $0xe8] sm:$0x3] %vm300, 0.0
      %329 = vst.msk [vmem:[#allocation2 + $0xf0] sm:$0xff] %vm297, 0.0
      %330 = vst.msk [vmem:[#allocation2 + $0xf8] sm:$0xff] %vm297, 0.0
      %331 = vst.msk [vmem:[#allocation2 + $0x100] sm:$0x3] %vm300, 0.0
      %332 = vst.msk [vmem:[#allocation2 + $0x108] sm:$0xff] %vm297, 0.0
      %333 = vst.msk [vmem:[#allocation2 + $0x110] sm:$0xff] %vm297, 0.0
      %334 = vst.msk [vmem:[#allocation2 + $0x118] sm:$0x3] %vm300, 0.0
      %335 = vst.msk [vmem:[#allocation2 + $0x120] sm:$0xff] %vm297, 0.0
      %336 = vst.msk [vmem:[#allocation2 + $0x128] sm:$0xff] %vm297, 0.0
      %337 = vst.msk [vmem:[#allocation2 + $0x130] sm:$0x3] %vm300, 0.0
      %338 = vst.msk [vmem:[#allocation2 + $0x138] sm:$0xff] %vm297, 0.0
      %339 = vst.msk [vmem:[#allocation2 + $0x140] sm:$0xff] %vm297, 0.0
      %340 = vst.msk [vmem:[#allocation2 + $0x148] sm:$0x3] %vm300, 0.0
      %341 = vst.msk [vmem:[#allocation2 + $0x150] sm:$0xff] %vm297, 0.0
      %342 = vst.msk [vmem:[#allocation2 + $0x158] sm:$0xff] %vm297, 0.0
      %343 = vst.msk [vmem:[#allocation2 + $0x160] sm:$0x3] %vm300, 0.0
      %344 = vst.msk [vmem:[#allocation2 + $0x168] sm:$0xff] %vm297, 0.0
      %345 = vst.msk [vmem:[#allocation2 + $0x170] sm:$0xff] %vm297, 0.0
      %346 = vst.msk [vmem:[#allocation2 + $0x178] sm:$0x3] %vm300, 0.0
      %347 = vst.msk [vmem:[#allocation2 + $0x180] sm:$0xff] %vm297, 0.0
      %348 = vst.msk [vmem:[#allocation2 + $0x188] sm:$0xff] %vm297, 0.0
      %349 = vst.msk [vmem:[#allocation2 + $0x190] sm:$0x3] %vm300, 0.0
      %350 = vst.msk [vmem:[#allocation2 + $0x198] sm:$0xff] %vm297, 0.0
      %351 = vst.msk [vmem:[#allocation2 + $0x1a0] sm:$0xff] %vm297, 0.0
      %352 = vst.msk [vmem:[#allocation2 + $0x1a8] sm:$0x3] %vm300, 0.0
      %s353 = scalar_lea.vmem [#allocation2], 24
      %354 = vst.msk [vmem:[%s353 + $0x1] sm:$0xff] %vm297, %v265
      %355 = vst.msk [vmem:[%s353 + $0x9] sm:$0xff] %vm297, %v266
      %356 = vst.msk [vmem:[%s353 + $0x19] sm:$0xff] %vm297, %v267
      %357 = vst.msk [vmem:[%s353 + $0x21] sm:$0xff] %vm297, %v268
      %358 = vst.msk [vmem:[%s353 + $0x31] sm:$0xff] %vm297, %v269
      %359 = vst.msk [vmem:[%s353 + $0x39] sm:$0xff] %vm297, %v270
      %360 = vst.msk [vmem:[%s353 + $0x49] sm:$0xff] %vm297, %v271
      %361 = vst.msk [vmem:[%s353 + $0x51] sm:$0xff] %vm297, %v272
      %362 = vst.msk [vmem:[%s353 + $0x61] sm:$0xff] %vm297, %v273
      %363 = vst.msk [vmem:[%s353 + $0x69] sm:$0xff] %vm297, %v274
      %364 = vst.msk [vmem:[%s353 + $0x79] sm:$0xff] %vm297, %v275
      %365 = vst.msk [vmem:[%s353 + $0x81] sm:$0xff] %vm297, %v276
      %366 = vst.msk [vmem:[%s353 + $0x91] sm:$0xff] %vm297, %v277
      %367 = vst.msk [vmem:[%s353 + $0x99] sm:$0xff] %vm297, %v278
      %368 = vst.msk [vmem:[%s353 + $0xa9] sm:$0xff] %vm297, %v279
      %369 = vst.msk [vmem:[%s353 + $0xb1] sm:$0xff] %vm297, %v280
      %370 = vst.msk [vmem:[%s353 + $0xc1] sm:$0xff] %vm297, %v281
      %371 = vst.msk [vmem:[%s353 + $0xc9] sm:$0xff] %vm297, %v282
      %372 = vst.msk [vmem:[%s353 + $0xd9] sm:$0xff] %vm297, %v283
      %373 = vst.msk [vmem:[%s353 + $0xe1] sm:$0xff] %vm297, %v284
      %374 = vst.msk [vmem:[%s353 + $0xf1] sm:$0xff] %vm297, %v285
      %375 = vst.msk [vmem:[%s353 + $0xf9] sm:$0xff] %vm297, %v286
      %376 = vst.msk [vmem:[%s353 + $0x109] sm:$0xff] %vm297, %v287
      %377 = vst.msk [vmem:[%s353 + $0x111] sm:$0xff] %vm297, %v288
      %378 = vst.msk [vmem:[%s353 + $0x121] sm:$0xff] %vm297, %v289
      %379 = vst.msk [vmem:[%s353 + $0x129] sm:$0xff] %vm297, %v290
      %380 = vst.msk [vmem:[%s353 + $0x139] sm:$0xff] %vm297, %v291
      %381 = vst.msk [vmem:[%s353 + $0x141] sm:$0xff] %vm297, %v292
      %382 = vst.msk [vmem:[%s353 + $0x151] sm:$0xff] %vm297, %v293
      %383 = vst.msk [vmem:[%s353 + $0x159] sm:$0xff] %vm297, %v294
      %384 = vst.msk [vmem:[%s353 + $0x169] sm:$0xff] %vm297, %v295
      %385 = vst.msk [vmem:[%s353 + $0x171] sm:$0xff] %vm297, %v296
      %v386 = vld [vmem:[#allocation2] sm:$0xff]
      %v387 = vld [vmem:[#allocation2 + $0x8] sm:$0xff]
      %v388 = vld [vmem:[#allocation2 + $0x10] sm:$0x3]
      %v389 = vld [vmem:[#allocation2 + $0x18] sm:$0xff]
      %v390 = vld [vmem:[#allocation2 + $0x20] sm:$0xff]
      %v391 = vld [vmem:[#allocation2 + $0x28] sm:$0x3]
      %v392 = vld [vmem:[#allocation2 + $0x30] sm:$0xff]
      %v393 = vld [vmem:[#allocation2 + $0x38] sm:$0xff]
      %v394 = vld [vmem:[#allocation2 + $0x40] sm:$0x3]
      %v395 = vld [vmem:[#allocation2 + $0x48] sm:$0xff]
      %v396 = vld [vmem:[#allocation2 + $0x50] sm:$0xff]
      %v397 = vld [vmem:[#allocation2 + $0x58] sm:$0x3]
      %v398 = vld [vmem:[#allocation2 + $0x60] sm:$0xff]
      %v399 = vld [vmem:[#allocation2 + $0x68] sm:$0xff]
      %v400 = vld [vmem:[#allocation2 + $0x70] sm:$0x3]
      %v401 = vld [vmem:[#allocation2 + $0x78] sm:$0xff]
      %v402 = vld [vmem:[#allocation2 + $0x80] sm:$0xff]
      %v403 = vld [vmem:[#allocation2 + $0x88] sm:$0x3]
      %v404 = vld [vmem:[#allocation2 + $0x90] sm:$0xff]
      %v405 = vld [vmem:[#allocation2 + $0x98] sm:$0xff]
      %v406 = vld [vmem:[#allocation2 + $0xa0] sm:$0x3]
      %v407 = vld [vmem:[#allocation2 + $0xa8] sm:$0xff]
      %v408 = vld [vmem:[#allocation2 + $0xb0] sm:$0xff]
      %v409 = vld [vmem:[#allocation2 + $0xb8] sm:$0x3]
      %v410 = vld [vmem:[#allocation2 + $0xc0] sm:$0xff]
      %v411 = vld [vmem:[#allocation2 + $0xc8] sm:$0xff]
      %v412 = vld [vmem:[#allocation2 + $0xd0] sm:$0x3]
      %v413 = vld [vmem:[#allocation2 + $0xd8] sm:$0xff]
      %v414 = vld [vmem:[#allocation2 + $0xe0] sm:$0xff]
      %v415 = vld [vmem:[#allocation2 + $0xe8] sm:$0x3]
      %v416 = vld [vmem:[#allocation2 + $0xf0] sm:$0xff]
      %v417 = vld [vmem:[#allocation2 + $0xf8] sm:$0xff]
      %v418 = vld [vmem:[#allocation2 + $0x100] sm:$0x3]
      %v419 = vld [vmem:[#allocation2 + $0x108] sm:$0xff]
      %v420 = vld [vmem:[#allocation2 + $0x110] sm:$0xff]
      %v421 = vld [vmem:[#allocation2 + $0x118] sm:$0x3]
      %v422 = vld [vmem:[#allocation2 + $0x120] sm:$0xff]
      %v423 = vld [vmem:[#allocation2 + $0x128] sm:$0xff]
      %v424 = vld [vmem:[#allocation2 + $0x130] sm:$0x3]
      %v425 = vld [vmem:[#allocation2 + $0x138] sm:$0xff]
      %v426 = vld [vmem:[#allocation2 + $0x140] sm:$0xff]
      %v427 = vld [vmem:[#allocation2 + $0x148] sm:$0x3]
      %v428 = vld [vmem:[#allocation2 + $0x150] sm:$0xff]
      %v429 = vld [vmem:[#allocation2 + $0x158] sm:$0xff]
      %v430 = vld [vmem:[#allocation2 + $0x160] sm:$0x3]
      %v431 = vld [vmem:[#allocation2 + $0x168] sm:$0xff]
      %v432 = vld [vmem:[#allocation2 + $0x170] sm:$0xff]
      %v433 = vld [vmem:[#allocation2 + $0x178] sm:$0x3]
      %v434 = vld [vmem:[#allocation2 + $0x180] sm:$0xff]
      %v435 = vld [vmem:[#allocation2 + $0x188] sm:$0xff]
      %v436 = vld [vmem:[#allocation2 + $0x190] sm:$0x3]
      %v437 = vld [vmem:[#allocation2 + $0x198] sm:$0xff]
      %v438 = vld [vmem:[#allocation2 + $0x1a0] sm:$0xff]
      %v439 = vld [vmem:[#allocation2 + $0x1a8] sm:$0x3]
      %v440 = vld [vmem:[%s1] sm:$0xf]
      %vm489 = vcmask 1046528
      %v490 = vrot.slane %v386, 1
      %v491 = vrot.slane %v387, 1
      %v492 = vsel %vm489, %v490, %v491
      %v493 = vrot.slane %v388, 1
      %v494 = vsel %vm489, %v491, %v493
      %v495 = vrot.slane %v389, 1
      %v496 = vrot.slane %v390, 1
      %v497 = vsel %vm489, %v495, %v496
      %v498 = vrot.slane %v391, 1
      %v499 = vsel %vm489, %v496, %v498
      %v500 = vrot.slane %v392, 1
      %v501 = vrot.slane %v393, 1
      %v502 = vsel %vm489, %v500, %v501
      %v503 = vrot.slane %v394, 1
      %v504 = vsel %vm489, %v501, %v503
      %v505 = vrot.slane %v395, 1
      %v506 = vrot.slane %v396, 1
      %v507 = vsel %vm489, %v505, %v506
      %v508 = vrot.slane %v397, 1
      %v509 = vsel %vm489, %v506, %v508
      %v510 = vrot.slane %v398, 1
      %v511 = vrot.slane %v399, 1
      %v512 = vsel %vm489, %v510, %v511
      %v513 = vrot.slane %v400, 1
      %v514 = vsel %vm489, %v511, %v513
      %v515 = vrot.slane %v401, 1
      %v516 = vrot.slane %v402, 1
      %v517 = vsel %vm489, %v515, %v516
      %v518 = vrot.slane %v403, 1
      %v519 = vsel %vm489, %v516, %v518
      %v520 = vrot.slane %v404, 1
      %v521 = vrot.slane %v405, 1
      %v522 = vsel %vm489, %v520, %v521
      %v523 = vrot.slane %v406, 1
      %v524 = vsel %vm489, %v521, %v523
      %v525 = vrot.slane %v407, 1
      %v526 = vrot.slane %v408, 1
      %v527 = vsel %vm489, %v525, %v526
      %v528 = vrot.slane %v409, 1
      %v529 = vsel %vm489, %v526, %v528
      %v530 = vrot.slane %v410, 1
      %v531 = vrot.slane %v411, 1
      %v532 = vsel %vm489, %v530, %v531
      %v533 = vrot.slane %v412, 1
      %v534 = vsel %vm489, %v531, %v533
      %v535 = vrot.slane %v413, 1
      %v536 = vrot.slane %v414, 1
      %v537 = vsel %vm489, %v535, %v536
      %v538 = vrot.slane %v415, 1
      %v539 = vsel %vm489, %v536, %v538
      %v540 = vrot.slane %v416, 1
      %v541 = vrot.slane %v417, 1
      %v542 = vsel %vm489, %v540, %v541
      %v543 = vrot.slane %v418, 1
      %v544 = vsel %vm489, %v541, %v543
      %v545 = vrot.slane %v419, 1
      %v546 = vrot.slane %v420, 1
      %v547 = vsel %vm489, %v545, %v546
      %v548 = vrot.slane %v421, 1
      %v549 = vsel %vm489, %v546, %v548
      %v550 = vrot.slane %v422, 1
      %v551 = vrot.slane %v423, 1
      %v552 = vsel %vm489, %v550, %v551
      %v553 = vrot.slane %v424, 1
      %v554 = vsel %vm489, %v551, %v553
      %v555 = vrot.slane %v425, 1
      %v556 = vrot.slane %v426, 1
      %v557 = vsel %vm489, %v555, %v556
      %v558 = vrot.slane %v427, 1
      %v559 = vsel %vm489, %v556, %v558
      %v560 = vrot.slane %v428, 1
      %v561 = vrot.slane %v429, 1
      %v562 = vsel %vm489, %v560, %v561
      %v563 = vrot.slane %v430, 1
      %v564 = vsel %vm489, %v561, %v563
      %v565 = vrot.slane %v431, 1
      %v566 = vrot.slane %v432, 1
      %v567 = vsel %vm489, %v565, %v566
      %v568 = vrot.slane %v433, 1
      %v569 = vsel %vm489, %v566, %v568
      %s570 = scalar_lea.vmem %s1, 4
      %v571 = vld [vmem:[%s570] sm:$0xf]
      %v572 = vsel %vm297, %v492, 0
      %v574 = vsel %vm297, %v494, 0
      %v576 = vsel %vm297, %v497, 0
      %v578 = vsel %vm297, %v499, 0
      %v580 = vsel %vm297, %v502, 0
      %v582 = vsel %vm297, %v504, 0
      %v584 = vsel %vm297, %v507, 0
      %v586 = vsel %vm297, %v509, 0
      %v588 = vsel %vm297, %v512, 0
      %v590 = vsel %vm297, %v514, 0
      %v592 = vsel %vm297, %v517, 0
      %v594 = vsel %vm297, %v519, 0
      %v596 = vsel %vm297, %v522, 0
      %v598 = vsel %vm297, %v524, 0
      %v600 = vsel %vm297, %v527, 0
      %v602 = vsel %vm297, %v529, 0
      %v604 = vsel %vm297, %v532, 0
      %v606 = vsel %vm297, %v534, 0
      %v608 = vsel %vm297, %v537, 0
      %v610 = vsel %vm297, %v539, 0
      %v612 = vsel %vm297, %v542, 0
      %v614 = vsel %vm297, %v544, 0
      %v616 = vsel %vm297, %v547, 0
      %v618 = vsel %vm297, %v549, 0
      %v620 = vsel %vm297, %v552, 0
      %v622 = vsel %vm297, %v554, 0
      %v624 = vsel %vm297, %v557, 0
      %v626 = vsel %vm297, %v559, 0
      %v628 = vsel %vm297, %v562, 0
      %v630 = vsel %vm297, %v564, 0
      %v632 = vsel %vm297, %v567, 0
      %v634 = vsel %vm297, %v569, 0
      %vm636 = vcmask 1043456
      %v638 = vsel %vm636, %v571, 0
      %640 = vmatprep.subr.mxu0 0.0
      %641 = vmatpush1.msra.mxu0 %v638
      %642 = vmatprep.subr.mxu0 0.0
      %643 = vmatpush1.msra.mxu0 0.0
      %644 = vmatprep.subr.mxu0 0.0
      %645 = vmatpush1.msra.mxu0 0.0
      %646 = vmatprep.subr.mxu0 0.0
      %647 = vmatpush1.msra.mxu0 0.0
      %648 = vmatprep.subr.mxu0 0.0
      %649 = vmatpush1.msra.mxu0 0.0
      %650 = vmatprep.subr.mxu0 0.0
      %651 = vmatpush1.msra.mxu0 0.0
      %652 = vmatprep.subr.mxu0 0.0
      %653 = vmatpush1.msra.mxu0 0.0
      %654 = vmatprep.subr.mxu0 0.0
      %655 = vmatpush1.msra.mxu0 0.0
      %656 = vmatprep.subr.mxu0 0.0
      %657 = vmatpush1.msra.mxu0 0.0
      %658 = vmatprep.subr.mxu0 0.0
      %659 = vmatpush1.msra.mxu0 0.0
      %660 = vmatprep.subr.mxu0 0.0
      %661 = vmatpush1.msra.mxu0 0.0
      %662 = vmatprep.subr.mxu0 0.0
      %663 = vmatpush1.msra.mxu0 0.0
      %664 = vmatprep.subr.mxu0 0.0
      %665 = vmatpush1.msra.mxu0 0.0
      %666 = vmatprep.subr.mxu0 0.0
      %667 = vmatpush1.msra.mxu0 0.0
      %668 = vmatprep.subr.mxu0 0.0
      %669 = vmatpush1.msra.mxu0 0.0
      %670 = vmatprep.subr.mxu0 0.0
      %671 = vmatpush1.msra.mxu0 0.0
      %672 = vmatprep.subr.mxu0 0.0
      %673 = vmatpush1.msra.mxu0 0.0
      %674 = vmatprep.subr.mxu0 0.0
      %675 = vmatpush1.msra.mxu0 0.0
      %676 = vmatprep.subr.mxu0 0.0
      %677 = vmatpush1.msra.mxu0 0.0
      %678 = vmatprep.subr.mxu0 0.0
      %679 = vmatpush1.msra.mxu0 0.0
      %680 = vmatprep.subr.mxu0 0.0
      %681 = vmatpush1.msra.mxu0 0.0
      %682 = vmatprep.subr.mxu0 0.0
      %683 = vmatpush1.msra.mxu0 0.0
      %684 = vmatprep.subr.mxu0 0.0
      %685 = vmatpush1.msra.mxu0 0.0
      %686 = vmatprep.subr.mxu0 0.0
      %687 = vmatpush1.msra.mxu0 0.0
      %688 = vmatprep.subr.mxu0 0.0
      %689 = vmatpush1.msra.mxu0 0.0
      %690 = vmatprep.subr.mxu0 0.0
      %691 = vmatpush1.msra.mxu0 0.0
      %692 = vmatprep.subr.mxu0 0.0
      %693 = vmatpush1.msra.mxu0 0.0
      %694 = vmatprep.subr.mxu0 0.0
      %695 = vmatpush1.msra.mxu0 0.0
      %696 = vmatprep.subr.mxu0 0.0
      %697 = vmatpush1.msra.mxu0 0.0
      %698 = vmatprep.subr.mxu0 0.0
      %699 = vmatpush1.msra.mxu0 0.0
      %700 = vmatprep.subr.mxu0 0.0
      %701 = vmatpush1.msra.mxu0 0.0
      %702 = vmatprep.subr.mxu0 0.0
      %703 = vmatpush1.msra.mxu0 0.0
      %704 = vmatprep.mubr.f32.mxu0 0.0
      %705 = vmatmul.mubr.f32.gmra.mrb[0].mxu0 %v572
      %v706 = vpop.f32.mrb[0].mxu0
      %v707 = vadd.f32 0.0, %v706
      %v708 = vpop.f32.mrb[0].mxu0
      %709 = vmatprep.mubr.f32.mxu0 0.0
      %710 = vmatmul.mubr.f32.gmra.mrb[0].mxu0 %v574
      %v711 = vpop.f32.mrb[0].mxu0
      %v712 = vadd.f32 0.0, %v711
      %v713 = vpop.f32.mrb[0].mxu0
      %714 = vmatprep.mubr.f32.mxu0 0.0
      %715 = vmatmul.mubr.f32.gmra.mrb[0].mxu0 %v576
      %v716 = vpop.f32.mrb[0].mxu0
      %v717 = vadd.f32 0.0, %v716
      %v718 = vpop.f32.mrb[0].mxu0
      %719 = vmatprep.mubr.f32.mxu0 0.0
      %720 = vmatmul.mubr.f32.gmra.mrb[0].mxu0 %v578
      %v721 = vpop.f32.mrb[0].mxu0
      %v722 = vadd.f32 0.0, %v721
      %v723 = vpop.f32.mrb[0].mxu0
      %724 = vmatprep.mubr.f32.mxu0 0.0
      %725 = vmatmul.mubr.f32.gmra.mrb[0].mxu0 %v580
      %v726 = vpop.f32.mrb[0].mxu0
      %v727 = vadd.f32 0.0, %v726
      %v728 = vpop.f32.mrb[0].mxu0
      %729 = vmatprep.mubr.f32.mxu0 0.0
      %730 = vmatmul.mubr.f32.gmra.mrb[0].mxu0 %v582
      %v731 = vpop.f32.mrb[0].mxu0
      %v732 = vadd.f32 0.0, %v731
      %v733 = vpop.f32.mrb[0].mxu0
      %734 = vmatprep.mubr.f32.mxu0 0.0
      %735 = vmatmul.mubr.f32.gmra.mrb[0].mxu0 %v584
      %v736 = vpop.f32.mrb[0].mxu0
      %v737 = vadd.f32 0.0, %v736
      %v738 = vpop.f32.mrb[0].mxu0
      %739 = vmatprep.mubr.f32.mxu0 0.0
      %740 = vmatmul.mubr.f32.gmra.mrb[0].mxu0 %v586
      %v741 = vpop.f32.mrb[0].mxu0
      %v742 = vadd.f32 0.0, %v741
      %v743 = vpop.f32.mrb[0].mxu0
      %744 = vmatprep.mubr.f32.mxu0 0.0
      %745 = vmatmul.mubr.f32.gmra.mrb[0].mxu0 %v588
      %v746 = vpop.f32.mrb[0].mxu0
      %v747 = vadd.f32 0.0, %v746
      %v748 = vpop.f32.mrb[0].mxu0
      %749 = vmatprep.mubr.f32.mxu0 0.0
      %750 = vmatmul.mubr.f32.gmra.mrb[0].mxu0 %v590
      %v751 = vpop.f32.mrb[0].mxu0
      %v752 = vadd.f32 0.0, %v751
      %v753 = vpop.f32.mrb[0].mxu0
      %754 = vmatprep.mubr.f32.mxu0 0.0
      %755 = vmatmul.mubr.f32.gmra.mrb[0].mxu0 %v592
      %v756 = vpop.f32.mrb[0].mxu0
      %v757 = vadd.f32 0.0, %v756
      %v758 = vpop.f32.mrb[0].mxu0
      %759 = vmatprep.mubr.f32.mxu0 0.0
      %760 = vmatmul.mubr.f32.gmra.mrb[0].mxu0 %v594
      %v761 = vpop.f32.mrb[0].mxu0
      %v762 = vadd.f32 0.0, %v761
      %v763 = vpop.f32.mrb[0].mxu0
      %764 = vmatprep.mubr.f32.mxu0 0.0
      %765 = vmatmul.mubr.f32.gmra.mrb[0].mxu0 %v596
      %v766 = vpop.f32.mrb[0].mxu0
      %v767 = vadd.f32 0.0, %v766
      %v768 = vpop.f32.mrb[0].mxu0
      %769 = vmatprep.mubr.f32.mxu0 0.0
      %770 = vmatmul.mubr.f32.gmra.mrb[0].mxu0 %v598
      %v771 = vpop.f32.mrb[0].mxu0
      %v772 = vadd.f32 0.0, %v771
      %v773 = vpop.f32.mrb[0].mxu0
      %774 = vmatprep.mubr.f32.mxu0 0.0
      %775 = vmatmul.mubr.f32.gmra.mrb[0].mxu0 %v600
      %v776 = vpop.f32.mrb[0].mxu0
      %v777 = vadd.f32 0.0, %v776
      %v778 = vpop.f32.mrb[0].mxu0
      %779 = vmatprep.mubr.f32.mxu0 0.0
      %780 = vmatmul.mubr.f32.gmra.mrb[0].mxu0 %v602
      %v781 = vpop.f32.mrb[0].mxu0
      %v782 = vadd.f32 0.0, %v781
      %v783 = vpop.f32.mrb[0].mxu0
      %784 = vmatprep.mubr.f32.mxu0 0.0
      %785 = vmatmul.mubr.f32.gmra.mrb[0].mxu0 %v604
      %v786 = vpop.f32.mrb[0].mxu0
      %v787 = vadd.f32 0.0, %v786
      %v788 = vpop.f32.mrb[0].mxu0
      %789 = vmatprep.mubr.f32.mxu0 0.0
      %790 = vmatmul.mubr.f32.gmra.mrb[0].mxu0 %v606
      %v791 = vpop.f32.mrb[0].mxu0
      %v792 = vadd.f32 0.0, %v791
      %v793 = vpop.f32.mrb[0].mxu0
      %794 = vmatprep.mubr.f32.mxu0 0.0
      %795 = vmatmul.mubr.f32.gmra.mrb[0].mxu0 %v608
      %v796 = vpop.f32.mrb[0].mxu0
      %v797 = vadd.f32 0.0, %v796
      %v798 = vpop.f32.mrb[0].mxu0
      %799 = vmatprep.mubr.f32.mxu0 0.0
      %800 = vmatmul.mubr.f32.gmra.mrb[0].mxu0 %v610
      %v801 = vpop.f32.mrb[0].mxu0
      %v802 = vadd.f32 0.0, %v801
      %v803 = vpop.f32.mrb[0].mxu0
      %804 = vmatprep.mubr.f32.mxu0 0.0
      %805 = vmatmul.mubr.f32.gmra.mrb[0].mxu0 %v612
      %v806 = vpop.f32.mrb[0].mxu0
      %v807 = vadd.f32 0.0, %v806
      %v808 = vpop.f32.mrb[0].mxu0
      %809 = vmatprep.mubr.f32.mxu0 0.0
      %810 = vmatmul.mubr.f32.gmra.mrb[0].mxu0 %v614
      %v811 = vpop.f32.mrb[0].mxu0
      %v812 = vadd.f32 0.0, %v811
      %v813 = vpop.f32.mrb[0].mxu0
      %814 = vmatprep.mubr.f32.mxu0 0.0
      %815 = vmatmul.mubr.f32.gmra.mrb[0].mxu0 %v616
      %v816 = vpop.f32.mrb[0].mxu0
      %v817 = vadd.f32 0.0, %v816
      %v818 = vpop.f32.mrb[0].mxu0
      %819 = vmatprep.mubr.f32.mxu0 0.0
      %820 = vmatmul.mubr.f32.gmra.mrb[0].mxu0 %v618
      %v821 = vpop.f32.mrb[0].mxu0
      %v822 = vadd.f32 0.0, %v821
      %v823 = vpop.f32.mrb[0].mxu0
      %824 = vmatprep.mubr.f32.mxu0 0.0
      %825 = vmatmul.mubr.f32.gmra.mrb[0].mxu0 %v620
      %v826 = vpop.f32.mrb[0].mxu0
      %v827 = vadd.f32 0.0, %v826
      %v828 = vpop.f32.mrb[0].mxu0
      %829 = vmatprep.mubr.f32.mxu0 0.0
      %830 = vmatmul.mubr.f32.gmra.mrb[0].mxu0 %v622
      %v831 = vpop.f32.mrb[0].mxu0
      %v832 = vadd.f32 0.0, %v831
      %v833 = vpop.f32.mrb[0].mxu0
      %834 = vmatprep.mubr.f32.mxu0 0.0
      %835 = vmatmul.mubr.f32.gmra.mrb[0].mxu0 %v624
      %v836 = vpop.f32.mrb[0].mxu0
      %v837 = vadd.f32 0.0, %v836
      %v838 = vpop.f32.mrb[0].mxu0
      %839 = vmatprep.mubr.f32.mxu0 0.0
      %840 = vmatmul.mubr.f32.gmra.mrb[0].mxu0 %v626
      %v841 = vpop.f32.mrb[0].mxu0
      %v842 = vadd.f32 0.0, %v841
      %v843 = vpop.f32.mrb[0].mxu0
      %844 = vmatprep.mubr.f32.mxu0 0.0
      %845 = vmatmul.mubr.f32.gmra.mrb[0].mxu0 %v628
      %v846 = vpop.f32.mrb[0].mxu0
      %v847 = vadd.f32 0.0, %v846
      %v848 = vpop.f32.mrb[0].mxu0
      %849 = vmatprep.mubr.f32.mxu0 0.0
      %850 = vmatmul.mubr.f32.gmra.mrb[0].mxu0 %v630
      %v851 = vpop.f32.mrb[0].mxu0
      %v852 = vadd.f32 0.0, %v851
      %v853 = vpop.f32.mrb[0].mxu0
      %854 = vmatprep.mubr.f32.mxu0 0.0
      %855 = vmatmul.mubr.f32.gmra.mrb[0].mxu0 %v632
      %v856 = vpop.f32.mrb[0].mxu0
      %v857 = vadd.f32 0.0, %v856
      %v858 = vpop.f32.mrb[0].mxu0
      %859 = vmatprep.mubr.f32.mxu0 0.0
      %860 = vmatmul.mubr.f32.gmra.mrb[0].mxu0 %v634
      %v861 = vpop.f32.mrb[0].mxu0
      %v862 = vadd.f32 0.0, %v861
      %v863 = vpop.f32.mrb[0].mxu0
      %864 = vdwg.mxu0
      %v865 = vsel %vm297, %v386, 0
      %v867 = vsel %vm297, %v387, 0
      %v869 = vsel %vm297, %v389, 0
      %v871 = vsel %vm297, %v390, 0
      %v873 = vsel %vm297, %v392, 0
      %v875 = vsel %vm297, %v393, 0
      %v877 = vsel %vm297, %v395, 0
      %v879 = vsel %vm297, %v396, 0
      %v881 = vsel %vm297, %v398, 0
      %v883 = vsel %vm297, %v399, 0
      %v885 = vsel %vm297, %v401, 0
      %v887 = vsel %vm297, %v402, 0
      %v889 = vsel %vm297, %v404, 0
      %v891 = vsel %vm297, %v405, 0
      %v893 = vsel %vm297, %v407, 0
      %v895 = vsel %vm297, %v408, 0
      %v897 = vsel %vm297, %v410, 0
      %v899 = vsel %vm297, %v411, 0
      %v901 = vsel %vm297, %v413, 0
      %v903 = vsel %vm297, %v414, 0
      %v905 = vsel %vm297, %v416, 0
      %v907 = vsel %vm297, %v417, 0
      %v909 = vsel %vm297, %v419, 0
      %v911 = vsel %vm297, %v420, 0
      %v913 = vsel %vm297, %v422, 0
      %v915 = vsel %vm297, %v423, 0
      %v917 = vsel %vm297, %v425, 0
      %v919 = vsel %vm297, %v426, 0
      %v921 = vsel %vm297, %v428, 0
      %v923 = vsel %vm297, %v429, 0
      %v925 = vsel %vm297, %v431, 0
      %v927 = vsel %vm297, %v432, 0
      %v930 = vsel %vm636, %v440, 0
      %932 = vmatprep.subr.mxu0 0.0
      %933 = vmatpush1.msra.mxu0 %v930
      %934 = vmatprep.subr.mxu0 0.0
      %935 = vmatpush1.msra.mxu0 0.0
      %936 = vmatprep.subr.mxu0 0.0
      %937 = vmatpush1.msra.mxu0 0.0
      %938 = vmatprep.subr.mxu0 0.0
      %939 = vmatpush1.msra.mxu0 0.0
      %940 = vmatprep.subr.mxu0 0.0
      %941 = vmatpush1.msra.mxu0 0.0
      %942 = vmatprep.subr.mxu0 0.0
      %943 = vmatpush1.msra.mxu0 0.0
      %944 = vmatprep.subr.mxu0 0.0
      %945 = vmatpush1.msra.mxu0 0.0
      %946 = vmatprep.subr.mxu0 0.0
      %947 = vmatpush1.msra.mxu0 0.0
      %948 = vmatprep.subr.mxu0 0.0
      %949 = vmatpush1.msra.mxu0 0.0
      %950 = vmatprep.subr.mxu0 0.0
      %951 = vmatpush1.msra.mxu0 0.0
      %952 = vmatprep.subr.mxu0 0.0
      %953 = vmatpush1.msra.mxu0 0.0
      %954 = vmatprep.subr.mxu0 0.0
      %955 = vmatpush1.msra.mxu0 0.0
      %956 = vmatprep.subr.mxu0 0.0
      %957 = vmatpush1.msra.mxu0 0.0
      %958 = vmatprep.subr.mxu0 0.0
      %959 = vmatpush1.msra.mxu0 0.0
      %960 = vmatprep.subr.mxu0 0.0
      %961 = vmatpush1.msra.mxu0 0.0
      %962 = vmatprep.subr.mxu0 0.0
      %963 = vmatpush1.msra.mxu0 0.0
      %964 = vmatprep.subr.mxu0 0.0
      %965 = vmatpush1.msra.mxu0 0.0
      %966 = vmatprep.subr.mxu0 0.0
      %967 = vmatpush1.msra.mxu0 0.0
      %968 = vmatprep.subr.mxu0 0.0
      %969 = vmatpush1.msra.mxu0 0.0
      %970 = vmatprep.subr.mxu0 0.0
      %971 = vmatpush1.msra.mxu0 0.0
      %972 = vmatprep.subr.mxu0 0.0
      %973 = vmatpush1.msra.mxu0 0.0
      %974 = vmatprep.subr.mxu0 0.0
      %975 = vmatpush1.msra.mxu0 0.0
      %976 = vmatprep.subr.mxu0 0.0
      %977 = vmatpush1.msra.mxu0 0.0
      %978 = vmatprep.subr.mxu0 0.0
      %979 = vmatpush1.msra.mxu0 0.0
      %980 = vmatprep.subr.mxu0 0.0
      %981 = vmatpush1.msra.mxu0 0.0
      %982 = vmatprep.subr.mxu0 0.0
      %983 = vmatpush1.msra.mxu0 0.0
      %984 = vmatprep.subr.mxu0 0.0
      %985 = vmatpush1.msra.mxu0 0.0
      %986 = vmatprep.subr.mxu0 0.0
      %987 = vmatpush1.msra.mxu0 0.0
      %988 = vmatprep.subr.mxu0 0.0
      %989 = vmatpush1.msra.mxu0 0.0
      %990 = vmatprep.subr.mxu0 0.0
      %991 = vmatpush1.msra.mxu0 0.0
      %992 = vmatprep.subr.mxu0 0.0
      %993 = vmatpush1.msra.mxu0 0.0
      %994 = vmatprep.subr.mxu0 0.0
      %995 = vmatpush1.msra.mxu0 0.0
      %996 = vmatprep.mubr.f32.mxu0 0.0
      %997 = vmatmul.mubr.f32.gmra.mrb[0].mxu0 %v865
      %v998 = vpop.f32.mrb[0].mxu0
      %v999 = vadd.f32 %v707, %v998
      %v1000 = vpop.f32.mrb[0].mxu0
      %1001 = vmatprep.mubr.f32.mxu0 0.0
      %1002 = vmatmul.mubr.f32.gmra.mrb[0].mxu0 %v867
      %v1003 = vpop.f32.mrb[0].mxu0
      %v1004 = vadd.f32 %v712, %v1003
      %v1005 = vpop.f32.mrb[0].mxu0
      %1006 = vmatprep.mubr.f32.mxu0 0.0
      %1007 = vmatmul.mubr.f32.gmra.mrb[0].mxu0 %v869
      %v1008 = vpop.f32.mrb[0].mxu0
      %v1009 = vadd.f32 %v717, %v1008
      %v1010 = vpop.f32.mrb[0].mxu0
      %1011 = vmatprep.mubr.f32.mxu0 0.0
      %1012 = vmatmul.mubr.f32.gmra.mrb[0].mxu0 %v871
      %v1013 = vpop.f32.mrb[0].mxu0
      %v1014 = vadd.f32 %v722, %v1013
      %v1015 = vpop.f32.mrb[0].mxu0
      %1016 = vmatprep.mubr.f32.mxu0 0.0
      %1017 = vmatmul.mubr.f32.gmra.mrb[0].mxu0 %v873
      %v1018 = vpop.f32.mrb[0].mxu0
      %v1019 = vadd.f32 %v727, %v1018
      %v1020 = vpop.f32.mrb[0].mxu0
      %1021 = vmatprep.mubr.f32.mxu0 0.0
      %1022 = vmatmul.mubr.f32.gmra.mrb[0].mxu0 %v875
      %v1023 = vpop.f32.mrb[0].mxu0
      %v1024 = vadd.f32 %v732, %v1023
      %v1025 = vpop.f32.mrb[0].mxu0
      %1026 = vmatprep.mubr.f32.mxu0 0.0
      %1027 = vmatmul.mubr.f32.gmra.mrb[0].mxu0 %v877
      %v1028 = vpop.f32.mrb[0].mxu0
      %v1029 = vadd.f32 %v737, %v1028
      %v1030 = vpop.f32.mrb[0].mxu0
      %1031 = vmatprep.mubr.f32.mxu0 0.0
      %1032 = vmatmul.mubr.f32.gmra.mrb[0].mxu0 %v879
      %v1033 = vpop.f32.mrb[0].mxu0
      %v1034 = vadd.f32 %v742, %v1033
      %v1035 = vpop.f32.mrb[0].mxu0
      %1036 = vmatprep.mubr.f32.mxu0 0.0
      %1037 = vmatmul.mubr.f32.gmra.mrb[0].mxu0 %v881
      %v1038 = vpop.f32.mrb[0].mxu0
      %v1039 = vadd.f32 %v747, %v1038
      %v1040 = vpop.f32.mrb[0].mxu0
      %1041 = vmatprep.mubr.f32.mxu0 0.0
      %1042 = vmatmul.mubr.f32.gmra.mrb[0].mxu0 %v883
      %v1043 = vpop.f32.mrb[0].mxu0
      %v1044 = vadd.f32 %v752, %v1043
      %v1045 = vpop.f32.mrb[0].mxu0
      %1046 = vmatprep.mubr.f32.mxu0 0.0
      %1047 = vmatmul.mubr.f32.gmra.mrb[0].mxu0 %v885
      %v1048 = vpop.f32.mrb[0].mxu0
      %v1049 = vadd.f32 %v757, %v1048
      %v1050 = vpop.f32.mrb[0].mxu0
      %1051 = vmatprep.mubr.f32.mxu0 0.0
      %1052 = vmatmul.mubr.f32.gmra.mrb[0].mxu0 %v887
      %v1053 = vpop.f32.mrb[0].mxu0
      %v1054 = vadd.f32 %v762, %v1053
      %v1055 = vpop.f32.mrb[0].mxu0
      %1056 = vmatprep.mubr.f32.mxu0 0.0
      %1057 = vmatmul.mubr.f32.gmra.mrb[0].mxu0 %v889
      %v1058 = vpop.f32.mrb[0].mxu0
      %v1059 = vadd.f32 %v767, %v1058
      %v1060 = vpop.f32.mrb[0].mxu0
      %1061 = vmatprep.mubr.f32.mxu0 0.0
      %1062 = vmatmul.mubr.f32.gmra.mrb[0].mxu0 %v891
      %v1063 = vpop.f32.mrb[0].mxu0
      %v1064 = vadd.f32 %v772, %v1063
      %v1065 = vpop.f32.mrb[0].mxu0
      %1066 = vmatprep.mubr.f32.mxu0 0.0
      %1067 = vmatmul.mubr.f32.gmra.mrb[0].mxu0 %v893
      %v1068 = vpop.f32.mrb[0].mxu0
      %v1069 = vadd.f32 %v777, %v1068
      %v1070 = vpop.f32.mrb[0].mxu0
      %1071 = vmatprep.mubr.f32.mxu0 0.0
      %1072 = vmatmul.mubr.f32.gmra.mrb[0].mxu0 %v895
      %v1073 = vpop.f32.mrb[0].mxu0
      %v1074 = vadd.f32 %v782, %v1073
      %v1075 = vpop.f32.mrb[0].mxu0
      %1076 = vmatprep.mubr.f32.mxu0 0.0
      %1077 = vmatmul.mubr.f32.gmra.mrb[0].mxu0 %v897
      %v1078 = vpop.f32.mrb[0].mxu0
      %v1079 = vadd.f32 %v787, %v1078
      %v1080 = vpop.f32.mrb[0].mxu0
      %1081 = vmatprep.mubr.f32.mxu0 0.0
      %1082 = vmatmul.mubr.f32.gmra.mrb[0].mxu0 %v899
      %v1083 = vpop.f32.mrb[0].mxu0
      %v1084 = vadd.f32 %v792, %v1083
      %v1085 = vpop.f32.mrb[0].mxu0
      %1086 = vmatprep.mubr.f32.mxu0 0.0
      %1087 = vmatmul.mubr.f32.gmra.mrb[0].mxu0 %v901
      %v1088 = vpop.f32.mrb[0].mxu0
      %v1089 = vadd.f32 %v797, %v1088
      %v1090 = vpop.f32.mrb[0].mxu0
      %1091 = vmatprep.mubr.f32.mxu0 0.0
      %1092 = vmatmul.mubr.f32.gmra.mrb[0].mxu0 %v903
      %v1093 = vpop.f32.mrb[0].mxu0
      %v1094 = vadd.f32 %v802, %v1093
      %v1095 = vpop.f32.mrb[0].mxu0
      %1096 = vmatprep.mubr.f32.mxu0 0.0
      %1097 = vmatmul.mubr.f32.gmra.mrb[0].mxu0 %v905
      %v1098 = vpop.f32.mrb[0].mxu0
      %v1099 = vadd.f32 %v807, %v1098
      %v1100 = vpop.f32.mrb[0].mxu0
      %1101 = vmatprep.mubr.f32.mxu0 0.0
      %1102 = vmatmul.mubr.f32.gmra.mrb[0].mxu0 %v907
      %v1103 = vpop.f32.mrb[0].mxu0
      %v1104 = vadd.f32 %v812, %v1103
      %v1105 = vpop.f32.mrb[0].mxu0
      %1106 = vmatprep.mubr.f32.mxu0 0.0
      %1107 = vmatmul.mubr.f32.gmra.mrb[0].mxu0 %v909
      %v1108 = vpop.f32.mrb[0].mxu0
      %v1109 = vadd.f32 %v817, %v1108
      %v1110 = vpop.f32.mrb[0].mxu0
      %1111 = vmatprep.mubr.f32.mxu0 0.0
      %1112 = vmatmul.mubr.f32.gmra.mrb[0].mxu0 %v911
      %v1113 = vpop.f32.mrb[0].mxu0
      %v1114 = vadd.f32 %v822, %v1113
      %v1115 = vpop.f32.mrb[0].mxu0
      %1116 = vmatprep.mubr.f32.mxu0 0.0
      %1117 = vmatmul.mubr.f32.gmra.mrb[0].mxu0 %v913
      %v1118 = vpop.f32.mrb[0].mxu0
      %v1119 = vadd.f32 %v827, %v1118
      %v1120 = vpop.f32.mrb[0].mxu0
      %1121 = vmatprep.mubr.f32.mxu0 0.0
      %1122 = vmatmul.mubr.f32.gmra.mrb[0].mxu0 %v915
      %v1123 = vpop.f32.mrb[0].mxu0
      %v1124 = vadd.f32 %v832, %v1123
      %v1125 = vpop.f32.mrb[0].mxu0
      %1126 = vmatprep.mubr.f32.mxu0 0.0
      %1127 = vmatmul.mubr.f32.gmra.mrb[0].mxu0 %v917
      %v1128 = vpop.f32.mrb[0].mxu0
      %v1129 = vadd.f32 %v837, %v1128
      %v1130 = vpop.f32.mrb[0].mxu0
      %1131 = vmatprep.mubr.f32.mxu0 0.0
      %1132 = vmatmul.mubr.f32.gmra.mrb[0].mxu0 %v919
      %v1133 = vpop.f32.mrb[0].mxu0
      %v1134 = vadd.f32 %v842, %v1133
      %v1135 = vpop.f32.mrb[0].mxu0
      %1136 = vmatprep.mubr.f32.mxu0 0.0
      %1137 = vmatmul.mubr.f32.gmra.mrb[0].mxu0 %v921
      %v1138 = vpop.f32.mrb[0].mxu0
      %v1139 = vadd.f32 %v847, %v1138
      %v1140 = vpop.f32.mrb[0].mxu0
      %1141 = vmatprep.mubr.f32.mxu0 0.0
      %1142 = vmatmul.mubr.f32.gmra.mrb[0].mxu0 %v923
      %v1143 = vpop.f32.mrb[0].mxu0
      %v1144 = vadd.f32 %v852, %v1143
      %v1145 = vpop.f32.mrb[0].mxu0
      %1146 = vmatprep.mubr.f32.mxu0 0.0
      %1147 = vmatmul.mubr.f32.gmra.mrb[0].mxu0 %v925
      %v1148 = vpop.f32.mrb[0].mxu0
      %v1149 = vadd.f32 %v857, %v1148
      %v1150 = vpop.f32.mrb[0].mxu0
      %1151 = vmatprep.mubr.f32.mxu0 0.0
      %1152 = vmatmul.mubr.f32.gmra.mrb[0].mxu0 %v927
      %v1153 = vpop.f32.mrb[0].mxu0
      %v1154 = vadd.f32 %v862, %v1153
      %v1155 = vpop.f32.mrb[0].mxu0
      %1156 = vdwg.mxu0
      %vm1157 = vcmask 1045504
      %v1158 = vrot.slane %v386, 2
      %v1159 = vrot.slane %v387, 2
      %v1160 = vsel %vm1157, %v1158, %v1159
      %v1161 = vrot.slane %v388, 2
      %v1162 = vsel %vm1157, %v1159, %v1161
      %v1163 = vrot.slane %v389, 2
      %v1164 = vrot.slane %v390, 2
      %v1165 = vsel %vm1157, %v1163, %v1164
      %v1166 = vrot.slane %v391, 2
      %v1167 = vsel %vm1157, %v1164, %v1166
      %v1168 = vrot.slane %v392, 2
      %v1169 = vrot.slane %v393, 2
      %v1170 = vsel %vm1157, %v1168, %v1169
      %v1171 = vrot.slane %v394, 2
      %v1172 = vsel %vm1157, %v1169, %v1171
      %v1173 = vrot.slane %v395, 2
      %v1174 = vrot.slane %v396, 2
      %v1175 = vsel %vm1157, %v1173, %v1174
      %v1176 = vrot.slane %v397, 2
      %v1177 = vsel %vm1157, %v1174, %v1176
      %v1178 = vrot.slane %v398, 2
      %v1179 = vrot.slane %v399, 2
      %v1180 = vsel %vm1157, %v1178, %v1179
      %v1181 = vrot.slane %v400, 2
      %v1182 = vsel %vm1157, %v1179, %v1181
      %v1183 = vrot.slane %v401, 2
      %v1184 = vrot.slane %v402, 2
      %v1185 = vsel %vm1157, %v1183, %v1184
      %v1186 = vrot.slane %v403, 2
      %v1187 = vsel %vm1157, %v1184, %v1186
      %v1188 = vrot.slane %v404, 2
      %v1189 = vrot.slane %v405, 2
      %v1190 = vsel %vm1157, %v1188, %v1189
      %v1191 = vrot.slane %v406, 2
      %v1192 = vsel %vm1157, %v1189, %v1191
      %v1193 = vrot.slane %v407, 2
      %v1194 = vrot.slane %v408, 2
      %v1195 = vsel %vm1157, %v1193, %v1194
      %v1196 = vrot.slane %v409, 2
      %v1197 = vsel %vm1157, %v1194, %v1196
      %v1198 = vrot.slane %v410, 2
      %v1199 = vrot.slane %v411, 2
      %v1200 = vsel %vm1157, %v1198, %v1199
      %v1201 = vrot.slane %v412, 2
      %v1202 = vsel %vm1157, %v1199, %v1201
      %v1203 = vrot.slane %v413, 2
      %v1204 = vrot.slane %v414, 2
      %v1205 = vsel %vm1157, %v1203, %v1204
      %v1206 = vrot.slane %v415, 2
      %v1207 = vsel %vm1157, %v1204, %v1206
      %v1208 = vrot.slane %v416, 2
      %v1209 = vrot.slane %v417, 2
      %v1210 = vsel %vm1157, %v1208, %v1209
      %v1211 = vrot.slane %v418, 2
      %v1212 = vsel %vm1157, %v1209, %v1211
      %v1213 = vrot.slane %v419, 2
      %v1214 = vrot.slane %v420, 2
      %v1215 = vsel %vm1157, %v1213, %v1214
      %v1216 = vrot.slane %v421, 2
      %v1217 = vsel %vm1157, %v1214, %v1216
      %v1218 = vrot.slane %v422, 2
      %v1219 = vrot.slane %v423, 2
      %v1220 = vsel %vm1157, %v1218, %v1219
      %v1221 = vrot.slane %v424, 2
      %v1222 = vsel %vm1157, %v1219, %v1221
      %v1223 = vrot.slane %v425, 2
      %v1224 = vrot.slane %v426, 2
      %v1225 = vsel %vm1157, %v1223, %v1224
      %v1226 = vrot.slane %v427, 2
      %v1227 = vsel %vm1157, %v1224, %v1226
      %v1228 = vrot.slane %v428, 2
      %v1229 = vrot.slane %v429, 2
      %v1230 = vsel %vm1157, %v1228, %v1229
      %v1231 = vrot.slane %v430, 2
      %v1232 = vsel %vm1157, %v1229, %v1231
      %v1233 = vrot.slane %v431, 2
      %v1234 = vrot.slane %v432, 2
      %v1235 = vsel %vm1157, %v1233, %v1234
      %v1236 = vrot.slane %v433, 2
      %v1237 = vsel %vm1157, %v1234, %v1236
      %s1238 = scalar_lea.vmem %s1, 8
      %v1239 = vld [vmem:[%s1238] sm:$0xf]
      %v1240 = vsel %vm297, %v1160, 0
      %v1242 = vsel %vm297, %v1162, 0
      %v1244 = vsel %vm297, %v1165, 0
      %v1246 = vsel %vm297, %v1167, 0
      %v1248 = vsel %vm297, %v1170, 0
      %v1250 = vsel %vm297, %v1172, 0
      %v1252 = vsel %vm297, %v1175, 0
      %v1254 = vsel %vm297, %v1177, 0
      %v1256 = vsel %vm297, %v1180, 0
      %v1258 = vsel %vm297, %v1182, 0
      %v1260 = vsel %vm297, %v1185, 0
      %v1262 = vsel %vm297, %v1187, 0
      %v1264 = vsel %vm297, %v1190, 0
      %v1266 = vsel %vm297, %v1192, 0
      %v1268 = vsel %vm297, %v1195, 0
      %v1270 = vsel %vm297, %v1197, 0
      %v1272 = vsel %vm297, %v1200, 0
      %v1274 = vsel %vm297, %v1202, 0
      %v1276 = vsel %vm297, %v1205, 0
      %v1278 = vsel %vm297, %v1207, 0
      %v1280 = vsel %vm297, %v1210, 0
      %v1282 = vsel %vm297, %v1212, 0
      %v1284 = vsel %vm297, %v1215, 0
      %v1286 = vsel %vm297, %v1217, 0
      %v1288 = vsel %vm297, %v1220, 0
      %v1290 = vsel %vm297, %v1222, 0
      %v1292 = vsel %vm297, %v1225, 0
      %v1294 = vsel %vm297, %v1227, 0
      %v1296 = vsel %vm297, %v1230, 0
      %v1298 = vsel %vm297, %v1232, 0
      %v1300 = vsel %vm297, %v1235, 0
      %v1302 = vsel %vm297, %v1237, 0
      %v1305 = vsel %vm636, %v1239, 0
      %1307 = vmatprep.subr.mxu0 0.0
      %1308 = vmatpush1.msra.mxu0 %v1305
      %1309 = vmatprep.subr.mxu0 0.0
      %1310 = vmatpush1.msra.mxu0 0.0
      %1311 = vmatprep.subr.mxu0 0.0
      %1312 = vmatpush1.msra.mxu0 0.0
      %1313 = vmatprep.subr.mxu0 0.0
      %1314 = vmatpush1.msra.mxu0 0.0
      %1315 = vmatprep.subr.mxu0 0.0
      %1316 = vmatpush1.msra.mxu0 0.0
      %1317 = vmatprep.subr.mxu0 0.0
      %1318 = vmatpush1.msra.mxu0 0.0
      %1319 = vmatprep.subr.mxu0 0.0
      %1320 = vmatpush1.msra.mxu0 0.0
      %1321 = vmatprep.subr.mxu0 0.0
      %1322 = vmatpush1.msra.mxu0 0.0
      %1323 = vmatprep.subr.mxu0 0.0
      %1324 = vmatpush1.msra.mxu0 0.0
      %1325 = vmatprep.subr.mxu0 0.0
      %1326 = vmatpush1.msra.mxu0 0.0
      %1327 = vmatprep.subr.mxu0 0.0
      %1328 = vmatpush1.msra.mxu0 0.0
      %1329 = vmatprep.subr.mxu0 0.0
      %1330 = vmatpush1.msra.mxu0 0.0
      %1331 = vmatprep.subr.mxu0 0.0
      %1332 = vmatpush1.msra.mxu0 0.0
      %1333 = vmatprep.subr.mxu0 0.0
      %1334 = vmatpush1.msra.mxu0 0.0
      %1335 = vmatprep.subr.mxu0 0.0
      %1336 = vmatpush1.msra.mxu0 0.0
      %1337 = vmatprep.subr.mxu0 0.0
      %1338 = vmatpush1.msra.mxu0 0.0
      %1339 = vmatprep.subr.mxu0 0.0
      %1340 = vmatpush1.msra.mxu0 0.0
      %1341 = vmatprep.subr.mxu0 0.0
      %1342 = vmatpush1.msra.mxu0 0.0
      %1343 = vmatprep.subr.mxu0 0.0
      %1344 = vmatpush1.msra.mxu0 0.0
      %1345 = vmatprep.subr.mxu0 0.0
      %1346 = vmatpush1.msra.mxu0 0.0
      %1347 = vmatprep.subr.mxu0 0.0
      %1348 = vmatpush1.msra.mxu0 0.0
      %1349 = vmatprep.subr.mxu0 0.0
      %1350 = vmatpush1.msra.mxu0 0.0
      %1351 = vmatprep.subr.mxu0 0.0
      %1352 = vmatpush1.msra.mxu0 0.0
      %1353 = vmatprep.subr.mxu0 0.0
      %1354 = vmatpush1.msra.mxu0 0.0
      %1355 = vmatprep.subr.mxu0 0.0
      %1356 = vmatpush1.msra.mxu0 0.0
      %1357 = vmatprep.subr.mxu0 0.0
      %1358 = vmatpush1.msra.mxu0 0.0
      %1359 = vmatprep.subr.mxu0 0.0
      %1360 = vmatpush1.msra.mxu0 0.0
      %1361 = vmatprep.subr.mxu0 0.0
      %1362 = vmatpush1.msra.mxu0 0.0
      %1363 = vmatprep.subr.mxu0 0.0
      %1364 = vmatpush1.msra.mxu0 0.0
      %1365 = vmatprep.subr.mxu0 0.0
      %1366 = vmatpush1.msra.mxu0 0.0
      %1367 = vmatprep.subr.mxu0 0.0
      %1368 = vmatpush1.msra.mxu0 0.0
      %1369 = vmatprep.subr.mxu0 0.0
      %1370 = vmatpush1.msra.mxu0 0.0
      %1371 = vmatprep.mubr.f32.mxu0 0.0
      %1372 = vmatmul.mubr.f32.gmra.mrb[0].mxu0 %v1240
      %v1373 = vpop.f32.mrb[0].mxu0
      %v1374 = vadd.f32 0.0, %v1373
      %v1375 = vpop.f32.mrb[0].mxu0
      %1376 = vmatprep.mubr.f32.mxu0 0.0
      %1377 = vmatmul.mubr.f32.gmra.mrb[0].mxu0 %v1242
      %v1378 = vpop.f32.mrb[0].mxu0
      %v1379 = vadd.f32 0.0, %v1378
      %v1380 = vpop.f32.mrb[0].mxu0
      %1381 = vmatprep.mubr.f32.mxu0 0.0
      %1382 = vmatmul.mubr.f32.gmra.mrb[0].mxu0 %v1244
      %v1383 = vpop.f32.mrb[0].mxu0
      %v1384 = vadd.f32 0.0, %v1383
      %v1385 = vpop.f32.mrb[0].mxu0
      %1386 = vmatprep.mubr.f32.mxu0 0.0
      %1387 = vmatmul.mubr.f32.gmra.mrb[0].mxu0 %v1246
      %v1388 = vpop.f32.mrb[0].mxu0
      %v1389 = vadd.f32 0.0, %v1388
      %v1390 = vpop.f32.mrb[0].mxu0
      %1391 = vmatprep.mubr.f32.mxu0 0.0
      %1392 = vmatmul.mubr.f32.gmra.mrb[0].mxu0 %v1248
      %v1393 = vpop.f32.mrb[0].mxu0
      %v1394 = vadd.f32 0.0, %v1393
      %v1395 = vpop.f32.mrb[0].mxu0
      %1396 = vmatprep.mubr.f32.mxu0 0.0
      %1397 = vmatmul.mubr.f32.gmra.mrb[0].mxu0 %v1250
      %v1398 = vpop.f32.mrb[0].mxu0
      %v1399 = vadd.f32 0.0, %v1398
      %v1400 = vpop.f32.mrb[0].mxu0
      %1401 = vmatprep.mubr.f32.mxu0 0.0
      %1402 = vmatmul.mubr.f32.gmra.mrb[0].mxu0 %v1252
      %v1403 = vpop.f32.mrb[0].mxu0
      %v1404 = vadd.f32 0.0, %v1403
      %v1405 = vpop.f32.mrb[0].mxu0
      %1406 = vmatprep.mubr.f32.mxu0 0.0
      %1407 = vmatmul.mubr.f32.gmra.mrb[0].mxu0 %v1254
      %v1408 = vpop.f32.mrb[0].mxu0
      %v1409 = vadd.f32 0.0, %v1408
      %v1410 = vpop.f32.mrb[0].mxu0
      %1411 = vmatprep.mubr.f32.mxu0 0.0
      %1412 = vmatmul.mubr.f32.gmra.mrb[0].mxu0 %v1256
      %v1413 = vpop.f32.mrb[0].mxu0
      %v1414 = vadd.f32 0.0, %v1413
      %v1415 = vpop.f32.mrb[0].mxu0
      %1416 = vmatprep.mubr.f32.mxu0 0.0
      %1417 = vmatmul.mubr.f32.gmra.mrb[0].mxu0 %v1258
      %v1418 = vpop.f32.mrb[0].mxu0
      %v1419 = vadd.f32 0.0, %v1418
      %v1420 = vpop.f32.mrb[0].mxu0
      %1421 = vmatprep.mubr.f32.mxu0 0.0
      %1422 = vmatmul.mubr.f32.gmra.mrb[0].mxu0 %v1260
      %v1423 = vpop.f32.mrb[0].mxu0
      %v1424 = vadd.f32 0.0, %v1423
      %v1425 = vpop.f32.mrb[0].mxu0
      %1426 = vmatprep.mubr.f32.mxu0 0.0
      %1427 = vmatmul.mubr.f32.gmra.mrb[0].mxu0 %v1262
      %v1428 = vpop.f32.mrb[0].mxu0
      %v1429 = vadd.f32 0.0, %v1428
      %v1430 = vpop.f32.mrb[0].mxu0
      %1431 = vmatprep.mubr.f32.mxu0 0.0
      %1432 = vmatmul.mubr.f32.gmra.mrb[0].mxu0 %v1264
      %v1433 = vpop.f32.mrb[0].mxu0
      %v1434 = vadd.f32 0.0, %v1433
      %v1435 = vpop.f32.mrb[0].mxu0
      %1436 = vmatprep.mubr.f32.mxu0 0.0
      %1437 = vmatmul.mubr.f32.gmra.mrb[0].mxu0 %v1266
      %v1438 = vpop.f32.mrb[0].mxu0
      %v1439 = vadd.f32 0.0, %v1438
      %v1440 = vpop.f32.mrb[0].mxu0
      %1441 = vmatprep.mubr.f32.mxu0 0.0
      %1442 = vmatmul.mubr.f32.gmra.mrb[0].mxu0 %v1268
      %v1443 = vpop.f32.mrb[0].mxu0
      %v1444 = vadd.f32 0.0, %v1443
      %v1445 = vpop.f32.mrb[0].mxu0
      %1446 = vmatprep.mubr.f32.mxu0 0.0
      %1447 = vmatmul.mubr.f32.gmra.mrb[0].mxu0 %v1270
      %v1448 = vpop.f32.mrb[0].mxu0
      %v1449 = vadd.f32 0.0, %v1448
      %v1450 = vpop.f32.mrb[0].mxu0
      %1451 = vmatprep.mubr.f32.mxu0 0.0
      %1452 = vmatmul.mubr.f32.gmra.mrb[0].mxu0 %v1272
      %v1453 = vpop.f32.mrb[0].mxu0
      %v1454 = vadd.f32 0.0, %v1453
      %v1455 = vpop.f32.mrb[0].mxu0
      %1456 = vmatprep.mubr.f32.mxu0 0.0
      %1457 = vmatmul.mubr.f32.gmra.mrb[0].mxu0 %v1274
      %v1458 = vpop.f32.mrb[0].mxu0
      %v1459 = vadd.f32 0.0, %v1458
      %v1460 = vpop.f32.mrb[0].mxu0
      %1461 = vmatprep.mubr.f32.mxu0 0.0
      %1462 = vmatmul.mubr.f32.gmra.mrb[0].mxu0 %v1276
      %v1463 = vpop.f32.mrb[0].mxu0
      %v1464 = vadd.f32 0.0, %v1463
      %v1465 = vpop.f32.mrb[0].mxu0
      %1466 = vmatprep.mubr.f32.mxu0 0.0
      %1467 = vmatmul.mubr.f32.gmra.mrb[0].mxu0 %v1278
      %v1468 = vpop.f32.mrb[0].mxu0
      %v1469 = vadd.f32 0.0, %v1468
      %v1470 = vpop.f32.mrb[0].mxu0
      %1471 = vmatprep.mubr.f32.mxu0 0.0
      %1472 = vmatmul.mubr.f32.gmra.mrb[0].mxu0 %v1280
      %v1473 = vpop.f32.mrb[0].mxu0
      %v1474 = vadd.f32 0.0, %v1473
      %v1475 = vpop.f32.mrb[0].mxu0
      %1476 = vmatprep.mubr.f32.mxu0 0.0
      %1477 = vmatmul.mubr.f32.gmra.mrb[0].mxu0 %v1282
      %v1478 = vpop.f32.mrb[0].mxu0
      %v1479 = vadd.f32 0.0, %v1478
      %v1480 = vpop.f32.mrb[0].mxu0
      %1481 = vmatprep.mubr.f32.mxu0 0.0
      %1482 = vmatmul.mubr.f32.gmra.mrb[0].mxu0 %v1284
      %v1483 = vpop.f32.mrb[0].mxu0
      %v1484 = vadd.f32 0.0, %v1483
      %v1485 = vpop.f32.mrb[0].mxu0
      %1486 = vmatprep.mubr.f32.mxu0 0.0
      %1487 = vmatmul.mubr.f32.gmra.mrb[0].mxu0 %v1286
      %v1488 = vpop.f32.mrb[0].mxu0
      %v1489 = vadd.f32 0.0, %v1488
      %v1490 = vpop.f32.mrb[0].mxu0
      %1491 = vmatprep.mubr.f32.mxu0 0.0
      %1492 = vmatmul.mubr.f32.gmra.mrb[0].mxu0 %v1288
      %v1493 = vpop.f32.mrb[0].mxu0
      %v1494 = vadd.f32 0.0, %v1493
      %v1495 = vpop.f32.mrb[0].mxu0
      %1496 = vmatprep.mubr.f32.mxu0 0.0
      %1497 = vmatmul.mubr.f32.gmra.mrb[0].mxu0 %v1290
      %v1498 = vpop.f32.mrb[0].mxu0
      %v1499 = vadd.f32 0.0, %v1498
      %v1500 = vpop.f32.mrb[0].mxu0
      %1501 = vmatprep.mubr.f32.mxu0 0.0
      %1502 = vmatmul.mubr.f32.gmra.mrb[0].mxu0 %v1292
      %v1503 = vpop.f32.mrb[0].mxu0
      %v1504 = vadd.f32 0.0, %v1503
      %v1505 = vpop.f32.mrb[0].mxu0
      %1506 = vmatprep.mubr.f32.mxu0 0.0
      %1507 = vmatmul.mubr.f32.gmra.mrb[0].mxu0 %v1294
      %v1508 = vpop.f32.mrb[0].mxu0
      %v1509 = vadd.f32 0.0, %v1508
      %v1510 = vpop.f32.mrb[0].mxu0
      %1511 = vmatprep.mubr.f32.mxu0 0.0
      %1512 = vmatmul.mubr.f32.gmra.mrb[0].mxu0 %v1296
      %v1513 = vpop.f32.mrb[0].mxu0
      %v1514 = vadd.f32 0.0, %v1513
      %v1515 = vpop.f32.mrb[0].mxu0
      %1516 = vmatprep.mubr.f32.mxu0 0.0
      %1517 = vmatmul.mubr.f32.gmra.mrb[0].mxu0 %v1298
      %v1518 = vpop.f32.mrb[0].mxu0
      %v1519 = vadd.f32 0.0, %v1518
      %v1520 = vpop.f32.mrb[0].mxu0
      %1521 = vmatprep.mubr.f32.mxu0 0.0
      %1522 = vmatmul.mubr.f32.gmra.mrb[0].mxu0 %v1300
      %v1523 = vpop.f32.mrb[0].mxu0
      %v1524 = vadd.f32 0.0, %v1523
      %v1525 = vpop.f32.mrb[0].mxu0
      %1526 = vmatprep.mubr.f32.mxu0 0.0
      %1527 = vmatmul.mubr.f32.gmra.mrb[0].mxu0 %v1302
      %v1528 = vpop.f32.mrb[0].mxu0
      %v1529 = vadd.f32 0.0, %v1528
      %v1530 = vpop.f32.mrb[0].mxu0
      %1531 = vdwg.mxu0
      %v1532 = vadd.f32 %v999, %v1374
      %v1533 = vadd.f32 %v1004, %v1379
      %v1534 = vadd.f32 %v1009, %v1384
      %v1535 = vadd.f32 %v1014, %v1389
      %v1536 = vadd.f32 %v1019, %v1394
      %v1537 = vadd.f32 %v1024, %v1399
      %v1538 = vadd.f32 %v1029, %v1404
      %v1539 = vadd.f32 %v1034, %v1409
      %v1540 = vadd.f32 %v1039, %v1414
      %v1541 = vadd.f32 %v1044, %v1419
      %v1542 = vadd.f32 %v1049, %v1424
      %v1543 = vadd.f32 %v1054, %v1429
      %v1544 = vadd.f32 %v1059, %v1434
      %v1545 = vadd.f32 %v1064, %v1439
      %v1546 = vadd.f32 %v1069, %v1444
      %v1547 = vadd.f32 %v1074, %v1449
      %v1548 = vadd.f32 %v1079, %v1454
      %v1549 = vadd.f32 %v1084, %v1459
      %v1550 = vadd.f32 %v1089, %v1464
      %v1551 = vadd.f32 %v1094, %v1469
      %v1552 = vadd.f32 %v1099, %v1474
      %v1553 = vadd.f32 %v1104, %v1479
      %v1554 = vadd.f32 %v1109, %v1484
      %v1555 = vadd.f32 %v1114, %v1489
      %v1556 = vadd.f32 %v1119, %v1494
      %v1557 = vadd.f32 %v1124, %v1499
      %v1558 = vadd.f32 %v1129, %v1504
      %v1559 = vadd.f32 %v1134, %v1509
      %v1560 = vadd.f32 %v1139, %v1514
      %v1561 = vadd.f32 %v1144, %v1519
      %v1562 = vadd.f32 %v1149, %v1524
      %v1563 = vadd.f32 %v1154, %v1529
      %s1564 = scalar_lea.vmem %s1, 12
      %v1565 = vld [vmem:[%s1564] sm:$0xf]
      %v1567 = vsel %vm297, %v434, 0
      %v1570 = vsel %vm297, %v435, 0
      %v1573 = vsel %vm636, %v1565, 0
      %1575 = vmatprep.subr.mxu0 0.0
      %1576 = vmatpush1.msra.mxu0 %v1573
      %1577 = vmatprep.subr.mxu0 0.0
      %1578 = vmatpush1.msra.mxu0 0.0
      %1579 = vmatprep.subr.mxu0 0.0
      %1580 = vmatpush1.msra.mxu0 0.0
      %1581 = vmatprep.subr.mxu0 0.0
      %1582 = vmatpush1.msra.mxu0 0.0
      %1583 = vmatprep.subr.mxu0 0.0
      %1584 = vmatpush1.msra.mxu0 0.0
      %1585 = vmatprep.subr.mxu0 0.0
      %1586 = vmatpush1.msra.mxu0 0.0
      %1587 = vmatprep.subr.mxu0 0.0
      %1588 = vmatpush1.msra.mxu0 0.0
      %1589 = vmatprep.subr.mxu0 0.0
      %1590 = vmatpush1.msra.mxu0 0.0
      %1591 = vmatprep.subr.mxu0 0.0
      %1592 = vmatpush1.msra.mxu0 0.0
      %1593 = vmatprep.subr.mxu0 0.0
      %1594 = vmatpush1.msra.mxu0 0.0
      %1595 = vmatprep.subr.mxu0 0.0
      %1596 = vmatpush1.msra.mxu0 0.0
      %1597 = vmatprep.subr.mxu0 0.0
      %1598 = vmatpush1.msra.mxu0 0.0
      %1599 = vmatprep.subr.mxu0 0.0
      %1600 = vmatpush1.msra.mxu0 0.0
      %1601 = vmatprep.subr.mxu0 0.0
      %1602 = vmatpush1.msra.mxu0 0.0
      %1603 = vmatprep.subr.mxu0 0.0
      %1604 = vmatpush1.msra.mxu0 0.0
      %1605 = vmatprep.subr.mxu0 0.0
      %1606 = vmatpush1.msra.mxu0 0.0
      %1607 = vmatprep.subr.mxu0 0.0
      %1608 = vmatpush1.msra.mxu0 0.0
      %1609 = vmatprep.subr.mxu0 0.0
      %1610 = vmatpush1.msra.mxu0 0.0
      %1611 = vmatprep.subr.mxu0 0.0
      %1612 = vmatpush1.msra.mxu0 0.0
      %1613 = vmatprep.subr.mxu0 0.0
      %1614 = vmatpush1.msra.mxu0 0.0
      %1615 = vmatprep.subr.mxu0 0.0
      %1616 = vmatpush1.msra.mxu0 0.0
      %1617 = vmatprep.subr.mxu0 0.0
      %1618 = vmatpush1.msra.mxu0 0.0
      %1619 = vmatprep.subr.mxu0 0.0
      %1620 = vmatpush1.msra.mxu0 0.0
      %1621 = vmatprep.subr.mxu0 0.0
      %1622 = vmatpush1.msra.mxu0 0.0
      %1623 = vmatprep.subr.mxu0 0.0
      %1624 = vmatpush1.msra.mxu0 0.0
      %1625 = vmatprep.subr.mxu0 0.0
      %1626 = vmatpush1.msra.mxu0 0.0
      %1627 = vmatprep.subr.mxu0 0.0
      %1628 = vmatpush1.msra.mxu0 0.0
      %1629 = vmatprep.subr.mxu0 0.0
      %1630 = vmatpush1.msra.mxu0 0.0
      %1631 = vmatprep.subr.mxu0 0.0
      %1632 = vmatpush1.msra.mxu0 0.0
      %1633 = vmatprep.subr.mxu0 0.0
      %1634 = vmatpush1.msra.mxu0 0.0
      %1635 = vmatprep.subr.mxu0 0.0
      %1636 = vmatpush1.msra.mxu0 0.0
      %1637 = vmatprep.subr.mxu0 0.0
      %1638 = vmatpush1.msra.mxu0 0.0
      %1639 = vmatprep.mubr.f32.mxu0 0.0
      %1640 = vmatmul.mubr.f32.gmra.mrb[0].mxu0 %v869
      %v1641 = vpop.f32.mrb[0].mxu0
      %v1642 = vadd.f32 0.0, %v1641
      %v1643 = vpop.f32.mrb[0].mxu0
      %1644 = vmatprep.mubr.f32.mxu0 0.0
      %1645 = vmatmul.mubr.f32.gmra.mrb[0].mxu0 %v871
      %v1646 = vpop.f32.mrb[0].mxu0
      %v1647 = vadd.f32 0.0, %v1646
      %v1648 = vpop.f32.mrb[0].mxu0
      %1649 = vmatprep.mubr.f32.mxu0 0.0
      %1650 = vmatmul.mubr.f32.gmra.mrb[0].mxu0 %v873
      %v1651 = vpop.f32.mrb[0].mxu0
      %v1652 = vadd.f32 0.0, %v1651
      %v1653 = vpop.f32.mrb[0].mxu0
      %1654 = vmatprep.mubr.f32.mxu0 0.0
      %1655 = vmatmul.mubr.f32.gmra.mrb[0].mxu0 %v875
      %v1656 = vpop.f32.mrb[0].mxu0
      %v1657 = vadd.f32 0.0, %v1656
      %v1658 = vpop.f32.mrb[0].mxu0
      %1659 = vmatprep.mubr.f32.mxu0 0.0
      %1660 = vmatmul.mubr.f32.gmra.mrb[0].mxu0 %v877
      %v1661 = vpop.f32.mrb[0].mxu0
      %v1662 = vadd.f32 0.0, %v1661
      %v1663 = vpop.f32.mrb[0].mxu0
      %1664 = vmatprep.mubr.f32.mxu0 0.0
      %1665 = vmatmul.mubr.f32.gmra.mrb[0].mxu0 %v879
      %v1666 = vpop.f32.mrb[0].mxu0
      %v1667 = vadd.f32 0.0, %v1666
      %v1668 = vpop.f32.mrb[0].mxu0
      %1669 = vmatprep.mubr.f32.mxu0 0.0
      %1670 = vmatmul.mubr.f32.gmra.mrb[0].mxu0 %v881
      %v1671 = vpop.f32.mrb[0].mxu0
      %v1672 = vadd.f32 0.0, %v1671
      %v1673 = vpop.f32.mrb[0].mxu0
      %1674 = vmatprep.mubr.f32.mxu0 0.0
      %1675 = vmatmul.mubr.f32.gmra.mrb[0].mxu0 %v883
      %v1676 = vpop.f32.mrb[0].mxu0
      %v1677 = vadd.f32 0.0, %v1676
      %v1678 = vpop.f32.mrb[0].mxu0
      %1679 = vmatprep.mubr.f32.mxu0 0.0
      %1680 = vmatmul.mubr.f32.gmra.mrb[0].mxu0 %v885
      %v1681 = vpop.f32.mrb[0].mxu0
      %v1682 = vadd.f32 0.0, %v1681
      %v1683 = vpop.f32.mrb[0].mxu0
      %1684 = vmatprep.mubr.f32.mxu0 0.0
      %1685 = vmatmul.mubr.f32.gmra.mrb[0].mxu0 %v887
      %v1686 = vpop.f32.mrb[0].mxu0
      %v1687 = vadd.f32 0.0, %v1686
      %v1688 = vpop.f32.mrb[0].mxu0
      %1689 = vmatprep.mubr.f32.mxu0 0.0
      %1690 = vmatmul.mubr.f32.gmra.mrb[0].mxu0 %v889
      %v1691 = vpop.f32.mrb[0].mxu0
      %v1692 = vadd.f32 0.0, %v1691
      %v1693 = vpop.f32.mrb[0].mxu0
      %1694 = vmatprep.mubr.f32.mxu0 0.0
      %1695 = vmatmul.mubr.f32.gmra.mrb[0].mxu0 %v891
      %v1696 = vpop.f32.mrb[0].mxu0
      %v1697 = vadd.f32 0.0, %v1696
      %v1698 = vpop.f32.mrb[0].mxu0
      %1699 = vmatprep.mubr.f32.mxu0 0.0
      %1700 = vmatmul.mubr.f32.gmra.mrb[0].mxu0 %v893
      %v1701 = vpop.f32.mrb[0].mxu0
      %v1702 = vadd.f32 0.0, %v1701
      %v1703 = vpop.f32.mrb[0].mxu0
      %1704 = vmatprep.mubr.f32.mxu0 0.0
      %1705 = vmatmul.mubr.f32.gmra.mrb[0].mxu0 %v895
      %v1706 = vpop.f32.mrb[0].mxu0
      %v1707 = vadd.f32 0.0, %v1706
      %v1708 = vpop.f32.mrb[0].mxu0
      %1709 = vmatprep.mubr.f32.mxu0 0.0
      %1710 = vmatmul.mubr.f32.gmra.mrb[0].mxu0 %v897
      %v1711 = vpop.f32.mrb[0].mxu0
      %v1712 = vadd.f32 0.0, %v1711
      %v1713 = vpop.f32.mrb[0].mxu0
      %1714 = vmatprep.mubr.f32.mxu0 0.0
      %1715 = vmatmul.mubr.f32.gmra.mrb[0].mxu0 %v899
      %v1716 = vpop.f32.mrb[0].mxu0
      %v1717 = vadd.f32 0.0, %v1716
      %v1718 = vpop.f32.mrb[0].mxu0
      %1719 = vmatprep.mubr.f32.mxu0 0.0
      %1720 = vmatmul.mubr.f32.gmra.mrb[0].mxu0 %v901
      %v1721 = vpop.f32.mrb[0].mxu0
      %v1722 = vadd.f32 0.0, %v1721
      %v1723 = vpop.f32.mrb[0].mxu0
      %1724 = vmatprep.mubr.f32.mxu0 0.0
      %1725 = vmatmul.mubr.f32.gmra.mrb[0].mxu0 %v903
      %v1726 = vpop.f32.mrb[0].mxu0
      %v1727 = vadd.f32 0.0, %v1726
      %v1728 = vpop.f32.mrb[0].mxu0
      %1729 = vmatprep.mubr.f32.mxu0 0.0
      %1730 = vmatmul.mubr.f32.gmra.mrb[0].mxu0 %v905
      %v1731 = vpop.f32.mrb[0].mxu0
      %v1732 = vadd.f32 0.0, %v1731
      %v1733 = vpop.f32.mrb[0].mxu0
      %1734 = vmatprep.mubr.f32.mxu0 0.0
      %1735 = vmatmul.mubr.f32.gmra.mrb[0].mxu0 %v907
      %v1736 = vpop.f32.mrb[0].mxu0
      %v1737 = vadd.f32 0.0, %v1736
      %v1738 = vpop.f32.mrb[0].mxu0
      %1739 = vmatprep.mubr.f32.mxu0 0.0
      %1740 = vmatmul.mubr.f32.gmra.mrb[0].mxu0 %v909
      %v1741 = vpop.f32.mrb[0].mxu0
      %v1742 = vadd.f32 0.0, %v1741
      %v1743 = vpop.f32.mrb[0].mxu0
      %1744 = vmatprep.mubr.f32.mxu0 0.0
      %1745 = vmatmul.mubr.f32.gmra.mrb[0].mxu0 %v911
      %v1746 = vpop.f32.mrb[0].mxu0
      %v1747 = vadd.f32 0.0, %v1746
      %v1748 = vpop.f32.mrb[0].mxu0
      %1749 = vmatprep.mubr.f32.mxu0 0.0
      %1750 = vmatmul.mubr.f32.gmra.mrb[0].mxu0 %v913
      %v1751 = vpop.f32.mrb[0].mxu0
      %v1752 = vadd.f32 0.0, %v1751
      %v1753 = vpop.f32.mrb[0].mxu0
      %1754 = vmatprep.mubr.f32.mxu0 0.0
      %1755 = vmatmul.mubr.f32.gmra.mrb[0].mxu0 %v915
      %v1756 = vpop.f32.mrb[0].mxu0
      %v1757 = vadd.f32 0.0, %v1756
      %v1758 = vpop.f32.mrb[0].mxu0
      %1759 = vmatprep.mubr.f32.mxu0 0.0
      %1760 = vmatmul.mubr.f32.gmra.mrb[0].mxu0 %v917
      %v1761 = vpop.f32.mrb[0].mxu0
      %v1762 = vadd.f32 0.0, %v1761
      %v1763 = vpop.f32.mrb[0].mxu0
      %1764 = vmatprep.mubr.f32.mxu0 0.0
      %1765 = vmatmul.mubr.f32.gmra.mrb[0].mxu0 %v919
      %v1766 = vpop.f32.mrb[0].mxu0
      %v1767 = vadd.f32 0.0, %v1766
      %v1768 = vpop.f32.mrb[0].mxu0
      %1769 = vmatprep.mubr.f32.mxu0 0.0
      %1770 = vmatmul.mubr.f32.gmra.mrb[0].mxu0 %v921
      %v1771 = vpop.f32.mrb[0].mxu0
      %v1772 = vadd.f32 0.0, %v1771
      %v1773 = vpop.f32.mrb[0].mxu0
      %1774 = vmatprep.mubr.f32.mxu0 0.0
      %1775 = vmatmul.mubr.f32.gmra.mrb[0].mxu0 %v923
      %v1776 = vpop.f32.mrb[0].mxu0
      %v1777 = vadd.f32 0.0, %v1776
      %v1778 = vpop.f32.mrb[0].mxu0
      %1779 = vmatprep.mubr.f32.mxu0 0.0
      %1780 = vmatmul.mubr.f32.gmra.mrb[0].mxu0 %v925
      %v1781 = vpop.f32.mrb[0].mxu0
      %v1782 = vadd.f32 0.0, %v1781
      %v1783 = vpop.f32.mrb[0].mxu0
      %1784 = vmatprep.mubr.f32.mxu0 0.0
      %1785 = vmatmul.mubr.f32.gmra.mrb[0].mxu0 %v927
      %v1786 = vpop.f32.mrb[0].mxu0
      %v1787 = vadd.f32 0.0, %v1786
      %v1788 = vpop.f32.mrb[0].mxu0
      %1789 = vmatprep.mubr.f32.mxu0 0.0
      %1790 = vmatmul.mubr.f32.gmra.mrb[0].mxu0 %v1567
      %v1791 = vpop.f32.mrb[0].mxu0
      %v1792 = vadd.f32 0.0, %v1791
      %v1793 = vpop.f32.mrb[0].mxu0
      %1794 = vmatprep.mubr.f32.mxu0 0.0
      %1795 = vmatmul.mubr.f32.gmra.mrb[0].mxu0 %v1570
      %v1796 = vpop.f32.mrb[0].mxu0
      %v1797 = vadd.f32 0.0, %v1796
      %v1798 = vpop.f32.mrb[0].mxu0
      %1799 = vdwg.mxu0
      %v1800 = vadd.f32 %v1532, %v1642
      %v1801 = vadd.f32 %v1533, %v1647
      %v1802 = vadd.f32 %v1534, %v1652
      %v1803 = vadd.f32 %v1535, %v1657
      %v1804 = vadd.f32 %v1536, %v1662
      %v1805 = vadd.f32 %v1537, %v1667
      %v1806 = vadd.f32 %v1538, %v1672
      %v1807 = vadd.f32 %v1539, %v1677
      %v1808 = vadd.f32 %v1540, %v1682
      %v1809 = vadd.f32 %v1541, %v1687
      %v1810 = vadd.f32 %v1542, %v1692
      %v1811 = vadd.f32 %v1543, %v1697
      %v1812 = vadd.f32 %v1544, %v1702
      %v1813 = vadd.f32 %v1545, %v1707
      %v1814 = vadd.f32 %v1546, %v1712
      %v1815 = vadd.f32 %v1547, %v1717
      %v1816 = vadd.f32 %v1548, %v1722
      %v1817 = vadd.f32 %v1549, %v1727
      %v1818 = vadd.f32 %v1550, %v1732
      %v1819 = vadd.f32 %v1551, %v1737
      %v1820 = vadd.f32 %v1552, %v1742
      %v1821 = vadd.f32 %v1553, %v1747
      %v1822 = vadd.f32 %v1554, %v1752
      %v1823 = vadd.f32 %v1555, %v1757
      %v1824 = vadd.f32 %v1556, %v1762
      %v1825 = vadd.f32 %v1557, %v1767
      %v1826 = vadd.f32 %v1558, %v1772
      %v1827 = vadd.f32 %v1559, %v1777
      %v1828 = vadd.f32 %v1560, %v1782
      %v1829 = vadd.f32 %v1561, %v1787
      %v1830 = vadd.f32 %v1562, %v1792
      %v1831 = vadd.f32 %v1563, %v1797
      %v1833 = vrot.slane %v434, 1
      %v1834 = vrot.slane %v435, 1
      %v1835 = vsel %vm489, %v1833, %v1834
      %v1836 = vrot.slane %v436, 1
      %v1837 = vsel %vm489, %v1834, %v1836
      %s1838 = scalar_lea.vmem %s1, 16
      %v1839 = vld [vmem:[%s1838] sm:$0xf]
      %v1840 = vsel %vm297, %v1835, 0
      %v1842 = vsel %vm297, %v1837, 0
      %v1845 = vsel %vm636, %v1839, 0
      %1847 = vmatprep.subr.mxu0 0.0
      %1848 = vmatpush1.msra.mxu0 %v1845
      %1849 = vmatprep.subr.mxu0 0.0
      %1850 = vmatpush1.msra.mxu0 0.0
      %1851 = vmatprep.subr.mxu0 0.0
      %1852 = vmatpush1.msra.mxu0 0.0
      %1853 = vmatprep.subr.mxu0 0.0
      %1854 = vmatpush1.msra.mxu0 0.0
      %1855 = vmatprep.subr.mxu0 0.0
      %1856 = vmatpush1.msra.mxu0 0.0
      %1857 = vmatprep.subr.mxu0 0.0
      %1858 = vmatpush1.msra.mxu0 0.0
      %1859 = vmatprep.subr.mxu0 0.0
      %1860 = vmatpush1.msra.mxu0 0.0
      %1861 = vmatprep.subr.mxu0 0.0
      %1862 = vmatpush1.msra.mxu0 0.0
      %1863 = vmatprep.subr.mxu0 0.0
      %1864 = vmatpush1.msra.mxu0 0.0
      %1865 = vmatprep.subr.mxu0 0.0
      %1866 = vmatpush1.msra.mxu0 0.0
      %1867 = vmatprep.subr.mxu0 0.0
      %1868 = vmatpush1.msra.mxu0 0.0
      %1869 = vmatprep.subr.mxu0 0.0
      %1870 = vmatpush1.msra.mxu0 0.0
      %1871 = vmatprep.subr.mxu0 0.0
      %1872 = vmatpush1.msra.mxu0 0.0
      %1873 = vmatprep.subr.mxu0 0.0
      %1874 = vmatpush1.msra.mxu0 0.0
      %1875 = vmatprep.subr.mxu0 0.0
      %1876 = vmatpush1.msra.mxu0 0.0
      %1877 = vmatprep.subr.mxu0 0.0
      %1878 = vmatpush1.msra.mxu0 0.0
      %1879 = vmatprep.subr.mxu0 0.0
      %1880 = vmatpush1.msra.mxu0 0.0
      %1881 = vmatprep.subr.mxu0 0.0
      %1882 = vmatpush1.msra.mxu0 0.0
      %1883 = vmatprep.subr.mxu0 0.0
      %1884 = vmatpush1.msra.mxu0 0.0
      %1885 = vmatprep.subr.mxu0 0.0
      %1886 = vmatpush1.msra.mxu0 0.0
      %1887 = vmatprep.subr.mxu0 0.0
      %1888 = vmatpush1.msra.mxu0 0.0
      %1889 = vmatprep.subr.mxu0 0.0
      %1890 = vmatpush1.msra.mxu0 0.0
      %1891 = vmatprep.subr.mxu0 0.0
      %1892 = vmatpush1.msra.mxu0 0.0
      %1893 = vmatprep.subr.mxu0 0.0
      %1894 = vmatpush1.msra.mxu0 0.0
      %1895 = vmatprep.subr.mxu0 0.0
      %1896 = vmatpush1.msra.mxu0 0.0
      %1897 = vmatprep.subr.mxu0 0.0
      %1898 = vmatpush1.msra.mxu0 0.0
      %1899 = vmatprep.subr.mxu0 0.0
      %1900 = vmatpush1.msra.mxu0 0.0
      %1901 = vmatprep.subr.mxu0 0.0
      %1902 = vmatpush1.msra.mxu0 0.0
      %1903 = vmatprep.subr.mxu0 0.0
      %1904 = vmatpush1.msra.mxu0 0.0
      %1905 = vmatprep.subr.mxu0 0.0
      %1906 = vmatpush1.msra.mxu0 0.0
      %1907 = vmatprep.subr.mxu0 0.0
      %1908 = vmatpush1.msra.mxu0 0.0
      %1909 = vmatprep.subr.mxu0 0.0
      %1910 = vmatpush1.msra.mxu0 0.0
      %1911 = vmatprep.mubr.f32.mxu0 0.0
      %1912 = vmatmul.mubr.f32.gmra.mrb[0].mxu0 %v576
      %v1913 = vpop.f32.mrb[0].mxu0
      %v1914 = vadd.f32 0.0, %v1913
      %v1915 = vpop.f32.mrb[0].mxu0
      %1916 = vmatprep.mubr.f32.mxu0 0.0
      %1917 = vmatmul.mubr.f32.gmra.mrb[0].mxu0 %v578
      %v1918 = vpop.f32.mrb[0].mxu0
      %v1919 = vadd.f32 0.0, %v1918
      %v1920 = vpop.f32.mrb[0].mxu0
      %1921 = vmatprep.mubr.f32.mxu0 0.0
      %1922 = vmatmul.mubr.f32.gmra.mrb[0].mxu0 %v580
      %v1923 = vpop.f32.mrb[0].mxu0
      %v1924 = vadd.f32 0.0, %v1923
      %v1925 = vpop.f32.mrb[0].mxu0
      %1926 = vmatprep.mubr.f32.mxu0 0.0
      %1927 = vmatmul.mubr.f32.gmra.mrb[0].mxu0 %v582
      %v1928 = vpop.f32.mrb[0].mxu0
      %v1929 = vadd.f32 0.0, %v1928
      %v1930 = vpop.f32.mrb[0].mxu0
      %1931 = vmatprep.mubr.f32.mxu0 0.0
      %1932 = vmatmul.mubr.f32.gmra.mrb[0].mxu0 %v584
      %v1933 = vpop.f32.mrb[0].mxu0
      %v1934 = vadd.f32 0.0, %v1933
      %v1935 = vpop.f32.mrb[0].mxu0
      %1936 = vmatprep.mubr.f32.mxu0 0.0
      %1937 = vmatmul.mubr.f32.gmra.mrb[0].mxu0 %v586
      %v1938 = vpop.f32.mrb[0].mxu0
      %v1939 = vadd.f32 0.0, %v1938
      %v1940 = vpop.f32.mrb[0].mxu0
      %1941 = vmatprep.mubr.f32.mxu0 0.0
      %1942 = vmatmul.mubr.f32.gmra.mrb[0].mxu0 %v588
      %v1943 = vpop.f32.mrb[0].mxu0
      %v1944 = vadd.f32 0.0, %v1943
      %v1945 = vpop.f32.mrb[0].mxu0
      %1946 = vmatprep.mubr.f32.mxu0 0.0
      %1947 = vmatmul.mubr.f32.gmra.mrb[0].mxu0 %v590
      %v1948 = vpop.f32.mrb[0].mxu0
      %v1949 = vadd.f32 0.0, %v1948
      %v1950 = vpop.f32.mrb[0].mxu0
      %1951 = vmatprep.mubr.f32.mxu0 0.0
      %1952 = vmatmul.mubr.f32.gmra.mrb[0].mxu0 %v592
      %v1953 = vpop.f32.mrb[0].mxu0
      %v1954 = vadd.f32 0.0, %v1953
      %v1955 = vpop.f32.mrb[0].mxu0
      %1956 = vmatprep.mubr.f32.mxu0 0.0
      %1957 = vmatmul.mubr.f32.gmra.mrb[0].mxu0 %v594
      %v1958 = vpop.f32.mrb[0].mxu0
      %v1959 = vadd.f32 0.0, %v1958
      %v1960 = vpop.f32.mrb[0].mxu0
      %1961 = vmatprep.mubr.f32.mxu0 0.0
      %1962 = vmatmul.mubr.f32.gmra.mrb[0].mxu0 %v596
      %v1963 = vpop.f32.mrb[0].mxu0
      %v1964 = vadd.f32 0.0, %v1963
      %v1965 = vpop.f32.mrb[0].mxu0
      %1966 = vmatprep.mubr.f32.mxu0 0.0
      %1967 = vmatmul.mubr.f32.gmra.mrb[0].mxu0 %v598
      %v1968 = vpop.f32.mrb[0].mxu0
      %v1969 = vadd.f32 0.0, %v1968
      %v1970 = vpop.f32.mrb[0].mxu0
      %1971 = vmatprep.mubr.f32.mxu0 0.0
      %1972 = vmatmul.mubr.f32.gmra.mrb[0].mxu0 %v600
      %v1973 = vpop.f32.mrb[0].mxu0
      %v1974 = vadd.f32 0.0, %v1973
      %v1975 = vpop.f32.mrb[0].mxu0
      %1976 = vmatprep.mubr.f32.mxu0 0.0
      %1977 = vmatmul.mubr.f32.gmra.mrb[0].mxu0 %v602
      %v1978 = vpop.f32.mrb[0].mxu0
      %v1979 = vadd.f32 0.0, %v1978
      %v1980 = vpop.f32.mrb[0].mxu0
      %1981 = vmatprep.mubr.f32.mxu0 0.0
      %1982 = vmatmul.mubr.f32.gmra.mrb[0].mxu0 %v604
      %v1983 = vpop.f32.mrb[0].mxu0
      %v1984 = vadd.f32 0.0, %v1983
      %v1985 = vpop.f32.mrb[0].mxu0
      %1986 = vmatprep.mubr.f32.mxu0 0.0
      %1987 = vmatmul.mubr.f32.gmra.mrb[0].mxu0 %v606
      %v1988 = vpop.f32.mrb[0].mxu0
      %v1989 = vadd.f32 0.0, %v1988
      %v1990 = vpop.f32.mrb[0].mxu0
      %1991 = vmatprep.mubr.f32.mxu0 0.0
      %1992 = vmatmul.mubr.f32.gmra.mrb[0].mxu0 %v608
      %v1993 = vpop.f32.mrb[0].mxu0
      %v1994 = vadd.f32 0.0, %v1993
      %v1995 = vpop.f32.mrb[0].mxu0
      %1996 = vmatprep.mubr.f32.mxu0 0.0
      %1997 = vmatmul.mubr.f32.gmra.mrb[0].mxu0 %v610
      %v1998 = vpop.f32.mrb[0].mxu0
      %v1999 = vadd.f32 0.0, %v1998
      %v2000 = vpop.f32.mrb[0].mxu0
      %2001 = vmatprep.mubr.f32.mxu0 0.0
      %2002 = vmatmul.mubr.f32.gmra.mrb[0].mxu0 %v612
      %v2003 = vpop.f32.mrb[0].mxu0
      %v2004 = vadd.f32 0.0, %v2003
      %v2005 = vpop.f32.mrb[0].mxu0
      %2006 = vmatprep.mubr.f32.mxu0 0.0
      %2007 = vmatmul.mubr.f32.gmra.mrb[0].mxu0 %v614
      %v2008 = vpop.f32.mrb[0].mxu0
      %v2009 = vadd.f32 0.0, %v2008
      %v2010 = vpop.f32.mrb[0].mxu0
      %2011 = vmatprep.mubr.f32.mxu0 0.0
      %2012 = vmatmul.mubr.f32.gmra.mrb[0].mxu0 %v616
      %v2013 = vpop.f32.mrb[0].mxu0
      %v2014 = vadd.f32 0.0, %v2013
      %v2015 = vpop.f32.mrb[0].mxu0
      %2016 = vmatprep.mubr.f32.mxu0 0.0
      %2017 = vmatmul.mubr.f32.gmra.mrb[0].mxu0 %v618
      %v2018 = vpop.f32.mrb[0].mxu0
      %v2019 = vadd.f32 0.0, %v2018
      %v2020 = vpop.f32.mrb[0].mxu0
      %2021 = vmatprep.mubr.f32.mxu0 0.0
      %2022 = vmatmul.mubr.f32.gmra.mrb[0].mxu0 %v620
      %v2023 = vpop.f32.mrb[0].mxu0
      %v2024 = vadd.f32 0.0, %v2023
      %v2025 = vpop.f32.mrb[0].mxu0
      %2026 = vmatprep.mubr.f32.mxu0 0.0
      %2027 = vmatmul.mubr.f32.gmra.mrb[0].mxu0 %v622
      %v2028 = vpop.f32.mrb[0].mxu0
      %v2029 = vadd.f32 0.0, %v2028
      %v2030 = vpop.f32.mrb[0].mxu0
      %2031 = vmatprep.mubr.f32.mxu0 0.0
      %2032 = vmatmul.mubr.f32.gmra.mrb[0].mxu0 %v624
      %v2033 = vpop.f32.mrb[0].mxu0
      %v2034 = vadd.f32 0.0, %v2033
      %v2035 = vpop.f32.mrb[0].mxu0
      %2036 = vmatprep.mubr.f32.mxu0 0.0
      %2037 = vmatmul.mubr.f32.gmra.mrb[0].mxu0 %v626
      %v2038 = vpop.f32.mrb[0].mxu0
      %v2039 = vadd.f32 0.0, %v2038
      %v2040 = vpop.f32.mrb[0].mxu0
      %2041 = vmatprep.mubr.f32.mxu0 0.0
      %2042 = vmatmul.mubr.f32.gmra.mrb[0].mxu0 %v628
      %v2043 = vpop.f32.mrb[0].mxu0
      %v2044 = vadd.f32 0.0, %v2043
      %v2045 = vpop.f32.mrb[0].mxu0
      %2046 = vmatprep.mubr.f32.mxu0 0.0
      %2047 = vmatmul.mubr.f32.gmra.mrb[0].mxu0 %v630
      %v2048 = vpop.f32.mrb[0].mxu0
      %v2049 = vadd.f32 0.0, %v2048
      %v2050 = vpop.f32.mrb[0].mxu0
      %2051 = vmatprep.mubr.f32.mxu0 0.0
      %2052 = vmatmul.mubr.f32.gmra.mrb[0].mxu0 %v632
      %v2053 = vpop.f32.mrb[0].mxu0
      %v2054 = vadd.f32 0.0, %v2053
      %v2055 = vpop.f32.mrb[0].mxu0
      %2056 = vmatprep.mubr.f32.mxu0 0.0
      %2057 = vmatmul.mubr.f32.gmra.mrb[0].mxu0 %v634
      %v2058 = vpop.f32.mrb[0].mxu0
      %v2059 = vadd.f32 0.0, %v2058
      %v2060 = vpop.f32.mrb[0].mxu0
      %2061 = vmatprep.mubr.f32.mxu0 0.0
      %2062 = vmatmul.mubr.f32.gmra.mrb[0].mxu0 %v1840
      %v2063 = vpop.f32.mrb[0].mxu0
      %v2064 = vadd.f32 0.0, %v2063
      %v2065 = vpop.f32.mrb[0].mxu0
      %2066 = vmatprep.mubr.f32.mxu0 0.0
      %2067 = vmatmul.mubr.f32.gmra.mrb[0].mxu0 %v1842
      %v2068 = vpop.f32.mrb[0].mxu0
      %v2069 = vadd.f32 0.0, %v2068
      %v2070 = vpop.f32.mrb[0].mxu0
      %2071 = vdwg.mxu0
      %v2072 = vadd.f32 %v1800, %v1914
      %v2073 = vadd.f32 %v1801, %v1919
      %v2074 = vadd.f32 %v1802, %v1924
      %v2075 = vadd.f32 %v1803, %v1929
      %v2076 = vadd.f32 %v1804, %v1934
      %v2077 = vadd.f32 %v1805, %v1939
      %v2078 = vadd.f32 %v1806, %v1944
      %v2079 = vadd.f32 %v1807, %v1949
      %v2080 = vadd.f32 %v1808, %v1954
      %v2081 = vadd.f32 %v1809, %v1959
      %v2082 = vadd.f32 %v1810, %v1964
      %v2083 = vadd.f32 %v1811, %v1969
      %v2084 = vadd.f32 %v1812, %v1974
      %v2085 = vadd.f32 %v1813, %v1979
      %v2086 = vadd.f32 %v1814, %v1984
      %v2087 = vadd.f32 %v1815, %v1989
      %v2088 = vadd.f32 %v1816, %v1994
      %v2089 = vadd.f32 %v1817, %v1999
      %v2090 = vadd.f32 %v1818, %v2004
      %v2091 = vadd.f32 %v1819, %v2009
      %v2092 = vadd.f32 %v1820, %v2014
      %v2093 = vadd.f32 %v1821, %v2019
      %v2094 = vadd.f32 %v1822, %v2024
      %v2095 = vadd.f32 %v1823, %v2029
      %v2096 = vadd.f32 %v1824, %v2034
      %v2097 = vadd.f32 %v1825, %v2039
      %v2098 = vadd.f32 %v1826, %v2044
      %v2099 = vadd.f32 %v1827, %v2049
      %v2100 = vadd.f32 %v1828, %v2054
      %v2101 = vadd.f32 %v1829, %v2059
      %v2102 = vadd.f32 %v1830, %v2064
      %v2103 = vadd.f32 %v1831, %v2069
      %v2104 = vrot.slane %v434, 2
      %v2105 = vrot.slane %v435, 2
      %v2106 = vsel %vm1157, %v2104, %v2105
      %v2107 = vrot.slane %v436, 2
      %v2108 = vsel %vm1157, %v2105, %v2107
      %s2109 = scalar_lea.vmem %s1, 20
      %v2110 = vld [vmem:[%s2109] sm:$0xf]
      %v2111 = vsel %vm297, %v2106, 0
      %v2113 = vsel %vm297, %v2108, 0
      %v2116 = vsel %vm636, %v2110, 0
      %2118 = vmatprep.subr.mxu0 0.0
      %2119 = vmatpush1.msra.mxu0 %v2116
      %2120 = vmatprep.subr.mxu0 0.0
      %2121 = vmatpush1.msra.mxu0 0.0
      %2122 = vmatprep.subr.mxu0 0.0
      %2123 = vmatpush1.msra.mxu0 0.0
      %2124 = vmatprep.subr.mxu0 0.0
      %2125 = vmatpush1.msra.mxu0 0.0
      %2126 = vmatprep.subr.mxu0 0.0
      %2127 = vmatpush1.msra.mxu0 0.0
      %2128 = vmatprep.subr.mxu0 0.0
      %2129 = vmatpush1.msra.mxu0 0.0
      %2130 = vmatprep.subr.mxu0 0.0
      %2131 = vmatpush1.msra.mxu0 0.0
      %2132 = vmatprep.subr.mxu0 0.0
      %2133 = vmatpush1.msra.mxu0 0.0
      %2134 = vmatprep.subr.mxu0 0.0
      %2135 = vmatpush1.msra.mxu0 0.0
      %2136 = vmatprep.subr.mxu0 0.0
      %2137 = vmatpush1.msra.mxu0 0.0
      %2138 = vmatprep.subr.mxu0 0.0
      %2139 = vmatpush1.msra.mxu0 0.0
      %2140 = vmatprep.subr.mxu0 0.0
      %2141 = vmatpush1.msra.mxu0 0.0
      %2142 = vmatprep.subr.mxu0 0.0
      %2143 = vmatpush1.msra.mxu0 0.0
      %2144 = vmatprep.subr.mxu0 0.0
      %2145 = vmatpush1.msra.mxu0 0.0
      %2146 = vmatprep.subr.mxu0 0.0
      %2147 = vmatpush1.msra.mxu0 0.0
      %2148 = vmatprep.subr.mxu0 0.0
      %2149 = vmatpush1.msra.mxu0 0.0
      %2150 = vmatprep.subr.mxu0 0.0
      %2151 = vmatpush1.msra.mxu0 0.0
      %2152 = vmatprep.subr.mxu0 0.0
      %2153 = vmatpush1.msra.mxu0 0.0
      %2154 = vmatprep.subr.mxu0 0.0
      %2155 = vmatpush1.msra.mxu0 0.0
      %2156 = vmatprep.subr.mxu0 0.0
      %2157 = vmatpush1.msra.mxu0 0.0
      %2158 = vmatprep.subr.mxu0 0.0
      %2159 = vmatpush1.msra.mxu0 0.0
      %2160 = vmatprep.subr.mxu0 0.0
      %2161 = vmatpush1.msra.mxu0 0.0
      %2162 = vmatprep.subr.mxu0 0.0
      %2163 = vmatpush1.msra.mxu0 0.0
      %2164 = vmatprep.subr.mxu0 0.0
      %2165 = vmatpush1.msra.mxu0 0.0
      %2166 = vmatprep.subr.mxu0 0.0
      %2167 = vmatpush1.msra.mxu0 0.0
      %2168 = vmatprep.subr.mxu0 0.0
      %2169 = vmatpush1.msra.mxu0 0.0
      %2170 = vmatprep.subr.mxu0 0.0
      %2171 = vmatpush1.msra.mxu0 0.0
      %2172 = vmatprep.subr.mxu0 0.0
      %2173 = vmatpush1.msra.mxu0 0.0
      %2174 = vmatprep.subr.mxu0 0.0
      %2175 = vmatpush1.msra.mxu0 0.0
      %2176 = vmatprep.subr.mxu0 0.0
      %2177 = vmatpush1.msra.mxu0 0.0
      %2178 = vmatprep.subr.mxu0 0.0
      %2179 = vmatpush1.msra.mxu0 0.0
      %2180 = vmatprep.subr.mxu0 0.0
      %2181 = vmatpush1.msra.mxu0 0.0
      %2182 = vmatprep.mubr.f32.mxu0 0.0
      %2183 = vmatmul.mubr.f32.gmra.mrb[0].mxu0 %v1244
      %v2184 = vpop.f32.mrb[0].mxu0
      %v2185 = vadd.f32 0.0, %v2184
      %v2186 = vpop.f32.mrb[0].mxu0
      %2187 = vmatprep.mubr.f32.mxu0 0.0
      %2188 = vmatmul.mubr.f32.gmra.mrb[0].mxu0 %v1246
      %v2189 = vpop.f32.mrb[0].mxu0
      %v2190 = vadd.f32 0.0, %v2189
      %v2191 = vpop.f32.mrb[0].mxu0
      %2192 = vmatprep.mubr.f32.mxu0 0.0
      %2193 = vmatmul.mubr.f32.gmra.mrb[0].mxu0 %v1248
      %v2194 = vpop.f32.mrb[0].mxu0
      %v2195 = vadd.f32 0.0, %v2194
      %v2196 = vpop.f32.mrb[0].mxu0
      %2197 = vmatprep.mubr.f32.mxu0 0.0
      %2198 = vmatmul.mubr.f32.gmra.mrb[0].mxu0 %v1250
      %v2199 = vpop.f32.mrb[0].mxu0
      %v2200 = vadd.f32 0.0, %v2199
      %v2201 = vpop.f32.mrb[0].mxu0
      %2202 = vmatprep.mubr.f32.mxu0 0.0
      %2203 = vmatmul.mubr.f32.gmra.mrb[0].mxu0 %v1252
      %v2204 = vpop.f32.mrb[0].mxu0
      %v2205 = vadd.f32 0.0, %v2204
      %v2206 = vpop.f32.mrb[0].mxu0
      %2207 = vmatprep.mubr.f32.mxu0 0.0
      %2208 = vmatmul.mubr.f32.gmra.mrb[0].mxu0 %v1254
      %v2209 = vpop.f32.mrb[0].mxu0
      %v2210 = vadd.f32 0.0, %v2209
      %v2211 = vpop.f32.mrb[0].mxu0
      %2212 = vmatprep.mubr.f32.mxu0 0.0
      %2213 = vmatmul.mubr.f32.gmra.mrb[0].mxu0 %v1256
      %v2214 = vpop.f32.mrb[0].mxu0
      %v2215 = vadd.f32 0.0, %v2214
      %v2216 = vpop.f32.mrb[0].mxu0
      %2217 = vmatprep.mubr.f32.mxu0 0.0
      %2218 = vmatmul.mubr.f32.gmra.mrb[0].mxu0 %v1258
      %v2219 = vpop.f32.mrb[0].mxu0
      %v2220 = vadd.f32 0.0, %v2219
      %v2221 = vpop.f32.mrb[0].mxu0
      %2222 = vmatprep.mubr.f32.mxu0 0.0
      %2223 = vmatmul.mubr.f32.gmra.mrb[0].mxu0 %v1260
      %v2224 = vpop.f32.mrb[0].mxu0
      %v2225 = vadd.f32 0.0, %v2224
      %v2226 = vpop.f32.mrb[0].mxu0
      %2227 = vmatprep.mubr.f32.mxu0 0.0
      %2228 = vmatmul.mubr.f32.gmra.mrb[0].mxu0 %v1262
      %v2229 = vpop.f32.mrb[0].mxu0
      %v2230 = vadd.f32 0.0, %v2229
      %v2231 = vpop.f32.mrb[0].mxu0
      %2232 = vmatprep.mubr.f32.mxu0 0.0
      %2233 = vmatmul.mubr.f32.gmra.mrb[0].mxu0 %v1264
      %v2234 = vpop.f32.mrb[0].mxu0
      %v2235 = vadd.f32 0.0, %v2234
      %v2236 = vpop.f32.mrb[0].mxu0
      %2237 = vmatprep.mubr.f32.mxu0 0.0
      %2238 = vmatmul.mubr.f32.gmra.mrb[0].mxu0 %v1266
      %v2239 = vpop.f32.mrb[0].mxu0
      %v2240 = vadd.f32 0.0, %v2239
      %v2241 = vpop.f32.mrb[0].mxu0
      %2242 = vmatprep.mubr.f32.mxu0 0.0
      %2243 = vmatmul.mubr.f32.gmra.mrb[0].mxu0 %v1268
      %v2244 = vpop.f32.mrb[0].mxu0
      %v2245 = vadd.f32 0.0, %v2244
      %v2246 = vpop.f32.mrb[0].mxu0
      %2247 = vmatprep.mubr.f32.mxu0 0.0
      %2248 = vmatmul.mubr.f32.gmra.mrb[0].mxu0 %v1270
      %v2249 = vpop.f32.mrb[0].mxu0
      %v2250 = vadd.f32 0.0, %v2249
      %v2251 = vpop.f32.mrb[0].mxu0
      %2252 = vmatprep.mubr.f32.mxu0 0.0
      %2253 = vmatmul.mubr.f32.gmra.mrb[0].mxu0 %v1272
      %v2254 = vpop.f32.mrb[0].mxu0
      %v2255 = vadd.f32 0.0, %v2254
      %v2256 = vpop.f32.mrb[0].mxu0
      %2257 = vmatprep.mubr.f32.mxu0 0.0
      %2258 = vmatmul.mubr.f32.gmra.mrb[0].mxu0 %v1274
      %v2259 = vpop.f32.mrb[0].mxu0
      %v2260 = vadd.f32 0.0, %v2259
      %v2261 = vpop.f32.mrb[0].mxu0
      %2262 = vmatprep.mubr.f32.mxu0 0.0
      %2263 = vmatmul.mubr.f32.gmra.mrb[0].mxu0 %v1276
      %v2264 = vpop.f32.mrb[0].mxu0
      %v2265 = vadd.f32 0.0, %v2264
      %v2266 = vpop.f32.mrb[0].mxu0
      %2267 = vmatprep.mubr.f32.mxu0 0.0
      %2268 = vmatmul.mubr.f32.gmra.mrb[0].mxu0 %v1278
      %v2269 = vpop.f32.mrb[0].mxu0
      %v2270 = vadd.f32 0.0, %v2269
      %v2271 = vpop.f32.mrb[0].mxu0
      %2272 = vmatprep.mubr.f32.mxu0 0.0
      %2273 = vmatmul.mubr.f32.gmra.mrb[0].mxu0 %v1280
      %v2274 = vpop.f32.mrb[0].mxu0
      %v2275 = vadd.f32 0.0, %v2274
      %v2276 = vpop.f32.mrb[0].mxu0
      %2277 = vmatprep.mubr.f32.mxu0 0.0
      %2278 = vmatmul.mubr.f32.gmra.mrb[0].mxu0 %v1282
      %v2279 = vpop.f32.mrb[0].mxu0
      %v2280 = vadd.f32 0.0, %v2279
      %v2281 = vpop.f32.mrb[0].mxu0
      %2282 = vmatprep.mubr.f32.mxu0 0.0
      %2283 = vmatmul.mubr.f32.gmra.mrb[0].mxu0 %v1284
      %v2284 = vpop.f32.mrb[0].mxu0
      %v2285 = vadd.f32 0.0, %v2284
      %v2286 = vpop.f32.mrb[0].mxu0
      %2287 = vmatprep.mubr.f32.mxu0 0.0
      %2288 = vmatmul.mubr.f32.gmra.mrb[0].mxu0 %v1286
      %v2289 = vpop.f32.mrb[0].mxu0
      %v2290 = vadd.f32 0.0, %v2289
      %v2291 = vpop.f32.mrb[0].mxu0
      %2292 = vmatprep.mubr.f32.mxu0 0.0
      %2293 = vmatmul.mubr.f32.gmra.mrb[0].mxu0 %v1288
      %v2294 = vpop.f32.mrb[0].mxu0
      %v2295 = vadd.f32 0.0, %v2294
      %v2296 = vpop.f32.mrb[0].mxu0
      %2297 = vmatprep.mubr.f32.mxu0 0.0
      %2298 = vmatmul.mubr.f32.gmra.mrb[0].mxu0 %v1290
      %v2299 = vpop.f32.mrb[0].mxu0
      %v2300 = vadd.f32 0.0, %v2299
      %v2301 = vpop.f32.mrb[0].mxu0
      %2302 = vmatprep.mubr.f32.mxu0 0.0
      %2303 = vmatmul.mubr.f32.gmra.mrb[0].mxu0 %v1292
      %v2304 = vpop.f32.mrb[0].mxu0
      %v2305 = vadd.f32 0.0, %v2304
      %v2306 = vpop.f32.mrb[0].mxu0
      %2307 = vmatprep.mubr.f32.mxu0 0.0
      %2308 = vmatmul.mubr.f32.gmra.mrb[0].mxu0 %v1294
      %v2309 = vpop.f32.mrb[0].mxu0
      %v2310 = vadd.f32 0.0, %v2309
      %v2311 = vpop.f32.mrb[0].mxu0
      %2312 = vmatprep.mubr.f32.mxu0 0.0
      %2313 = vmatmul.mubr.f32.gmra.mrb[0].mxu0 %v1296
      %v2314 = vpop.f32.mrb[0].mxu0
      %v2315 = vadd.f32 0.0, %v2314
      %v2316 = vpop.f32.mrb[0].mxu0
      %2317 = vmatprep.mubr.f32.mxu0 0.0
      %2318 = vmatmul.mubr.f32.gmra.mrb[0].mxu0 %v1298
      %v2319 = vpop.f32.mrb[0].mxu0
      %v2320 = vadd.f32 0.0, %v2319
      %v2321 = vpop.f32.mrb[0].mxu0
      %2322 = vmatprep.mubr.f32.mxu0 0.0
      %2323 = vmatmul.mubr.f32.gmra.mrb[0].mxu0 %v1300
      %v2324 = vpop.f32.mrb[0].mxu0
      %v2325 = vadd.f32 0.0, %v2324
      %v2326 = vpop.f32.mrb[0].mxu0
      %2327 = vmatprep.mubr.f32.mxu0 0.0
      %2328 = vmatmul.mubr.f32.gmra.mrb[0].mxu0 %v1302
      %v2329 = vpop.f32.mrb[0].mxu0
      %v2330 = vadd.f32 0.0, %v2329
      %v2331 = vpop.f32.mrb[0].mxu0
      %2332 = vmatprep.mubr.f32.mxu0 0.0
      %2333 = vmatmul.mubr.f32.gmra.mrb[0].mxu0 %v2111
      %v2334 = vpop.f32.mrb[0].mxu0
      %v2335 = vadd.f32 0.0, %v2334
      %v2336 = vpop.f32.mrb[0].mxu0
      %2337 = vmatprep.mubr.f32.mxu0 0.0
      %2338 = vmatmul.mubr.f32.gmra.mrb[0].mxu0 %v2113
      %v2339 = vpop.f32.mrb[0].mxu0
      %v2340 = vadd.f32 0.0, %v2339
      %v2341 = vpop.f32.mrb[0].mxu0
      %2342 = vdwg.mxu0
      %v2343 = vadd.f32 %v2072, %v2185
      %v2344 = vadd.f32 %v2073, %v2190
      %v2345 = vadd.f32 %v2074, %v2195
      %v2346 = vadd.f32 %v2075, %v2200
      %v2347 = vadd.f32 %v2076, %v2205
      %v2348 = vadd.f32 %v2077, %v2210
      %v2349 = vadd.f32 %v2078, %v2215
      %v2350 = vadd.f32 %v2079, %v2220
      %v2351 = vadd.f32 %v2080, %v2225
      %v2352 = vadd.f32 %v2081, %v2230
      %v2353 = vadd.f32 %v2082, %v2235
      %v2354 = vadd.f32 %v2083, %v2240
      %v2355 = vadd.f32 %v2084, %v2245
      %v2356 = vadd.f32 %v2085, %v2250
      %v2357 = vadd.f32 %v2086, %v2255
      %v2358 = vadd.f32 %v2087, %v2260
      %v2359 = vadd.f32 %v2088, %v2265
      %v2360 = vadd.f32 %v2089, %v2270
      %v2361 = vadd.f32 %v2090, %v2275
      %v2362 = vadd.f32 %v2091, %v2280
      %v2363 = vadd.f32 %v2092, %v2285
      %v2364 = vadd.f32 %v2093, %v2290
      %v2365 = vadd.f32 %v2094, %v2295
      %v2366 = vadd.f32 %v2095, %v2300
      %v2367 = vadd.f32 %v2096, %v2305
      %v2368 = vadd.f32 %v2097, %v2310
      %v2369 = vadd.f32 %v2098, %v2315
      %v2370 = vadd.f32 %v2099, %v2320
      %v2371 = vadd.f32 %v2100, %v2325
      %v2372 = vadd.f32 %v2101, %v2330
      %v2373 = vadd.f32 %v2102, %v2335
      %v2374 = vadd.f32 %v2103, %v2340
      %s2375 = scalar_lea.vmem %s1, 24
      %v2376 = vld [vmem:[%s2375] sm:$0xf]
      %v2378 = vsel %vm297, %v437, 0
      %v2381 = vsel %vm297, %v438, 0
      %v2384 = vsel %vm636, %v2376, 0
      %2386 = vmatprep.subr.mxu0 0.0
      %2387 = vmatpush1.msra.mxu0 %v2384
      %2388 = vmatprep.subr.mxu0 0.0
      %2389 = vmatpush1.msra.mxu0 0.0
      %2390 = vmatprep.subr.mxu0 0.0
      %2391 = vmatpush1.msra.mxu0 0.0
      %2392 = vmatprep.subr.mxu0 0.0
      %2393 = vmatpush1.msra.mxu0 0.0
      %2394 = vmatprep.subr.mxu0 0.0
      %2395 = vmatpush1.msra.mxu0 0.0
      %2396 = vmatprep.subr.mxu0 0.0
      %2397 = vmatpush1.msra.mxu0 0.0
      %2398 = vmatprep.subr.mxu0 0.0
      %2399 = vmatpush1.msra.mxu0 0.0
      %2400 = vmatprep.subr.mxu0 0.0
      %2401 = vmatpush1.msra.mxu0 0.0
      %2402 = vmatprep.subr.mxu0 0.0
      %2403 = vmatpush1.msra.mxu0 0.0
      %2404 = vmatprep.subr.mxu0 0.0
      %2405 = vmatpush1.msra.mxu0 0.0
      %2406 = vmatprep.subr.mxu0 0.0
      %2407 = vmatpush1.msra.mxu0 0.0
      %2408 = vmatprep.subr.mxu0 0.0
      %2409 = vmatpush1.msra.mxu0 0.0
      %2410 = vmatprep.subr.mxu0 0.0
      %2411 = vmatpush1.msra.mxu0 0.0
      %2412 = vmatprep.subr.mxu0 0.0
      %2413 = vmatpush1.msra.mxu0 0.0
      %2414 = vmatprep.subr.mxu0 0.0
      %2415 = vmatpush1.msra.mxu0 0.0
      %2416 = vmatprep.subr.mxu0 0.0
      %2417 = vmatpush1.msra.mxu0 0.0
      %2418 = vmatprep.subr.mxu0 0.0
      %2419 = vmatpush1.msra.mxu0 0.0
      %2420 = vmatprep.subr.mxu0 0.0
      %2421 = vmatpush1.msra.mxu0 0.0
      %2422 = vmatprep.subr.mxu0 0.0
      %2423 = vmatpush1.msra.mxu0 0.0
      %2424 = vmatprep.subr.mxu0 0.0
      %2425 = vmatpush1.msra.mxu0 0.0
      %2426 = vmatprep.subr.mxu0 0.0
      %2427 = vmatpush1.msra.mxu0 0.0
      %2428 = vmatprep.subr.mxu0 0.0
      %2429 = vmatpush1.msra.mxu0 0.0
      %2430 = vmatprep.subr.mxu0 0.0
      %2431 = vmatpush1.msra.mxu0 0.0
      %2432 = vmatprep.subr.mxu0 0.0
      %2433 = vmatpush1.msra.mxu0 0.0
      %2434 = vmatprep.subr.mxu0 0.0
      %2435 = vmatpush1.msra.mxu0 0.0
      %2436 = vmatprep.subr.mxu0 0.0
      %2437 = vmatpush1.msra.mxu0 0.0
      %2438 = vmatprep.subr.mxu0 0.0
      %2439 = vmatpush1.msra.mxu0 0.0
      %2440 = vmatprep.subr.mxu0 0.0
      %2441 = vmatpush1.msra.mxu0 0.0
      %2442 = vmatprep.subr.mxu0 0.0
      %2443 = vmatpush1.msra.mxu0 0.0
      %2444 = vmatprep.subr.mxu0 0.0
      %2445 = vmatpush1.msra.mxu0 0.0
      %2446 = vmatprep.subr.mxu0 0.0
      %2447 = vmatpush1.msra.mxu0 0.0
      %2448 = vmatprep.subr.mxu0 0.0
      %2449 = vmatpush1.msra.mxu0 0.0
      %2450 = vmatprep.mubr.f32.mxu0 0.0
      %2451 = vmatmul.mubr.f32.gmra.mrb[0].mxu0 %v873
      %v2452 = vpop.f32.mrb[0].mxu0
      %v2453 = vadd.f32 0.0, %v2452
      %v2454 = vpop.f32.mrb[0].mxu0
      %2455 = vmatprep.mubr.f32.mxu0 0.0
      %2456 = vmatmul.mubr.f32.gmra.mrb[0].mxu0 %v875
      %v2457 = vpop.f32.mrb[0].mxu0
      %v2458 = vadd.f32 0.0, %v2457
      %v2459 = vpop.f32.mrb[0].mxu0
      %2460 = vmatprep.mubr.f32.mxu0 0.0
      %2461 = vmatmul.mubr.f32.gmra.mrb[0].mxu0 %v877
      %v2462 = vpop.f32.mrb[0].mxu0
      %v2463 = vadd.f32 0.0, %v2462
      %v2464 = vpop.f32.mrb[0].mxu0
      %2465 = vmatprep.mubr.f32.mxu0 0.0
      %2466 = vmatmul.mubr.f32.gmra.mrb[0].mxu0 %v879
      %v2467 = vpop.f32.mrb[0].mxu0
      %v2468 = vadd.f32 0.0, %v2467
      %v2469 = vpop.f32.mrb[0].mxu0
      %2470 = vmatprep.mubr.f32.mxu0 0.0
      %2471 = vmatmul.mubr.f32.gmra.mrb[0].mxu0 %v881
      %v2472 = vpop.f32.mrb[0].mxu0
      %v2473 = vadd.f32 0.0, %v2472
      %v2474 = vpop.f32.mrb[0].mxu0
      %2475 = vmatprep.mubr.f32.mxu0 0.0
      %2476 = vmatmul.mubr.f32.gmra.mrb[0].mxu0 %v883
      %v2477 = vpop.f32.mrb[0].mxu0
      %v2478 = vadd.f32 0.0, %v2477
      %v2479 = vpop.f32.mrb[0].mxu0
      %2480 = vmatprep.mubr.f32.mxu0 0.0
      %2481 = vmatmul.mubr.f32.gmra.mrb[0].mxu0 %v885
      %v2482 = vpop.f32.mrb[0].mxu0
      %v2483 = vadd.f32 0.0, %v2482
      %v2484 = vpop.f32.mrb[0].mxu0
      %2485 = vmatprep.mubr.f32.mxu0 0.0
      %2486 = vmatmul.mubr.f32.gmra.mrb[0].mxu0 %v887
      %v2487 = vpop.f32.mrb[0].mxu0
      %v2488 = vadd.f32 0.0, %v2487
      %v2489 = vpop.f32.mrb[0].mxu0
      %2490 = vmatprep.mubr.f32.mxu0 0.0
      %2491 = vmatmul.mubr.f32.gmra.mrb[0].mxu0 %v889
      %v2492 = vpop.f32.mrb[0].mxu0
      %v2493 = vadd.f32 0.0, %v2492
      %v2494 = vpop.f32.mrb[0].mxu0
      %2495 = vmatprep.mubr.f32.mxu0 0.0
      %2496 = vmatmul.mubr.f32.gmra.mrb[0].mxu0 %v891
      %v2497 = vpop.f32.mrb[0].mxu0
      %v2498 = vadd.f32 0.0, %v2497
      %v2499 = vpop.f32.mrb[0].mxu0
      %2500 = vmatprep.mubr.f32.mxu0 0.0
      %2501 = vmatmul.mubr.f32.gmra.mrb[0].mxu0 %v893
      %v2502 = vpop.f32.mrb[0].mxu0
      %v2503 = vadd.f32 0.0, %v2502
      %v2504 = vpop.f32.mrb[0].mxu0
      %2505 = vmatprep.mubr.f32.mxu0 0.0
      %2506 = vmatmul.mubr.f32.gmra.mrb[0].mxu0 %v895
      %v2507 = vpop.f32.mrb[0].mxu0
      %v2508 = vadd.f32 0.0, %v2507
      %v2509 = vpop.f32.mrb[0].mxu0
      %2510 = vmatprep.mubr.f32.mxu0 0.0
      %2511 = vmatmul.mubr.f32.gmra.mrb[0].mxu0 %v897
      %v2512 = vpop.f32.mrb[0].mxu0
      %v2513 = vadd.f32 0.0, %v2512
      %v2514 = vpop.f32.mrb[0].mxu0
      %2515 = vmatprep.mubr.f32.mxu0 0.0
      %2516 = vmatmul.mubr.f32.gmra.mrb[0].mxu0 %v899
      %v2517 = vpop.f32.mrb[0].mxu0
      %v2518 = vadd.f32 0.0, %v2517
      %v2519 = vpop.f32.mrb[0].mxu0
      %2520 = vmatprep.mubr.f32.mxu0 0.0
      %2521 = vmatmul.mubr.f32.gmra.mrb[0].mxu0 %v901
      %v2522 = vpop.f32.mrb[0].mxu0
      %v2523 = vadd.f32 0.0, %v2522
      %v2524 = vpop.f32.mrb[0].mxu0
      %2525 = vmatprep.mubr.f32.mxu0 0.0
      %2526 = vmatmul.mubr.f32.gmra.mrb[0].mxu0 %v903
      %v2527 = vpop.f32.mrb[0].mxu0
      %v2528 = vadd.f32 0.0, %v2527
      %v2529 = vpop.f32.mrb[0].mxu0
      %2530 = vmatprep.mubr.f32.mxu0 0.0
      %2531 = vmatmul.mubr.f32.gmra.mrb[0].mxu0 %v905
      %v2532 = vpop.f32.mrb[0].mxu0
      %v2533 = vadd.f32 0.0, %v2532
      %v2534 = vpop.f32.mrb[0].mxu0
      %2535 = vmatprep.mubr.f32.mxu0 0.0
      %2536 = vmatmul.mubr.f32.gmra.mrb[0].mxu0 %v907
      %v2537 = vpop.f32.mrb[0].mxu0
      %v2538 = vadd.f32 0.0, %v2537
      %v2539 = vpop.f32.mrb[0].mxu0
      %2540 = vmatprep.mubr.f32.mxu0 0.0
      %2541 = vmatmul.mubr.f32.gmra.mrb[0].mxu0 %v909
      %v2542 = vpop.f32.mrb[0].mxu0
      %v2543 = vadd.f32 0.0, %v2542
      %v2544 = vpop.f32.mrb[0].mxu0
      %2545 = vmatprep.mubr.f32.mxu0 0.0
      %2546 = vmatmul.mubr.f32.gmra.mrb[0].mxu0 %v911
      %v2547 = vpop.f32.mrb[0].mxu0
      %v2548 = vadd.f32 0.0, %v2547
      %v2549 = vpop.f32.mrb[0].mxu0
      %2550 = vmatprep.mubr.f32.mxu0 0.0
      %2551 = vmatmul.mubr.f32.gmra.mrb[0].mxu0 %v913
      %v2552 = vpop.f32.mrb[0].mxu0
      %v2553 = vadd.f32 0.0, %v2552
      %v2554 = vpop.f32.mrb[0].mxu0
      %2555 = vmatprep.mubr.f32.mxu0 0.0
      %2556 = vmatmul.mubr.f32.gmra.mrb[0].mxu0 %v915
      %v2557 = vpop.f32.mrb[0].mxu0
      %v2558 = vadd.f32 0.0, %v2557
      %v2559 = vpop.f32.mrb[0].mxu0
      %2560 = vmatprep.mubr.f32.mxu0 0.0
      %2561 = vmatmul.mubr.f32.gmra.mrb[0].mxu0 %v917
      %v2562 = vpop.f32.mrb[0].mxu0
      %v2563 = vadd.f32 0.0, %v2562
      %v2564 = vpop.f32.mrb[0].mxu0
      %2565 = vmatprep.mubr.f32.mxu0 0.0
      %2566 = vmatmul.mubr.f32.gmra.mrb[0].mxu0 %v919
      %v2567 = vpop.f32.mrb[0].mxu0
      %v2568 = vadd.f32 0.0, %v2567
      %v2569 = vpop.f32.mrb[0].mxu0
      %2570 = vmatprep.mubr.f32.mxu0 0.0
      %2571 = vmatmul.mubr.f32.gmra.mrb[0].mxu0 %v921
      %v2572 = vpop.f32.mrb[0].mxu0
      %v2573 = vadd.f32 0.0, %v2572
      %v2574 = vpop.f32.mrb[0].mxu0
      %2575 = vmatprep.mubr.f32.mxu0 0.0
      %2576 = vmatmul.mubr.f32.gmra.mrb[0].mxu0 %v923
      %v2577 = vpop.f32.mrb[0].mxu0
      %v2578 = vadd.f32 0.0, %v2577
      %v2579 = vpop.f32.mrb[0].mxu0
      %2580 = vmatprep.mubr.f32.mxu0 0.0
      %2581 = vmatmul.mubr.f32.gmra.mrb[0].mxu0 %v925
      %v2582 = vpop.f32.mrb[0].mxu0
      %v2583 = vadd.f32 0.0, %v2582
      %v2584 = vpop.f32.mrb[0].mxu0
      %2585 = vmatprep.mubr.f32.mxu0 0.0
      %2586 = vmatmul.mubr.f32.gmra.mrb[0].mxu0 %v927
      %v2587 = vpop.f32.mrb[0].mxu0
      %v2588 = vadd.f32 0.0, %v2587
      %v2589 = vpop.f32.mrb[0].mxu0
      %2590 = vmatprep.mubr.f32.mxu0 0.0
      %2591 = vmatmul.mubr.f32.gmra.mrb[0].mxu0 %v1567
      %v2592 = vpop.f32.mrb[0].mxu0
      %v2593 = vadd.f32 0.0, %v2592
      %v2594 = vpop.f32.mrb[0].mxu0
      %2595 = vmatprep.mubr.f32.mxu0 0.0
      %2596 = vmatmul.mubr.f32.gmra.mrb[0].mxu0 %v1570
      %v2597 = vpop.f32.mrb[0].mxu0
      %v2598 = vadd.f32 0.0, %v2597
      %v2599 = vpop.f32.mrb[0].mxu0
      %2600 = vmatprep.mubr.f32.mxu0 0.0
      %2601 = vmatmul.mubr.f32.gmra.mrb[0].mxu0 %v2378
      %v2602 = vpop.f32.mrb[0].mxu0
      %v2603 = vadd.f32 0.0, %v2602
      %v2604 = vpop.f32.mrb[0].mxu0
      %2605 = vmatprep.mubr.f32.mxu0 0.0
      %2606 = vmatmul.mubr.f32.gmra.mrb[0].mxu0 %v2381
      %v2607 = vpop.f32.mrb[0].mxu0
      %v2608 = vadd.f32 0.0, %v2607
      %v2609 = vpop.f32.mrb[0].mxu0
      %2610 = vdwg.mxu0
      %v2611 = vadd.f32 %v2343, %v2453
      %v2612 = vadd.f32 %v2344, %v2458
      %v2613 = vadd.f32 %v2345, %v2463
      %v2614 = vadd.f32 %v2346, %v2468
      %v2615 = vadd.f32 %v2347, %v2473
      %v2616 = vadd.f32 %v2348, %v2478
      %v2617 = vadd.f32 %v2349, %v2483
      %v2618 = vadd.f32 %v2350, %v2488
      %v2619 = vadd.f32 %v2351, %v2493
      %v2620 = vadd.f32 %v2352, %v2498
      %v2621 = vadd.f32 %v2353, %v2503
      %v2622 = vadd.f32 %v2354, %v2508
      %v2623 = vadd.f32 %v2355, %v2513
      %v2624 = vadd.f32 %v2356, %v2518
      %v2625 = vadd.f32 %v2357, %v2523
      %v2626 = vadd.f32 %v2358, %v2528
      %v2627 = vadd.f32 %v2359, %v2533
      %v2628 = vadd.f32 %v2360, %v2538
      %v2629 = vadd.f32 %v2361, %v2543
      %v2630 = vadd.f32 %v2362, %v2548
      %v2631 = vadd.f32 %v2363, %v2553
      %v2632 = vadd.f32 %v2364, %v2558
      %v2633 = vadd.f32 %v2365, %v2563
      %v2634 = vadd.f32 %v2366, %v2568
      %v2635 = vadd.f32 %v2367, %v2573
      %v2636 = vadd.f32 %v2368, %v2578
      %v2637 = vadd.f32 %v2369, %v2583
      %v2638 = vadd.f32 %v2370, %v2588
      %v2639 = vadd.f32 %v2371, %v2593
      %v2640 = vadd.f32 %v2372, %v2598
      %v2641 = vadd.f32 %v2373, %v2603
      %v2642 = vadd.f32 %v2374, %v2608
      %v2644 = vrot.slane %v437, 1
      %v2645 = vrot.slane %v438, 1
      %v2646 = vsel %vm489, %v2644, %v2645
      %v2647 = vrot.slane %v439, 1
      %v2648 = vsel %vm489, %v2645, %v2647
      %s2649 = scalar_lea.vmem %s1, 28
      %v2650 = vld [vmem:[%s2649] sm:$0xf]
      %v2651 = vsel %vm297, %v2646, 0
      %v2653 = vsel %vm297, %v2648, 0
      %v2656 = vsel %vm636, %v2650, 0
      %2658 = vmatprep.subr.mxu0 0.0
      %2659 = vmatpush1.msra.mxu0 %v2656
      %2660 = vmatprep.subr.mxu0 0.0
      %2661 = vmatpush1.msra.mxu0 0.0
      %2662 = vmatprep.subr.mxu0 0.0
      %2663 = vmatpush1.msra.mxu0 0.0
      %2664 = vmatprep.subr.mxu0 0.0
      %2665 = vmatpush1.msra.mxu0 0.0
      %2666 = vmatprep.subr.mxu0 0.0
      %2667 = vmatpush1.msra.mxu0 0.0
      %2668 = vmatprep.subr.mxu0 0.0
      %2669 = vmatpush1.msra.mxu0 0.0
      %2670 = vmatprep.subr.mxu0 0.0
      %2671 = vmatpush1.msra.mxu0 0.0
      %2672 = vmatprep.subr.mxu0 0.0
      %2673 = vmatpush1.msra.mxu0 0.0
      %2674 = vmatprep.subr.mxu0 0.0
      %2675 = vmatpush1.msra.mxu0 0.0
      %2676 = vmatprep.subr.mxu0 0.0
      %2677 = vmatpush1.msra.mxu0 0.0
      %2678 = vmatprep.subr.mxu0 0.0
      %2679 = vmatpush1.msra.mxu0 0.0
      %2680 = vmatprep.subr.mxu0 0.0
      %2681 = vmatpush1.msra.mxu0 0.0
      %2682 = vmatprep.subr.mxu0 0.0
      %2683 = vmatpush1.msra.mxu0 0.0
      %2684 = vmatprep.subr.mxu0 0.0
      %2685 = vmatpush1.msra.mxu0 0.0
      %2686 = vmatprep.subr.mxu0 0.0
      %2687 = vmatpush1.msra.mxu0 0.0
      %2688 = vmatprep.subr.mxu0 0.0
      %2689 = vmatpush1.msra.mxu0 0.0
      %2690 = vmatprep.subr.mxu0 0.0
      %2691 = vmatpush1.msra.mxu0 0.0
      %2692 = vmatprep.subr.mxu0 0.0
      %2693 = vmatpush1.msra.mxu0 0.0
      %2694 = vmatprep.subr.mxu0 0.0
      %2695 = vmatpush1.msra.mxu0 0.0
      %2696 = vmatprep.subr.mxu0 0.0
      %2697 = vmatpush1.msra.mxu0 0.0
      %2698 = vmatprep.subr.mxu0 0.0
      %2699 = vmatpush1.msra.mxu0 0.0
      %2700 = vmatprep.subr.mxu0 0.0
      %2701 = vmatpush1.msra.mxu0 0.0
      %2702 = vmatprep.subr.mxu0 0.0
      %2703 = vmatpush1.msra.mxu0 0.0
      %2704 = vmatprep.subr.mxu0 0.0
      %2705 = vmatpush1.msra.mxu0 0.0
      %2706 = vmatprep.subr.mxu0 0.0
      %2707 = vmatpush1.msra.mxu0 0.0
      %2708 = vmatprep.subr.mxu0 0.0
      %2709 = vmatpush1.msra.mxu0 0.0
      %2710 = vmatprep.subr.mxu0 0.0
      %2711 = vmatpush1.msra.mxu0 0.0
      %2712 = vmatprep.subr.mxu0 0.0
      %2713 = vmatpush1.msra.mxu0 0.0
      %2714 = vmatprep.subr.mxu0 0.0
      %2715 = vmatpush1.msra.mxu0 0.0
      %2716 = vmatprep.subr.mxu0 0.0
      %2717 = vmatpush1.msra.mxu0 0.0
      %2718 = vmatprep.subr.mxu0 0.0
      %2719 = vmatpush1.msra.mxu0 0.0
      %2720 = vmatprep.subr.mxu0 0.0
      %2721 = vmatpush1.msra.mxu0 0.0
      %2722 = vmatprep.mubr.f32.mxu0 0.0
      %2723 = vmatmul.mubr.f32.gmra.mrb[0].mxu0 %v580
      %v2724 = vpop.f32.mrb[0].mxu0
      %v2725 = vadd.f32 0.0, %v2724
      %v2726 = vpop.f32.mrb[0].mxu0
      %2727 = vmatprep.mubr.f32.mxu0 0.0
      %2728 = vmatmul.mubr.f32.gmra.mrb[0].mxu0 %v582
      %v2729 = vpop.f32.mrb[0].mxu0
      %v2730 = vadd.f32 0.0, %v2729
      %v2731 = vpop.f32.mrb[0].mxu0
      %2732 = vmatprep.mubr.f32.mxu0 0.0
      %2733 = vmatmul.mubr.f32.gmra.mrb[0].mxu0 %v584
      %v2734 = vpop.f32.mrb[0].mxu0
      %v2735 = vadd.f32 0.0, %v2734
      %v2736 = vpop.f32.mrb[0].mxu0
      %2737 = vmatprep.mubr.f32.mxu0 0.0
      %2738 = vmatmul.mubr.f32.gmra.mrb[0].mxu0 %v586
      %v2739 = vpop.f32.mrb[0].mxu0
      %v2740 = vadd.f32 0.0, %v2739
      %v2741 = vpop.f32.mrb[0].mxu0
      %2742 = vmatprep.mubr.f32.mxu0 0.0
      %2743 = vmatmul.mubr.f32.gmra.mrb[0].mxu0 %v588
      %v2744 = vpop.f32.mrb[0].mxu0
      %v2745 = vadd.f32 0.0, %v2744
      %v2746 = vpop.f32.mrb[0].mxu0
      %2747 = vmatprep.mubr.f32.mxu0 0.0
      %2748 = vmatmul.mubr.f32.gmra.mrb[0].mxu0 %v590
      %v2749 = vpop.f32.mrb[0].mxu0
      %v2750 = vadd.f32 0.0, %v2749
      %v2751 = vpop.f32.mrb[0].mxu0
      %2752 = vmatprep.mubr.f32.mxu0 0.0
      %2753 = vmatmul.mubr.f32.gmra.mrb[0].mxu0 %v592
      %v2754 = vpop.f32.mrb[0].mxu0
      %v2755 = vadd.f32 0.0, %v2754
      %v2756 = vpop.f32.mrb[0].mxu0
      %2757 = vmatprep.mubr.f32.mxu0 0.0
      %2758 = vmatmul.mubr.f32.gmra.mrb[0].mxu0 %v594
      %v2759 = vpop.f32.mrb[0].mxu0
      %v2760 = vadd.f32 0.0, %v2759
      %v2761 = vpop.f32.mrb[0].mxu0
      %2762 = vmatprep.mubr.f32.mxu0 0.0
      %2763 = vmatmul.mubr.f32.gmra.mrb[0].mxu0 %v596
      %v2764 = vpop.f32.mrb[0].mxu0
      %v2765 = vadd.f32 0.0, %v2764
      %v2766 = vpop.f32.mrb[0].mxu0
      %2767 = vmatprep.mubr.f32.mxu0 0.0
      %2768 = vmatmul.mubr.f32.gmra.mrb[0].mxu0 %v598
      %v2769 = vpop.f32.mrb[0].mxu0
      %v2770 = vadd.f32 0.0, %v2769
      %v2771 = vpop.f32.mrb[0].mxu0
      %2772 = vmatprep.mubr.f32.mxu0 0.0
      %2773 = vmatmul.mubr.f32.gmra.mrb[0].mxu0 %v600
      %v2774 = vpop.f32.mrb[0].mxu0
      %v2775 = vadd.f32 0.0, %v2774
      %v2776 = vpop.f32.mrb[0].mxu0
      %2777 = vmatprep.mubr.f32.mxu0 0.0
      %2778 = vmatmul.mubr.f32.gmra.mrb[0].mxu0 %v602
      %v2779 = vpop.f32.mrb[0].mxu0
      %v2780 = vadd.f32 0.0, %v2779
      %v2781 = vpop.f32.mrb[0].mxu0
      %2782 = vmatprep.mubr.f32.mxu0 0.0
      %2783 = vmatmul.mubr.f32.gmra.mrb[0].mxu0 %v604
      %v2784 = vpop.f32.mrb[0].mxu0
      %v2785 = vadd.f32 0.0, %v2784
      %v2786 = vpop.f32.mrb[0].mxu0
      %2787 = vmatprep.mubr.f32.mxu0 0.0
      %2788 = vmatmul.mubr.f32.gmra.mrb[0].mxu0 %v606
      %v2789 = vpop.f32.mrb[0].mxu0
      %v2790 = vadd.f32 0.0, %v2789
      %v2791 = vpop.f32.mrb[0].mxu0
      %2792 = vmatprep.mubr.f32.mxu0 0.0
      %2793 = vmatmul.mubr.f32.gmra.mrb[0].mxu0 %v608
      %v2794 = vpop.f32.mrb[0].mxu0
      %v2795 = vadd.f32 0.0, %v2794
      %v2796 = vpop.f32.mrb[0].mxu0
      %2797 = vmatprep.mubr.f32.mxu0 0.0
      %2798 = vmatmul.mubr.f32.gmra.mrb[0].mxu0 %v610
      %v2799 = vpop.f32.mrb[0].mxu0
      %v2800 = vadd.f32 0.0, %v2799
      %v2801 = vpop.f32.mrb[0].mxu0
      %2802 = vmatprep.mubr.f32.mxu0 0.0
      %2803 = vmatmul.mubr.f32.gmra.mrb[0].mxu0 %v612
      %v2804 = vpop.f32.mrb[0].mxu0
      %v2805 = vadd.f32 0.0, %v2804
      %v2806 = vpop.f32.mrb[0].mxu0
      %2807 = vmatprep.mubr.f32.mxu0 0.0
      %2808 = vmatmul.mubr.f32.gmra.mrb[0].mxu0 %v614
      %v2809 = vpop.f32.mrb[0].mxu0
      %v2810 = vadd.f32 0.0, %v2809
      %v2811 = vpop.f32.mrb[0].mxu0
      %2812 = vmatprep.mubr.f32.mxu0 0.0
      %2813 = vmatmul.mubr.f32.gmra.mrb[0].mxu0 %v616
      %v2814 = vpop.f32.mrb[0].mxu0
      %v2815 = vadd.f32 0.0, %v2814
      %v2816 = vpop.f32.mrb[0].mxu0
      %2817 = vmatprep.mubr.f32.mxu0 0.0
      %2818 = vmatmul.mubr.f32.gmra.mrb[0].mxu0 %v618
      %v2819 = vpop.f32.mrb[0].mxu0
      %v2820 = vadd.f32 0.0, %v2819
      %v2821 = vpop.f32.mrb[0].mxu0
      %2822 = vmatprep.mubr.f32.mxu0 0.0
      %2823 = vmatmul.mubr.f32.gmra.mrb[0].mxu0 %v620
      %v2824 = vpop.f32.mrb[0].mxu0
      %v2825 = vadd.f32 0.0, %v2824
      %v2826 = vpop.f32.mrb[0].mxu0
      %2827 = vmatprep.mubr.f32.mxu0 0.0
      %2828 = vmatmul.mubr.f32.gmra.mrb[0].mxu0 %v622
      %v2829 = vpop.f32.mrb[0].mxu0
      %v2830 = vadd.f32 0.0, %v2829
      %v2831 = vpop.f32.mrb[0].mxu0
      %2832 = vmatprep.mubr.f32.mxu0 0.0
      %2833 = vmatmul.mubr.f32.gmra.mrb[0].mxu0 %v624
      %v2834 = vpop.f32.mrb[0].mxu0
      %v2835 = vadd.f32 0.0, %v2834
      %v2836 = vpop.f32.mrb[0].mxu0
      %2837 = vmatprep.mubr.f32.mxu0 0.0
      %2838 = vmatmul.mubr.f32.gmra.mrb[0].mxu0 %v626
      %v2839 = vpop.f32.mrb[0].mxu0
      %v2840 = vadd.f32 0.0, %v2839
      %v2841 = vpop.f32.mrb[0].mxu0
      %2842 = vmatprep.mubr.f32.mxu0 0.0
      %2843 = vmatmul.mubr.f32.gmra.mrb[0].mxu0 %v628
      %v2844 = vpop.f32.mrb[0].mxu0
      %v2845 = vadd.f32 0.0, %v2844
      %v2846 = vpop.f32.mrb[0].mxu0
      %2847 = vmatprep.mubr.f32.mxu0 0.0
      %2848 = vmatmul.mubr.f32.gmra.mrb[0].mxu0 %v630
      %v2849 = vpop.f32.mrb[0].mxu0
      %v2850 = vadd.f32 0.0, %v2849
      %v2851 = vpop.f32.mrb[0].mxu0
      %2852 = vmatprep.mubr.f32.mxu0 0.0
      %2853 = vmatmul.mubr.f32.gmra.mrb[0].mxu0 %v632
      %v2854 = vpop.f32.mrb[0].mxu0
      %v2855 = vadd.f32 0.0, %v2854
      %v2856 = vpop.f32.mrb[0].mxu0
      %2857 = vmatprep.mubr.f32.mxu0 0.0
      %2858 = vmatmul.mubr.f32.gmra.mrb[0].mxu0 %v634
      %v2859 = vpop.f32.mrb[0].mxu0
      %v2860 = vadd.f32 0.0, %v2859
      %v2861 = vpop.f32.mrb[0].mxu0
      %2862 = vmatprep.mubr.f32.mxu0 0.0
      %2863 = vmatmul.mubr.f32.gmra.mrb[0].mxu0 %v1840
      %v2864 = vpop.f32.mrb[0].mxu0
      %v2865 = vadd.f32 0.0, %v2864
      %v2866 = vpop.f32.mrb[0].mxu0
      %2867 = vmatprep.mubr.f32.mxu0 0.0
      %2868 = vmatmul.mubr.f32.gmra.mrb[0].mxu0 %v1842
      %v2869 = vpop.f32.mrb[0].mxu0
      %v2870 = vadd.f32 0.0, %v2869
      %v2871 = vpop.f32.mrb[0].mxu0
      %2872 = vmatprep.mubr.f32.mxu0 0.0
      %2873 = vmatmul.mubr.f32.gmra.mrb[0].mxu0 %v2651
      %v2874 = vpop.f32.mrb[0].mxu0
      %v2875 = vadd.f32 0.0, %v2874
      %v2876 = vpop.f32.mrb[0].mxu0
      %2877 = vmatprep.mubr.f32.mxu0 0.0
      %2878 = vmatmul.mubr.f32.gmra.mrb[0].mxu0 %v2653
      %v2879 = vpop.f32.mrb[0].mxu0
      %v2880 = vadd.f32 0.0, %v2879
      %v2881 = vpop.f32.mrb[0].mxu0
      %2882 = vdwg.mxu0
      %v2883 = vadd.f32 %v2611, %v2725
      %v2884 = vadd.f32 %v2612, %v2730
      %v2885 = vadd.f32 %v2613, %v2735
      %v2886 = vadd.f32 %v2614, %v2740
      %v2887 = vadd.f32 %v2615, %v2745
      %v2888 = vadd.f32 %v2616, %v2750
      %v2889 = vadd.f32 %v2617, %v2755
      %v2890 = vadd.f32 %v2618, %v2760
      %v2891 = vadd.f32 %v2619, %v2765
      %v2892 = vadd.f32 %v2620, %v2770
      %v2893 = vadd.f32 %v2621, %v2775
      %v2894 = vadd.f32 %v2622, %v2780
      %v2895 = vadd.f32 %v2623, %v2785
      %v2896 = vadd.f32 %v2624, %v2790
      %v2897 = vadd.f32 %v2625, %v2795
      %v2898 = vadd.f32 %v2626, %v2800
      %v2899 = vadd.f32 %v2627, %v2805
      %v2900 = vadd.f32 %v2628, %v2810
      %v2901 = vadd.f32 %v2629, %v2815
      %v2902 = vadd.f32 %v2630, %v2820
      %v2903 = vadd.f32 %v2631, %v2825
      %v2904 = vadd.f32 %v2632, %v2830
      %v2905 = vadd.f32 %v2633, %v2835
      %v2906 = vadd.f32 %v2634, %v2840
      %v2907 = vadd.f32 %v2635, %v2845
      %v2908 = vadd.f32 %v2636, %v2850
      %v2909 = vadd.f32 %v2637, %v2855
      %v2910 = vadd.f32 %v2638, %v2860
      %v2911 = vadd.f32 %v2639, %v2865
      %v2912 = vadd.f32 %v2640, %v2870
      %v2913 = vadd.f32 %v2641, %v2875
      %v2914 = vadd.f32 %v2642, %v2880
      %v2915 = vrot.slane %v437, 2
      %v2916 = vrot.slane %v438, 2
      %v2917 = vsel %vm1157, %v2915, %v2916
      %v2918 = vrot.slane %v439, 2
      %v2919 = vsel %vm1157, %v2916, %v2918
      %s2920 = scalar_lea.vmem %s1, 32
      %v2921 = vld [vmem:[%s2920] sm:$0xf]
      %v2922 = vsel %vm297, %v2917, 0
      %v2924 = vsel %vm297, %v2919, 0
      %v2927 = vsel %vm636, %v2921, 0
      %2929 = vmatprep.subr.mxu0 0.0
      %2930 = vmatpush1.msra.mxu0 %v2927
      %2931 = vmatprep.subr.mxu0 0.0
      %2932 = vmatpush1.msra.mxu0 0.0
      %2933 = vmatprep.subr.mxu0 0.0
      %2934 = vmatpush1.msra.mxu0 0.0
      %2935 = vmatprep.subr.mxu0 0.0
      %2936 = vmatpush1.msra.mxu0 0.0
      %2937 = vmatprep.subr.mxu0 0.0
      %2938 = vmatpush1.msra.mxu0 0.0
      %2939 = vmatprep.subr.mxu0 0.0
      %2940 = vmatpush1.msra.mxu0 0.0
      %2941 = vmatprep.subr.mxu0 0.0
      %2942 = vmatpush1.msra.mxu0 0.0
      %2943 = vmatprep.subr.mxu0 0.0
      %2944 = vmatpush1.msra.mxu0 0.0
      %2945 = vmatprep.subr.mxu0 0.0
      %2946 = vmatpush1.msra.mxu0 0.0
      %2947 = vmatprep.subr.mxu0 0.0
      %2948 = vmatpush1.msra.mxu0 0.0
      %2949 = vmatprep.subr.mxu0 0.0
      %2950 = vmatpush1.msra.mxu0 0.0
      %2951 = vmatprep.subr.mxu0 0.0
      %2952 = vmatpush1.msra.mxu0 0.0
      %2953 = vmatprep.subr.mxu0 0.0
      %2954 = vmatpush1.msra.mxu0 0.0
      %2955 = vmatprep.subr.mxu0 0.0
      %2956 = vmatpush1.msra.mxu0 0.0
      %2957 = vmatprep.subr.mxu0 0.0
      %2958 = vmatpush1.msra.mxu0 0.0
      %2959 = vmatprep.subr.mxu0 0.0
      %2960 = vmatpush1.msra.mxu0 0.0
      %2961 = vmatprep.subr.mxu0 0.0
      %2962 = vmatpush1.msra.mxu0 0.0
      %2963 = vmatprep.subr.mxu0 0.0
      %2964 = vmatpush1.msra.mxu0 0.0
      %2965 = vmatprep.subr.mxu0 0.0
      %2966 = vmatpush1.msra.mxu0 0.0
      %2967 = vmatprep.subr.mxu0 0.0
      %2968 = vmatpush1.msra.mxu0 0.0
      %2969 = vmatprep.subr.mxu0 0.0
      %2970 = vmatpush1.msra.mxu0 0.0
      %2971 = vmatprep.subr.mxu0 0.0
      %2972 = vmatpush1.msra.mxu0 0.0
      %2973 = vmatprep.subr.mxu0 0.0
      %2974 = vmatpush1.msra.mxu0 0.0
      %2975 = vmatprep.subr.mxu0 0.0
      %2976 = vmatpush1.msra.mxu0 0.0
      %2977 = vmatprep.subr.mxu0 0.0
      %2978 = vmatpush1.msra.mxu0 0.0
      %2979 = vmatprep.subr.mxu0 0.0
      %2980 = vmatpush1.msra.mxu0 0.0
      %2981 = vmatprep.subr.mxu0 0.0
      %2982 = vmatpush1.msra.mxu0 0.0
      %2983 = vmatprep.subr.mxu0 0.0
      %2984 = vmatpush1.msra.mxu0 0.0
      %2985 = vmatprep.subr.mxu0 0.0
      %2986 = vmatpush1.msra.mxu0 0.0
      %2987 = vmatprep.subr.mxu0 0.0
      %2988 = vmatpush1.msra.mxu0 0.0
      %2989 = vmatprep.subr.mxu0 0.0
      %2990 = vmatpush1.msra.mxu0 0.0
      %2991 = vmatprep.subr.mxu0 0.0
      %2992 = vmatpush1.msra.mxu0 0.0
      %2993 = vmatprep.mubr.f32.mxu0 0.0
      %2994 = vmatmul.mubr.f32.gmra.mrb[0].mxu0 %v1248
      %v2995 = vpop.f32.mrb[0].mxu0
      %v2996 = vadd.f32 0.0, %v2995
      %v2997 = vpop.f32.mrb[0].mxu0
      %2998 = vmatprep.mubr.f32.mxu0 0.0
      %2999 = vmatmul.mubr.f32.gmra.mrb[0].mxu0 %v1250
      %v3000 = vpop.f32.mrb[0].mxu0
      %v3001 = vadd.f32 0.0, %v3000
      %v3002 = vpop.f32.mrb[0].mxu0
      %3003 = vmatprep.mubr.f32.mxu0 0.0
      %3004 = vmatmul.mubr.f32.gmra.mrb[0].mxu0 %v1252
      %v3005 = vpop.f32.mrb[0].mxu0
      %v3006 = vadd.f32 0.0, %v3005
      %v3007 = vpop.f32.mrb[0].mxu0
      %3008 = vmatprep.mubr.f32.mxu0 0.0
      %3009 = vmatmul.mubr.f32.gmra.mrb[0].mxu0 %v1254
      %v3010 = vpop.f32.mrb[0].mxu0
      %v3011 = vadd.f32 0.0, %v3010
      %v3012 = vpop.f32.mrb[0].mxu0
      %3013 = vmatprep.mubr.f32.mxu0 0.0
      %3014 = vmatmul.mubr.f32.gmra.mrb[0].mxu0 %v1256
      %v3015 = vpop.f32.mrb[0].mxu0
      %v3016 = vadd.f32 0.0, %v3015
      %v3017 = vpop.f32.mrb[0].mxu0
      %3018 = vmatprep.mubr.f32.mxu0 0.0
      %3019 = vmatmul.mubr.f32.gmra.mrb[0].mxu0 %v1258
      %v3020 = vpop.f32.mrb[0].mxu0
      %v3021 = vadd.f32 0.0, %v3020
      %v3022 = vpop.f32.mrb[0].mxu0
      %3023 = vmatprep.mubr.f32.mxu0 0.0
      %3024 = vmatmul.mubr.f32.gmra.mrb[0].mxu0 %v1260
      %v3025 = vpop.f32.mrb[0].mxu0
      %v3026 = vadd.f32 0.0, %v3025
      %v3027 = vpop.f32.mrb[0].mxu0
      %3028 = vmatprep.mubr.f32.mxu0 0.0
      %3029 = vmatmul.mubr.f32.gmra.mrb[0].mxu0 %v1262
      %v3030 = vpop.f32.mrb[0].mxu0
      %v3031 = vadd.f32 0.0, %v3030
      %v3032 = vpop.f32.mrb[0].mxu0
      %3033 = vmatprep.mubr.f32.mxu0 0.0
      %3034 = vmatmul.mubr.f32.gmra.mrb[0].mxu0 %v1264
      %v3035 = vpop.f32.mrb[0].mxu0
      %v3036 = vadd.f32 0.0, %v3035
      %v3037 = vpop.f32.mrb[0].mxu0
      %3038 = vmatprep.mubr.f32.mxu0 0.0
      %3039 = vmatmul.mubr.f32.gmra.mrb[0].mxu0 %v1266
      %v3040 = vpop.f32.mrb[0].mxu0
      %v3041 = vadd.f32 0.0, %v3040
      %v3042 = vpop.f32.mrb[0].mxu0
      %3043 = vmatprep.mubr.f32.mxu0 0.0
      %3044 = vmatmul.mubr.f32.gmra.mrb[0].mxu0 %v1268
      %v3045 = vpop.f32.mrb[0].mxu0
      %v3046 = vadd.f32 0.0, %v3045
      %v3047 = vpop.f32.mrb[0].mxu0
      %3048 = vmatprep.mubr.f32.mxu0 0.0
      %3049 = vmatmul.mubr.f32.gmra.mrb[0].mxu0 %v1270
      %v3050 = vpop.f32.mrb[0].mxu0
      %v3051 = vadd.f32 0.0, %v3050
      %v3052 = vpop.f32.mrb[0].mxu0
      %3053 = vmatprep.mubr.f32.mxu0 0.0
      %3054 = vmatmul.mubr.f32.gmra.mrb[0].mxu0 %v1272
      %v3055 = vpop.f32.mrb[0].mxu0
      %v3056 = vadd.f32 0.0, %v3055
      %v3057 = vpop.f32.mrb[0].mxu0
      %3058 = vmatprep.mubr.f32.mxu0 0.0
      %3059 = vmatmul.mubr.f32.gmra.mrb[0].mxu0 %v1274
      %v3060 = vpop.f32.mrb[0].mxu0
      %v3061 = vadd.f32 0.0, %v3060
      %v3062 = vpop.f32.mrb[0].mxu0
      %3063 = vmatprep.mubr.f32.mxu0 0.0
      %3064 = vmatmul.mubr.f32.gmra.mrb[0].mxu0 %v1276
      %v3065 = vpop.f32.mrb[0].mxu0
      %v3066 = vadd.f32 0.0, %v3065
      %v3067 = vpop.f32.mrb[0].mxu0
      %3068 = vmatprep.mubr.f32.mxu0 0.0
      %3069 = vmatmul.mubr.f32.gmra.mrb[0].mxu0 %v1278
      %v3070 = vpop.f32.mrb[0].mxu0
      %v3071 = vadd.f32 0.0, %v3070
      %v3072 = vpop.f32.mrb[0].mxu0
      %3073 = vmatprep.mubr.f32.mxu0 0.0
      %3074 = vmatmul.mubr.f32.gmra.mrb[0].mxu0 %v1280
      %v3075 = vpop.f32.mrb[0].mxu0
      %v3076 = vadd.f32 0.0, %v3075
      %v3077 = vpop.f32.mrb[0].mxu0
      %3078 = vmatprep.mubr.f32.mxu0 0.0
      %3079 = vmatmul.mubr.f32.gmra.mrb[0].mxu0 %v1282
      %v3080 = vpop.f32.mrb[0].mxu0
      %v3081 = vadd.f32 0.0, %v3080
      %v3082 = vpop.f32.mrb[0].mxu0
      %3083 = vmatprep.mubr.f32.mxu0 0.0
      %3084 = vmatmul.mubr.f32.gmra.mrb[0].mxu0 %v1284
      %v3085 = vpop.f32.mrb[0].mxu0
      %v3086 = vadd.f32 0.0, %v3085
      %v3087 = vpop.f32.mrb[0].mxu0
      %3088 = vmatprep.mubr.f32.mxu0 0.0
      %3089 = vmatmul.mubr.f32.gmra.mrb[0].mxu0 %v1286
      %v3090 = vpop.f32.mrb[0].mxu0
      %v3091 = vadd.f32 0.0, %v3090
      %v3092 = vpop.f32.mrb[0].mxu0
      %3093 = vmatprep.mubr.f32.mxu0 0.0
      %3094 = vmatmul.mubr.f32.gmra.mrb[0].mxu0 %v1288
      %v3095 = vpop.f32.mrb[0].mxu0
      %v3096 = vadd.f32 0.0, %v3095
      %v3097 = vpop.f32.mrb[0].mxu0
      %3098 = vmatprep.mubr.f32.mxu0 0.0
      %3099 = vmatmul.mubr.f32.gmra.mrb[0].mxu0 %v1290
      %v3100 = vpop.f32.mrb[0].mxu0
      %v3101 = vadd.f32 0.0, %v3100
      %v3102 = vpop.f32.mrb[0].mxu0
      %3103 = vmatprep.mubr.f32.mxu0 0.0
      %3104 = vmatmul.mubr.f32.gmra.mrb[0].mxu0 %v1292
      %v3105 = vpop.f32.mrb[0].mxu0
      %v3106 = vadd.f32 0.0, %v3105
      %v3107 = vpop.f32.mrb[0].mxu0
      %3108 = vmatprep.mubr.f32.mxu0 0.0
      %3109 = vmatmul.mubr.f32.gmra.mrb[0].mxu0 %v1294
      %v3110 = vpop.f32.mrb[0].mxu0
      %v3111 = vadd.f32 0.0, %v3110
      %v3112 = vpop.f32.mrb[0].mxu0
      %3113 = vmatprep.mubr.f32.mxu0 0.0
      %3114 = vmatmul.mubr.f32.gmra.mrb[0].mxu0 %v1296
      %v3115 = vpop.f32.mrb[0].mxu0
      %v3116 = vadd.f32 0.0, %v3115
      %v3117 = vpop.f32.mrb[0].mxu0
      %3118 = vmatprep.mubr.f32.mxu0 0.0
      %3119 = vmatmul.mubr.f32.gmra.mrb[0].mxu0 %v1298
      %v3120 = vpop.f32.mrb[0].mxu0
      %v3121 = vadd.f32 0.0, %v3120
      %v3122 = vpop.f32.mrb[0].mxu0
      %3123 = vmatprep.mubr.f32.mxu0 0.0
      %3124 = vmatmul.mubr.f32.gmra.mrb[0].mxu0 %v1300
      %v3125 = vpop.f32.mrb[0].mxu0
      %v3126 = vadd.f32 0.0, %v3125
      %v3127 = vpop.f32.mrb[0].mxu0
      %3128 = vmatprep.mubr.f32.mxu0 0.0
      %3129 = vmatmul.mubr.f32.gmra.mrb[0].mxu0 %v1302
      %v3130 = vpop.f32.mrb[0].mxu0
      %v3131 = vadd.f32 0.0, %v3130
      %v3132 = vpop.f32.mrb[0].mxu0
      %3133 = vmatprep.mubr.f32.mxu0 0.0
      %3134 = vmatmul.mubr.f32.gmra.mrb[0].mxu0 %v2111
      %v3135 = vpop.f32.mrb[0].mxu0
      %v3136 = vadd.f32 0.0, %v3135
      %v3137 = vpop.f32.mrb[0].mxu0
      %3138 = vmatprep.mubr.f32.mxu0 0.0
      %3139 = vmatmul.mubr.f32.gmra.mrb[0].mxu0 %v2113
      %v3140 = vpop.f32.mrb[0].mxu0
      %v3141 = vadd.f32 0.0, %v3140
      %v3142 = vpop.f32.mrb[0].mxu0
      %3143 = vmatprep.mubr.f32.mxu0 0.0
      %3144 = vmatmul.mubr.f32.gmra.mrb[0].mxu0 %v2922
      %v3145 = vpop.f32.mrb[0].mxu0
      %v3146 = vadd.f32 0.0, %v3145
      %v3147 = vpop.f32.mrb[0].mxu0
      %3148 = vmatprep.mubr.f32.mxu0 0.0
      %3149 = vmatmul.mubr.f32.gmra.mrb[0].mxu0 %v2924
      %v3150 = vpop.f32.mrb[0].mxu0
      %v3151 = vadd.f32 0.0, %v3150
      %v3152 = vpop.f32.mrb[0].mxu0
      %3153 = vdwg.mxu0
      %v3154 = vadd.f32 %v2883, %v2996
      %v3155 = vadd.f32 %v2884, %v3001
      %v3156 = vadd.f32 %v2885, %v3006
      %v3157 = vadd.f32 %v2886, %v3011
      %v3158 = vadd.f32 %v2887, %v3016
      %v3159 = vadd.f32 %v2888, %v3021
      %v3160 = vadd.f32 %v2889, %v3026
      %v3161 = vadd.f32 %v2890, %v3031
      %v3162 = vadd.f32 %v2891, %v3036
      %v3163 = vadd.f32 %v2892, %v3041
      %v3164 = vadd.f32 %v2893, %v3046
      %v3165 = vadd.f32 %v2894, %v3051
      %v3166 = vadd.f32 %v2895, %v3056
      %v3167 = vadd.f32 %v2896, %v3061
      %v3168 = vadd.f32 %v2897, %v3066
      %v3169 = vadd.f32 %v2898, %v3071
      %v3170 = vadd.f32 %v2899, %v3076
      %v3171 = vadd.f32 %v2900, %v3081
      %v3172 = vadd.f32 %v2901, %v3086
      %v3173 = vadd.f32 %v2902, %v3091
      %v3174 = vadd.f32 %v2903, %v3096
      %v3175 = vadd.f32 %v2904, %v3101
      %v3176 = vadd.f32 %v2905, %v3106
      %v3177 = vadd.f32 %v2906, %v3111
      %v3178 = vadd.f32 %v2907, %v3116
      %v3179 = vadd.f32 %v2908, %v3121
      %v3180 = vadd.f32 %v2909, %v3126
      %v3181 = vadd.f32 %v2910, %v3131
      %v3182 = vadd.f32 %v2911, %v3136
      %v3183 = vadd.f32 %v2912, %v3141
      %v3184 = vadd.f32 %v2913, %v3146
      %v3185 = vadd.f32 %v2914, %v3151
      %v3186 = vld [vmem:[%s2] sm:$0x1]
      %v3188 = vlaneseq
      %v3189 = vshrl.u32 %v3188, 7
      %v3190 = vsub.s32 0, %v3189
      %v3191 = vrot.slane %v3186, %v3190
      %v3193 = vadd.f32 %v3154, %v3191
      %v3194 = vadd.f32 %v3155, %v3191
      %v3195 = vadd.f32 %v3156, %v3191
      %v3196 = vadd.f32 %v3157, %v3191
      %v3197 = vadd.f32 %v3158, %v3191
      %v3198 = vadd.f32 %v3159, %v3191
      %v3199 = vadd.f32 %v3160, %v3191
      %v3200 = vadd.f32 %v3161, %v3191
      %v3201 = vadd.f32 %v3162, %v3191
      %v3202 = vadd.f32 %v3163, %v3191
      %v3203 = vadd.f32 %v3164, %v3191
      %v3204 = vadd.f32 %v3165, %v3191
      %v3205 = vadd.f32 %v3166, %v3191
      %v3206 = vadd.f32 %v3167, %v3191
      %v3207 = vadd.f32 %v3168, %v3191
      %v3208 = vadd.f32 %v3169, %v3191
      %v3209 = vadd.f32 %v3170, %v3191
      %v3210 = vadd.f32 %v3171, %v3191
      %v3211 = vadd.f32 %v3172, %v3191
      %v3212 = vadd.f32 %v3173, %v3191
      %v3213 = vadd.f32 %v3174, %v3191
      %v3214 = vadd.f32 %v3175, %v3191
      %v3215 = vadd.f32 %v3176, %v3191
      %v3216 = vadd.f32 %v3177, %v3191
      %v3217 = vadd.f32 %v3178, %v3191
      %v3218 = vadd.f32 %v3179, %v3191
      %v3219 = vadd.f32 %v3180, %v3191
      %v3220 = vadd.f32 %v3181, %v3191
      %v3221 = vadd.f32 %v3182, %v3191
      %v3222 = vadd.f32 %v3183, %v3191
      %v3223 = vadd.f32 %v3184, %v3191
      %v3224 = vadd.f32 %v3185, %v3191
      %v3225 = vmax.f32 %v3193, 0.0
      %v3226 = vmax.f32 %v3194, 0.0
      %v3227 = vmax.f32 %v3195, 0.0
      %v3228 = vmax.f32 %v3196, 0.0
      %v3229 = vmax.f32 %v3197, 0.0
      %v3230 = vmax.f32 %v3198, 0.0
      %v3231 = vmax.f32 %v3199, 0.0
      %v3232 = vmax.f32 %v3200, 0.0
      %v3233 = vmax.f32 %v3201, 0.0
      %v3234 = vmax.f32 %v3202, 0.0
      %v3235 = vmax.f32 %v3203, 0.0
      %v3236 = vmax.f32 %v3204, 0.0
      %v3237 = vmax.f32 %v3205, 0.0
      %v3238 = vmax.f32 %v3206, 0.0
      %v3239 = vmax.f32 %v3207, 0.0
      %v3240 = vmax.f32 %v3208, 0.0
      %v3241 = vmax.f32 %v3209, 0.0
      %v3242 = vmax.f32 %v3210, 0.0
      %v3243 = vmax.f32 %v3211, 0.0
      %v3244 = vmax.f32 %v3212, 0.0
      %v3245 = vmax.f32 %v3213, 0.0
      %v3246 = vmax.f32 %v3214, 0.0
      %v3247 = vmax.f32 %v3215, 0.0
      %v3248 = vmax.f32 %v3216, 0.0
      %v3249 = vmax.f32 %v3217, 0.0
      %v3250 = vmax.f32 %v3218, 0.0
      %v3251 = vmax.f32 %v3219, 0.0
      %v3252 = vmax.f32 %v3220, 0.0
      %v3253 = vmax.f32 %v3221, 0.0
      %v3254 = vmax.f32 %v3222, 0.0
      %v3255 = vmax.f32 %v3223, 0.0
      %v3256 = vmax.f32 %v3224, 0.0
      %vm3257 = vcmask 64512
      %3258 = vst.msk [vmem:[#allocation3] sm:$0xff] %vm3257, 0.0
      %3259 = vst.msk [vmem:[#allocation3 + $0x8] sm:$0xff] %vm3257, 0.0
      %vm3260 = vcmask 58368
      %3261 = vst.msk [vmem:[#allocation3 + $0x10] sm:$0x3] %vm3260, 0.0
      %3262 = vst.msk [vmem:[#allocation3 + $0x18] sm:$0xff] %vm3257, 0.0
      %3263 = vst.msk [vmem:[#allocation3 + $0x20] sm:$0xff] %vm3257, 0.0
      %3264 = vst.msk [vmem:[#allocation3 + $0x28] sm:$0x3] %vm3260, 0.0
      %3265 = vst.msk [vmem:[#allocation3 + $0x30] sm:$0xff] %vm3257, 0.0
      %3266 = vst.msk [vmem:[#allocation3 + $0x38] sm:$0xff] %vm3257, 0.0
      %3267 = vst.msk [vmem:[#allocation3 + $0x40] sm:$0x3] %vm3260, 0.0
      %3268 = vst.msk [vmem:[#allocation3 + $0x48] sm:$0xff] %vm3257, 0.0
      %3269 = vst.msk [vmem:[#allocation3 + $0x50] sm:$0xff] %vm3257, 0.0
      %3270 = vst.msk [vmem:[#allocation3 + $0x58] sm:$0x3] %vm3260, 0.0
      %3271 = vst.msk [vmem:[#allocation3 + $0x60] sm:$0xff] %vm3257, 0.0
      %3272 = vst.msk [vmem:[#allocation3 + $0x68] sm:$0xff] %vm3257, 0.0
      %3273 = vst.msk [vmem:[#allocation3 + $0x70] sm:$0x3] %vm3260, 0.0
      %3274 = vst.msk [vmem:[#allocation3 + $0x78] sm:$0xff] %vm3257, 0.0
      %3275 = vst.msk [vmem:[#allocation3 + $0x80] sm:$0xff] %vm3257, 0.0
      %3276 = vst.msk [vmem:[#allocation3 + $0x88] sm:$0x3] %vm3260, 0.0
      %3277 = vst.msk [vmem:[#allocation3 + $0x90] sm:$0xff] %vm3257, 0.0
      %3278 = vst.msk [vmem:[#allocation3 + $0x98] sm:$0xff] %vm3257, 0.0
      %3279 = vst.msk [vmem:[#allocation3 + $0xa0] sm:$0x3] %vm3260, 0.0
      %3280 = vst.msk [vmem:[#allocation3 + $0xa8] sm:$0xff] %vm3257, 0.0
      %3281 = vst.msk [vmem:[#allocation3 + $0xb0] sm:$0xff] %vm3257, 0.0
      %3282 = vst.msk [vmem:[#allocation3 + $0xb8] sm:$0x3] %vm3260, 0.0
      %3283 = vst.msk [vmem:[#allocation3 + $0xc0] sm:$0xff] %vm3257, 0.0
      %3284 = vst.msk [vmem:[#allocation3 + $0xc8] sm:$0xff] %vm3257, 0.0
      %3285 = vst.msk [vmem:[#allocation3 + $0xd0] sm:$0x3] %vm3260, 0.0
      %3286 = vst.msk [vmem:[#allocation3 + $0xd8] sm:$0xff] %vm3257, 0.0
      %3287 = vst.msk [vmem:[#allocation3 + $0xe0] sm:$0xff] %vm3257, 0.0
      %3288 = vst.msk [vmem:[#allocation3 + $0xe8] sm:$0x3] %vm3260, 0.0
      %3289 = vst.msk [vmem:[#allocation3 + $0xf0] sm:$0xff] %vm3257, 0.0
      %3290 = vst.msk [vmem:[#allocation3 + $0xf8] sm:$0xff] %vm3257, 0.0
      %3291 = vst.msk [vmem:[#allocation3 + $0x100] sm:$0x3] %vm3260, 0.0
      %3292 = vst.msk [vmem:[#allocation3 + $0x108] sm:$0xff] %vm3257, 0.0
      %3293 = vst.msk [vmem:[#allocation3 + $0x110] sm:$0xff] %vm3257, 0.0
      %3294 = vst.msk [vmem:[#allocation3 + $0x118] sm:$0x3] %vm3260, 0.0
      %3295 = vst.msk [vmem:[#allocation3 + $0x120] sm:$0xff] %vm3257, 0.0
      %3296 = vst.msk [vmem:[#allocation3 + $0x128] sm:$0xff] %vm3257, 0.0
      %3297 = vst.msk [vmem:[#allocation3 + $0x130] sm:$0x3] %vm3260, 0.0
      %3298 = vst.msk [vmem:[#allocation3 + $0x138] sm:$0xff] %vm3257, 0.0
      %3299 = vst.msk [vmem:[#allocation3 + $0x140] sm:$0xff] %vm3257, 0.0
      %3300 = vst.msk [vmem:[#allocation3 + $0x148] sm:$0x3] %vm3260, 0.0
      %3301 = vst.msk [vmem:[#allocation3 + $0x150] sm:$0xff] %vm3257, 0.0
      %3302 = vst.msk [vmem:[#allocation3 + $0x158] sm:$0xff] %vm3257, 0.0
      %3303 = vst.msk [vmem:[#allocation3 + $0x160] sm:$0x3] %vm3260, 0.0
      %3304 = vst.msk [vmem:[#allocation3 + $0x168] sm:$0xff] %vm3257, 0.0
      %3305 = vst.msk [vmem:[#allocation3 + $0x170] sm:$0xff] %vm3257, 0.0
      %3306 = vst.msk [vmem:[#allocation3 + $0x178] sm:$0x3] %vm3260, 0.0
      %3307 = vst.msk [vmem:[#allocation3 + $0x180] sm:$0xff] %vm3257, 0.0
      %3308 = vst.msk [vmem:[#allocation3 + $0x188] sm:$0xff] %vm3257, 0.0
      %3309 = vst.msk [vmem:[#allocation3 + $0x190] sm:$0x3] %vm3260, 0.0
      %3310 = vst.msk [vmem:[#allocation3 + $0x198] sm:$0xff] %vm3257, 0.0
      %3311 = vst.msk [vmem:[#allocation3 + $0x1a0] sm:$0xff] %vm3257, 0.0
      %3312 = vst.msk [vmem:[#allocation3 + $0x1a8] sm:$0x3] %vm3260, 0.0
      %s3313 = scalar_lea.vmem [#allocation3], 24
      %3314 = vst.msk [vmem:[%s3313 + $0x1] sm:$0xff] %vm3257, %v3225
      %3315 = vst.msk [vmem:[%s3313 + $0x9] sm:$0xff] %vm3257, %v3226
      %3316 = vst.msk [vmem:[%s3313 + $0x19] sm:$0xff] %vm3257, %v3227
      %3317 = vst.msk [vmem:[%s3313 + $0x21] sm:$0xff] %vm3257, %v3228
      %3318 = vst.msk [vmem:[%s3313 + $0x31] sm:$0xff] %vm3257, %v3229
      %3319 = vst.msk [vmem:[%s3313 + $0x39] sm:$0xff] %vm3257, %v3230
      %3320 = vst.msk [vmem:[%s3313 + $0x49] sm:$0xff] %vm3257, %v3231
      %3321 = vst.msk [vmem:[%s3313 + $0x51] sm:$0xff] %vm3257, %v3232
      %3322 = vst.msk [vmem:[%s3313 + $0x61] sm:$0xff] %vm3257, %v3233
      %3323 = vst.msk [vmem:[%s3313 + $0x69] sm:$0xff] %vm3257, %v3234
      %3324 = vst.msk [vmem:[%s3313 + $0x79] sm:$0xff] %vm3257, %v3235
      %3325 = vst.msk [vmem:[%s3313 + $0x81] sm:$0xff] %vm3257, %v3236
      %3326 = vst.msk [vmem:[%s3313 + $0x91] sm:$0xff] %vm3257, %v3237
      %3327 = vst.msk [vmem:[%s3313 + $0x99] sm:$0xff] %vm3257, %v3238
      %3328 = vst.msk [vmem:[%s3313 + $0xa9] sm:$0xff] %vm3257, %v3239
      %3329 = vst.msk [vmem:[%s3313 + $0xb1] sm:$0xff] %vm3257, %v3240
      %3330 = vst.msk [vmem:[%s3313 + $0xc1] sm:$0xff] %vm3257, %v3241
      %3331 = vst.msk [vmem:[%s3313 + $0xc9] sm:$0xff] %vm3257, %v3242
      %3332 = vst.msk [vmem:[%s3313 + $0xd9] sm:$0xff] %vm3257, %v3243
      %3333 = vst.msk [vmem:[%s3313 + $0xe1] sm:$0xff] %vm3257, %v3244
      %3334 = vst.msk [vmem:[%s3313 + $0xf1] sm:$0xff] %vm3257, %v3245
      %3335 = vst.msk [vmem:[%s3313 + $0xf9] sm:$0xff] %vm3257, %v3246
      %3336 = vst.msk [vmem:[%s3313 + $0x109] sm:$0xff] %vm3257, %v3247
      %3337 = vst.msk [vmem:[%s3313 + $0x111] sm:$0xff] %vm3257, %v3248
      %3338 = vst.msk [vmem:[%s3313 + $0x121] sm:$0xff] %vm3257, %v3249
      %3339 = vst.msk [vmem:[%s3313 + $0x129] sm:$0xff] %vm3257, %v3250
      %3340 = vst.msk [vmem:[%s3313 + $0x139] sm:$0xff] %vm3257, %v3251
      %3341 = vst.msk [vmem:[%s3313 + $0x141] sm:$0xff] %vm3257, %v3252
      %3342 = vst.msk [vmem:[%s3313 + $0x151] sm:$0xff] %vm3257, %v3253
      %3343 = vst.msk [vmem:[%s3313 + $0x159] sm:$0xff] %vm3257, %v3254
      %3344 = vst.msk [vmem:[%s3313 + $0x169] sm:$0xff] %vm3257, %v3255
      %3345 = vst.msk [vmem:[%s3313 + $0x171] sm:$0xff] %vm3257, %v3256
      %v3346 = vld [vmem:[#allocation3] sm:$0xff]
      %v3347 = vld [vmem:[#allocation3 + $0x8] sm:$0xff]
      %v3348 = vld [vmem:[#allocation3 + $0x10] sm:$0x3]
      %v3349 = vld [vmem:[#allocation3 + $0x18] sm:$0xff]
      %v3350 = vld [vmem:[#allocation3 + $0x20] sm:$0xff]
      %v3351 = vld [vmem:[#allocation3 + $0x28] sm:$0x3]
      %v3352 = vld [vmem:[#allocation3 + $0x30] sm:$0xff]
      %v3353 = vld [vmem:[#allocation3 + $0x38] sm:$0xff]
      %v3354 = vld [vmem:[#allocation3 + $0x40] sm:$0x3]
      %v3355 = vld [vmem:[#allocation3 + $0x48] sm:$0xff]
      %v3356 = vld [vmem:[#allocation3 + $0x50] sm:$0xff]
      %v3357 = vld [vmem:[#allocation3 + $0x58] sm:$0x3]
      %v3358 = vld [vmem:[#allocation3 + $0x60] sm:$0xff]
      %v3359 = vld [vmem:[#allocation3 + $0x68] sm:$0xff]
      %v3360 = vld [vmem:[#allocation3 + $0x70] sm:$0x3]
      %v3361 = vld [vmem:[#allocation3 + $0x78] sm:$0xff]
      %v3362 = vld [vmem:[#allocation3 + $0x80] sm:$0xff]
      %v3363 = vld [vmem:[#allocation3 + $0x88] sm:$0x3]
      %v3364 = vld [vmem:[#allocation3 + $0x90] sm:$0xff]
      %v3365 = vld [vmem:[#allocation3 + $0x98] sm:$0xff]
      %v3366 = vld [vmem:[#allocation3 + $0xa0] sm:$0x3]
      %v3367 = vld [vmem:[#allocation3 + $0xa8] sm:$0xff]
      %v3368 = vld [vmem:[#allocation3 + $0xb0] sm:$0xff]
      %v3369 = vld [vmem:[#allocation3 + $0xb8] sm:$0x3]
      %v3370 = vld [vmem:[#allocation3 + $0xc0] sm:$0xff]
      %v3371 = vld [vmem:[#allocation3 + $0xc8] sm:$0xff]
      %v3372 = vld [vmem:[#allocation3 + $0xd0] sm:$0x3]
      %v3373 = vld [vmem:[#allocation3 + $0xd8] sm:$0xff]
      %v3374 = vld [vmem:[#allocation3 + $0xe0] sm:$0xff]
      %v3375 = vld [vmem:[#allocation3 + $0xe8] sm:$0x3]
      %v3376 = vld [vmem:[#allocation3 + $0xf0] sm:$0xff]
      %v3377 = vld [vmem:[#allocation3 + $0xf8] sm:$0xff]
      %v3378 = vld [vmem:[#allocation3 + $0x100] sm:$0x3]
      %v3379 = vld [vmem:[#allocation3 + $0x108] sm:$0xff]
      %v3380 = vld [vmem:[#allocation3 + $0x110] sm:$0xff]
      %v3381 = vld [vmem:[#allocation3 + $0x118] sm:$0x3]
      %v3382 = vld [vmem:[#allocation3 + $0x120] sm:$0xff]
      %v3383 = vld [vmem:[#allocation3 + $0x128] sm:$0xff]
      %v3384 = vld [vmem:[#allocation3 + $0x130] sm:$0x3]
      %v3385 = vld [vmem:[#allocation3 + $0x138] sm:$0xff]
      %v3386 = vld [vmem:[#allocation3 + $0x140] sm:$0xff]
      %v3387 = vld [vmem:[#allocation3 + $0x148] sm:$0x3]
      %v3388 = vld [vmem:[#allocation3 + $0x150] sm:$0xff]
      %v3389 = vld [vmem:[#allocation3 + $0x158] sm:$0xff]
      %v3390 = vld [vmem:[#allocation3 + $0x160] sm:$0x3]
      %v3391 = vld [vmem:[#allocation3 + $0x168] sm:$0xff]
      %v3392 = vld [vmem:[#allocation3 + $0x170] sm:$0xff]
      %v3393 = vld [vmem:[#allocation3 + $0x178] sm:$0x3]
      %v3394 = vld [vmem:[#allocation3 + $0x180] sm:$0xff]
      %v3395 = vld [vmem:[#allocation3 + $0x188] sm:$0xff]
      %v3396 = vld [vmem:[#allocation3 + $0x190] sm:$0x3]
      %v3397 = vld [vmem:[#allocation3 + $0x198] sm:$0xff]
      %v3398 = vld [vmem:[#allocation3 + $0x1a0] sm:$0xff]
      %v3399 = vld [vmem:[#allocation3 + $0x1a8] sm:$0x3]
      %v3400 = vld [vmem:[%s3] sm:$0xff]
      %v3449 = vrot.slane %v3346, 1
      %v3450 = vrot.slane %v3347, 1
      %v3451 = vsel %vm489, %v3449, %v3450
      %v3452 = vrot.slane %v3348, 1
      %v3453 = vsel %vm489, %v3450, %v3452
      %v3454 = vrot.slane %v3349, 1
      %v3455 = vrot.slane %v3350, 1
      %v3456 = vsel %vm489, %v3454, %v3455
      %v3457 = vrot.slane %v3351, 1
      %v3458 = vsel %vm489, %v3455, %v3457
      %v3459 = vrot.slane %v3352, 1
      %v3460 = vrot.slane %v3353, 1
      %v3461 = vsel %vm489, %v3459, %v3460
      %v3462 = vrot.slane %v3354, 1
      %v3463 = vsel %vm489, %v3460, %v3462
      %v3464 = vrot.slane %v3355, 1
      %v3465 = vrot.slane %v3356, 1
      %v3466 = vsel %vm489, %v3464, %v3465
      %v3467 = vrot.slane %v3357, 1
      %v3468 = vsel %vm489, %v3465, %v3467
      %v3469 = vrot.slane %v3358, 1
      %v3470 = vrot.slane %v3359, 1
      %v3471 = vsel %vm489, %v3469, %v3470
      %v3472 = vrot.slane %v3360, 1
      %v3473 = vsel %vm489, %v3470, %v3472
      %v3474 = vrot.slane %v3361, 1
      %v3475 = vrot.slane %v3362, 1
      %v3476 = vsel %vm489, %v3474, %v3475
      %v3477 = vrot.slane %v3363, 1
      %v3478 = vsel %vm489, %v3475, %v3477
      %v3479 = vrot.slane %v3364, 1
      %v3480 = vrot.slane %v3365, 1
      %v3481 = vsel %vm489, %v3479, %v3480
      %v3482 = vrot.slane %v3366, 1
      %v3483 = vsel %vm489, %v3480, %v3482
      %v3484 = vrot.slane %v3367, 1
      %v3485 = vrot.slane %v3368, 1
      %v3486 = vsel %vm489, %v3484, %v3485
      %v3487 = vrot.slane %v3369, 1
      %v3488 = vsel %vm489, %v3485, %v3487
      %v3489 = vrot.slane %v3370, 1
      %v3490 = vrot.slane %v3371, 1
      %v3491 = vsel %vm489, %v3489, %v3490
      %v3492 = vrot.slane %v3372, 1
      %v3493 = vsel %vm489, %v3490, %v3492
      %v3494 = vrot.slane %v3373, 1
      %v3495 = vrot.slane %v3374, 1
      %v3496 = vsel %vm489, %v3494, %v3495
      %v3497 = vrot.slane %v3375, 1
      %v3498 = vsel %vm489, %v3495, %v3497
      %v3499 = vrot.slane %v3376, 1
      %v3500 = vrot.slane %v3377, 1
      %v3501 = vsel %vm489, %v3499, %v3500
      %v3502 = vrot.slane %v3378, 1
      %v3503 = vsel %vm489, %v3500, %v3502
      %v3504 = vrot.slane %v3379, 1
      %v3505 = vrot.slane %v3380, 1
      %v3506 = vsel %vm489, %v3504, %v3505
      %v3507 = vrot.slane %v3381, 1
      %v3508 = vsel %vm489, %v3505, %v3507
      %v3509 = vrot.slane %v3382, 1
      %v3510 = vrot.slane %v3383, 1
      %v3511 = vsel %vm489, %v3509, %v3510
      %v3512 = vrot.slane %v3384, 1
      %v3513 = vsel %vm489, %v3510, %v3512
      %v3514 = vrot.slane %v3385, 1
      %v3515 = vrot.slane %v3386, 1
      %v3516 = vsel %vm489, %v3514, %v3515
      %v3517 = vrot.slane %v3387, 1
      %v3518 = vsel %vm489, %v3515, %v3517
      %v3519 = vrot.slane %v3388, 1
      %v3520 = vrot.slane %v3389, 1
      %v3521 = vsel %vm489, %v3519, %v3520
      %v3522 = vrot.slane %v3390, 1
      %v3523 = vsel %vm489, %v3520, %v3522
      %v3524 = vrot.slane %v3391, 1
      %v3525 = vrot.slane %v3392, 1
      %v3526 = vsel %vm489, %v3524, %v3525
      %v3527 = vrot.slane %v3393, 1
      %v3528 = vsel %vm489, %v3525, %v3527
      %s3529 = scalar_lea.vmem %s3, 8
      %v3530 = vld [vmem:[%s3529] sm:$0xff]
      %v3531 = vsel %vm3257, %v3451, 0
      %v3533 = vsel %vm3257, %v3453, 0
      %v3535 = vsel %vm3257, %v3456, 0
      %v3537 = vsel %vm3257, %v3458, 0
      %v3539 = vsel %vm3257, %v3461, 0
      %v3541 = vsel %vm3257, %v3463, 0
      %v3543 = vsel %vm3257, %v3466, 0
      %v3545 = vsel %vm3257, %v3468, 0
      %v3547 = vsel %vm3257, %v3471, 0
      %v3549 = vsel %vm3257, %v3473, 0
      %v3551 = vsel %vm3257, %v3476, 0
      %v3553 = vsel %vm3257, %v3478, 0
      %v3555 = vsel %vm3257, %v3481, 0
      %v3557 = vsel %vm3257, %v3483, 0
      %v3559 = vsel %vm3257, %v3486, 0
      %v3561 = vsel %vm3257, %v3488, 0
      %v3563 = vsel %vm3257, %v3491, 0
      %v3565 = vsel %vm3257, %v3493, 0
      %v3567 = vsel %vm3257, %v3496, 0
      %v3569 = vsel %vm3257, %v3498, 0
      %v3571 = vsel %vm3257, %v3501, 0
      %v3573 = vsel %vm3257, %v3503, 0
      %v3575 = vsel %vm3257, %v3506, 0
      %v3577 = vsel %vm3257, %v3508, 0
      %v3579 = vsel %vm3257, %v3511, 0
      %v3581 = vsel %vm3257, %v3513, 0
      %v3583 = vsel %vm3257, %v3516, 0
      %v3585 = vsel %vm3257, %v3518, 0
      %v3587 = vsel %vm3257, %v3521, 0
      %v3589 = vsel %vm3257, %v3523, 0
      %v3591 = vsel %vm3257, %v3526, 0
      %v3593 = vsel %vm3257, %v3528, 0
      %3595 = vmatprep.subr.mxu0 0.0
      %3596 = vmatpush1.msra.mxu0 %v3530
      %3597 = vmatprep.subr.mxu0 0.0
      %3598 = vmatpush1.msra.mxu0 0.0
      %3599 = vmatprep.subr.mxu0 0.0
      %3600 = vmatpush1.msra.mxu0 0.0
      %3601 = vmatprep.subr.mxu0 0.0
      %3602 = vmatpush1.msra.mxu0 0.0
      %3603 = vmatprep.subr.mxu0 0.0
      %3604 = vmatpush1.msra.mxu0 0.0
      %3605 = vmatprep.subr.mxu0 0.0
      %3606 = vmatpush1.msra.mxu0 0.0
      %3607 = vmatprep.subr.mxu0 0.0
      %3608 = vmatpush1.msra.mxu0 0.0
      %3609 = vmatprep.subr.mxu0 0.0
      %3610 = vmatpush1.msra.mxu0 0.0
      %3611 = vmatprep.subr.mxu0 0.0
      %3612 = vmatpush1.msra.mxu0 0.0
      %3613 = vmatprep.subr.mxu0 0.0
      %3614 = vmatpush1.msra.mxu0 0.0
      %3615 = vmatprep.subr.mxu0 0.0
      %3616 = vmatpush1.msra.mxu0 0.0
      %3617 = vmatprep.subr.mxu0 0.0
      %3618 = vmatpush1.msra.mxu0 0.0
      %3619 = vmatprep.subr.mxu0 0.0
      %3620 = vmatpush1.msra.mxu0 0.0
      %3621 = vmatprep.subr.mxu0 0.0
      %3622 = vmatpush1.msra.mxu0 0.0
      %3623 = vmatprep.subr.mxu0 0.0
      %3624 = vmatpush1.msra.mxu0 0.0
      %3625 = vmatprep.subr.mxu0 0.0
      %3626 = vmatpush1.msra.mxu0 0.0
      %3627 = vmatprep.subr.mxu0 0.0
      %3628 = vmatpush1.msra.mxu0 0.0
      %3629 = vmatprep.subr.mxu0 0.0
      %3630 = vmatpush1.msra.mxu0 0.0
      %3631 = vmatprep.subr.mxu0 0.0
      %3632 = vmatpush1.msra.mxu0 0.0
      %3633 = vmatprep.subr.mxu0 0.0
      %3634 = vmatpush1.msra.mxu0 0.0
      %3635 = vmatprep.subr.mxu0 0.0
      %3636 = vmatpush1.msra.mxu0 0.0
      %3637 = vmatprep.subr.mxu0 0.0
      %3638 = vmatpush1.msra.mxu0 0.0
      %3639 = vmatprep.subr.mxu0 0.0
      %3640 = vmatpush1.msra.mxu0 0.0
      %3641 = vmatprep.subr.mxu0 0.0
      %3642 = vmatpush1.msra.mxu0 0.0
      %3643 = vmatprep.subr.mxu0 0.0
      %3644 = vmatpush1.msra.mxu0 0.0
      %3645 = vmatprep.subr.mxu0 0.0
      %3646 = vmatpush1.msra.mxu0 0.0
      %3647 = vmatprep.subr.mxu0 0.0
      %3648 = vmatpush1.msra.mxu0 0.0
      %3649 = vmatprep.subr.mxu0 0.0
      %3650 = vmatpush1.msra.mxu0 0.0
      %3651 = vmatprep.subr.mxu0 0.0
      %3652 = vmatpush1.msra.mxu0 0.0
      %3653 = vmatprep.subr.mxu0 0.0
      %3654 = vmatpush1.msra.mxu0 0.0
      %3655 = vmatprep.subr.mxu0 0.0
      %3656 = vmatpush1.msra.mxu0 0.0
      %3657 = vmatprep.subr.mxu0 0.0
      %3658 = vmatpush1.msra.mxu0 0.0
      %3659 = vmatprep.mubr.f32.mxu0 0.0
      %3660 = vmatmul.mubr.f32.gmra.mrb[0].mxu0 %v3531
      %v3661 = vpop.f32.mrb[0].mxu0
      %v3662 = vadd.f32 0.0, %v3661
      %v3663 = vpop.f32.mrb[0].mxu0
      %3664 = vmatprep.mubr.f32.mxu0 0.0
      %3665 = vmatmul.mubr.f32.gmra.mrb[0].mxu0 %v3533
      %v3666 = vpop.f32.mrb[0].mxu0
      %v3667 = vadd.f32 0.0, %v3666
      %v3668 = vpop.f32.mrb[0].mxu0
      %3669 = vmatprep.mubr.f32.mxu0 0.0
      %3670 = vmatmul.mubr.f32.gmra.mrb[0].mxu0 %v3535
      %v3671 = vpop.f32.mrb[0].mxu0
      %v3672 = vadd.f32 0.0, %v3671
      %v3673 = vpop.f32.mrb[0].mxu0
      %3674 = vmatprep.mubr.f32.mxu0 0.0
      %3675 = vmatmul.mubr.f32.gmra.mrb[0].mxu0 %v3537
      %v3676 = vpop.f32.mrb[0].mxu0
      %v3677 = vadd.f32 0.0, %v3676
      %v3678 = vpop.f32.mrb[0].mxu0
      %3679 = vmatprep.mubr.f32.mxu0 0.0
      %3680 = vmatmul.mubr.f32.gmra.mrb[0].mxu0 %v3539
      %v3681 = vpop.f32.mrb[0].mxu0
      %v3682 = vadd.f32 0.0, %v3681
      %v3683 = vpop.f32.mrb[0].mxu0
      %3684 = vmatprep.mubr.f32.mxu0 0.0
      %3685 = vmatmul.mubr.f32.gmra.mrb[0].mxu0 %v3541
      %v3686 = vpop.f32.mrb[0].mxu0
      %v3687 = vadd.f32 0.0, %v3686
      %v3688 = vpop.f32.mrb[0].mxu0
      %3689 = vmatprep.mubr.f32.mxu0 0.0
      %3690 = vmatmul.mubr.f32.gmra.mrb[0].mxu0 %v3543
      %v3691 = vpop.f32.mrb[0].mxu0
      %v3692 = vadd.f32 0.0, %v3691
      %v3693 = vpop.f32.mrb[0].mxu0
      %3694 = vmatprep.mubr.f32.mxu0 0.0
      %3695 = vmatmul.mubr.f32.gmra.mrb[0].mxu0 %v3545
      %v3696 = vpop.f32.mrb[0].mxu0
      %v3697 = vadd.f32 0.0, %v3696
      %v3698 = vpop.f32.mrb[0].mxu0
      %3699 = vmatprep.mubr.f32.mxu0 0.0
      %3700 = vmatmul.mubr.f32.gmra.mrb[0].mxu0 %v3547
      %v3701 = vpop.f32.mrb[0].mxu0
      %v3702 = vadd.f32 0.0, %v3701
      %v3703 = vpop.f32.mrb[0].mxu0
      %3704 = vmatprep.mubr.f32.mxu0 0.0
      %3705 = vmatmul.mubr.f32.gmra.mrb[0].mxu0 %v3549
      %v3706 = vpop.f32.mrb[0].mxu0
      %v3707 = vadd.f32 0.0, %v3706
      %v3708 = vpop.f32.mrb[0].mxu0
      %3709 = vmatprep.mubr.f32.mxu0 0.0
      %3710 = vmatmul.mubr.f32.gmra.mrb[0].mxu0 %v3551
      %v3711 = vpop.f32.mrb[0].mxu0
      %v3712 = vadd.f32 0.0, %v3711
      %v3713 = vpop.f32.mrb[0].mxu0
      %3714 = vmatprep.mubr.f32.mxu0 0.0
      %3715 = vmatmul.mubr.f32.gmra.mrb[0].mxu0 %v3553
      %v3716 = vpop.f32.mrb[0].mxu0
      %v3717 = vadd.f32 0.0, %v3716
      %v3718 = vpop.f32.mrb[0].mxu0
      %3719 = vmatprep.mubr.f32.mxu0 0.0
      %3720 = vmatmul.mubr.f32.gmra.mrb[0].mxu0 %v3555
      %v3721 = vpop.f32.mrb[0].mxu0
      %v3722 = vadd.f32 0.0, %v3721
      %v3723 = vpop.f32.mrb[0].mxu0
      %3724 = vmatprep.mubr.f32.mxu0 0.0
      %3725 = vmatmul.mubr.f32.gmra.mrb[0].mxu0 %v3557
      %v3726 = vpop.f32.mrb[0].mxu0
      %v3727 = vadd.f32 0.0, %v3726
      %v3728 = vpop.f32.mrb[0].mxu0
      %3729 = vmatprep.mubr.f32.mxu0 0.0
      %3730 = vmatmul.mubr.f32.gmra.mrb[0].mxu0 %v3559
      %v3731 = vpop.f32.mrb[0].mxu0
      %v3732 = vadd.f32 0.0, %v3731
      %v3733 = vpop.f32.mrb[0].mxu0
      %3734 = vmatprep.mubr.f32.mxu0 0.0
      %3735 = vmatmul.mubr.f32.gmra.mrb[0].mxu0 %v3561
      %v3736 = vpop.f32.mrb[0].mxu0
      %v3737 = vadd.f32 0.0, %v3736
      %v3738 = vpop.f32.mrb[0].mxu0
      %3739 = vmatprep.mubr.f32.mxu0 0.0
      %3740 = vmatmul.mubr.f32.gmra.mrb[0].mxu0 %v3563
      %v3741 = vpop.f32.mrb[0].mxu0
      %v3742 = vadd.f32 0.0, %v3741
      %v3743 = vpop.f32.mrb[0].mxu0
      %3744 = vmatprep.mubr.f32.mxu0 0.0
      %3745 = vmatmul.mubr.f32.gmra.mrb[0].mxu0 %v3565
      %v3746 = vpop.f32.mrb[0].mxu0
      %v3747 = vadd.f32 0.0, %v3746
      %v3748 = vpop.f32.mrb[0].mxu0
      %3749 = vmatprep.mubr.f32.mxu0 0.0
      %3750 = vmatmul.mubr.f32.gmra.mrb[0].mxu0 %v3567
      %v3751 = vpop.f32.mrb[0].mxu0
      %v3752 = vadd.f32 0.0, %v3751
      %v3753 = vpop.f32.mrb[0].mxu0
      %3754 = vmatprep.mubr.f32.mxu0 0.0
      %3755 = vmatmul.mubr.f32.gmra.mrb[0].mxu0 %v3569
      %v3756 = vpop.f32.mrb[0].mxu0
      %v3757 = vadd.f32 0.0, %v3756
      %v3758 = vpop.f32.mrb[0].mxu0
      %3759 = vmatprep.mubr.f32.mxu0 0.0
      %3760 = vmatmul.mubr.f32.gmra.mrb[0].mxu0 %v3571
      %v3761 = vpop.f32.mrb[0].mxu0
      %v3762 = vadd.f32 0.0, %v3761
      %v3763 = vpop.f32.mrb[0].mxu0
      %3764 = vmatprep.mubr.f32.mxu0 0.0
      %3765 = vmatmul.mubr.f32.gmra.mrb[0].mxu0 %v3573
      %v3766 = vpop.f32.mrb[0].mxu0
      %v3767 = vadd.f32 0.0, %v3766
      %v3768 = vpop.f32.mrb[0].mxu0
      %3769 = vmatprep.mubr.f32.mxu0 0.0
      %3770 = vmatmul.mubr.f32.gmra.mrb[0].mxu0 %v3575
      %v3771 = vpop.f32.mrb[0].mxu0
      %v3772 = vadd.f32 0.0, %v3771
      %v3773 = vpop.f32.mrb[0].mxu0
      %3774 = vmatprep.mubr.f32.mxu0 0.0
      %3775 = vmatmul.mubr.f32.gmra.mrb[0].mxu0 %v3577
      %v3776 = vpop.f32.mrb[0].mxu0
      %v3777 = vadd.f32 0.0, %v3776
      %v3778 = vpop.f32.mrb[0].mxu0
      %3779 = vmatprep.mubr.f32.mxu0 0.0
      %3780 = vmatmul.mubr.f32.gmra.mrb[0].mxu0 %v3579
      %v3781 = vpop.f32.mrb[0].mxu0
      %v3782 = vadd.f32 0.0, %v3781
      %v3783 = vpop.f32.mrb[0].mxu0
      %3784 = vmatprep.mubr.f32.mxu0 0.0
      %3785 = vmatmul.mubr.f32.gmra.mrb[0].mxu0 %v3581
      %v3786 = vpop.f32.mrb[0].mxu0
      %v3787 = vadd.f32 0.0, %v3786
      %v3788 = vpop.f32.mrb[0].mxu0
      %3789 = vmatprep.mubr.f32.mxu0 0.0
      %3790 = vmatmul.mubr.f32.gmra.mrb[0].mxu0 %v3583
      %v3791 = vpop.f32.mrb[0].mxu0
      %v3792 = vadd.f32 0.0, %v3791
      %v3793 = vpop.f32.mrb[0].mxu0
      %3794 = vmatprep.mubr.f32.mxu0 0.0
      %3795 = vmatmul.mubr.f32.gmra.mrb[0].mxu0 %v3585
      %v3796 = vpop.f32.mrb[0].mxu0
      %v3797 = vadd.f32 0.0, %v3796
      %v3798 = vpop.f32.mrb[0].mxu0
      %3799 = vmatprep.mubr.f32.mxu0 0.0
      %3800 = vmatmul.mubr.f32.gmra.mrb[0].mxu0 %v3587
      %v3801 = vpop.f32.mrb[0].mxu0
      %v3802 = vadd.f32 0.0, %v3801
      %v3803 = vpop.f32.mrb[0].mxu0
      %3804 = vmatprep.mubr.f32.mxu0 0.0
      %3805 = vmatmul.mubr.f32.gmra.mrb[0].mxu0 %v3589
      %v3806 = vpop.f32.mrb[0].mxu0
      %v3807 = vadd.f32 0.0, %v3806
      %v3808 = vpop.f32.mrb[0].mxu0
      %3809 = vmatprep.mubr.f32.mxu0 0.0
      %3810 = vmatmul.mubr.f32.gmra.mrb[0].mxu0 %v3591
      %v3811 = vpop.f32.mrb[0].mxu0
      %v3812 = vadd.f32 0.0, %v3811
      %v3813 = vpop.f32.mrb[0].mxu0
      %3814 = vmatprep.mubr.f32.mxu0 0.0
      %3815 = vmatmul.mubr.f32.gmra.mrb[0].mxu0 %v3593
      %v3816 = vpop.f32.mrb[0].mxu0
      %v3817 = vadd.f32 0.0, %v3816
      %v3818 = vpop.f32.mrb[0].mxu0
      %3819 = vdwg.mxu0
      %v3820 = vsel %vm3257, %v3346, 0
      %v3822 = vsel %vm3257, %v3347, 0
      %v3824 = vsel %vm3257, %v3349, 0
      %v3826 = vsel %vm3257, %v3350, 0
      %v3828 = vsel %vm3257, %v3352, 0
      %v3830 = vsel %vm3257, %v3353, 0
      %v3832 = vsel %vm3257, %v3355, 0
      %v3834 = vsel %vm3257, %v3356, 0
      %v3836 = vsel %vm3257, %v3358, 0
      %v3838 = vsel %vm3257, %v3359, 0
      %v3840 = vsel %vm3257, %v3361, 0
      %v3842 = vsel %vm3257, %v3362, 0
      %v3844 = vsel %vm3257, %v3364, 0
      %v3846 = vsel %vm3257, %v3365, 0
      %v3848 = vsel %vm3257, %v3367, 0
      %v3850 = vsel %vm3257, %v3368, 0
      %v3852 = vsel %vm3257, %v3370, 0
      %v3854 = vsel %vm3257, %v3371, 0
      %v3856 = vsel %vm3257, %v3373, 0
      %v3858 = vsel %vm3257, %v3374, 0
      %v3860 = vsel %vm3257, %v3376, 0
      %v3862 = vsel %vm3257, %v3377, 0
      %v3864 = vsel %vm3257, %v3379, 0
      %v3866 = vsel %vm3257, %v3380, 0
      %v3868 = vsel %vm3257, %v3382, 0
      %v3870 = vsel %vm3257, %v3383, 0
      %v3872 = vsel %vm3257, %v3385, 0
      %v3874 = vsel %vm3257, %v3386, 0
      %v3876 = vsel %vm3257, %v3388, 0
      %v3878 = vsel %vm3257, %v3389, 0
      %v3880 = vsel %vm3257, %v3391, 0
      %v3882 = vsel %vm3257, %v3392, 0
      %3884 = vmatprep.subr.mxu0 0.0
      %3885 = vmatpush1.msra.mxu0 %v3400
      %3886 = vmatprep.subr.mxu0 0.0
      %3887 = vmatpush1.msra.mxu0 0.0
      %3888 = vmatprep.subr.mxu0 0.0
      %3889 = vmatpush1.msra.mxu0 0.0
      %3890 = vmatprep.subr.mxu0 0.0
      %3891 = vmatpush1.msra.mxu0 0.0
      %3892 = vmatprep.subr.mxu0 0.0
      %3893 = vmatpush1.msra.mxu0 0.0
      %3894 = vmatprep.subr.mxu0 0.0
      %3895 = vmatpush1.msra.mxu0 0.0
      %3896 = vmatprep.subr.mxu0 0.0
      %3897 = vmatpush1.msra.mxu0 0.0
      %3898 = vmatprep.subr.mxu0 0.0
      %3899 = vmatpush1.msra.mxu0 0.0
      %3900 = vmatprep.subr.mxu0 0.0
      %3901 = vmatpush1.msra.mxu0 0.0
      %3902 = vmatprep.subr.mxu0 0.0
      %3903 = vmatpush1.msra.mxu0 0.0
      %3904 = vmatprep.subr.mxu0 0.0
      %3905 = vmatpush1.msra.mxu0 0.0
      %3906 = vmatprep.subr.mxu0 0.0
      %3907 = vmatpush1.msra.mxu0 0.0
      %3908 = vmatprep.subr.mxu0 0.0
      %3909 = vmatpush1.msra.mxu0 0.0
      %3910 = vmatprep.subr.mxu0 0.0
      %3911 = vmatpush1.msra.mxu0 0.0
      %3912 = vmatprep.subr.mxu0 0.0
      %3913 = vmatpush1.msra.mxu0 0.0
      %3914 = vmatprep.subr.mxu0 0.0
      %3915 = vmatpush1.msra.mxu0 0.0
      %3916 = vmatprep.subr.mxu0 0.0
      %3917 = vmatpush1.msra.mxu0 0.0
      %3918 = vmatprep.subr.mxu0 0.0
      %3919 = vmatpush1.msra.mxu0 0.0
      %3920 = vmatprep.subr.mxu0 0.0
      %3921 = vmatpush1.msra.mxu0 0.0
      %3922 = vmatprep.subr.mxu0 0.0
      %3923 = vmatpush1.msra.mxu0 0.0
      %3924 = vmatprep.subr.mxu0 0.0
      %3925 = vmatpush1.msra.mxu0 0.0
      %3926 = vmatprep.subr.mxu0 0.0
      %3927 = vmatpush1.msra.mxu0 0.0
      %3928 = vmatprep.subr.mxu0 0.0
      %3929 = vmatpush1.msra.mxu0 0.0
      %3930 = vmatprep.subr.mxu0 0.0
      %3931 = vmatpush1.msra.mxu0 0.0
      %3932 = vmatprep.subr.mxu0 0.0
      %3933 = vmatpush1.msra.mxu0 0.0
      %3934 = vmatprep.subr.mxu0 0.0
      %3935 = vmatpush1.msra.mxu0 0.0
      %3936 = vmatprep.subr.mxu0 0.0
      %3937 = vmatpush1.msra.mxu0 0.0
      %3938 = vmatprep.subr.mxu0 0.0
      %3939 = vmatpush1.msra.mxu0 0.0
      %3940 = vmatprep.subr.mxu0 0.0
      %3941 = vmatpush1.msra.mxu0 0.0
      %3942 = vmatprep.subr.mxu0 0.0
      %3943 = vmatpush1.msra.mxu0 0.0
      %3944 = vmatprep.subr.mxu0 0.0
      %3945 = vmatpush1.msra.mxu0 0.0
      %3946 = vmatprep.subr.mxu0 0.0
      %3947 = vmatpush1.msra.mxu0 0.0
      %3948 = vmatprep.mubr.f32.mxu0 0.0
      %3949 = vmatmul.mubr.f32.gmra.mrb[0].mxu0 %v3820
      %v3950 = vpop.f32.mrb[0].mxu0
      %v3951 = vadd.f32 %v3662, %v3950
      %v3952 = vpop.f32.mrb[0].mxu0
      %3953 = vmatprep.mubr.f32.mxu0 0.0
      %3954 = vmatmul.mubr.f32.gmra.mrb[0].mxu0 %v3822
      %v3955 = vpop.f32.mrb[0].mxu0
      %v3956 = vadd.f32 %v3667, %v3955
      %v3957 = vpop.f32.mrb[0].mxu0
      %3958 = vmatprep.mubr.f32.mxu0 0.0
      %3959 = vmatmul.mubr.f32.gmra.mrb[0].mxu0 %v3824
      %v3960 = vpop.f32.mrb[0].mxu0
      %v3961 = vadd.f32 %v3672, %v3960
      %v3962 = vpop.f32.mrb[0].mxu0
      %3963 = vmatprep.mubr.f32.mxu0 0.0
      %3964 = vmatmul.mubr.f32.gmra.mrb[0].mxu0 %v3826
      %v3965 = vpop.f32.mrb[0].mxu0
      %v3966 = vadd.f32 %v3677, %v3965
      %v3967 = vpop.f32.mrb[0].mxu0
      %3968 = vmatprep.mubr.f32.mxu0 0.0
      %3969 = vmatmul.mubr.f32.gmra.mrb[0].mxu0 %v3828
      %v3970 = vpop.f32.mrb[0].mxu0
      %v3971 = vadd.f32 %v3682, %v3970
      %v3972 = vpop.f32.mrb[0].mxu0
      %3973 = vmatprep.mubr.f32.mxu0 0.0
      %3974 = vmatmul.mubr.f32.gmra.mrb[0].mxu0 %v3830
      %v3975 = vpop.f32.mrb[0].mxu0
      %v3976 = vadd.f32 %v3687, %v3975
      %v3977 = vpop.f32.mrb[0].mxu0
      %3978 = vmatprep.mubr.f32.mxu0 0.0
      %3979 = vmatmul.mubr.f32.gmra.mrb[0].mxu0 %v3832
      %v3980 = vpop.f32.mrb[0].mxu0
      %v3981 = vadd.f32 %v3692, %v3980
      %v3982 = vpop.f32.mrb[0].mxu0
      %3983 = vmatprep.mubr.f32.mxu0 0.0
      %3984 = vmatmul.mubr.f32.gmra.mrb[0].mxu0 %v3834
      %v3985 = vpop.f32.mrb[0].mxu0
      %v3986 = vadd.f32 %v3697, %v3985
      %v3987 = vpop.f32.mrb[0].mxu0
      %3988 = vmatprep.mubr.f32.mxu0 0.0
      %3989 = vmatmul.mubr.f32.gmra.mrb[0].mxu0 %v3836
      %v3990 = vpop.f32.mrb[0].mxu0
      %v3991 = vadd.f32 %v3702, %v3990
      %v3992 = vpop.f32.mrb[0].mxu0
      %3993 = vmatprep.mubr.f32.mxu0 0.0
      %3994 = vmatmul.mubr.f32.gmra.mrb[0].mxu0 %v3838
      %v3995 = vpop.f32.mrb[0].mxu0
      %v3996 = vadd.f32 %v3707, %v3995
      %v3997 = vpop.f32.mrb[0].mxu0
      %3998 = vmatprep.mubr.f32.mxu0 0.0
      %3999 = vmatmul.mubr.f32.gmra.mrb[0].mxu0 %v3840
      %v4000 = vpop.f32.mrb[0].mxu0
      %v4001 = vadd.f32 %v3712, %v4000
      %v4002 = vpop.f32.mrb[0].mxu0
      %4003 = vmatprep.mubr.f32.mxu0 0.0
      %4004 = vmatmul.mubr.f32.gmra.mrb[0].mxu0 %v3842
      %v4005 = vpop.f32.mrb[0].mxu0
      %v4006 = vadd.f32 %v3717, %v4005
      %v4007 = vpop.f32.mrb[0].mxu0
      %4008 = vmatprep.mubr.f32.mxu0 0.0
      %4009 = vmatmul.mubr.f32.gmra.mrb[0].mxu0 %v3844
      %v4010 = vpop.f32.mrb[0].mxu0
      %v4011 = vadd.f32 %v3722, %v4010
      %v4012 = vpop.f32.mrb[0].mxu0
      %4013 = vmatprep.mubr.f32.mxu0 0.0
      %4014 = vmatmul.mubr.f32.gmra.mrb[0].mxu0 %v3846
      %v4015 = vpop.f32.mrb[0].mxu0
      %v4016 = vadd.f32 %v3727, %v4015
      %v4017 = vpop.f32.mrb[0].mxu0
      %4018 = vmatprep.mubr.f32.mxu0 0.0
      %4019 = vmatmul.mubr.f32.gmra.mrb[0].mxu0 %v3848
      %v4020 = vpop.f32.mrb[0].mxu0
      %v4021 = vadd.f32 %v3732, %v4020
      %v4022 = vpop.f32.mrb[0].mxu0
      %4023 = vmatprep.mubr.f32.mxu0 0.0
      %4024 = vmatmul.mubr.f32.gmra.mrb[0].mxu0 %v3850
      %v4025 = vpop.f32.mrb[0].mxu0
      %v4026 = vadd.f32 %v3737, %v4025
      %v4027 = vpop.f32.mrb[0].mxu0
      %4028 = vmatprep.mubr.f32.mxu0 0.0
      %4029 = vmatmul.mubr.f32.gmra.mrb[0].mxu0 %v3852
      %v4030 = vpop.f32.mrb[0].mxu0
      %v4031 = vadd.f32 %v3742, %v4030
      %v4032 = vpop.f32.mrb[0].mxu0
      %4033 = vmatprep.mubr.f32.mxu0 0.0
      %4034 = vmatmul.mubr.f32.gmra.mrb[0].mxu0 %v3854
      %v4035 = vpop.f32.mrb[0].mxu0
      %v4036 = vadd.f32 %v3747, %v4035
      %v4037 = vpop.f32.mrb[0].mxu0
      %4038 = vmatprep.mubr.f32.mxu0 0.0
      %4039 = vmatmul.mubr.f32.gmra.mrb[0].mxu0 %v3856
      %v4040 = vpop.f32.mrb[0].mxu0
      %v4041 = vadd.f32 %v3752, %v4040
      %v4042 = vpop.f32.mrb[0].mxu0
      %4043 = vmatprep.mubr.f32.mxu0 0.0
      %4044 = vmatmul.mubr.f32.gmra.mrb[0].mxu0 %v3858
      %v4045 = vpop.f32.mrb[0].mxu0
      %v4046 = vadd.f32 %v3757, %v4045
      %v4047 = vpop.f32.mrb[0].mxu0
      %4048 = vmatprep.mubr.f32.mxu0 0.0
      %4049 = vmatmul.mubr.f32.gmra.mrb[0].mxu0 %v3860
      %v4050 = vpop.f32.mrb[0].mxu0
      %v4051 = vadd.f32 %v3762, %v4050
      %v4052 = vpop.f32.mrb[0].mxu0
      %4053 = vmatprep.mubr.f32.mxu0 0.0
      %4054 = vmatmul.mubr.f32.gmra.mrb[0].mxu0 %v3862
      %v4055 = vpop.f32.mrb[0].mxu0
      %v4056 = vadd.f32 %v3767, %v4055
      %v4057 = vpop.f32.mrb[0].mxu0
      %4058 = vmatprep.mubr.f32.mxu0 0.0
      %4059 = vmatmul.mubr.f32.gmra.mrb[0].mxu0 %v3864
      %v4060 = vpop.f32.mrb[0].mxu0
      %v4061 = vadd.f32 %v3772, %v4060
      %v4062 = vpop.f32.mrb[0].mxu0
      %4063 = vmatprep.mubr.f32.mxu0 0.0
      %4064 = vmatmul.mubr.f32.gmra.mrb[0].mxu0 %v3866
      %v4065 = vpop.f32.mrb[0].mxu0
      %v4066 = vadd.f32 %v3777, %v4065
      %v4067 = vpop.f32.mrb[0].mxu0
      %4068 = vmatprep.mubr.f32.mxu0 0.0
      %4069 = vmatmul.mubr.f32.gmra.mrb[0].mxu0 %v3868
      %v4070 = vpop.f32.mrb[0].mxu0
      %v4071 = vadd.f32 %v3782, %v4070
      %v4072 = vpop.f32.mrb[0].mxu0
      %4073 = vmatprep.mubr.f32.mxu0 0.0
      %4074 = vmatmul.mubr.f32.gmra.mrb[0].mxu0 %v3870
      %v4075 = vpop.f32.mrb[0].mxu0
      %v4076 = vadd.f32 %v3787, %v4075
      %v4077 = vpop.f32.mrb[0].mxu0
      %4078 = vmatprep.mubr.f32.mxu0 0.0
      %4079 = vmatmul.mubr.f32.gmra.mrb[0].mxu0 %v3872
      %v4080 = vpop.f32.mrb[0].mxu0
      %v4081 = vadd.f32 %v3792, %v4080
      %v4082 = vpop.f32.mrb[0].mxu0
      %4083 = vmatprep.mubr.f32.mxu0 0.0
      %4084 = vmatmul.mubr.f32.gmra.mrb[0].mxu0 %v3874
      %v4085 = vpop.f32.mrb[0].mxu0
      %v4086 = vadd.f32 %v3797, %v4085
      %v4087 = vpop.f32.mrb[0].mxu0
      %4088 = vmatprep.mubr.f32.mxu0 0.0
      %4089 = vmatmul.mubr.f32.gmra.mrb[0].mxu0 %v3876
      %v4090 = vpop.f32.mrb[0].mxu0
      %v4091 = vadd.f32 %v3802, %v4090
      %v4092 = vpop.f32.mrb[0].mxu0
      %4093 = vmatprep.mubr.f32.mxu0 0.0
      %4094 = vmatmul.mubr.f32.gmra.mrb[0].mxu0 %v3878
      %v4095 = vpop.f32.mrb[0].mxu0
      %v4096 = vadd.f32 %v3807, %v4095
      %v4097 = vpop.f32.mrb[0].mxu0
      %4098 = vmatprep.mubr.f32.mxu0 0.0
      %4099 = vmatmul.mubr.f32.gmra.mrb[0].mxu0 %v3880
      %v4100 = vpop.f32.mrb[0].mxu0
      %v4101 = vadd.f32 %v3812, %v4100
      %v4102 = vpop.f32.mrb[0].mxu0
      %4103 = vmatprep.mubr.f32.mxu0 0.0
      %4104 = vmatmul.mubr.f32.gmra.mrb[0].mxu0 %v3882
      %v4105 = vpop.f32.mrb[0].mxu0
      %v4106 = vadd.f32 %v3817, %v4105
      %v4107 = vpop.f32.mrb[0].mxu0
      %4108 = vdwg.mxu0
      %v4109 = vrot.slane %v3346, 2
      %v4110 = vrot.slane %v3347, 2
      %v4111 = vsel %vm1157, %v4109, %v4110
      %v4112 = vrot.slane %v3348, 2
      %v4113 = vsel %vm1157, %v4110, %v4112
      %v4114 = vrot.slane %v3349, 2
      %v4115 = vrot.slane %v3350, 2
      %v4116 = vsel %vm1157, %v4114, %v4115
      %v4117 = vrot.slane %v3351, 2
      %v4118 = vsel %vm1157, %v4115, %v4117
      %v4119 = vrot.slane %v3352, 2
      %v4120 = vrot.slane %v3353, 2
      %v4121 = vsel %vm1157, %v4119, %v4120
      %v4122 = vrot.slane %v3354, 2
      %v4123 = vsel %vm1157, %v4120, %v4122
      %v4124 = vrot.slane %v3355, 2
      %v4125 = vrot.slane %v3356, 2
      %v4126 = vsel %vm1157, %v4124, %v4125
      %v4127 = vrot.slane %v3357, 2
      %v4128 = vsel %vm1157, %v4125, %v4127
      %v4129 = vrot.slane %v3358, 2
      %v4130 = vrot.slane %v3359, 2
      %v4131 = vsel %vm1157, %v4129, %v4130
      %v4132 = vrot.slane %v3360, 2
      %v4133 = vsel %vm1157, %v4130, %v4132
      %v4134 = vrot.slane %v3361, 2
      %v4135 = vrot.slane %v3362, 2
      %v4136 = vsel %vm1157, %v4134, %v4135
      %v4137 = vrot.slane %v3363, 2
      %v4138 = vsel %vm1157, %v4135, %v4137
      %v4139 = vrot.slane %v3364, 2
      %v4140 = vrot.slane %v3365, 2
      %v4141 = vsel %vm1157, %v4139, %v4140
      %v4142 = vrot.slane %v3366, 2
      %v4143 = vsel %vm1157, %v4140, %v4142
      %v4144 = vrot.slane %v3367, 2
      %v4145 = vrot.slane %v3368, 2
      %v4146 = vsel %vm1157, %v4144, %v4145
      %v4147 = vrot.slane %v3369, 2
      %v4148 = vsel %vm1157, %v4145, %v4147
      %v4149 = vrot.slane %v3370, 2
      %v4150 = vrot.slane %v3371, 2
      %v4151 = vsel %vm1157, %v4149, %v4150
      %v4152 = vrot.slane %v3372, 2
      %v4153 = vsel %vm1157, %v4150, %v4152
      %v4154 = vrot.slane %v3373, 2
      %v4155 = vrot.slane %v3374, 2
      %v4156 = vsel %vm1157, %v4154, %v4155
      %v4157 = vrot.slane %v3375, 2
      %v4158 = vsel %vm1157, %v4155, %v4157
      %v4159 = vrot.slane %v3376, 2
      %v4160 = vrot.slane %v3377, 2
      %v4161 = vsel %vm1157, %v4159, %v4160
      %v4162 = vrot.slane %v3378, 2
      %v4163 = vsel %vm1157, %v4160, %v4162
      %v4164 = vrot.slane %v3379, 2
      %v4165 = vrot.slane %v3380, 2
      %v4166 = vsel %vm1157, %v4164, %v4165
      %v4167 = vrot.slane %v3381, 2
      %v4168 = vsel %vm1157, %v4165, %v4167
      %v4169 = vrot.slane %v3382, 2
      %v4170 = vrot.slane %v3383, 2
      %v4171 = vsel %vm1157, %v4169, %v4170
      %v4172 = vrot.slane %v3384, 2
      %v4173 = vsel %vm1157, %v4170, %v4172
      %v4174 = vrot.slane %v3385, 2
      %v4175 = vrot.slane %v3386, 2
      %v4176 = vsel %vm1157, %v4174, %v4175
      %v4177 = vrot.slane %v3387, 2
      %v4178 = vsel %vm1157, %v4175, %v4177
      %v4179 = vrot.slane %v3388, 2
      %v4180 = vrot.slane %v3389, 2
      %v4181 = vsel %vm1157, %v4179, %v4180
      %v4182 = vrot.slane %v3390, 2
      %v4183 = vsel %vm1157, %v4180, %v4182
      %v4184 = vrot.slane %v3391, 2
      %v4185 = vrot.slane %v3392, 2
      %v4186 = vsel %vm1157, %v4184, %v4185
      %v4187 = vrot.slane %v3393, 2
      %v4188 = vsel %vm1157, %v4185, %v4187
      %s4189 = scalar_lea.vmem %s3, 16
      %v4190 = vld [vmem:[%s4189] sm:$0xff]
      %v4191 = vsel %vm3257, %v4111, 0
      %v4193 = vsel %vm3257, %v4113, 0
      %v4195 = vsel %vm3257, %v4116, 0
      %v4197 = vsel %vm3257, %v4118, 0
      %v4199 = vsel %vm3257, %v4121, 0
      %v4201 = vsel %vm3257, %v4123, 0
      %v4203 = vsel %vm3257, %v4126, 0
      %v4205 = vsel %vm3257, %v4128, 0
      %v4207 = vsel %vm3257, %v4131, 0
      %v4209 = vsel %vm3257, %v4133, 0
      %v4211 = vsel %vm3257, %v4136, 0
      %v4213 = vsel %vm3257, %v4138, 0
      %v4215 = vsel %vm3257, %v4141, 0
      %v4217 = vsel %vm3257, %v4143, 0
      %v4219 = vsel %vm3257, %v4146, 0
      %v4221 = vsel %vm3257, %v4148, 0
      %v4223 = vsel %vm3257, %v4151, 0
      %v4225 = vsel %vm3257, %v4153, 0
      %v4227 = vsel %vm3257, %v4156, 0
      %v4229 = vsel %vm3257, %v4158, 0
      %v4231 = vsel %vm3257, %v4161, 0
      %v4233 = vsel %vm3257, %v4163, 0
      %v4235 = vsel %vm3257, %v4166, 0
      %v4237 = vsel %vm3257, %v4168, 0
      %v4239 = vsel %vm3257, %v4171, 0
      %v4241 = vsel %vm3257, %v4173, 0
      %v4243 = vsel %vm3257, %v4176, 0
      %v4245 = vsel %vm3257, %v4178, 0
      %v4247 = vsel %vm3257, %v4181, 0
      %v4249 = vsel %vm3257, %v4183, 0
      %v4251 = vsel %vm3257, %v4186, 0
      %v4253 = vsel %vm3257, %v4188, 0
      %4255 = vmatprep.subr.mxu0 0.0
      %4256 = vmatpush1.msra.mxu0 %v4190
      %4257 = vmatprep.subr.mxu0 0.0
      %4258 = vmatpush1.msra.mxu0 0.0
      %4259 = vmatprep.subr.mxu0 0.0
      %4260 = vmatpush1.msra.mxu0 0.0
      %4261 = vmatprep.subr.mxu0 0.0
      %4262 = vmatpush1.msra.mxu0 0.0
      %4263 = vmatprep.subr.mxu0 0.0
      %4264 = vmatpush1.msra.mxu0 0.0
      %4265 = vmatprep.subr.mxu0 0.0
      %4266 = vmatpush1.msra.mxu0 0.0
      %4267 = vmatprep.subr.mxu0 0.0
      %4268 = vmatpush1.msra.mxu0 0.0
      %4269 = vmatprep.subr.mxu0 0.0
      %4270 = vmatpush1.msra.mxu0 0.0
      %4271 = vmatprep.subr.mxu0 0.0
      %4272 = vmatpush1.msra.mxu0 0.0
      %4273 = vmatprep.subr.mxu0 0.0
      %4274 = vmatpush1.msra.mxu0 0.0
      %4275 = vmatprep.subr.mxu0 0.0
      %4276 = vmatpush1.msra.mxu0 0.0
      %4277 = vmatprep.subr.mxu0 0.0
      %4278 = vmatpush1.msra.mxu0 0.0
      %4279 = vmatprep.subr.mxu0 0.0
      %4280 = vmatpush1.msra.mxu0 0.0
      %4281 = vmatprep.subr.mxu0 0.0
      %4282 = vmatpush1.msra.mxu0 0.0
      %4283 = vmatprep.subr.mxu0 0.0
      %4284 = vmatpush1.msra.mxu0 0.0
      %4285 = vmatprep.subr.mxu0 0.0
      %4286 = vmatpush1.msra.mxu0 0.0
      %4287 = vmatprep.subr.mxu0 0.0
      %4288 = vmatpush1.msra.mxu0 0.0
      %4289 = vmatprep.subr.mxu0 0.0
      %4290 = vmatpush1.msra.mxu0 0.0
      %4291 = vmatprep.subr.mxu0 0.0
      %4292 = vmatpush1.msra.mxu0 0.0
      %4293 = vmatprep.subr.mxu0 0.0
      %4294 = vmatpush1.msra.mxu0 0.0
      %4295 = vmatprep.subr.mxu0 0.0
      %4296 = vmatpush1.msra.mxu0 0.0
      %4297 = vmatprep.subr.mxu0 0.0
      %4298 = vmatpush1.msra.mxu0 0.0
      %4299 = vmatprep.subr.mxu0 0.0
      %4300 = vmatpush1.msra.mxu0 0.0
      %4301 = vmatprep.subr.mxu0 0.0
      %4302 = vmatpush1.msra.mxu0 0.0
      %4303 = vmatprep.subr.mxu0 0.0
      %4304 = vmatpush1.msra.mxu0 0.0
      %4305 = vmatprep.subr.mxu0 0.0
      %4306 = vmatpush1.msra.mxu0 0.0
      %4307 = vmatprep.subr.mxu0 0.0
      %4308 = vmatpush1.msra.mxu0 0.0
      %4309 = vmatprep.subr.mxu0 0.0
      %4310 = vmatpush1.msra.mxu0 0.0
      %4311 = vmatprep.subr.mxu0 0.0
      %4312 = vmatpush1.msra.mxu0 0.0
      %4313 = vmatprep.subr.mxu0 0.0
      %4314 = vmatpush1.msra.mxu0 0.0
      %4315 = vmatprep.subr.mxu0 0.0
      %4316 = vmatpush1.msra.mxu0 0.0
      %4317 = vmatprep.subr.mxu0 0.0
      %4318 = vmatpush1.msra.mxu0 0.0
      %4319 = vmatprep.mubr.f32.mxu0 0.0
      %4320 = vmatmul.mubr.f32.gmra.mrb[0].mxu0 %v4191
      %v4321 = vpop.f32.mrb[0].mxu0
      %v4322 = vadd.f32 0.0, %v4321
      %v4323 = vpop.f32.mrb[0].mxu0
      %4324 = vmatprep.mubr.f32.mxu0 0.0
      %4325 = vmatmul.mubr.f32.gmra.mrb[0].mxu0 %v4193
      %v4326 = vpop.f32.mrb[0].mxu0
      %v4327 = vadd.f32 0.0, %v4326
      %v4328 = vpop.f32.mrb[0].mxu0
      %4329 = vmatprep.mubr.f32.mxu0 0.0
      %4330 = vmatmul.mubr.f32.gmra.mrb[0].mxu0 %v4195
      %v4331 = vpop.f32.mrb[0].mxu0
      %v4332 = vadd.f32 0.0, %v4331
      %v4333 = vpop.f32.mrb[0].mxu0
      %4334 = vmatprep.mubr.f32.mxu0 0.0
      %4335 = vmatmul.mubr.f32.gmra.mrb[0].mxu0 %v4197
      %v4336 = vpop.f32.mrb[0].mxu0
      %v4337 = vadd.f32 0.0, %v4336
      %v4338 = vpop.f32.mrb[0].mxu0
      %4339 = vmatprep.mubr.f32.mxu0 0.0
      %4340 = vmatmul.mubr.f32.gmra.mrb[0].mxu0 %v4199
      %v4341 = vpop.f32.mrb[0].mxu0
      %v4342 = vadd.f32 0.0, %v4341
      %v4343 = vpop.f32.mrb[0].mxu0
      %4344 = vmatprep.mubr.f32.mxu0 0.0
      %4345 = vmatmul.mubr.f32.gmra.mrb[0].mxu0 %v4201
      %v4346 = vpop.f32.mrb[0].mxu0
      %v4347 = vadd.f32 0.0, %v4346
      %v4348 = vpop.f32.mrb[0].mxu0
      %4349 = vmatprep.mubr.f32.mxu0 0.0
      %4350 = vmatmul.mubr.f32.gmra.mrb[0].mxu0 %v4203
      %v4351 = vpop.f32.mrb[0].mxu0
      %v4352 = vadd.f32 0.0, %v4351
      %v4353 = vpop.f32.mrb[0].mxu0
      %4354 = vmatprep.mubr.f32.mxu0 0.0
      %4355 = vmatmul.mubr.f32.gmra.mrb[0].mxu0 %v4205
      %v4356 = vpop.f32.mrb[0].mxu0
      %v4357 = vadd.f32 0.0, %v4356
      %v4358 = vpop.f32.mrb[0].mxu0
      %4359 = vmatprep.mubr.f32.mxu0 0.0
      %4360 = vmatmul.mubr.f32.gmra.mrb[0].mxu0 %v4207
      %v4361 = vpop.f32.mrb[0].mxu0
      %v4362 = vadd.f32 0.0, %v4361
      %v4363 = vpop.f32.mrb[0].mxu0
      %4364 = vmatprep.mubr.f32.mxu0 0.0
      %4365 = vmatmul.mubr.f32.gmra.mrb[0].mxu0 %v4209
      %v4366 = vpop.f32.mrb[0].mxu0
      %v4367 = vadd.f32 0.0, %v4366
      %v4368 = vpop.f32.mrb[0].mxu0
      %4369 = vmatprep.mubr.f32.mxu0 0.0
      %4370 = vmatmul.mubr.f32.gmra.mrb[0].mxu0 %v4211
      %v4371 = vpop.f32.mrb[0].mxu0
      %v4372 = vadd.f32 0.0, %v4371
      %v4373 = vpop.f32.mrb[0].mxu0
      %4374 = vmatprep.mubr.f32.mxu0 0.0
      %4375 = vmatmul.mubr.f32.gmra.mrb[0].mxu0 %v4213
      %v4376 = vpop.f32.mrb[0].mxu0
      %v4377 = vadd.f32 0.0, %v4376
      %v4378 = vpop.f32.mrb[0].mxu0
      %4379 = vmatprep.mubr.f32.mxu0 0.0
      %4380 = vmatmul.mubr.f32.gmra.mrb[0].mxu0 %v4215
      %v4381 = vpop.f32.mrb[0].mxu0
      %v4382 = vadd.f32 0.0, %v4381
      %v4383 = vpop.f32.mrb[0].mxu0
      %4384 = vmatprep.mubr.f32.mxu0 0.0
      %4385 = vmatmul.mubr.f32.gmra.mrb[0].mxu0 %v4217
      %v4386 = vpop.f32.mrb[0].mxu0
      %v4387 = vadd.f32 0.0, %v4386
      %v4388 = vpop.f32.mrb[0].mxu0
      %4389 = vmatprep.mubr.f32.mxu0 0.0
      %4390 = vmatmul.mubr.f32.gmra.mrb[0].mxu0 %v4219
      %v4391 = vpop.f32.mrb[0].mxu0
      %v4392 = vadd.f32 0.0, %v4391
      %v4393 = vpop.f32.mrb[0].mxu0
      %4394 = vmatprep.mubr.f32.mxu0 0.0
      %4395 = vmatmul.mubr.f32.gmra.mrb[0].mxu0 %v4221
      %v4396 = vpop.f32.mrb[0].mxu0
      %v4397 = vadd.f32 0.0, %v4396
      %v4398 = vpop.f32.mrb[0].mxu0
      %4399 = vmatprep.mubr.f32.mxu0 0.0
      %4400 = vmatmul.mubr.f32.gmra.mrb[0].mxu0 %v4223
      %v4401 = vpop.f32.mrb[0].mxu0
      %v4402 = vadd.f32 0.0, %v4401
      %v4403 = vpop.f32.mrb[0].mxu0
      %4404 = vmatprep.mubr.f32.mxu0 0.0
      %4405 = vmatmul.mubr.f32.gmra.mrb[0].mxu0 %v4225
      %v4406 = vpop.f32.mrb[0].mxu0
      %v4407 = vadd.f32 0.0, %v4406
      %v4408 = vpop.f32.mrb[0].mxu0
      %4409 = vmatprep.mubr.f32.mxu0 0.0
      %4410 = vmatmul.mubr.f32.gmra.mrb[0].mxu0 %v4227
      %v4411 = vpop.f32.mrb[0].mxu0
      %v4412 = vadd.f32 0.0, %v4411
      %v4413 = vpop.f32.mrb[0].mxu0
      %4414 = vmatprep.mubr.f32.mxu0 0.0
      %4415 = vmatmul.mubr.f32.gmra.mrb[0].mxu0 %v4229
      %v4416 = vpop.f32.mrb[0].mxu0
      %v4417 = vadd.f32 0.0, %v4416
      %v4418 = vpop.f32.mrb[0].mxu0
      %4419 = vmatprep.mubr.f32.mxu0 0.0
      %4420 = vmatmul.mubr.f32.gmra.mrb[0].mxu0 %v4231
      %v4421 = vpop.f32.mrb[0].mxu0
      %v4422 = vadd.f32 0.0, %v4421
      %v4423 = vpop.f32.mrb[0].mxu0
      %4424 = vmatprep.mubr.f32.mxu0 0.0
      %4425 = vmatmul.mubr.f32.gmra.mrb[0].mxu0 %v4233
      %v4426 = vpop.f32.mrb[0].mxu0
      %v4427 = vadd.f32 0.0, %v4426
      %v4428 = vpop.f32.mrb[0].mxu0
      %4429 = vmatprep.mubr.f32.mxu0 0.0
      %4430 = vmatmul.mubr.f32.gmra.mrb[0].mxu0 %v4235
      %v4431 = vpop.f32.mrb[0].mxu0
      %v4432 = vadd.f32 0.0, %v4431
      %v4433 = vpop.f32.mrb[0].mxu0
      %4434 = vmatprep.mubr.f32.mxu0 0.0
      %4435 = vmatmul.mubr.f32.gmra.mrb[0].mxu0 %v4237
      %v4436 = vpop.f32.mrb[0].mxu0
      %v4437 = vadd.f32 0.0, %v4436
      %v4438 = vpop.f32.mrb[0].mxu0
      %4439 = vmatprep.mubr.f32.mxu0 0.0
      %4440 = vmatmul.mubr.f32.gmra.mrb[0].mxu0 %v4239
      %v4441 = vpop.f32.mrb[0].mxu0
      %v4442 = vadd.f32 0.0, %v4441
      %v4443 = vpop.f32.mrb[0].mxu0
      %4444 = vmatprep.mubr.f32.mxu0 0.0
      %4445 = vmatmul.mubr.f32.gmra.mrb[0].mxu0 %v4241
      %v4446 = vpop.f32.mrb[0].mxu0
      %v4447 = vadd.f32 0.0, %v4446
      %v4448 = vpop.f32.mrb[0].mxu0
      %4449 = vmatprep.mubr.f32.mxu0 0.0
      %4450 = vmatmul.mubr.f32.gmra.mrb[0].mxu0 %v4243
      %v4451 = vpop.f32.mrb[0].mxu0
      %v4452 = vadd.f32 0.0, %v4451
      %v4453 = vpop.f32.mrb[0].mxu0
      %4454 = vmatprep.mubr.f32.mxu0 0.0
      %4455 = vmatmul.mubr.f32.gmra.mrb[0].mxu0 %v4245
      %v4456 = vpop.f32.mrb[0].mxu0
      %v4457 = vadd.f32 0.0, %v4456
      %v4458 = vpop.f32.mrb[0].mxu0
      %4459 = vmatprep.mubr.f32.mxu0 0.0
      %4460 = vmatmul.mubr.f32.gmra.mrb[0].mxu0 %v4247
      %v4461 = vpop.f32.mrb[0].mxu0
      %v4462 = vadd.f32 0.0, %v4461
      %v4463 = vpop.f32.mrb[0].mxu0
      %4464 = vmatprep.mubr.f32.mxu0 0.0
      %4465 = vmatmul.mubr.f32.gmra.mrb[0].mxu0 %v4249
      %v4466 = vpop.f32.mrb[0].mxu0
      %v4467 = vadd.f32 0.0, %v4466
      %v4468 = vpop.f32.mrb[0].mxu0
      %4469 = vmatprep.mubr.f32.mxu0 0.0
      %4470 = vmatmul.mubr.f32.gmra.mrb[0].mxu0 %v4251
      %v4471 = vpop.f32.mrb[0].mxu0
      %v4472 = vadd.f32 0.0, %v4471
      %v4473 = vpop.f32.mrb[0].mxu0
      %4474 = vmatprep.mubr.f32.mxu0 0.0
      %4475 = vmatmul.mubr.f32.gmra.mrb[0].mxu0 %v4253
      %v4476 = vpop.f32.mrb[0].mxu0
      %v4477 = vadd.f32 0.0, %v4476
      %v4478 = vpop.f32.mrb[0].mxu0
      %4479 = vdwg.mxu0
      %v4480 = vadd.f32 %v3951, %v4322
      %v4481 = vadd.f32 %v3956, %v4327
      %v4482 = vadd.f32 %v3961, %v4332
      %v4483 = vadd.f32 %v3966, %v4337
      %v4484 = vadd.f32 %v3971, %v4342
      %v4485 = vadd.f32 %v3976, %v4347
      %v4486 = vadd.f32 %v3981, %v4352
      %v4487 = vadd.f32 %v3986, %v4357
      %v4488 = vadd.f32 %v3991, %v4362
      %v4489 = vadd.f32 %v3996, %v4367
      %v4490 = vadd.f32 %v4001, %v4372
      %v4491 = vadd.f32 %v4006, %v4377
      %v4492 = vadd.f32 %v4011, %v4382
      %v4493 = vadd.f32 %v4016, %v4387
      %v4494 = vadd.f32 %v4021, %v4392
      %v4495 = vadd.f32 %v4026, %v4397
      %v4496 = vadd.f32 %v4031, %v4402
      %v4497 = vadd.f32 %v4036, %v4407
      %v4498 = vadd.f32 %v4041, %v4412
      %v4499 = vadd.f32 %v4046, %v4417
      %v4500 = vadd.f32 %v4051, %v4422
      %v4501 = vadd.f32 %v4056, %v4427
      %v4502 = vadd.f32 %v4061, %v4432
      %v4503 = vadd.f32 %v4066, %v4437
      %v4504 = vadd.f32 %v4071, %v4442
      %v4505 = vadd.f32 %v4076, %v4447
      %v4506 = vadd.f32 %v4081, %v4452
      %v4507 = vadd.f32 %v4086, %v4457
      %v4508 = vadd.f32 %v4091, %v4462
      %v4509 = vadd.f32 %v4096, %v4467
      %v4510 = vadd.f32 %v4101, %v4472
      %v4511 = vadd.f32 %v4106, %v4477
      %s4512 = scalar_lea.vmem %s3, 24
      %v4513 = vld [vmem:[%s4512] sm:$0xff]
      %v4515 = vsel %vm3257, %v3394, 0
      %v4518 = vsel %vm3257, %v3395, 0
      %4520 = vmatprep.subr.mxu0 0.0
      %4521 = vmatpush1.msra.mxu0 %v4513
      %4522 = vmatprep.subr.mxu0 0.0
      %4523 = vmatpush1.msra.mxu0 0.0
      %4524 = vmatprep.subr.mxu0 0.0
      %4525 = vmatpush1.msra.mxu0 0.0
      %4526 = vmatprep.subr.mxu0 0.0
      %4527 = vmatpush1.msra.mxu0 0.0
      %4528 = vmatprep.subr.mxu0 0.0
      %4529 = vmatpush1.msra.mxu0 0.0
      %4530 = vmatprep.subr.mxu0 0.0
      %4531 = vmatpush1.msra.mxu0 0.0
      %4532 = vmatprep.subr.mxu0 0.0
      %4533 = vmatpush1.msra.mxu0 0.0
      %4534 = vmatprep.subr.mxu0 0.0
      %4535 = vmatpush1.msra.mxu0 0.0
      %4536 = vmatprep.subr.mxu0 0.0
      %4537 = vmatpush1.msra.mxu0 0.0
      %4538 = vmatprep.subr.mxu0 0.0
      %4539 = vmatpush1.msra.mxu0 0.0
      %4540 = vmatprep.subr.mxu0 0.0
      %4541 = vmatpush1.msra.mxu0 0.0
      %4542 = vmatprep.subr.mxu0 0.0
      %4543 = vmatpush1.msra.mxu0 0.0
      %4544 = vmatprep.subr.mxu0 0.0
      %4545 = vmatpush1.msra.mxu0 0.0
      %4546 = vmatprep.subr.mxu0 0.0
      %4547 = vmatpush1.msra.mxu0 0.0
      %4548 = vmatprep.subr.mxu0 0.0
      %4549 = vmatpush1.msra.mxu0 0.0
      %4550 = vmatprep.subr.mxu0 0.0
      %4551 = vmatpush1.msra.mxu0 0.0
      %4552 = vmatprep.subr.mxu0 0.0
      %4553 = vmatpush1.msra.mxu0 0.0
      %4554 = vmatprep.subr.mxu0 0.0
      %4555 = vmatpush1.msra.mxu0 0.0
      %4556 = vmatprep.subr.mxu0 0.0
      %4557 = vmatpush1.msra.mxu0 0.0
      %4558 = vmatprep.subr.mxu0 0.0
      %4559 = vmatpush1.msra.mxu0 0.0
      %4560 = vmatprep.subr.mxu0 0.0
      %4561 = vmatpush1.msra.mxu0 0.0
      %4562 = vmatprep.subr.mxu0 0.0
      %4563 = vmatpush1.msra.mxu0 0.0
      %4564 = vmatprep.subr.mxu0 0.0
      %4565 = vmatpush1.msra.mxu0 0.0
      %4566 = vmatprep.subr.mxu0 0.0
      %4567 = vmatpush1.msra.mxu0 0.0
      %4568 = vmatprep.subr.mxu0 0.0
      %4569 = vmatpush1.msra.mxu0 0.0
      %4570 = vmatprep.subr.mxu0 0.0
      %4571 = vmatpush1.msra.mxu0 0.0
      %4572 = vmatprep.subr.mxu0 0.0
      %4573 = vmatpush1.msra.mxu0 0.0
      %4574 = vmatprep.subr.mxu0 0.0
      %4575 = vmatpush1.msra.mxu0 0.0
      %4576 = vmatprep.subr.mxu0 0.0
      %4577 = vmatpush1.msra.mxu0 0.0
      %4578 = vmatprep.subr.mxu0 0.0
      %4579 = vmatpush1.msra.mxu0 0.0
      %4580 = vmatprep.subr.mxu0 0.0
      %4581 = vmatpush1.msra.mxu0 0.0
      %4582 = vmatprep.subr.mxu0 0.0
      %4583 = vmatpush1.msra.mxu0 0.0
      %4584 = vmatprep.mubr.f32.mxu0 0.0
      %4585 = vmatmul.mubr.f32.gmra.mrb[0].mxu0 %v3824
      %v4586 = vpop.f32.mrb[0].mxu0
      %v4587 = vadd.f32 0.0, %v4586
      %v4588 = vpop.f32.mrb[0].mxu0
      %4589 = vmatprep.mubr.f32.mxu0 0.0
      %4590 = vmatmul.mubr.f32.gmra.mrb[0].mxu0 %v3826
      %v4591 = vpop.f32.mrb[0].mxu0
      %v4592 = vadd.f32 0.0, %v4591
      %v4593 = vpop.f32.mrb[0].mxu0
      %4594 = vmatprep.mubr.f32.mxu0 0.0
      %4595 = vmatmul.mubr.f32.gmra.mrb[0].mxu0 %v3828
      %v4596 = vpop.f32.mrb[0].mxu0
      %v4597 = vadd.f32 0.0, %v4596
      %v4598 = vpop.f32.mrb[0].mxu0
      %4599 = vmatprep.mubr.f32.mxu0 0.0
      %4600 = vmatmul.mubr.f32.gmra.mrb[0].mxu0 %v3830
      %v4601 = vpop.f32.mrb[0].mxu0
      %v4602 = vadd.f32 0.0, %v4601
      %v4603 = vpop.f32.mrb[0].mxu0
      %4604 = vmatprep.mubr.f32.mxu0 0.0
      %4605 = vmatmul.mubr.f32.gmra.mrb[0].mxu0 %v3832
      %v4606 = vpop.f32.mrb[0].mxu0
      %v4607 = vadd.f32 0.0, %v4606
      %v4608 = vpop.f32.mrb[0].mxu0
      %4609 = vmatprep.mubr.f32.mxu0 0.0
      %4610 = vmatmul.mubr.f32.gmra.mrb[0].mxu0 %v3834
      %v4611 = vpop.f32.mrb[0].mxu0
      %v4612 = vadd.f32 0.0, %v4611
      %v4613 = vpop.f32.mrb[0].mxu0
      %4614 = vmatprep.mubr.f32.mxu0 0.0
      %4615 = vmatmul.mubr.f32.gmra.mrb[0].mxu0 %v3836
      %v4616 = vpop.f32.mrb[0].mxu0
      %v4617 = vadd.f32 0.0, %v4616
      %v4618 = vpop.f32.mrb[0].mxu0
      %4619 = vmatprep.mubr.f32.mxu0 0.0
      %4620 = vmatmul.mubr.f32.gmra.mrb[0].mxu0 %v3838
      %v4621 = vpop.f32.mrb[0].mxu0
      %v4622 = vadd.f32 0.0, %v4621
      %v4623 = vpop.f32.mrb[0].mxu0
      %4624 = vmatprep.mubr.f32.mxu0 0.0
      %4625 = vmatmul.mubr.f32.gmra.mrb[0].mxu0 %v3840
      %v4626 = vpop.f32.mrb[0].mxu0
      %v4627 = vadd.f32 0.0, %v4626
      %v4628 = vpop.f32.mrb[0].mxu0
      %4629 = vmatprep.mubr.f32.mxu0 0.0
      %4630 = vmatmul.mubr.f32.gmra.mrb[0].mxu0 %v3842
      %v4631 = vpop.f32.mrb[0].mxu0
      %v4632 = vadd.f32 0.0, %v4631
      %v4633 = vpop.f32.mrb[0].mxu0
      %4634 = vmatprep.mubr.f32.mxu0 0.0
      %4635 = vmatmul.mubr.f32.gmra.mrb[0].mxu0 %v3844
      %v4636 = vpop.f32.mrb[0].mxu0
      %v4637 = vadd.f32 0.0, %v4636
      %v4638 = vpop.f32.mrb[0].mxu0
      %4639 = vmatprep.mubr.f32.mxu0 0.0
      %4640 = vmatmul.mubr.f32.gmra.mrb[0].mxu0 %v3846
      %v4641 = vpop.f32.mrb[0].mxu0
      %v4642 = vadd.f32 0.0, %v4641
      %v4643 = vpop.f32.mrb[0].mxu0
      %4644 = vmatprep.mubr.f32.mxu0 0.0
      %4645 = vmatmul.mubr.f32.gmra.mrb[0].mxu0 %v3848
      %v4646 = vpop.f32.mrb[0].mxu0
      %v4647 = vadd.f32 0.0, %v4646
      %v4648 = vpop.f32.mrb[0].mxu0
      %4649 = vmatprep.mubr.f32.mxu0 0.0
      %4650 = vmatmul.mubr.f32.gmra.mrb[0].mxu0 %v3850
      %v4651 = vpop.f32.mrb[0].mxu0
      %v4652 = vadd.f32 0.0, %v4651
      %v4653 = vpop.f32.mrb[0].mxu0
      %4654 = vmatprep.mubr.f32.mxu0 0.0
      %4655 = vmatmul.mubr.f32.gmra.mrb[0].mxu0 %v3852
      %v4656 = vpop.f32.mrb[0].mxu0
      %v4657 = vadd.f32 0.0, %v4656
      %v4658 = vpop.f32.mrb[0].mxu0
      %4659 = vmatprep.mubr.f32.mxu0 0.0
      %4660 = vmatmul.mubr.f32.gmra.mrb[0].mxu0 %v3854
      %v4661 = vpop.f32.mrb[0].mxu0
      %v4662 = vadd.f32 0.0, %v4661
      %v4663 = vpop.f32.mrb[0].mxu0
      %4664 = vmatprep.mubr.f32.mxu0 0.0
      %4665 = vmatmul.mubr.f32.gmra.mrb[0].mxu0 %v3856
      %v4666 = vpop.f32.mrb[0].mxu0
      %v4667 = vadd.f32 0.0, %v4666
      %v4668 = vpop.f32.mrb[0].mxu0
      %4669 = vmatprep.mubr.f32.mxu0 0.0
      %4670 = vmatmul.mubr.f32.gmra.mrb[0].mxu0 %v3858
      %v4671 = vpop.f32.mrb[0].mxu0
      %v4672 = vadd.f32 0.0, %v4671
      %v4673 = vpop.f32.mrb[0].mxu0
      %4674 = vmatprep.mubr.f32.mxu0 0.0
      %4675 = vmatmul.mubr.f32.gmra.mrb[0].mxu0 %v3860
      %v4676 = vpop.f32.mrb[0].mxu0
      %v4677 = vadd.f32 0.0, %v4676
      %v4678 = vpop.f32.mrb[0].mxu0
      %4679 = vmatprep.mubr.f32.mxu0 0.0
      %4680 = vmatmul.mubr.f32.gmra.mrb[0].mxu0 %v3862
      %v4681 = vpop.f32.mrb[0].mxu0
      %v4682 = vadd.f32 0.0, %v4681
      %v4683 = vpop.f32.mrb[0].mxu0
      %4684 = vmatprep.mubr.f32.mxu0 0.0
      %4685 = vmatmul.mubr.f32.gmra.mrb[0].mxu0 %v3864
      %v4686 = vpop.f32.mrb[0].mxu0
      %v4687 = vadd.f32 0.0, %v4686
      %v4688 = vpop.f32.mrb[0].mxu0
      %4689 = vmatprep.mubr.f32.mxu0 0.0
      %4690 = vmatmul.mubr.f32.gmra.mrb[0].mxu0 %v3866
      %v4691 = vpop.f32.mrb[0].mxu0
      %v4692 = vadd.f32 0.0, %v4691
      %v4693 = vpop.f32.mrb[0].mxu0
      %4694 = vmatprep.mubr.f32.mxu0 0.0
      %4695 = vmatmul.mubr.f32.gmra.mrb[0].mxu0 %v3868
      %v4696 = vpop.f32.mrb[0].mxu0
      %v4697 = vadd.f32 0.0, %v4696
      %v4698 = vpop.f32.mrb[0].mxu0
      %4699 = vmatprep.mubr.f32.mxu0 0.0
      %4700 = vmatmul.mubr.f32.gmra.mrb[0].mxu0 %v3870
      %v4701 = vpop.f32.mrb[0].mxu0
      %v4702 = vadd.f32 0.0, %v4701
      %v4703 = vpop.f32.mrb[0].mxu0
      %4704 = vmatprep.mubr.f32.mxu0 0.0
      %4705 = vmatmul.mubr.f32.gmra.mrb[0].mxu0 %v3872
      %v4706 = vpop.f32.mrb[0].mxu0
      %v4707 = vadd.f32 0.0, %v4706
      %v4708 = vpop.f32.mrb[0].mxu0
      %4709 = vmatprep.mubr.f32.mxu0 0.0
      %4710 = vmatmul.mubr.f32.gmra.mrb[0].mxu0 %v3874
      %v4711 = vpop.f32.mrb[0].mxu0
      %v4712 = vadd.f32 0.0, %v4711
      %v4713 = vpop.f32.mrb[0].mxu0
      %4714 = vmatprep.mubr.f32.mxu0 0.0
      %4715 = vmatmul.mubr.f32.gmra.mrb[0].mxu0 %v3876
      %v4716 = vpop.f32.mrb[0].mxu0
      %v4717 = vadd.f32 0.0, %v4716
      %v4718 = vpop.f32.mrb[0].mxu0
      %4719 = vmatprep.mubr.f32.mxu0 0.0
      %4720 = vmatmul.mubr.f32.gmra.mrb[0].mxu0 %v3878
      %v4721 = vpop.f32.mrb[0].mxu0
      %v4722 = vadd.f32 0.0, %v4721
      %v4723 = vpop.f32.mrb[0].mxu0
      %4724 = vmatprep.mubr.f32.mxu0 0.0
      %4725 = vmatmul.mubr.f32.gmra.mrb[0].mxu0 %v3880
      %v4726 = vpop.f32.mrb[0].mxu0
      %v4727 = vadd.f32 0.0, %v4726
      %v4728 = vpop.f32.mrb[0].mxu0
      %4729 = vmatprep.mubr.f32.mxu0 0.0
      %4730 = vmatmul.mubr.f32.gmra.mrb[0].mxu0 %v3882
      %v4731 = vpop.f32.mrb[0].mxu0
      %v4732 = vadd.f32 0.0, %v4731
      %v4733 = vpop.f32.mrb[0].mxu0
      %4734 = vmatprep.mubr.f32.mxu0 0.0
      %4735 = vmatmul.mubr.f32.gmra.mrb[0].mxu0 %v4515
      %v4736 = vpop.f32.mrb[0].mxu0
      %v4737 = vadd.f32 0.0, %v4736
      %v4738 = vpop.f32.mrb[0].mxu0
      %4739 = vmatprep.mubr.f32.mxu0 0.0
      %4740 = vmatmul.mubr.f32.gmra.mrb[0].mxu0 %v4518
      %v4741 = vpop.f32.mrb[0].mxu0
      %v4742 = vadd.f32 0.0, %v4741
      %v4743 = vpop.f32.mrb[0].mxu0
      %4744 = vdwg.mxu0
      %v4745 = vadd.f32 %v4480, %v4587
      %v4746 = vadd.f32 %v4481, %v4592
      %v4747 = vadd.f32 %v4482, %v4597
      %v4748 = vadd.f32 %v4483, %v4602
      %v4749 = vadd.f32 %v4484, %v4607
      %v4750 = vadd.f32 %v4485, %v4612
      %v4751 = vadd.f32 %v4486, %v4617
      %v4752 = vadd.f32 %v4487, %v4622
      %v4753 = vadd.f32 %v4488, %v4627
      %v4754 = vadd.f32 %v4489, %v4632
      %v4755 = vadd.f32 %v4490, %v4637
      %v4756 = vadd.f32 %v4491, %v4642
      %v4757 = vadd.f32 %v4492, %v4647
      %v4758 = vadd.f32 %v4493, %v4652
      %v4759 = vadd.f32 %v4494, %v4657
      %v4760 = vadd.f32 %v4495, %v4662
      %v4761 = vadd.f32 %v4496, %v4667
      %v4762 = vadd.f32 %v4497, %v4672
      %v4763 = vadd.f32 %v4498, %v4677
      %v4764 = vadd.f32 %v4499, %v4682
      %v4765 = vadd.f32 %v4500, %v4687
      %v4766 = vadd.f32 %v4501, %v4692
      %v4767 = vadd.f32 %v4502, %v4697
      %v4768 = vadd.f32 %v4503, %v4702
      %v4769 = vadd.f32 %v4504, %v4707
      %v4770 = vadd.f32 %v4505, %v4712
      %v4771 = vadd.f32 %v4506, %v4717
      %v4772 = vadd.f32 %v4507, %v4722
      %v4773 = vadd.f32 %v4508, %v4727
      %v4774 = vadd.f32 %v4509, %v4732
      %v4775 = vadd.f32 %v4510, %v4737
      %v4776 = vadd.f32 %v4511, %v4742
      %v4778 = vrot.slane %v3394, 1
      %v4779 = vrot.slane %v3395, 1
      %v4780 = vsel %vm489, %v4778, %v4779
      %v4781 = vrot.slane %v3396, 1
      %v4782 = vsel %vm489, %v4779, %v4781
      %s4783 = scalar_lea.vmem %s3, 32
      %v4784 = vld [vmem:[%s4783] sm:$0xff]
      %v4785 = vsel %vm3257, %v4780, 0
      %v4787 = vsel %vm3257, %v4782, 0
      %4789 = vmatprep.subr.mxu0 0.0
      %4790 = vmatpush1.msra.mxu0 %v4784
      %4791 = vmatprep.subr.mxu0 0.0
      %4792 = vmatpush1.msra.mxu0 0.0
      %4793 = vmatprep.subr.mxu0 0.0
      %4794 = vmatpush1.msra.mxu0 0.0
      %4795 = vmatprep.subr.mxu0 0.0
      %4796 = vmatpush1.msra.mxu0 0.0
      %4797 = vmatprep.subr.mxu0 0.0
      %4798 = vmatpush1.msra.mxu0 0.0
      %4799 = vmatprep.subr.mxu0 0.0
      %4800 = vmatpush1.msra.mxu0 0.0
      %4801 = vmatprep.subr.mxu0 0.0
      %4802 = vmatpush1.msra.mxu0 0.0
      %4803 = vmatprep.subr.mxu0 0.0
      %4804 = vmatpush1.msra.mxu0 0.0
      %4805 = vmatprep.subr.mxu0 0.0
      %4806 = vmatpush1.msra.mxu0 0.0
      %4807 = vmatprep.subr.mxu0 0.0
      %4808 = vmatpush1.msra.mxu0 0.0
      %4809 = vmatprep.subr.mxu0 0.0
      %4810 = vmatpush1.msra.mxu0 0.0
      %4811 = vmatprep.subr.mxu0 0.0
      %4812 = vmatpush1.msra.mxu0 0.0
      %4813 = vmatprep.subr.mxu0 0.0
      %4814 = vmatpush1.msra.mxu0 0.0
      %4815 = vmatprep.subr.mxu0 0.0
      %4816 = vmatpush1.msra.mxu0 0.0
      %4817 = vmatprep.subr.mxu0 0.0
      %4818 = vmatpush1.msra.mxu0 0.0
      %4819 = vmatprep.subr.mxu0 0.0
      %4820 = vmatpush1.msra.mxu0 0.0
      %4821 = vmatprep.subr.mxu0 0.0
      %4822 = vmatpush1.msra.mxu0 0.0
      %4823 = vmatprep.subr.mxu0 0.0
      %4824 = vmatpush1.msra.mxu0 0.0
      %4825 = vmatprep.subr.mxu0 0.0
      %4826 = vmatpush1.msra.mxu0 0.0
      %4827 = vmatprep.subr.mxu0 0.0
      %4828 = vmatpush1.msra.mxu0 0.0
      %4829 = vmatprep.subr.mxu0 0.0
      %4830 = vmatpush1.msra.mxu0 0.0
      %4831 = vmatprep.subr.mxu0 0.0
      %4832 = vmatpush1.msra.mxu0 0.0
      %4833 = vmatprep.subr.mxu0 0.0
      %4834 = vmatpush1.msra.mxu0 0.0
      %4835 = vmatprep.subr.mxu0 0.0
      %4836 = vmatpush1.msra.mxu0 0.0
      %4837 = vmatprep.subr.mxu0 0.0
      %4838 = vmatpush1.msra.mxu0 0.0
      %4839 = vmatprep.subr.mxu0 0.0
      %4840 = vmatpush1.msra.mxu0 0.0
      %4841 = vmatprep.subr.mxu0 0.0
      %4842 = vmatpush1.msra.mxu0 0.0
      %4843 = vmatprep.subr.mxu0 0.0
      %4844 = vmatpush1.msra.mxu0 0.0
      %4845 = vmatprep.subr.mxu0 0.0
      %4846 = vmatpush1.msra.mxu0 0.0
      %4847 = vmatprep.subr.mxu0 0.0
      %4848 = vmatpush1.msra.mxu0 0.0
      %4849 = vmatprep.subr.mxu0 0.0
      %4850 = vmatpush1.msra.mxu0 0.0
      %4851 = vmatprep.subr.mxu0 0.0
      %4852 = vmatpush1.msra.mxu0 0.0
      %4853 = vmatprep.mubr.f32.mxu0 0.0
      %4854 = vmatmul.mubr.f32.gmra.mrb[0].mxu0 %v3535
      %v4855 = vpop.f32.mrb[0].mxu0
      %v4856 = vadd.f32 0.0, %v4855
      %v4857 = vpop.f32.mrb[0].mxu0
      %4858 = vmatprep.mubr.f32.mxu0 0.0
      %4859 = vmatmul.mubr.f32.gmra.mrb[0].mxu0 %v3537
      %v4860 = vpop.f32.mrb[0].mxu0
      %v4861 = vadd.f32 0.0, %v4860
      %v4862 = vpop.f32.mrb[0].mxu0
      %4863 = vmatprep.mubr.f32.mxu0 0.0
      %4864 = vmatmul.mubr.f32.gmra.mrb[0].mxu0 %v3539
      %v4865 = vpop.f32.mrb[0].mxu0
      %v4866 = vadd.f32 0.0, %v4865
      %v4867 = vpop.f32.mrb[0].mxu0
      %4868 = vmatprep.mubr.f32.mxu0 0.0
      %4869 = vmatmul.mubr.f32.gmra.mrb[0].mxu0 %v3541
      %v4870 = vpop.f32.mrb[0].mxu0
      %v4871 = vadd.f32 0.0, %v4870
      %v4872 = vpop.f32.mrb[0].mxu0
      %4873 = vmatprep.mubr.f32.mxu0 0.0
      %4874 = vmatmul.mubr.f32.gmra.mrb[0].mxu0 %v3543
      %v4875 = vpop.f32.mrb[0].mxu0
      %v4876 = vadd.f32 0.0, %v4875
      %v4877 = vpop.f32.mrb[0].mxu0
      %4878 = vmatprep.mubr.f32.mxu0 0.0
      %4879 = vmatmul.mubr.f32.gmra.mrb[0].mxu0 %v3545
      %v4880 = vpop.f32.mrb[0].mxu0
      %v4881 = vadd.f32 0.0, %v4880
      %v4882 = vpop.f32.mrb[0].mxu0
      %4883 = vmatprep.mubr.f32.mxu0 0.0
      %4884 = vmatmul.mubr.f32.gmra.mrb[0].mxu0 %v3547
      %v4885 = vpop.f32.mrb[0].mxu0
      %v4886 = vadd.f32 0.0, %v4885
      %v4887 = vpop.f32.mrb[0].mxu0
      %4888 = vmatprep.mubr.f32.mxu0 0.0
      %4889 = vmatmul.mubr.f32.gmra.mrb[0].mxu0 %v3549
      %v4890 = vpop.f32.mrb[0].mxu0
      %v4891 = vadd.f32 0.0, %v4890
      %v4892 = vpop.f32.mrb[0].mxu0
      %4893 = vmatprep.mubr.f32.mxu0 0.0
      %4894 = vmatmul.mubr.f32.gmra.mrb[0].mxu0 %v3551
      %v4895 = vpop.f32.mrb[0].mxu0
      %v4896 = vadd.f32 0.0, %v4895
      %v4897 = vpop.f32.mrb[0].mxu0
      %4898 = vmatprep.mubr.f32.mxu0 0.0
      %4899 = vmatmul.mubr.f32.gmra.mrb[0].mxu0 %v3553
      %v4900 = vpop.f32.mrb[0].mxu0
      %v4901 = vadd.f32 0.0, %v4900
      %v4902 = vpop.f32.mrb[0].mxu0
      %4903 = vmatprep.mubr.f32.mxu0 0.0
      %4904 = vmatmul.mubr.f32.gmra.mrb[0].mxu0 %v3555
      %v4905 = vpop.f32.mrb[0].mxu0
      %v4906 = vadd.f32 0.0, %v4905
      %v4907 = vpop.f32.mrb[0].mxu0
      %4908 = vmatprep.mubr.f32.mxu0 0.0
      %4909 = vmatmul.mubr.f32.gmra.mrb[0].mxu0 %v3557
      %v4910 = vpop.f32.mrb[0].mxu0
      %v4911 = vadd.f32 0.0, %v4910
      %v4912 = vpop.f32.mrb[0].mxu0
      %4913 = vmatprep.mubr.f32.mxu0 0.0
      %4914 = vmatmul.mubr.f32.gmra.mrb[0].mxu0 %v3559
      %v4915 = vpop.f32.mrb[0].mxu0
      %v4916 = vadd.f32 0.0, %v4915
      %v4917 = vpop.f32.mrb[0].mxu0
      %4918 = vmatprep.mubr.f32.mxu0 0.0
      %4919 = vmatmul.mubr.f32.gmra.mrb[0].mxu0 %v3561
      %v4920 = vpop.f32.mrb[0].mxu0
      %v4921 = vadd.f32 0.0, %v4920
      %v4922 = vpop.f32.mrb[0].mxu0
      %4923 = vmatprep.mubr.f32.mxu0 0.0
      %4924 = vmatmul.mubr.f32.gmra.mrb[0].mxu0 %v3563
      %v4925 = vpop.f32.mrb[0].mxu0
      %v4926 = vadd.f32 0.0, %v4925
      %v4927 = vpop.f32.mrb[0].mxu0
      %4928 = vmatprep.mubr.f32.mxu0 0.0
      %4929 = vmatmul.mubr.f32.gmra.mrb[0].mxu0 %v3565
      %v4930 = vpop.f32.mrb[0].mxu0
      %v4931 = vadd.f32 0.0, %v4930
      %v4932 = vpop.f32.mrb[0].mxu0
      %4933 = vmatprep.mubr.f32.mxu0 0.0
      %4934 = vmatmul.mubr.f32.gmra.mrb[0].mxu0 %v3567
      %v4935 = vpop.f32.mrb[0].mxu0
      %v4936 = vadd.f32 0.0, %v4935
      %v4937 = vpop.f32.mrb[0].mxu0
      %4938 = vmatprep.mubr.f32.mxu0 0.0
      %4939 = vmatmul.mubr.f32.gmra.mrb[0].mxu0 %v3569
      %v4940 = vpop.f32.mrb[0].mxu0
      %v4941 = vadd.f32 0.0, %v4940
      %v4942 = vpop.f32.mrb[0].mxu0
      %4943 = vmatprep.mubr.f32.mxu0 0.0
      %4944 = vmatmul.mubr.f32.gmra.mrb[0].mxu0 %v3571
      %v4945 = vpop.f32.mrb[0].mxu0
      %v4946 = vadd.f32 0.0, %v4945
      %v4947 = vpop.f32.mrb[0].mxu0
      %4948 = vmatprep.mubr.f32.mxu0 0.0
      %4949 = vmatmul.mubr.f32.gmra.mrb[0].mxu0 %v3573
      %v4950 = vpop.f32.mrb[0].mxu0
      %v4951 = vadd.f32 0.0, %v4950
      %v4952 = vpop.f32.mrb[0].mxu0
      %4953 = vmatprep.mubr.f32.mxu0 0.0
      %4954 = vmatmul.mubr.f32.gmra.mrb[0].mxu0 %v3575
      %v4955 = vpop.f32.mrb[0].mxu0
      %v4956 = vadd.f32 0.0, %v4955
      %v4957 = vpop.f32.mrb[0].mxu0
      %4958 = vmatprep.mubr.f32.mxu0 0.0
      %4959 = vmatmul.mubr.f32.gmra.mrb[0].mxu0 %v3577
      %v4960 = vpop.f32.mrb[0].mxu0
      %v4961 = vadd.f32 0.0, %v4960
      %v4962 = vpop.f32.mrb[0].mxu0
      %4963 = vmatprep.mubr.f32.mxu0 0.0
      %4964 = vmatmul.mubr.f32.gmra.mrb[0].mxu0 %v3579
      %v4965 = vpop.f32.mrb[0].mxu0
      %v4966 = vadd.f32 0.0, %v4965
      %v4967 = vpop.f32.mrb[0].mxu0
      %4968 = vmatprep.mubr.f32.mxu0 0.0
      %4969 = vmatmul.mubr.f32.gmra.mrb[0].mxu0 %v3581
      %v4970 = vpop.f32.mrb[0].mxu0
      %v4971 = vadd.f32 0.0, %v4970
      %v4972 = vpop.f32.mrb[0].mxu0
      %4973 = vmatprep.mubr.f32.mxu0 0.0
      %4974 = vmatmul.mubr.f32.gmra.mrb[0].mxu0 %v3583
      %v4975 = vpop.f32.mrb[0].mxu0
      %v4976 = vadd.f32 0.0, %v4975
      %v4977 = vpop.f32.mrb[0].mxu0
      %4978 = vmatprep.mubr.f32.mxu0 0.0
      %4979 = vmatmul.mubr.f32.gmra.mrb[0].mxu0 %v3585
      %v4980 = vpop.f32.mrb[0].mxu0
      %v4981 = vadd.f32 0.0, %v4980
      %v4982 = vpop.f32.mrb[0].mxu0
      %4983 = vmatprep.mubr.f32.mxu0 0.0
      %4984 = vmatmul.mubr.f32.gmra.mrb[0].mxu0 %v3587
      %v4985 = vpop.f32.mrb[0].mxu0
      %v4986 = vadd.f32 0.0, %v4985
      %v4987 = vpop.f32.mrb[0].mxu0
      %4988 = vmatprep.mubr.f32.mxu0 0.0
      %4989 = vmatmul.mubr.f32.gmra.mrb[0].mxu0 %v3589
      %v4990 = vpop.f32.mrb[0].mxu0
      %v4991 = vadd.f32 0.0, %v4990
      %v4992 = vpop.f32.mrb[0].mxu0
      %4993 = vmatprep.mubr.f32.mxu0 0.0
      %4994 = vmatmul.mubr.f32.gmra.mrb[0].mxu0 %v3591
      %v4995 = vpop.f32.mrb[0].mxu0
      %v4996 = vadd.f32 0.0, %v4995
      %v4997 = vpop.f32.mrb[0].mxu0
      %4998 = vmatprep.mubr.f32.mxu0 0.0
      %4999 = vmatmul.mubr.f32.gmra.mrb[0].mxu0 %v3593
      %v5000 = vpop.f32.mrb[0].mxu0
      %v5001 = vadd.f32 0.0, %v5000
      %v5002 = vpop.f32.mrb[0].mxu0
      %5003 = vmatprep.mubr.f32.mxu0 0.0
      %5004 = vmatmul.mubr.f32.gmra.mrb[0].mxu0 %v4785
      %v5005 = vpop.f32.mrb[0].mxu0
      %v5006 = vadd.f32 0.0, %v5005
      %v5007 = vpop.f32.mrb[0].mxu0
      %5008 = vmatprep.mubr.f32.mxu0 0.0
      %5009 = vmatmul.mubr.f32.gmra.mrb[0].mxu0 %v4787
      %v5010 = vpop.f32.mrb[0].mxu0
      %v5011 = vadd.f32 0.0, %v5010
      %v5012 = vpop.f32.mrb[0].mxu0
      %5013 = vdwg.mxu0
      %v5014 = vadd.f32 %v4745, %v4856
      %v5015 = vadd.f32 %v4746, %v4861
      %v5016 = vadd.f32 %v4747, %v4866
      %v5017 = vadd.f32 %v4748, %v4871
      %v5018 = vadd.f32 %v4749, %v4876
      %v5019 = vadd.f32 %v4750, %v4881
      %v5020 = vadd.f32 %v4751, %v4886
      %v5021 = vadd.f32 %v4752, %v4891
      %v5022 = vadd.f32 %v4753, %v4896
      %v5023 = vadd.f32 %v4754, %v4901
      %v5024 = vadd.f32 %v4755, %v4906
      %v5025 = vadd.f32 %v4756, %v4911
      %v5026 = vadd.f32 %v4757, %v4916
      %v5027 = vadd.f32 %v4758, %v4921
      %v5028 = vadd.f32 %v4759, %v4926
      %v5029 = vadd.f32 %v4760, %v4931
      %v5030 = vadd.f32 %v4761, %v4936
      %v5031 = vadd.f32 %v4762, %v4941
      %v5032 = vadd.f32 %v4763, %v4946
      %v5033 = vadd.f32 %v4764, %v4951
      %v5034 = vadd.f32 %v4765, %v4956
      %v5035 = vadd.f32 %v4766, %v4961
      %v5036 = vadd.f32 %v4767, %v4966
      %v5037 = vadd.f32 %v4768, %v4971
      %v5038 = vadd.f32 %v4769, %v4976
      %v5039 = vadd.f32 %v4770, %v4981
      %v5040 = vadd.f32 %v4771, %v4986
      %v5041 = vadd.f32 %v4772, %v4991
      %v5042 = vadd.f32 %v4773, %v4996
      %v5043 = vadd.f32 %v4774, %v5001
      %v5044 = vadd.f32 %v4775, %v5006
      %v5045 = vadd.f32 %v4776, %v5011
      %v5046 = vrot.slane %v3394, 2
      %v5047 = vrot.slane %v3395, 2
      %v5048 = vsel %vm1157, %v5046, %v5047
      %v5049 = vrot.slane %v3396, 2
      %v5050 = vsel %vm1157, %v5047, %v5049
      %s5051 = scalar_lea.vmem %s3, 40
      %v5052 = vld [vmem:[%s5051] sm:$0xff]
      %v5053 = vsel %vm3257, %v5048, 0
      %v5055 = vsel %vm3257, %v5050, 0
      %5057 = vmatprep.subr.mxu0 0.0
      %5058 = vmatpush1.msra.mxu0 %v5052
      %5059 = vmatprep.subr.mxu0 0.0
      %5060 = vmatpush1.msra.mxu0 0.0
      %5061 = vmatprep.subr.mxu0 0.0
      %5062 = vmatpush1.msra.mxu0 0.0
      %5063 = vmatprep.subr.mxu0 0.0
      %5064 = vmatpush1.msra.mxu0 0.0
      %5065 = vmatprep.subr.mxu0 0.0
      %5066 = vmatpush1.msra.mxu0 0.0
      %5067 = vmatprep.subr.mxu0 0.0
      %5068 = vmatpush1.msra.mxu0 0.0
      %5069 = vmatprep.subr.mxu0 0.0
      %5070 = vmatpush1.msra.mxu0 0.0
      %5071 = vmatprep.subr.mxu0 0.0
      %5072 = vmatpush1.msra.mxu0 0.0
      %5073 = vmatprep.subr.mxu0 0.0
      %5074 = vmatpush1.msra.mxu0 0.0
      %5075 = vmatprep.subr.mxu0 0.0
      %5076 = vmatpush1.msra.mxu0 0.0
      %5077 = vmatprep.subr.mxu0 0.0
      %5078 = vmatpush1.msra.mxu0 0.0
      %5079 = vmatprep.subr.mxu0 0.0
      %5080 = vmatpush1.msra.mxu0 0.0
      %5081 = vmatprep.subr.mxu0 0.0
      %5082 = vmatpush1.msra.mxu0 0.0
      %5083 = vmatprep.subr.mxu0 0.0
      %5084 = vmatpush1.msra.mxu0 0.0
      %5085 = vmatprep.subr.mxu0 0.0
      %5086 = vmatpush1.msra.mxu0 0.0
      %5087 = vmatprep.subr.mxu0 0.0
      %5088 = vmatpush1.msra.mxu0 0.0
      %5089 = vmatprep.subr.mxu0 0.0
      %5090 = vmatpush1.msra.mxu0 0.0
      %5091 = vmatprep.subr.mxu0 0.0
      %5092 = vmatpush1.msra.mxu0 0.0
      %5093 = vmatprep.subr.mxu0 0.0
      %5094 = vmatpush1.msra.mxu0 0.0
      %5095 = vmatprep.subr.mxu0 0.0
      %5096 = vmatpush1.msra.mxu0 0.0
      %5097 = vmatprep.subr.mxu0 0.0
      %5098 = vmatpush1.msra.mxu0 0.0
      %5099 = vmatprep.subr.mxu0 0.0
      %5100 = vmatpush1.msra.mxu0 0.0
      %5101 = vmatprep.subr.mxu0 0.0
      %5102 = vmatpush1.msra.mxu0 0.0
      %5103 = vmatprep.subr.mxu0 0.0
      %5104 = vmatpush1.msra.mxu0 0.0
      %5105 = vmatprep.subr.mxu0 0.0
      %5106 = vmatpush1.msra.mxu0 0.0
      %5107 = vmatprep.subr.mxu0 0.0
      %5108 = vmatpush1.msra.mxu0 0.0
      %5109 = vmatprep.subr.mxu0 0.0
      %5110 = vmatpush1.msra.mxu0 0.0
      %5111 = vmatprep.subr.mxu0 0.0
      %5112 = vmatpush1.msra.mxu0 0.0
      %5113 = vmatprep.subr.mxu0 0.0
      %5114 = vmatpush1.msra.mxu0 0.0
      %5115 = vmatprep.subr.mxu0 0.0
      %5116 = vmatpush1.msra.mxu0 0.0
      %5117 = vmatprep.subr.mxu0 0.0
      %5118 = vmatpush1.msra.mxu0 0.0
      %5119 = vmatprep.subr.mxu0 0.0
      %5120 = vmatpush1.msra.mxu0 0.0
      %5121 = vmatprep.mubr.f32.mxu0 0.0
      %5122 = vmatmul.mubr.f32.gmra.mrb[0].mxu0 %v4195
      %v5123 = vpop.f32.mrb[0].mxu0
      %v5124 = vadd.f32 0.0, %v5123
      %v5125 = vpop.f32.mrb[0].mxu0
      %5126 = vmatprep.mubr.f32.mxu0 0.0
      %5127 = vmatmul.mubr.f32.gmra.mrb[0].mxu0 %v4197
      %v5128 = vpop.f32.mrb[0].mxu0
      %v5129 = vadd.f32 0.0, %v5128
      %v5130 = vpop.f32.mrb[0].mxu0
      %5131 = vmatprep.mubr.f32.mxu0 0.0
      %5132 = vmatmul.mubr.f32.gmra.mrb[0].mxu0 %v4199
      %v5133 = vpop.f32.mrb[0].mxu0
      %v5134 = vadd.f32 0.0, %v5133
      %v5135 = vpop.f32.mrb[0].mxu0
      %5136 = vmatprep.mubr.f32.mxu0 0.0
      %5137 = vmatmul.mubr.f32.gmra.mrb[0].mxu0 %v4201
      %v5138 = vpop.f32.mrb[0].mxu0
      %v5139 = vadd.f32 0.0, %v5138
      %v5140 = vpop.f32.mrb[0].mxu0
      %5141 = vmatprep.mubr.f32.mxu0 0.0
      %5142 = vmatmul.mubr.f32.gmra.mrb[0].mxu0 %v4203
      %v5143 = vpop.f32.mrb[0].mxu0
      %v5144 = vadd.f32 0.0, %v5143
      %v5145 = vpop.f32.mrb[0].mxu0
      %5146 = vmatprep.mubr.f32.mxu0 0.0
      %5147 = vmatmul.mubr.f32.gmra.mrb[0].mxu0 %v4205
      %v5148 = vpop.f32.mrb[0].mxu0
      %v5149 = vadd.f32 0.0, %v5148
      %v5150 = vpop.f32.mrb[0].mxu0
      %5151 = vmatprep.mubr.f32.mxu0 0.0
      %5152 = vmatmul.mubr.f32.gmra.mrb[0].mxu0 %v4207
      %v5153 = vpop.f32.mrb[0].mxu0
      %v5154 = vadd.f32 0.0, %v5153
      %v5155 = vpop.f32.mrb[0].mxu0
      %5156 = vmatprep.mubr.f32.mxu0 0.0
      %5157 = vmatmul.mubr.f32.gmra.mrb[0].mxu0 %v4209
      %v5158 = vpop.f32.mrb[0].mxu0
      %v5159 = vadd.f32 0.0, %v5158
      %v5160 = vpop.f32.mrb[0].mxu0
      %5161 = vmatprep.mubr.f32.mxu0 0.0
      %5162 = vmatmul.mubr.f32.gmra.mrb[0].mxu0 %v4211
      %v5163 = vpop.f32.mrb[0].mxu0
      %v5164 = vadd.f32 0.0, %v5163
      %v5165 = vpop.f32.mrb[0].mxu0
      %5166 = vmatprep.mubr.f32.mxu0 0.0
      %5167 = vmatmul.mubr.f32.gmra.mrb[0].mxu0 %v4213
      %v5168 = vpop.f32.mrb[0].mxu0
      %v5169 = vadd.f32 0.0, %v5168
      %v5170 = vpop.f32.mrb[0].mxu0
      %5171 = vmatprep.mubr.f32.mxu0 0.0
      %5172 = vmatmul.mubr.f32.gmra.mrb[0].mxu0 %v4215
      %v5173 = vpop.f32.mrb[0].mxu0
      %v5174 = vadd.f32 0.0, %v5173
      %v5175 = vpop.f32.mrb[0].mxu0
      %5176 = vmatprep.mubr.f32.mxu0 0.0
      %5177 = vmatmul.mubr.f32.gmra.mrb[0].mxu0 %v4217
      %v5178 = vpop.f32.mrb[0].mxu0
      %v5179 = vadd.f32 0.0, %v5178
      %v5180 = vpop.f32.mrb[0].mxu0
      %5181 = vmatprep.mubr.f32.mxu0 0.0
      %5182 = vmatmul.mubr.f32.gmra.mrb[0].mxu0 %v4219
      %v5183 = vpop.f32.mrb[0].mxu0
      %v5184 = vadd.f32 0.0, %v5183
      %v5185 = vpop.f32.mrb[0].mxu0
      %5186 = vmatprep.mubr.f32.mxu0 0.0
      %5187 = vmatmul.mubr.f32.gmra.mrb[0].mxu0 %v4221
      %v5188 = vpop.f32.mrb[0].mxu0
      %v5189 = vadd.f32 0.0, %v5188
      %v5190 = vpop.f32.mrb[0].mxu0
      %5191 = vmatprep.mubr.f32.mxu0 0.0
      %5192 = vmatmul.mubr.f32.gmra.mrb[0].mxu0 %v4223
      %v5193 = vpop.f32.mrb[0].mxu0
      %v5194 = vadd.f32 0.0, %v5193
      %v5195 = vpop.f32.mrb[0].mxu0
      %5196 = vmatprep.mubr.f32.mxu0 0.0
      %5197 = vmatmul.mubr.f32.gmra.mrb[0].mxu0 %v4225
      %v5198 = vpop.f32.mrb[0].mxu0
      %v5199 = vadd.f32 0.0, %v5198
      %v5200 = vpop.f32.mrb[0].mxu0
      %5201 = vmatprep.mubr.f32.mxu0 0.0
      %5202 = vmatmul.mubr.f32.gmra.mrb[0].mxu0 %v4227
      %v5203 = vpop.f32.mrb[0].mxu0
      %v5204 = vadd.f32 0.0, %v5203
      %v5205 = vpop.f32.mrb[0].mxu0
      %5206 = vmatprep.mubr.f32.mxu0 0.0
      %5207 = vmatmul.mubr.f32.gmra.mrb[0].mxu0 %v4229
      %v5208 = vpop.f32.mrb[0].mxu0
      %v5209 = vadd.f32 0.0, %v5208
      %v5210 = vpop.f32.mrb[0].mxu0
      %5211 = vmatprep.mubr.f32.mxu0 0.0
      %5212 = vmatmul.mubr.f32.gmra.mrb[0].mxu0 %v4231
      %v5213 = vpop.f32.mrb[0].mxu0
      %v5214 = vadd.f32 0.0, %v5213
      %v5215 = vpop.f32.mrb[0].mxu0
      %5216 = vmatprep.mubr.f32.mxu0 0.0
      %5217 = vmatmul.mubr.f32.gmra.mrb[0].mxu0 %v4233
      %v5218 = vpop.f32.mrb[0].mxu0
      %v5219 = vadd.f32 0.0, %v5218
      %v5220 = vpop.f32.mrb[0].mxu0
      %5221 = vmatprep.mubr.f32.mxu0 0.0
      %5222 = vmatmul.mubr.f32.gmra.mrb[0].mxu0 %v4235
      %v5223 = vpop.f32.mrb[0].mxu0
      %v5224 = vadd.f32 0.0, %v5223
      %v5225 = vpop.f32.mrb[0].mxu0
      %5226 = vmatprep.mubr.f32.mxu0 0.0
      %5227 = vmatmul.mubr.f32.gmra.mrb[0].mxu0 %v4237
      %v5228 = vpop.f32.mrb[0].mxu0
      %v5229 = vadd.f32 0.0, %v5228
      %v5230 = vpop.f32.mrb[0].mxu0
      %5231 = vmatprep.mubr.f32.mxu0 0.0
      %5232 = vmatmul.mubr.f32.gmra.mrb[0].mxu0 %v4239
      %v5233 = vpop.f32.mrb[0].mxu0
      %v5234 = vadd.f32 0.0, %v5233
      %v5235 = vpop.f32.mrb[0].mxu0
      %5236 = vmatprep.mubr.f32.mxu0 0.0
      %5237 = vmatmul.mubr.f32.gmra.mrb[0].mxu0 %v4241
      %v5238 = vpop.f32.mrb[0].mxu0
      %v5239 = vadd.f32 0.0, %v5238
      %v5240 = vpop.f32.mrb[0].mxu0
      %5241 = vmatprep.mubr.f32.mxu0 0.0
      %5242 = vmatmul.mubr.f32.gmra.mrb[0].mxu0 %v4243
      %v5243 = vpop.f32.mrb[0].mxu0
      %v5244 = vadd.f32 0.0, %v5243
      %v5245 = vpop.f32.mrb[0].mxu0
      %5246 = vmatprep.mubr.f32.mxu0 0.0
      %5247 = vmatmul.mubr.f32.gmra.mrb[0].mxu0 %v4245
      %v5248 = vpop.f32.mrb[0].mxu0
      %v5249 = vadd.f32 0.0, %v5248
      %v5250 = vpop.f32.mrb[0].mxu0
      %5251 = vmatprep.mubr.f32.mxu0 0.0
      %5252 = vmatmul.mubr.f32.gmra.mrb[0].mxu0 %v4247
      %v5253 = vpop.f32.mrb[0].mxu0
      %v5254 = vadd.f32 0.0, %v5253
      %v5255 = vpop.f32.mrb[0].mxu0
      %5256 = vmatprep.mubr.f32.mxu0 0.0
      %5257 = vmatmul.mubr.f32.gmra.mrb[0].mxu0 %v4249
      %v5258 = vpop.f32.mrb[0].mxu0
      %v5259 = vadd.f32 0.0, %v5258
      %v5260 = vpop.f32.mrb[0].mxu0
      %5261 = vmatprep.mubr.f32.mxu0 0.0
      %5262 = vmatmul.mubr.f32.gmra.mrb[0].mxu0 %v4251
      %v5263 = vpop.f32.mrb[0].mxu0
      %v5264 = vadd.f32 0.0, %v5263
      %v5265 = vpop.f32.mrb[0].mxu0
      %5266 = vmatprep.mubr.f32.mxu0 0.0
      %5267 = vmatmul.mubr.f32.gmra.mrb[0].mxu0 %v4253
      %v5268 = vpop.f32.mrb[0].mxu0
      %v5269 = vadd.f32 0.0, %v5268
      %v5270 = vpop.f32.mrb[0].mxu0
      %5271 = vmatprep.mubr.f32.mxu0 0.0
      %5272 = vmatmul.mubr.f32.gmra.mrb[0].mxu0 %v5053
      %v5273 = vpop.f32.mrb[0].mxu0
      %v5274 = vadd.f32 0.0, %v5273
      %v5275 = vpop.f32.mrb[0].mxu0
      %5276 = vmatprep.mubr.f32.mxu0 0.0
      %5277 = vmatmul.mubr.f32.gmra.mrb[0].mxu0 %v5055
      %v5278 = vpop.f32.mrb[0].mxu0
      %v5279 = vadd.f32 0.0, %v5278
      %v5280 = vpop.f32.mrb[0].mxu0
      %5281 = vdwg.mxu0
      %v5282 = vadd.f32 %v5014, %v5124
      %v5283 = vadd.f32 %v5015, %v5129
      %v5284 = vadd.f32 %v5016, %v5134
      %v5285 = vadd.f32 %v5017, %v5139
      %v5286 = vadd.f32 %v5018, %v5144
      %v5287 = vadd.f32 %v5019, %v5149
      %v5288 = vadd.f32 %v5020, %v5154
      %v5289 = vadd.f32 %v5021, %v5159
      %v5290 = vadd.f32 %v5022, %v5164
      %v5291 = vadd.f32 %v5023, %v5169
      %v5292 = vadd.f32 %v5024, %v5174
      %v5293 = vadd.f32 %v5025, %v5179
      %v5294 = vadd.f32 %v5026, %v5184
      %v5295 = vadd.f32 %v5027, %v5189
      %v5296 = vadd.f32 %v5028, %v5194
      %v5297 = vadd.f32 %v5029, %v5199
      %v5298 = vadd.f32 %v5030, %v5204
      %v5299 = vadd.f32 %v5031, %v5209
      %v5300 = vadd.f32 %v5032, %v5214
      %v5301 = vadd.f32 %v5033, %v5219
      %v5302 = vadd.f32 %v5034, %v5224
      %v5303 = vadd.f32 %v5035, %v5229
      %v5304 = vadd.f32 %v5036, %v5234
      %v5305 = vadd.f32 %v5037, %v5239
      %v5306 = vadd.f32 %v5038, %v5244
      %v5307 = vadd.f32 %v5039, %v5249
      %v5308 = vadd.f32 %v5040, %v5254
      %v5309 = vadd.f32 %v5041, %v5259
      %v5310 = vadd.f32 %v5042, %v5264
      %v5311 = vadd.f32 %v5043, %v5269
      %v5312 = vadd.f32 %v5044, %v5274
      %v5313 = vadd.f32 %v5045, %v5279
      %s5314 = scalar_lea.vmem %s3, 48
      %v5315 = vld [vmem:[%s5314] sm:$0xff]
      %v5317 = vsel %vm3257, %v3397, 0
      %v5320 = vsel %vm3257, %v3398, 0
      %5322 = vmatprep.subr.mxu0 0.0
      %5323 = vmatpush1.msra.mxu0 %v5315
      %5324 = vmatprep.subr.mxu0 0.0
      %5325 = vmatpush1.msra.mxu0 0.0
      %5326 = vmatprep.subr.mxu0 0.0
      %5327 = vmatpush1.msra.mxu0 0.0
      %5328 = vmatprep.subr.mxu0 0.0
      %5329 = vmatpush1.msra.mxu0 0.0
      %5330 = vmatprep.subr.mxu0 0.0
      %5331 = vmatpush1.msra.mxu0 0.0
      %5332 = vmatprep.subr.mxu0 0.0
      %5333 = vmatpush1.msra.mxu0 0.0
      %5334 = vmatprep.subr.mxu0 0.0
      %5335 = vmatpush1.msra.mxu0 0.0
      %5336 = vmatprep.subr.mxu0 0.0
      %5337 = vmatpush1.msra.mxu0 0.0
      %5338 = vmatprep.subr.mxu0 0.0
      %5339 = vmatpush1.msra.mxu0 0.0
      %5340 = vmatprep.subr.mxu0 0.0
      %5341 = vmatpush1.msra.mxu0 0.0
      %5342 = vmatprep.subr.mxu0 0.0
      %5343 = vmatpush1.msra.mxu0 0.0
      %5344 = vmatprep.subr.mxu0 0.0
      %5345 = vmatpush1.msra.mxu0 0.0
      %5346 = vmatprep.subr.mxu0 0.0
      %5347 = vmatpush1.msra.mxu0 0.0
      %5348 = vmatprep.subr.mxu0 0.0
      %5349 = vmatpush1.msra.mxu0 0.0
      %5350 = vmatprep.subr.mxu0 0.0
      %5351 = vmatpush1.msra.mxu0 0.0
      %5352 = vmatprep.subr.mxu0 0.0
      %5353 = vmatpush1.msra.mxu0 0.0
      %5354 = vmatprep.subr.mxu0 0.0
      %5355 = vmatpush1.msra.mxu0 0.0
      %5356 = vmatprep.subr.mxu0 0.0
      %5357 = vmatpush1.msra.mxu0 0.0
      %5358 = vmatprep.subr.mxu0 0.0
      %5359 = vmatpush1.msra.mxu0 0.0
      %5360 = vmatprep.subr.mxu0 0.0
      %5361 = vmatpush1.msra.mxu0 0.0
      %5362 = vmatprep.subr.mxu0 0.0
      %5363 = vmatpush1.msra.mxu0 0.0
      %5364 = vmatprep.subr.mxu0 0.0
      %5365 = vmatpush1.msra.mxu0 0.0
      %5366 = vmatprep.subr.mxu0 0.0
      %5367 = vmatpush1.msra.mxu0 0.0
      %5368 = vmatprep.subr.mxu0 0.0
      %5369 = vmatpush1.msra.mxu0 0.0
      %5370 = vmatprep.subr.mxu0 0.0
      %5371 = vmatpush1.msra.mxu0 0.0
      %5372 = vmatprep.subr.mxu0 0.0
      %5373 = vmatpush1.msra.mxu0 0.0
      %5374 = vmatprep.subr.mxu0 0.0
      %5375 = vmatpush1.msra.mxu0 0.0
      %5376 = vmatprep.subr.mxu0 0.0
      %5377 = vmatpush1.msra.mxu0 0.0
      %5378 = vmatprep.subr.mxu0 0.0
      %5379 = vmatpush1.msra.mxu0 0.0
      %5380 = vmatprep.subr.mxu0 0.0
      %5381 = vmatpush1.msra.mxu0 0.0
      %5382 = vmatprep.subr.mxu0 0.0
      %5383 = vmatpush1.msra.mxu0 0.0
      %5384 = vmatprep.subr.mxu0 0.0
      %5385 = vmatpush1.msra.mxu0 0.0
      %5386 = vmatprep.mubr.f32.mxu0 0.0
      %5387 = vmatmul.mubr.f32.gmra.mrb[0].mxu0 %v3828
      %v5388 = vpop.f32.mrb[0].mxu0
      %v5389 = vadd.f32 0.0, %v5388
      %v5390 = vpop.f32.mrb[0].mxu0
      %5391 = vmatprep.mubr.f32.mxu0 0.0
      %5392 = vmatmul.mubr.f32.gmra.mrb[0].mxu0 %v3830
      %v5393 = vpop.f32.mrb[0].mxu0
      %v5394 = vadd.f32 0.0, %v5393
      %v5395 = vpop.f32.mrb[0].mxu0
      %5396 = vmatprep.mubr.f32.mxu0 0.0
      %5397 = vmatmul.mubr.f32.gmra.mrb[0].mxu0 %v3832
      %v5398 = vpop.f32.mrb[0].mxu0
      %v5399 = vadd.f32 0.0, %v5398
      %v5400 = vpop.f32.mrb[0].mxu0
      %5401 = vmatprep.mubr.f32.mxu0 0.0
      %5402 = vmatmul.mubr.f32.gmra.mrb[0].mxu0 %v3834
      %v5403 = vpop.f32.mrb[0].mxu0
      %v5404 = vadd.f32 0.0, %v5403
      %v5405 = vpop.f32.mrb[0].mxu0
      %5406 = vmatprep.mubr.f32.mxu0 0.0
      %5407 = vmatmul.mubr.f32.gmra.mrb[0].mxu0 %v3836
      %v5408 = vpop.f32.mrb[0].mxu0
      %v5409 = vadd.f32 0.0, %v5408
      %v5410 = vpop.f32.mrb[0].mxu0
      %5411 = vmatprep.mubr.f32.mxu0 0.0
      %5412 = vmatmul.mubr.f32.gmra.mrb[0].mxu0 %v3838
      %v5413 = vpop.f32.mrb[0].mxu0
      %v5414 = vadd.f32 0.0, %v5413
      %v5415 = vpop.f32.mrb[0].mxu0
      %5416 = vmatprep.mubr.f32.mxu0 0.0
      %5417 = vmatmul.mubr.f32.gmra.mrb[0].mxu0 %v3840
      %v5418 = vpop.f32.mrb[0].mxu0
      %v5419 = vadd.f32 0.0, %v5418
      %v5420 = vpop.f32.mrb[0].mxu0
      %5421 = vmatprep.mubr.f32.mxu0 0.0
      %5422 = vmatmul.mubr.f32.gmra.mrb[0].mxu0 %v3842
      %v5423 = vpop.f32.mrb[0].mxu0
      %v5424 = vadd.f32 0.0, %v5423
      %v5425 = vpop.f32.mrb[0].mxu0
      %5426 = vmatprep.mubr.f32.mxu0 0.0
      %5427 = vmatmul.mubr.f32.gmra.mrb[0].mxu0 %v3844
      %v5428 = vpop.f32.mrb[0].mxu0
      %v5429 = vadd.f32 0.0, %v5428
      %v5430 = vpop.f32.mrb[0].mxu0
      %5431 = vmatprep.mubr.f32.mxu0 0.0
      %5432 = vmatmul.mubr.f32.gmra.mrb[0].mxu0 %v3846
      %v5433 = vpop.f32.mrb[0].mxu0
      %v5434 = vadd.f32 0.0, %v5433
      %v5435 = vpop.f32.mrb[0].mxu0
      %5436 = vmatprep.mubr.f32.mxu0 0.0
      %5437 = vmatmul.mubr.f32.gmra.mrb[0].mxu0 %v3848
      %v5438 = vpop.f32.mrb[0].mxu0
      %v5439 = vadd.f32 0.0, %v5438
      %v5440 = vpop.f32.mrb[0].mxu0
      %5441 = vmatprep.mubr.f32.mxu0 0.0
      %5442 = vmatmul.mubr.f32.gmra.mrb[0].mxu0 %v3850
      %v5443 = vpop.f32.mrb[0].mxu0
      %v5444 = vadd.f32 0.0, %v5443
      %v5445 = vpop.f32.mrb[0].mxu0
      %5446 = vmatprep.mubr.f32.mxu0 0.0
      %5447 = vmatmul.mubr.f32.gmra.mrb[0].mxu0 %v3852
      %v5448 = vpop.f32.mrb[0].mxu0
      %v5449 = vadd.f32 0.0, %v5448
      %v5450 = vpop.f32.mrb[0].mxu0
      %5451 = vmatprep.mubr.f32.mxu0 0.0
      %5452 = vmatmul.mubr.f32.gmra.mrb[0].mxu0 %v3854
      %v5453 = vpop.f32.mrb[0].mxu0
      %v5454 = vadd.f32 0.0, %v5453
      %v5455 = vpop.f32.mrb[0].mxu0
      %5456 = vmatprep.mubr.f32.mxu0 0.0
      %5457 = vmatmul.mubr.f32.gmra.mrb[0].mxu0 %v3856
      %v5458 = vpop.f32.mrb[0].mxu0
      %v5459 = vadd.f32 0.0, %v5458
      %v5460 = vpop.f32.mrb[0].mxu0
      %5461 = vmatprep.mubr.f32.mxu0 0.0
      %5462 = vmatmul.mubr.f32.gmra.mrb[0].mxu0 %v3858
      %v5463 = vpop.f32.mrb[0].mxu0
      %v5464 = vadd.f32 0.0, %v5463
      %v5465 = vpop.f32.mrb[0].mxu0
      %5466 = vmatprep.mubr.f32.mxu0 0.0
      %5467 = vmatmul.mubr.f32.gmra.mrb[0].mxu0 %v3860
      %v5468 = vpop.f32.mrb[0].mxu0
      %v5469 = vadd.f32 0.0, %v5468
      %v5470 = vpop.f32.mrb[0].mxu0
      %5471 = vmatprep.mubr.f32.mxu0 0.0
      %5472 = vmatmul.mubr.f32.gmra.mrb[0].mxu0 %v3862
      %v5473 = vpop.f32.mrb[0].mxu0
      %v5474 = vadd.f32 0.0, %v5473
      %v5475 = vpop.f32.mrb[0].mxu0
      %5476 = vmatprep.mubr.f32.mxu0 0.0
      %5477 = vmatmul.mubr.f32.gmra.mrb[0].mxu0 %v3864
      %v5478 = vpop.f32.mrb[0].mxu0
      %v5479 = vadd.f32 0.0, %v5478
      %v5480 = vpop.f32.mrb[0].mxu0
      %5481 = vmatprep.mubr.f32.mxu0 0.0
      %5482 = vmatmul.mubr.f32.gmra.mrb[0].mxu0 %v3866
      %v5483 = vpop.f32.mrb[0].mxu0
      %v5484 = vadd.f32 0.0, %v5483
      %v5485 = vpop.f32.mrb[0].mxu0
      %5486 = vmatprep.mubr.f32.mxu0 0.0
      %5487 = vmatmul.mubr.f32.gmra.mrb[0].mxu0 %v3868
      %v5488 = vpop.f32.mrb[0].mxu0
      %v5489 = vadd.f32 0.0, %v5488
      %v5490 = vpop.f32.mrb[0].mxu0
      %5491 = vmatprep.mubr.f32.mxu0 0.0
      %5492 = vmatmul.mubr.f32.gmra.mrb[0].mxu0 %v3870
      %v5493 = vpop.f32.mrb[0].mxu0
      %v5494 = vadd.f32 0.0, %v5493
      %v5495 = vpop.f32.mrb[0].mxu0
      %5496 = vmatprep.mubr.f32.mxu0 0.0
      %5497 = vmatmul.mubr.f32.gmra.mrb[0].mxu0 %v3872
      %v5498 = vpop.f32.mrb[0].mxu0
      %v5499 = vadd.f32 0.0, %v5498
      %v5500 = vpop.f32.mrb[0].mxu0
      %5501 = vmatprep.mubr.f32.mxu0 0.0
      %5502 = vmatmul.mubr.f32.gmra.mrb[0].mxu0 %v3874
      %v5503 = vpop.f32.mrb[0].mxu0
      %v5504 = vadd.f32 0.0, %v5503
      %v5505 = vpop.f32.mrb[0].mxu0
      %5506 = vmatprep.mubr.f32.mxu0 0.0
      %5507 = vmatmul.mubr.f32.gmra.mrb[0].mxu0 %v3876
      %v5508 = vpop.f32.mrb[0].mxu0
      %v5509 = vadd.f32 0.0, %v5508
      %v5510 = vpop.f32.mrb[0].mxu0
      %5511 = vmatprep.mubr.f32.mxu0 0.0
      %5512 = vmatmul.mubr.f32.gmra.mrb[0].mxu0 %v3878
      %v5513 = vpop.f32.mrb[0].mxu0
      %v5514 = vadd.f32 0.0, %v5513
      %v5515 = vpop.f32.mrb[0].mxu0
      %5516 = vmatprep.mubr.f32.mxu0 0.0
      %5517 = vmatmul.mubr.f32.gmra.mrb[0].mxu0 %v3880
      %v5518 = vpop.f32.mrb[0].mxu0
      %v5519 = vadd.f32 0.0, %v5518
      %v5520 = vpop.f32.mrb[0].mxu0
      %5521 = vmatprep.mubr.f32.mxu0 0.0
      %5522 = vmatmul.mubr.f32.gmra.mrb[0].mxu0 %v3882
      %v5523 = vpop.f32.mrb[0].mxu0
      %v5524 = vadd.f32 0.0, %v5523
      %v5525 = vpop.f32.mrb[0].mxu0
      %5526 = vmatprep.mubr.f32.mxu0 0.0
      %5527 = vmatmul.mubr.f32.gmra.mrb[0].mxu0 %v4515
      %v5528 = vpop.f32.mrb[0].mxu0
      %v5529 = vadd.f32 0.0, %v5528
      %v5530 = vpop.f32.mrb[0].mxu0
      %5531 = vmatprep.mubr.f32.mxu0 0.0
      %5532 = vmatmul.mubr.f32.gmra.mrb[0].mxu0 %v4518
      %v5533 = vpop.f32.mrb[0].mxu0
      %v5534 = vadd.f32 0.0, %v5533
      %v5535 = vpop.f32.mrb[0].mxu0
      %5536 = vmatprep.mubr.f32.mxu0 0.0
      %5537 = vmatmul.mubr.f32.gmra.mrb[0].mxu0 %v5317
      %v5538 = vpop.f32.mrb[0].mxu0
      %v5539 = vadd.f32 0.0, %v5538
      %v5540 = vpop.f32.mrb[0].mxu0
      %5541 = vmatprep.mubr.f32.mxu0 0.0
      %5542 = vmatmul.mubr.f32.gmra.mrb[0].mxu0 %v5320
      %v5543 = vpop.f32.mrb[0].mxu0
      %v5544 = vadd.f32 0.0, %v5543
      %v5545 = vpop.f32.mrb[0].mxu0
      %5546 = vdwg.mxu0
      %v5547 = vadd.f32 %v5282, %v5389
      %v5548 = vadd.f32 %v5283, %v5394
      %v5549 = vadd.f32 %v5284, %v5399
      %v5550 = vadd.f32 %v5285, %v5404
      %v5551 = vadd.f32 %v5286, %v5409
      %v5552 = vadd.f32 %v5287, %v5414
      %v5553 = vadd.f32 %v5288, %v5419
      %v5554 = vadd.f32 %v5289, %v5424
      %v5555 = vadd.f32 %v5290, %v5429
      %v5556 = vadd.f32 %v5291, %v5434
      %v5557 = vadd.f32 %v5292, %v5439
      %v5558 = vadd.f32 %v5293, %v5444
      %v5559 = vadd.f32 %v5294, %v5449
      %v5560 = vadd.f32 %v5295, %v5454
      %v5561 = vadd.f32 %v5296, %v5459
      %v5562 = vadd.f32 %v5297, %v5464
      %v5563 = vadd.f32 %v5298, %v5469
      %v5564 = vadd.f32 %v5299, %v5474
      %v5565 = vadd.f32 %v5300, %v5479
      %v5566 = vadd.f32 %v5301, %v5484
      %v5567 = vadd.f32 %v5302, %v5489
      %v5568 = vadd.f32 %v5303, %v5494
      %v5569 = vadd.f32 %v5304, %v5499
      %v5570 = vadd.f32 %v5305, %v5504
      %v5571 = vadd.f32 %v5306, %v5509
      %v5572 = vadd.f32 %v5307, %v5514
      %v5573 = vadd.f32 %v5308, %v5519
      %v5574 = vadd.f32 %v5309, %v5524
      %v5575 = vadd.f32 %v5310, %v5529
      %v5576 = vadd.f32 %v5311, %v5534
      %v5577 = vadd.f32 %v5312, %v5539
      %v5578 = vadd.f32 %v5313, %v5544
      %v5580 = vrot.slane %v3397, 1
      %v5581 = vrot.slane %v3398, 1
      %v5582 = vsel %vm489, %v5580, %v5581
      %v5583 = vrot.slane %v3399, 1
      %v5584 = vsel %vm489, %v5581, %v5583
      %s5585 = scalar_lea.vmem %s3, 56
      %v5586 = vld [vmem:[%s5585] sm:$0xff]
      %v5587 = vsel %vm3257, %v5582, 0
      %v5589 = vsel %vm3257, %v5584, 0
      %5591 = vmatprep.subr.mxu0 0.0
      %5592 = vmatpush1.msra.mxu0 %v5586
      %5593 = vmatprep.subr.mxu0 0.0
      %5594 = vmatpush1.msra.mxu0 0.0
      %5595 = vmatprep.subr.mxu0 0.0
      %5596 = vmatpush1.msra.mxu0 0.0
      %5597 = vmatprep.subr.mxu0 0.0
      %5598 = vmatpush1.msra.mxu0 0.0
      %5599 = vmatprep.subr.mxu0 0.0
      %5600 = vmatpush1.msra.mxu0 0.0
      %5601 = vmatprep.subr.mxu0 0.0
      %5602 = vmatpush1.msra.mxu0 0.0
      %5603 = vmatprep.subr.mxu0 0.0
      %5604 = vmatpush1.msra.mxu0 0.0
      %5605 = vmatprep.subr.mxu0 0.0
      %5606 = vmatpush1.msra.mxu0 0.0
      %5607 = vmatprep.subr.mxu0 0.0
      %5608 = vmatpush1.msra.mxu0 0.0
      %5609 = vmatprep.subr.mxu0 0.0
      %5610 = vmatpush1.msra.mxu0 0.0
      %5611 = vmatprep.subr.mxu0 0.0
      %5612 = vmatpush1.msra.mxu0 0.0
      %5613 = vmatprep.subr.mxu0 0.0
      %5614 = vmatpush1.msra.mxu0 0.0
      %5615 = vmatprep.subr.mxu0 0.0
      %5616 = vmatpush1.msra.mxu0 0.0
      %5617 = vmatprep.subr.mxu0 0.0
      %5618 = vmatpush1.msra.mxu0 0.0
      %5619 = vmatprep.subr.mxu0 0.0
      %5620 = vmatpush1.msra.mxu0 0.0
      %5621 = vmatprep.subr.mxu0 0.0
      %5622 = vmatpush1.msra.mxu0 0.0
      %5623 = vmatprep.subr.mxu0 0.0
      %5624 = vmatpush1.msra.mxu0 0.0
      %5625 = vmatprep.subr.mxu0 0.0
      %5626 = vmatpush1.msra.mxu0 0.0
      %5627 = vmatprep.subr.mxu0 0.0
      %5628 = vmatpush1.msra.mxu0 0.0
      %5629 = vmatprep.subr.mxu0 0.0
      %5630 = vmatpush1.msra.mxu0 0.0
      %5631 = vmatprep.subr.mxu0 0.0
      %5632 = vmatpush1.msra.mxu0 0.0
      %5633 = vmatprep.subr.mxu0 0.0
      %5634 = vmatpush1.msra.mxu0 0.0
      %5635 = vmatprep.subr.mxu0 0.0
      %5636 = vmatpush1.msra.mxu0 0.0
      %5637 = vmatprep.subr.mxu0 0.0
      %5638 = vmatpush1.msra.mxu0 0.0
      %5639 = vmatprep.subr.mxu0 0.0
      %5640 = vmatpush1.msra.mxu0 0.0
      %5641 = vmatprep.subr.mxu0 0.0
      %5642 = vmatpush1.msra.mxu0 0.0
      %5643 = vmatprep.subr.mxu0 0.0
      %5644 = vmatpush1.msra.mxu0 0.0
      %5645 = vmatprep.subr.mxu0 0.0
      %5646 = vmatpush1.msra.mxu0 0.0
      %5647 = vmatprep.subr.mxu0 0.0
      %5648 = vmatpush1.msra.mxu0 0.0
      %5649 = vmatprep.subr.mxu0 0.0
      %5650 = vmatpush1.msra.mxu0 0.0
      %5651 = vmatprep.subr.mxu0 0.0
      %5652 = vmatpush1.msra.mxu0 0.0
      %5653 = vmatprep.subr.mxu0 0.0
      %5654 = vmatpush1.msra.mxu0 0.0
      %5655 = vmatprep.mubr.f32.mxu0 0.0
      %5656 = vmatmul.mubr.f32.gmra.mrb[0].mxu0 %v3539
      %v5657 = vpop.f32.mrb[0].mxu0
      %v5658 = vadd.f32 0.0, %v5657
      %v5659 = vpop.f32.mrb[0].mxu0
      %5660 = vmatprep.mubr.f32.mxu0 0.0
      %5661 = vmatmul.mubr.f32.gmra.mrb[0].mxu0 %v3541
      %v5662 = vpop.f32.mrb[0].mxu0
      %v5663 = vadd.f32 0.0, %v5662
      %v5664 = vpop.f32.mrb[0].mxu0
      %5665 = vmatprep.mubr.f32.mxu0 0.0
      %5666 = vmatmul.mubr.f32.gmra.mrb[0].mxu0 %v3543
      %v5667 = vpop.f32.mrb[0].mxu0
      %v5668 = vadd.f32 0.0, %v5667
      %v5669 = vpop.f32.mrb[0].mxu0
      %5670 = vmatprep.mubr.f32.mxu0 0.0
      %5671 = vmatmul.mubr.f32.gmra.mrb[0].mxu0 %v3545
      %v5672 = vpop.f32.mrb[0].mxu0
      %v5673 = vadd.f32 0.0, %v5672
      %v5674 = vpop.f32.mrb[0].mxu0
      %5675 = vmatprep.mubr.f32.mxu0 0.0
      %5676 = vmatmul.mubr.f32.gmra.mrb[0].mxu0 %v3547
      %v5677 = vpop.f32.mrb[0].mxu0
      %v5678 = vadd.f32 0.0, %v5677
      %v5679 = vpop.f32.mrb[0].mxu0
      %5680 = vmatprep.mubr.f32.mxu0 0.0
      %5681 = vmatmul.mubr.f32.gmra.mrb[0].mxu0 %v3549
      %v5682 = vpop.f32.mrb[0].mxu0
      %v5683 = vadd.f32 0.0, %v5682
      %v5684 = vpop.f32.mrb[0].mxu0
      %5685 = vmatprep.mubr.f32.mxu0 0.0
      %5686 = vmatmul.mubr.f32.gmra.mrb[0].mxu0 %v3551
      %v5687 = vpop.f32.mrb[0].mxu0
      %v5688 = vadd.f32 0.0, %v5687
      %v5689 = vpop.f32.mrb[0].mxu0
      %5690 = vmatprep.mubr.f32.mxu0 0.0
      %5691 = vmatmul.mubr.f32.gmra.mrb[0].mxu0 %v3553
      %v5692 = vpop.f32.mrb[0].mxu0
      %v5693 = vadd.f32 0.0, %v5692
      %v5694 = vpop.f32.mrb[0].mxu0
      %5695 = vmatprep.mubr.f32.mxu0 0.0
      %5696 = vmatmul.mubr.f32.gmra.mrb[0].mxu0 %v3555
      %v5697 = vpop.f32.mrb[0].mxu0
      %v5698 = vadd.f32 0.0, %v5697
      %v5699 = vpop.f32.mrb[0].mxu0
      %5700 = vmatprep.mubr.f32.mxu0 0.0
      %5701 = vmatmul.mubr.f32.gmra.mrb[0].mxu0 %v3557
      %v5702 = vpop.f32.mrb[0].mxu0
      %v5703 = vadd.f32 0.0, %v5702
      %v5704 = vpop.f32.mrb[0].mxu0
      %5705 = vmatprep.mubr.f32.mxu0 0.0
      %5706 = vmatmul.mubr.f32.gmra.mrb[0].mxu0 %v3559
      %v5707 = vpop.f32.mrb[0].mxu0
      %v5708 = vadd.f32 0.0, %v5707
      %v5709 = vpop.f32.mrb[0].mxu0
      %5710 = vmatprep.mubr.f32.mxu0 0.0
      %5711 = vmatmul.mubr.f32.gmra.mrb[0].mxu0 %v3561
      %v5712 = vpop.f32.mrb[0].mxu0
      %v5713 = vadd.f32 0.0, %v5712
      %v5714 = vpop.f32.mrb[0].mxu0
      %5715 = vmatprep.mubr.f32.mxu0 0.0
      %5716 = vmatmul.mubr.f32.gmra.mrb[0].mxu0 %v3563
      %v5717 = vpop.f32.mrb[0].mxu0
      %v5718 = vadd.f32 0.0, %v5717
      %v5719 = vpop.f32.mrb[0].mxu0
      %5720 = vmatprep.mubr.f32.mxu0 0.0
      %5721 = vmatmul.mubr.f32.gmra.mrb[0].mxu0 %v3565
      %v5722 = vpop.f32.mrb[0].mxu0
      %v5723 = vadd.f32 0.0, %v5722
      %v5724 = vpop.f32.mrb[0].mxu0
      %5725 = vmatprep.mubr.f32.mxu0 0.0
      %5726 = vmatmul.mubr.f32.gmra.mrb[0].mxu0 %v3567
      %v5727 = vpop.f32.mrb[0].mxu0
      %v5728 = vadd.f32 0.0, %v5727
      %v5729 = vpop.f32.mrb[0].mxu0
      %5730 = vmatprep.mubr.f32.mxu0 0.0
      %5731 = vmatmul.mubr.f32.gmra.mrb[0].mxu0 %v3569
      %v5732 = vpop.f32.mrb[0].mxu0
      %v5733 = vadd.f32 0.0, %v5732
      %v5734 = vpop.f32.mrb[0].mxu0
      %5735 = vmatprep.mubr.f32.mxu0 0.0
      %5736 = vmatmul.mubr.f32.gmra.mrb[0].mxu0 %v3571
      %v5737 = vpop.f32.mrb[0].mxu0
      %v5738 = vadd.f32 0.0, %v5737
      %v5739 = vpop.f32.mrb[0].mxu0
      %5740 = vmatprep.mubr.f32.mxu0 0.0
      %5741 = vmatmul.mubr.f32.gmra.mrb[0].mxu0 %v3573
      %v5742 = vpop.f32.mrb[0].mxu0
      %v5743 = vadd.f32 0.0, %v5742
      %v5744 = vpop.f32.mrb[0].mxu0
      %5745 = vmatprep.mubr.f32.mxu0 0.0
      %5746 = vmatmul.mubr.f32.gmra.mrb[0].mxu0 %v3575
      %v5747 = vpop.f32.mrb[0].mxu0
      %v5748 = vadd.f32 0.0, %v5747
      %v5749 = vpop.f32.mrb[0].mxu0
      %5750 = vmatprep.mubr.f32.mxu0 0.0
      %5751 = vmatmul.mubr.f32.gmra.mrb[0].mxu0 %v3577
      %v5752 = vpop.f32.mrb[0].mxu0
      %v5753 = vadd.f32 0.0, %v5752
      %v5754 = vpop.f32.mrb[0].mxu0
      %5755 = vmatprep.mubr.f32.mxu0 0.0
      %5756 = vmatmul.mubr.f32.gmra.mrb[0].mxu0 %v3579
      %v5757 = vpop.f32.mrb[0].mxu0
      %v5758 = vadd.f32 0.0, %v5757
      %v5759 = vpop.f32.mrb[0].mxu0
      %5760 = vmatprep.mubr.f32.mxu0 0.0
      %5761 = vmatmul.mubr.f32.gmra.mrb[0].mxu0 %v3581
      %v5762 = vpop.f32.mrb[0].mxu0
      %v5763 = vadd.f32 0.0, %v5762
      %v5764 = vpop.f32.mrb[0].mxu0
      %5765 = vmatprep.mubr.f32.mxu0 0.0
      %5766 = vmatmul.mubr.f32.gmra.mrb[0].mxu0 %v3583
      %v5767 = vpop.f32.mrb[0].mxu0
      %v5768 = vadd.f32 0.0, %v5767
      %v5769 = vpop.f32.mrb[0].mxu0
      %5770 = vmatprep.mubr.f32.mxu0 0.0
      %5771 = vmatmul.mubr.f32.gmra.mrb[0].mxu0 %v3585
      %v5772 = vpop.f32.mrb[0].mxu0
      %v5773 = vadd.f32 0.0, %v5772
      %v5774 = vpop.f32.mrb[0].mxu0
      %5775 = vmatprep.mubr.f32.mxu0 0.0
      %5776 = vmatmul.mubr.f32.gmra.mrb[0].mxu0 %v3587
      %v5777 = vpop.f32.mrb[0].mxu0
      %v5778 = vadd.f32 0.0, %v5777
      %v5779 = vpop.f32.mrb[0].mxu0
      %5780 = vmatprep.mubr.f32.mxu0 0.0
      %5781 = vmatmul.mubr.f32.gmra.mrb[0].mxu0 %v3589
      %v5782 = vpop.f32.mrb[0].mxu0
      %v5783 = vadd.f32 0.0, %v5782
      %v5784 = vpop.f32.mrb[0].mxu0
      %5785 = vmatprep.mubr.f32.mxu0 0.0
      %5786 = vmatmul.mubr.f32.gmra.mrb[0].mxu0 %v3591
      %v5787 = vpop.f32.mrb[0].mxu0
      %v5788 = vadd.f32 0.0, %v5787
      %v5789 = vpop.f32.mrb[0].mxu0
      %5790 = vmatprep.mubr.f32.mxu0 0.0
      %5791 = vmatmul.mubr.f32.gmra.mrb[0].mxu0 %v3593
      %v5792 = vpop.f32.mrb[0].mxu0
      %v5793 = vadd.f32 0.0, %v5792
      %v5794 = vpop.f32.mrb[0].mxu0
      %5795 = vmatprep.mubr.f32.mxu0 0.0
      %5796 = vmatmul.mubr.f32.gmra.mrb[0].mxu0 %v4785
      %v5797 = vpop.f32.mrb[0].mxu0
      %v5798 = vadd.f32 0.0, %v5797
      %v5799 = vpop.f32.mrb[0].mxu0
      %5800 = vmatprep.mubr.f32.mxu0 0.0
      %5801 = vmatmul.mubr.f32.gmra.mrb[0].mxu0 %v4787
      %v5802 = vpop.f32.mrb[0].mxu0
      %v5803 = vadd.f32 0.0, %v5802
      %v5804 = vpop.f32.mrb[0].mxu0
      %5805 = vmatprep.mubr.f32.mxu0 0.0
      %5806 = vmatmul.mubr.f32.gmra.mrb[0].mxu0 %v5587
      %v5807 = vpop.f32.mrb[0].mxu0
      %v5808 = vadd.f32 0.0, %v5807
      %v5809 = vpop.f32.mrb[0].mxu0
      %5810 = vmatprep.mubr.f32.mxu0 0.0
      %5811 = vmatmul.mubr.f32.gmra.mrb[0].mxu0 %v5589
      %v5812 = vpop.f32.mrb[0].mxu0
      %v5813 = vadd.f32 0.0, %v5812
      %v5814 = vpop.f32.mrb[0].mxu0
      %5815 = vdwg.mxu0
      %v5816 = vadd.f32 %v5547, %v5658
      %v5817 = vadd.f32 %v5548, %v5663
      %v5818 = vadd.f32 %v5549, %v5668
      %v5819 = vadd.f32 %v5550, %v5673
      %v5820 = vadd.f32 %v5551, %v5678
      %v5821 = vadd.f32 %v5552, %v5683
      %v5822 = vadd.f32 %v5553, %v5688
      %v5823 = vadd.f32 %v5554, %v5693
      %v5824 = vadd.f32 %v5555, %v5698
      %v5825 = vadd.f32 %v5556, %v5703
      %v5826 = vadd.f32 %v5557, %v5708
      %v5827 = vadd.f32 %v5558, %v5713
      %v5828 = vadd.f32 %v5559, %v5718
      %v5829 = vadd.f32 %v5560, %v5723
      %v5830 = vadd.f32 %v5561, %v5728
      %v5831 = vadd.f32 %v5562, %v5733
      %v5832 = vadd.f32 %v5563, %v5738
      %v5833 = vadd.f32 %v5564, %v5743
      %v5834 = vadd.f32 %v5565, %v5748
      %v5835 = vadd.f32 %v5566, %v5753
      %v5836 = vadd.f32 %v5567, %v5758
      %v5837 = vadd.f32 %v5568, %v5763
      %v5838 = vadd.f32 %v5569, %v5768
      %v5839 = vadd.f32 %v5570, %v5773
      %v5840 = vadd.f32 %v5571, %v5778
      %v5841 = vadd.f32 %v5572, %v5783
      %v5842 = vadd.f32 %v5573, %v5788
      %v5843 = vadd.f32 %v5574, %v5793
      %v5844 = vadd.f32 %v5575, %v5798
      %v5845 = vadd.f32 %v5576, %v5803
      %v5846 = vadd.f32 %v5577, %v5808
      %v5847 = vadd.f32 %v5578, %v5813
      %v5848 = vrot.slane %v3397, 2
      %v5849 = vrot.slane %v3398, 2
      %v5850 = vsel %vm1157, %v5848, %v5849
      %v5851 = vrot.slane %v3399, 2
      %v5852 = vsel %vm1157, %v5849, %v5851
      %s5853 = scalar_lea.vmem %s3, 64
      %v5854 = vld [vmem:[%s5853] sm:$0xff]
      %v5855 = vsel %vm3257, %v5850, 0
      %v5857 = vsel %vm3257, %v5852, 0
      %5859 = vmatprep.subr.mxu0 0.0
      %5860 = vmatpush1.msra.mxu0 %v5854
      %5861 = vmatprep.subr.mxu0 0.0
      %5862 = vmatpush1.msra.mxu0 0.0
      %5863 = vmatprep.subr.mxu0 0.0
      %5864 = vmatpush1.msra.mxu0 0.0
      %5865 = vmatprep.subr.mxu0 0.0
      %5866 = vmatpush1.msra.mxu0 0.0
      %5867 = vmatprep.subr.mxu0 0.0
      %5868 = vmatpush1.msra.mxu0 0.0
      %5869 = vmatprep.subr.mxu0 0.0
      %5870 = vmatpush1.msra.mxu0 0.0
      %5871 = vmatprep.subr.mxu0 0.0
      %5872 = vmatpush1.msra.mxu0 0.0
      %5873 = vmatprep.subr.mxu0 0.0
      %5874 = vmatpush1.msra.mxu0 0.0
      %5875 = vmatprep.subr.mxu0 0.0
      %5876 = vmatpush1.msra.mxu0 0.0
      %5877 = vmatprep.subr.mxu0 0.0
      %5878 = vmatpush1.msra.mxu0 0.0
      %5879 = vmatprep.subr.mxu0 0.0
      %5880 = vmatpush1.msra.mxu0 0.0
      %5881 = vmatprep.subr.mxu0 0.0
      %5882 = vmatpush1.msra.mxu0 0.0
      %5883 = vmatprep.subr.mxu0 0.0
      %5884 = vmatpush1.msra.mxu0 0.0
      %5885 = vmatprep.subr.mxu0 0.0
      %5886 = vmatpush1.msra.mxu0 0.0
      %5887 = vmatprep.subr.mxu0 0.0
      %5888 = vmatpush1.msra.mxu0 0.0
      %5889 = vmatprep.subr.mxu0 0.0
      %5890 = vmatpush1.msra.mxu0 0.0
      %5891 = vmatprep.subr.mxu0 0.0
      %5892 = vmatpush1.msra.mxu0 0.0
      %5893 = vmatprep.subr.mxu0 0.0
      %5894 = vmatpush1.msra.mxu0 0.0
      %5895 = vmatprep.subr.mxu0 0.0
      %5896 = vmatpush1.msra.mxu0 0.0
      %5897 = vmatprep.subr.mxu0 0.0
      %5898 = vmatpush1.msra.mxu0 0.0
      %5899 = vmatprep.subr.mxu0 0.0
      %5900 = vmatpush1.msra.mxu0 0.0
      %5901 = vmatprep.subr.mxu0 0.0
      %5902 = vmatpush1.msra.mxu0 0.0
      %5903 = vmatprep.subr.mxu0 0.0
      %5904 = vmatpush1.msra.mxu0 0.0
      %5905 = vmatprep.subr.mxu0 0.0
      %5906 = vmatpush1.msra.mxu0 0.0
      %5907 = vmatprep.subr.mxu0 0.0
      %5908 = vmatpush1.msra.mxu0 0.0
      %5909 = vmatprep.subr.mxu0 0.0
      %5910 = vmatpush1.msra.mxu0 0.0
      %5911 = vmatprep.subr.mxu0 0.0
      %5912 = vmatpush1.msra.mxu0 0.0
      %5913 = vmatprep.subr.mxu0 0.0
      %5914 = vmatpush1.msra.mxu0 0.0
      %5915 = vmatprep.subr.mxu0 0.0
      %5916 = vmatpush1.msra.mxu0 0.0
      %5917 = vmatprep.subr.mxu0 0.0
      %5918 = vmatpush1.msra.mxu0 0.0
      %5919 = vmatprep.subr.mxu0 0.0
      %5920 = vmatpush1.msra.mxu0 0.0
      %5921 = vmatprep.subr.mxu0 0.0
      %5922 = vmatpush1.msra.mxu0 0.0
      %5923 = vmatprep.mubr.f32.mxu0 0.0
      %5924 = vmatmul.mubr.f32.gmra.mrb[0].mxu0 %v4199
      %v5925 = vpop.f32.mrb[0].mxu0
      %v5926 = vadd.f32 0.0, %v5925
      %v5927 = vpop.f32.mrb[0].mxu0
      %5928 = vmatprep.mubr.f32.mxu0 0.0
      %5929 = vmatmul.mubr.f32.gmra.mrb[0].mxu0 %v4201
      %v5930 = vpop.f32.mrb[0].mxu0
      %v5931 = vadd.f32 0.0, %v5930
      %v5932 = vpop.f32.mrb[0].mxu0
      %5933 = vmatprep.mubr.f32.mxu0 0.0
      %5934 = vmatmul.mubr.f32.gmra.mrb[0].mxu0 %v4203
      %v5935 = vpop.f32.mrb[0].mxu0
      %v5936 = vadd.f32 0.0, %v5935
      %v5937 = vpop.f32.mrb[0].mxu0
      %5938 = vmatprep.mubr.f32.mxu0 0.0
      %5939 = vmatmul.mubr.f32.gmra.mrb[0].mxu0 %v4205
      %v5940 = vpop.f32.mrb[0].mxu0
      %v5941 = vadd.f32 0.0, %v5940
      %v5942 = vpop.f32.mrb[0].mxu0
      %5943 = vmatprep.mubr.f32.mxu0 0.0
      %5944 = vmatmul.mubr.f32.gmra.mrb[0].mxu0 %v4207
      %v5945 = vpop.f32.mrb[0].mxu0
      %v5946 = vadd.f32 0.0, %v5945
      %v5947 = vpop.f32.mrb[0].mxu0
      %5948 = vmatprep.mubr.f32.mxu0 0.0
      %5949 = vmatmul.mubr.f32.gmra.mrb[0].mxu0 %v4209
      %v5950 = vpop.f32.mrb[0].mxu0
      %v5951 = vadd.f32 0.0, %v5950
      %v5952 = vpop.f32.mrb[0].mxu0
      %5953 = vmatprep.mubr.f32.mxu0 0.0
      %5954 = vmatmul.mubr.f32.gmra.mrb[0].mxu0 %v4211
      %v5955 = vpop.f32.mrb[0].mxu0
      %v5956 = vadd.f32 0.0, %v5955
      %v5957 = vpop.f32.mrb[0].mxu0
      %5958 = vmatprep.mubr.f32.mxu0 0.0
      %5959 = vmatmul.mubr.f32.gmra.mrb[0].mxu0 %v4213
      %v5960 = vpop.f32.mrb[0].mxu0
      %v5961 = vadd.f32 0.0, %v5960
      %v5962 = vpop.f32.mrb[0].mxu0
      %5963 = vmatprep.mubr.f32.mxu0 0.0
      %5964 = vmatmul.mubr.f32.gmra.mrb[0].mxu0 %v4215
      %v5965 = vpop.f32.mrb[0].mxu0
      %v5966 = vadd.f32 0.0, %v5965
      %v5967 = vpop.f32.mrb[0].mxu0
      %5968 = vmatprep.mubr.f32.mxu0 0.0
      %5969 = vmatmul.mubr.f32.gmra.mrb[0].mxu0 %v4217
      %v5970 = vpop.f32.mrb[0].mxu0
      %v5971 = vadd.f32 0.0, %v5970
      %v5972 = vpop.f32.mrb[0].mxu0
      %5973 = vmatprep.mubr.f32.mxu0 0.0
      %5974 = vmatmul.mubr.f32.gmra.mrb[0].mxu0 %v4219
      %v5975 = vpop.f32.mrb[0].mxu0
      %v5976 = vadd.f32 0.0, %v5975
      %v5977 = vpop.f32.mrb[0].mxu0
      %5978 = vmatprep.mubr.f32.mxu0 0.0
      %5979 = vmatmul.mubr.f32.gmra.mrb[0].mxu0 %v4221
      %v5980 = vpop.f32.mrb[0].mxu0
      %v5981 = vadd.f32 0.0, %v5980
      %v5982 = vpop.f32.mrb[0].mxu0
      %5983 = vmatprep.mubr.f32.mxu0 0.0
      %5984 = vmatmul.mubr.f32.gmra.mrb[0].mxu0 %v4223
      %v5985 = vpop.f32.mrb[0].mxu0
      %v5986 = vadd.f32 0.0, %v5985
      %v5987 = vpop.f32.mrb[0].mxu0
      %5988 = vmatprep.mubr.f32.mxu0 0.0
      %5989 = vmatmul.mubr.f32.gmra.mrb[0].mxu0 %v4225
      %v5990 = vpop.f32.mrb[0].mxu0
      %v5991 = vadd.f32 0.0, %v5990
      %v5992 = vpop.f32.mrb[0].mxu0
      %5993 = vmatprep.mubr.f32.mxu0 0.0
      %5994 = vmatmul.mubr.f32.gmra.mrb[0].mxu0 %v4227
      %v5995 = vpop.f32.mrb[0].mxu0
      %v5996 = vadd.f32 0.0, %v5995
      %v5997 = vpop.f32.mrb[0].mxu0
      %5998 = vmatprep.mubr.f32.mxu0 0.0
      %5999 = vmatmul.mubr.f32.gmra.mrb[0].mxu0 %v4229
      %v6000 = vpop.f32.mrb[0].mxu0
      %v6001 = vadd.f32 0.0, %v6000
      %v6002 = vpop.f32.mrb[0].mxu0
      %6003 = vmatprep.mubr.f32.mxu0 0.0
      %6004 = vmatmul.mubr.f32.gmra.mrb[0].mxu0 %v4231
      %v6005 = vpop.f32.mrb[0].mxu0
      %v6006 = vadd.f32 0.0, %v6005
      %v6007 = vpop.f32.mrb[0].mxu0
      %6008 = vmatprep.mubr.f32.mxu0 0.0
      %6009 = vmatmul.mubr.f32.gmra.mrb[0].mxu0 %v4233
      %v6010 = vpop.f32.mrb[0].mxu0
      %v6011 = vadd.f32 0.0, %v6010
      %v6012 = vpop.f32.mrb[0].mxu0
      %6013 = vmatprep.mubr.f32.mxu0 0.0
      %6014 = vmatmul.mubr.f32.gmra.mrb[0].mxu0 %v4235
      %v6015 = vpop.f32.mrb[0].mxu0
      %v6016 = vadd.f32 0.0, %v6015
      %v6017 = vpop.f32.mrb[0].mxu0
      %6018 = vmatprep.mubr.f32.mxu0 0.0
      %6019 = vmatmul.mubr.f32.gmra.mrb[0].mxu0 %v4237
      %v6020 = vpop.f32.mrb[0].mxu0
      %v6021 = vadd.f32 0.0, %v6020
      %v6022 = vpop.f32.mrb[0].mxu0
      %6023 = vmatprep.mubr.f32.mxu0 0.0
      %6024 = vmatmul.mubr.f32.gmra.mrb[0].mxu0 %v4239
      %v6025 = vpop.f32.mrb[0].mxu0
      %v6026 = vadd.f32 0.0, %v6025
      %v6027 = vpop.f32.mrb[0].mxu0
      %6028 = vmatprep.mubr.f32.mxu0 0.0
      %6029 = vmatmul.mubr.f32.gmra.mrb[0].mxu0 %v4241
      %v6030 = vpop.f32.mrb[0].mxu0
      %v6031 = vadd.f32 0.0, %v6030
      %v6032 = vpop.f32.mrb[0].mxu0
      %6033 = vmatprep.mubr.f32.mxu0 0.0
      %6034 = vmatmul.mubr.f32.gmra.mrb[0].mxu0 %v4243
      %v6035 = vpop.f32.mrb[0].mxu0
      %v6036 = vadd.f32 0.0, %v6035
      %v6037 = vpop.f32.mrb[0].mxu0
      %6038 = vmatprep.mubr.f32.mxu0 0.0
      %6039 = vmatmul.mubr.f32.gmra.mrb[0].mxu0 %v4245
      %v6040 = vpop.f32.mrb[0].mxu0
      %v6041 = vadd.f32 0.0, %v6040
      %v6042 = vpop.f32.mrb[0].mxu0
      %6043 = vmatprep.mubr.f32.mxu0 0.0
      %6044 = vmatmul.mubr.f32.gmra.mrb[0].mxu0 %v4247
      %v6045 = vpop.f32.mrb[0].mxu0
      %v6046 = vadd.f32 0.0, %v6045
      %v6047 = vpop.f32.mrb[0].mxu0
      %6048 = vmatprep.mubr.f32.mxu0 0.0
      %6049 = vmatmul.mubr.f32.gmra.mrb[0].mxu0 %v4249
      %v6050 = vpop.f32.mrb[0].mxu0
      %v6051 = vadd.f32 0.0, %v6050
      %v6052 = vpop.f32.mrb[0].mxu0
      %6053 = vmatprep.mubr.f32.mxu0 0.0
      %6054 = vmatmul.mubr.f32.gmra.mrb[0].mxu0 %v4251
      %v6055 = vpop.f32.mrb[0].mxu0
      %v6056 = vadd.f32 0.0, %v6055
      %v6057 = vpop.f32.mrb[0].mxu0
      %6058 = vmatprep.mubr.f32.mxu0 0.0
      %6059 = vmatmul.mubr.f32.gmra.mrb[0].mxu0 %v4253
      %v6060 = vpop.f32.mrb[0].mxu0
      %v6061 = vadd.f32 0.0, %v6060
      %v6062 = vpop.f32.mrb[0].mxu0
      %6063 = vmatprep.mubr.f32.mxu0 0.0
      %6064 = vmatmul.mubr.f32.gmra.mrb[0].mxu0 %v5053
      %v6065 = vpop.f32.mrb[0].mxu0
      %v6066 = vadd.f32 0.0, %v6065
      %v6067 = vpop.f32.mrb[0].mxu0
      %6068 = vmatprep.mubr.f32.mxu0 0.0
      %6069 = vmatmul.mubr.f32.gmra.mrb[0].mxu0 %v5055
      %v6070 = vpop.f32.mrb[0].mxu0
      %v6071 = vadd.f32 0.0, %v6070
      %v6072 = vpop.f32.mrb[0].mxu0
      %6073 = vmatprep.mubr.f32.mxu0 0.0
      %6074 = vmatmul.mubr.f32.gmra.mrb[0].mxu0 %v5855
      %v6075 = vpop.f32.mrb[0].mxu0
      %v6076 = vadd.f32 0.0, %v6075
      %v6077 = vpop.f32.mrb[0].mxu0
      %6078 = vmatprep.mubr.f32.mxu0 0.0
      %6079 = vmatmul.mubr.f32.gmra.mrb[0].mxu0 %v5857
      %v6080 = vpop.f32.mrb[0].mxu0
      %v6081 = vadd.f32 0.0, %v6080
      %v6082 = vpop.f32.mrb[0].mxu0
      %6083 = vdwg.mxu0
      %v6084 = vadd.f32 %v5816, %v5926
      %v6085 = vadd.f32 %v5817, %v5931
      %v6086 = vadd.f32 %v5818, %v5936
      %v6087 = vadd.f32 %v5819, %v5941
      %v6088 = vadd.f32 %v5820, %v5946
      %v6089 = vadd.f32 %v5821, %v5951
      %v6090 = vadd.f32 %v5822, %v5956
      %v6091 = vadd.f32 %v5823, %v5961
      %v6092 = vadd.f32 %v5824, %v5966
      %v6093 = vadd.f32 %v5825, %v5971
      %v6094 = vadd.f32 %v5826, %v5976
      %v6095 = vadd.f32 %v5827, %v5981
      %v6096 = vadd.f32 %v5828, %v5986
      %v6097 = vadd.f32 %v5829, %v5991
      %v6098 = vadd.f32 %v5830, %v5996
      %v6099 = vadd.f32 %v5831, %v6001
      %v6100 = vadd.f32 %v5832, %v6006
      %v6101 = vadd.f32 %v5833, %v6011
      %v6102 = vadd.f32 %v5834, %v6016
      %v6103 = vadd.f32 %v5835, %v6021
      %v6104 = vadd.f32 %v5836, %v6026
      %v6105 = vadd.f32 %v5837, %v6031
      %v6106 = vadd.f32 %v5838, %v6036
      %v6107 = vadd.f32 %v5839, %v6041
      %v6108 = vadd.f32 %v5840, %v6046
      %v6109 = vadd.f32 %v5841, %v6051
      %v6110 = vadd.f32 %v5842, %v6056
      %v6111 = vadd.f32 %v5843, %v6061
      %v6112 = vadd.f32 %v5844, %v6066
      %v6113 = vadd.f32 %v5845, %v6071
      %v6114 = vadd.f32 %v5846, %v6076
      %v6115 = vadd.f32 %v5847, %v6081
      %v6116 = vld [vmem:[%s4] sm:$0x1]
      %v6118 = vlaneseq
      %v6119 = vshrl.u32 %v6118, 7
      %v6120 = vsub.s32 0, %v6119
      %v6121 = vrot.slane %v6116, %v6120
      %v6123 = vadd.f32 %v6084, %v6121
      %v6124 = vadd.f32 %v6085, %v6121
      %v6125 = vadd.f32 %v6086, %v6121
      %v6126 = vadd.f32 %v6087, %v6121
      %v6127 = vadd.f32 %v6088, %v6121
      %v6128 = vadd.f32 %v6089, %v6121
      %v6129 = vadd.f32 %v6090, %v6121
      %v6130 = vadd.f32 %v6091, %v6121
      %v6131 = vadd.f32 %v6092, %v6121
      %v6132 = vadd.f32 %v6093, %v6121
      %v6133 = vadd.f32 %v6094, %v6121
      %v6134 = vadd.f32 %v6095, %v6121
      %v6135 = vadd.f32 %v6096, %v6121
      %v6136 = vadd.f32 %v6097, %v6121
      %v6137 = vadd.f32 %v6098, %v6121
      %v6138 = vadd.f32 %v6099, %v6121
      %v6139 = vadd.f32 %v6100, %v6121
      %v6140 = vadd.f32 %v6101, %v6121
      %v6141 = vadd.f32 %v6102, %v6121
      %v6142 = vadd.f32 %v6103, %v6121
      %v6143 = vadd.f32 %v6104, %v6121
      %v6144 = vadd.f32 %v6105, %v6121
      %v6145 = vadd.f32 %v6106, %v6121
      %v6146 = vadd.f32 %v6107, %v6121
      %v6147 = vadd.f32 %v6108, %v6121
      %v6148 = vadd.f32 %v6109, %v6121
      %v6149 = vadd.f32 %v6110, %v6121
      %v6150 = vadd.f32 %v6111, %v6121
      %v6151 = vadd.f32 %v6112, %v6121
      %v6152 = vadd.f32 %v6113, %v6121
      %v6153 = vadd.f32 %v6114, %v6121
      %v6154 = vadd.f32 %v6115, %v6121
      %v6155 = vmax.f32 %v6123, 0.0
      %v6156 = vmax.f32 %v6124, 0.0
      %v6157 = vmax.f32 %v6125, 0.0
      %v6158 = vmax.f32 %v6126, 0.0
      %v6159 = vmax.f32 %v6127, 0.0
      %v6160 = vmax.f32 %v6128, 0.0
      %v6161 = vmax.f32 %v6129, 0.0
      %v6162 = vmax.f32 %v6130, 0.0
      %v6163 = vmax.f32 %v6131, 0.0
      %v6164 = vmax.f32 %v6132, 0.0
      %v6165 = vmax.f32 %v6133, 0.0
      %v6166 = vmax.f32 %v6134, 0.0
      %v6167 = vmax.f32 %v6135, 0.0
      %v6168 = vmax.f32 %v6136, 0.0
      %v6169 = vmax.f32 %v6137, 0.0
      %v6170 = vmax.f32 %v6138, 0.0
      %v6171 = vmax.f32 %v6139, 0.0
      %v6172 = vmax.f32 %v6140, 0.0
      %v6173 = vmax.f32 %v6141, 0.0
      %v6174 = vmax.f32 %v6142, 0.0
      %v6175 = vmax.f32 %v6143, 0.0
      %v6176 = vmax.f32 %v6144, 0.0
      %v6177 = vmax.f32 %v6145, 0.0
      %v6178 = vmax.f32 %v6146, 0.0
      %v6179 = vmax.f32 %v6147, 0.0
      %v6180 = vmax.f32 %v6148, 0.0
      %v6181 = vmax.f32 %v6149, 0.0
      %v6182 = vmax.f32 %v6150, 0.0
      %v6183 = vmax.f32 %v6151, 0.0
      %v6184 = vmax.f32 %v6152, 0.0
      %v6185 = vmax.f32 %v6153, 0.0
      %v6186 = vmax.f32 %v6154, 0.0
      %6187 = vst.msk [vmem:[%s259] sm:$0xff] %vm3257, %v6155
      %6188 = vst.msk [vmem:[%s259 + $0x8] sm:$0xff] %vm3257, %v6156
      %6189 = vst.msk [vmem:[%s259 + $0x10] sm:$0xff] %vm3257, %v6157
      %6190 = vst.msk [vmem:[%s259 + $0x18] sm:$0xff] %vm3257, %v6158
      %6191 = vst.msk [vmem:[%s259 + $0x20] sm:$0xff] %vm3257, %v6159
      %6192 = vst.msk [vmem:[%s259 + $0x28] sm:$0xff] %vm3257, %v6160
      %6193 = vst.msk [vmem:[%s259 + $0x30] sm:$0xff] %vm3257, %v6161
      %6194 = vst.msk [vmem:[%s259 + $0x38] sm:$0xff] %vm3257, %v6162
      %6195 = vst.msk [vmem:[%s259 + $0x40] sm:$0xff] %vm3257, %v6163
      %6196 = vst.msk [vmem:[%s259 + $0x48] sm:$0xff] %vm3257, %v6164
      %6197 = vst.msk [vmem:[%s259 + $0x50] sm:$0xff] %vm3257, %v6165
      %6198 = vst.msk [vmem:[%s259 + $0x58] sm:$0xff] %vm3257, %v6166
      %6199 = vst.msk [vmem:[%s259 + $0x60] sm:$0xff] %vm3257, %v6167
      %6200 = vst.msk [vmem:[%s259 + $0x68] sm:$0xff] %vm3257, %v6168
      %6201 = vst.msk [vmem:[%s259 + $0x70] sm:$0xff] %vm3257, %v6169
      %6202 = vst.msk [vmem:[%s259 + $0x78] sm:$0xff] %vm3257, %v6170
      %6203 = vst.msk [vmem:[%s259 + $0x80] sm:$0xff] %vm3257, %v6171
      %6204 = vst.msk [vmem:[%s259 + $0x88] sm:$0xff] %vm3257, %v6172
      %6205 = vst.msk [vmem:[%s259 + $0x90] sm:$0xff] %vm3257, %v6173
      %6206 = vst.msk [vmem:[%s259 + $0x98] sm:$0xff] %vm3257, %v6174
      %6207 = vst.msk [vmem:[%s259 + $0xa0] sm:$0xff] %vm3257, %v6175
      %6208 = vst.msk [vmem:[%s259 + $0xa8] sm:$0xff] %vm3257, %v6176
      %6209 = vst.msk [vmem:[%s259 + $0xb0] sm:$0xff] %vm3257, %v6177
      %6210 = vst.msk [vmem:[%s259 + $0xb8] sm:$0xff] %vm3257, %v6178
      %6211 = vst.msk [vmem:[%s259 + $0xc0] sm:$0xff] %vm3257, %v6179
      %6212 = vst.msk [vmem:[%s259 + $0xc8] sm:$0xff] %vm3257, %v6180
      %6213 = vst.msk [vmem:[%s259 + $0xd0] sm:$0xff] %vm3257, %v6181
      %6214 = vst.msk [vmem:[%s259 + $0xd8] sm:$0xff] %vm3257, %v6182
      %6215 = vst.msk [vmem:[%s259 + $0xe0] sm:$0xff] %vm3257, %v6183
      %6216 = vst.msk [vmem:[%s259 + $0xe8] sm:$0xff] %vm3257, %v6184
      %6217 = vst.msk [vmem:[%s259 + $0xf0] sm:$0xff] %vm3257, %v6185
      %6218 = vst.msk [vmem:[%s259 + $0xf8] sm:$0xff] %vm3257, %v6186
      %v6219 = vsel %vm3257, %v6155, -inf
      %v6220 = vsel %vm3257, %v6157, -inf
      %v6221 = vmax.f32 %v6219, %v6220
      %v6222 = vsel %vm3257, %v6156, -inf
      %v6223 = vsel %vm3257, %v6158, -inf
      %v6224 = vmax.f32 %v6222, %v6223
      %v6225 = vsel %vm3257, %v6159, -inf
      %v6226 = vsel %vm3257, %v6161, -inf
      %v6227 = vmax.f32 %v6225, %v6226
      %v6228 = vsel %vm3257, %v6160, -inf
      %v6229 = vsel %vm3257, %v6162, -inf
      %v6230 = vmax.f32 %v6228, %v6229
      %v6231 = vsel %vm3257, %v6163, -inf
      %v6232 = vsel %vm3257, %v6165, -inf
      %v6233 = vmax.f32 %v6231, %v6232
      %v6234 = vsel %vm3257, %v6164, -inf
      %v6235 = vsel %vm3257, %v6166, -inf
      %v6236 = vmax.f32 %v6234, %v6235
      %v6237 = vsel %vm3257, %v6167, -inf
      %v6238 = vsel %vm3257, %v6169, -inf
      %v6239 = vmax.f32 %v6237, %v6238
      %v6240 = vsel %vm3257, %v6168, -inf
      %v6241 = vsel %vm3257, %v6170, -inf
      %v6242 = vmax.f32 %v6240, %v6241
      %v6243 = vsel %vm3257, %v6171, -inf
      %v6244 = vsel %vm3257, %v6173, -inf
      %v6245 = vmax.f32 %v6243, %v6244
      %v6246 = vsel %vm3257, %v6172, -inf
      %v6247 = vsel %vm3257, %v6174, -inf
      %v6248 = vmax.f32 %v6246, %v6247
      %v6249 = vsel %vm3257, %v6175, -inf
      %v6250 = vsel %vm3257, %v6177, -inf
      %v6251 = vmax.f32 %v6249, %v6250
      %v6252 = vsel %vm3257, %v6176, -inf
      %v6253 = vsel %vm3257, %v6178, -inf
      %v6254 = vmax.f32 %v6252, %v6253
      %v6255 = vsel %vm3257, %v6179, -inf
      %v6256 = vsel %vm3257, %v6181, -inf
      %v6257 = vmax.f32 %v6255, %v6256
      %v6258 = vsel %vm3257, %v6180, -inf
      %v6259 = vsel %vm3257, %v6182, -inf
      %v6260 = vmax.f32 %v6258, %v6259
      %v6261 = vsel %vm3257, %v6183, -inf
      %v6262 = vsel %vm3257, %v6185, -inf
      %v6263 = vmax.f32 %v6261, %v6262
      %v6264 = vsel %vm3257, %v6184, -inf
      %v6265 = vsel %vm3257, %v6186, -inf
      %v6266 = vmax.f32 %v6264, %v6265
      %v6283 = vcombine.high %v6221, %v6221
      %v6285 = vunpack.c.l.s4 1983009808
      %v6286 = vunpack.c.0.s8 %v6285
      %v6287 = vlaneseq
      %v6288 = vshrl.u32 %v6287, 7
      %v6289 = vsub.s32 %v6286, %v6288
      %v6290 = vrot.slane %v6221, %v6289
      %v6292 = vunpack.c.l.s4 1983009808
      %v6293 = vunpack.c.0.s8 %v6292
      %v6294 = vlaneseq
      %v6295 = vshrl.u32 %v6294, 7
      %v6296 = vsub.s32 %v6293, %v6295
      %v6297 = vrot.slane %v6283, %v6296
      %v6298 = vcombine.high %v6290, %v6290
      %v6299 = vcombine.high %v6297, %v6297
      %v6300 = vcombine.high %v6224, %v6224
      %v6302 = vunpack.c.l.s4 1983009808
      %v6303 = vunpack.c.0.s8 %v6302
      %v6304 = vlaneseq
      %v6305 = vshrl.u32 %v6304, 7
      %v6306 = vsub.s32 %v6303, %v6305
      %v6307 = vrot.slane %v6224, %v6306
      %v6309 = vunpack.c.l.s4 1983009808
      %v6310 = vunpack.c.0.s8 %v6309
      %v6311 = vlaneseq
      %v6312 = vshrl.u32 %v6311, 7
      %v6313 = vsub.s32 %v6310, %v6312
      %v6314 = vrot.slane %v6300, %v6313
      %v6315 = vcombine.high %v6307, %v6307
      %v6316 = vcombine.high %v6314, %v6314
      %v6317 = vcombine.high %v6227, %v6227
      %v6319 = vunpack.c.l.s4 1983009808
      %v6320 = vunpack.c.0.s8 %v6319
      %v6321 = vlaneseq
      %v6322 = vshrl.u32 %v6321, 7
      %v6323 = vsub.s32 %v6320, %v6322
      %v6324 = vrot.slane %v6227, %v6323
      %v6326 = vunpack.c.l.s4 1983009808
      %v6327 = vunpack.c.0.s8 %v6326
      %v6328 = vlaneseq
      %v6329 = vshrl.u32 %v6328, 7
      %v6330 = vsub.s32 %v6327, %v6329
      %v6331 = vrot.slane %v6317, %v6330
      %v6332 = vcombine.high %v6324, %v6324
      %v6333 = vcombine.high %v6331, %v6331
      %v6334 = vcombine.high %v6230, %v6230
      %v6336 = vunpack.c.l.s4 1983009808
      %v6337 = vunpack.c.0.s8 %v6336
      %v6338 = vlaneseq
      %v6339 = vshrl.u32 %v6338, 7
      %v6340 = vsub.s32 %v6337, %v6339
      %v6341 = vrot.slane %v6230, %v6340
      %v6343 = vunpack.c.l.s4 1983009808
      %v6344 = vunpack.c.0.s8 %v6343
      %v6345 = vlaneseq
      %v6346 = vshrl.u32 %v6345, 7
      %v6347 = vsub.s32 %v6344, %v6346
      %v6348 = vrot.slane %v6334, %v6347
      %v6349 = vcombine.high %v6341, %v6341
      %v6350 = vcombine.high %v6348, %v6348
      %v6351 = vcombine.high %v6233, %v6233
      %v6353 = vunpack.c.l.s4 1983009808
      %v6354 = vunpack.c.0.s8 %v6353
      %v6355 = vlaneseq
      %v6356 = vshrl.u32 %v6355, 7
      %v6357 = vsub.s32 %v6354, %v6356
      %v6358 = vrot.slane %v6233, %v6357
      %v6360 = vunpack.c.l.s4 1983009808
      %v6361 = vunpack.c.0.s8 %v6360
      %v6362 = vlaneseq
      %v6363 = vshrl.u32 %v6362, 7
      %v6364 = vsub.s32 %v6361, %v6363
      %v6365 = vrot.slane %v6351, %v6364
      %v6366 = vcombine.high %v6358, %v6358
      %v6367 = vcombine.high %v6365, %v6365
      %v6368 = vcombine.high %v6236, %v6236
      %v6370 = vunpack.c.l.s4 1983009808
      %v6371 = vunpack.c.0.s8 %v6370
      %v6372 = vlaneseq
      %v6373 = vshrl.u32 %v6372, 7
      %v6374 = vsub.s32 %v6371, %v6373
      %v6375 = vrot.slane %v6236, %v6374
      %v6377 = vunpack.c.l.s4 1983009808
      %v6378 = vunpack.c.0.s8 %v6377
      %v6379 = vlaneseq
      %v6380 = vshrl.u32 %v6379, 7
      %v6381 = vsub.s32 %v6378, %v6380
      %v6382 = vrot.slane %v6368, %v6381
      %v6383 = vcombine.high %v6375, %v6375
      %v6384 = vcombine.high %v6382, %v6382
      %v6385 = vcombine.high %v6239, %v6239
      %v6387 = vunpack.c.l.s4 1983009808
      %v6388 = vunpack.c.0.s8 %v6387
      %v6389 = vlaneseq
      %v6390 = vshrl.u32 %v6389, 7
      %v6391 = vsub.s32 %v6388, %v6390
      %v6392 = vrot.slane %v6239, %v6391
      %v6394 = vunpack.c.l.s4 1983009808
      %v6395 = vunpack.c.0.s8 %v6394
      %v6396 = vlaneseq
      %v6397 = vshrl.u32 %v6396, 7
      %v6398 = vsub.s32 %v6395, %v6397
      %v6399 = vrot.slane %v6385, %v6398
      %v6400 = vcombine.high %v6392, %v6392
      %v6401 = vcombine.high %v6399, %v6399
      %v6402 = vcombine.high %v6242, %v6242
      %v6404 = vunpack.c.l.s4 1983009808
      %v6405 = vunpack.c.0.s8 %v6404
      %v6406 = vlaneseq
      %v6407 = vshrl.u32 %v6406, 7
      %v6408 = vsub.s32 %v6405, %v6407
      %v6409 = vrot.slane %v6242, %v6408
      %v6411 = vunpack.c.l.s4 1983009808
      %v6412 = vunpack.c.0.s8 %v6411
      %v6413 = vlaneseq
      %v6414 = vshrl.u32 %v6413, 7
      %v6415 = vsub.s32 %v6412, %v6414
      %v6416 = vrot.slane %v6402, %v6415
      %v6417 = vcombine.high %v6409, %v6409
      %v6418 = vcombine.high %v6416, %v6416
      %v6419 = vcombine.high %v6245, %v6245
      %v6421 = vunpack.c.l.s4 1983009808
      %v6422 = vunpack.c.0.s8 %v6421
      %v6423 = vlaneseq
      %v6424 = vshrl.u32 %v6423, 7
      %v6425 = vsub.s32 %v6422, %v6424
      %v6426 = vrot.slane %v6245, %v6425
      %v6428 = vunpack.c.l.s4 1983009808
      %v6429 = vunpack.c.0.s8 %v6428
      %v6430 = vlaneseq
      %v6431 = vshrl.u32 %v6430, 7
      %v6432 = vsub.s32 %v6429, %v6431
      %v6433 = vrot.slane %v6419, %v6432
      %v6434 = vcombine.high %v6426, %v6426
      %v6435 = vcombine.high %v6433, %v6433
      %v6436 = vcombine.high %v6248, %v6248
      %v6438 = vunpack.c.l.s4 1983009808
      %v6439 = vunpack.c.0.s8 %v6438
      %v6440 = vlaneseq
      %v6441 = vshrl.u32 %v6440, 7
      %v6442 = vsub.s32 %v6439, %v6441
      %v6443 = vrot.slane %v6248, %v6442
      %v6445 = vunpack.c.l.s4 1983009808
      %v6446 = vunpack.c.0.s8 %v6445
      %v6447 = vlaneseq
      %v6448 = vshrl.u32 %v6447, 7
      %v6449 = vsub.s32 %v6446, %v6448
      %v6450 = vrot.slane %v6436, %v6449
      %v6451 = vcombine.high %v6443, %v6443
      %v6452 = vcombine.high %v6450, %v6450
      %v6453 = vcombine.high %v6251, %v6251
      %v6455 = vunpack.c.l.s4 1983009808
      %v6456 = vunpack.c.0.s8 %v6455
      %v6457 = vlaneseq
      %v6458 = vshrl.u32 %v6457, 7
      %v6459 = vsub.s32 %v6456, %v6458
      %v6460 = vrot.slane %v6251, %v6459
      %v6462 = vunpack.c.l.s4 1983009808
      %v6463 = vunpack.c.0.s8 %v6462
      %v6464 = vlaneseq
      %v6465 = vshrl.u32 %v6464, 7
      %v6466 = vsub.s32 %v6463, %v6465
      %v6467 = vrot.slane %v6453, %v6466
      %v6468 = vcombine.high %v6460, %v6460
      %v6469 = vcombine.high %v6467, %v6467
      %v6470 = vcombine.high %v6254, %v6254
      %v6472 = vunpack.c.l.s4 1983009808
      %v6473 = vunpack.c.0.s8 %v6472
      %v6474 = vlaneseq
      %v6475 = vshrl.u32 %v6474, 7
      %v6476 = vsub.s32 %v6473, %v6475
      %v6477 = vrot.slane %v6254, %v6476
      %v6479 = vunpack.c.l.s4 1983009808
      %v6480 = vunpack.c.0.s8 %v6479
      %v6481 = vlaneseq
      %v6482 = vshrl.u32 %v6481, 7
      %v6483 = vsub.s32 %v6480, %v6482
      %v6484 = vrot.slane %v6470, %v6483
      %v6485 = vcombine.high %v6477, %v6477
      %v6486 = vcombine.high %v6484, %v6484
      %v6487 = vcombine.high %v6257, %v6257
      %v6489 = vunpack.c.l.s4 1983009808
      %v6490 = vunpack.c.0.s8 %v6489
      %v6491 = vlaneseq
      %v6492 = vshrl.u32 %v6491, 7
      %v6493 = vsub.s32 %v6490, %v6492
      %v6494 = vrot.slane %v6257, %v6493
      %v6496 = vunpack.c.l.s4 1983009808
      %v6497 = vunpack.c.0.s8 %v6496
      %v6498 = vlaneseq
      %v6499 = vshrl.u32 %v6498, 7
      %v6500 = vsub.s32 %v6497, %v6499
      %v6501 = vrot.slane %v6487, %v6500
      %v6502 = vcombine.high %v6494, %v6494
      %v6503 = vcombine.high %v6501, %v6501
      %v6504 = vcombine.high %v6260, %v6260
      %v6506 = vunpack.c.l.s4 1983009808
      %v6507 = vunpack.c.0.s8 %v6506
      %v6508 = vlaneseq
      %v6509 = vshrl.u32 %v6508, 7
      %v6510 = vsub.s32 %v6507, %v6509
      %v6511 = vrot.slane %v6260, %v6510
      %v6513 = vunpack.c.l.s4 1983009808
      %v6514 = vunpack.c.0.s8 %v6513
      %v6515 = vlaneseq
      %v6516 = vshrl.u32 %v6515, 7
      %v6517 = vsub.s32 %v6514, %v6516
      %v6518 = vrot.slane %v6504, %v6517
      %v6519 = vcombine.high %v6511, %v6511
      %v6520 = vcombine.high %v6518, %v6518
      %v6521 = vcombine.high %v6263, %v6263
      %v6523 = vunpack.c.l.s4 1983009808
      %v6524 = vunpack.c.0.s8 %v6523
      %v6525 = vlaneseq
      %v6526 = vshrl.u32 %v6525, 7
      %v6527 = vsub.s32 %v6524, %v6526
      %v6528 = vrot.slane %v6263, %v6527
      %v6530 = vunpack.c.l.s4 1983009808
      %v6531 = vunpack.c.0.s8 %v6530
      %v6532 = vlaneseq
      %v6533 = vshrl.u32 %v6532, 7
      %v6534 = vsub.s32 %v6531, %v6533
      %v6535 = vrot.slane %v6521, %v6534
      %v6536 = vcombine.high %v6528, %v6528
      %v6537 = vcombine.high %v6535, %v6535
      %v6538 = vcombine.high %v6266, %v6266
      %v6540 = vunpack.c.l.s4 1983009808
      %v6541 = vunpack.c.0.s8 %v6540
      %v6542 = vlaneseq
      %v6543 = vshrl.u32 %v6542, 7
      %v6544 = vsub.s32 %v6541, %v6543
      %v6545 = vrot.slane %v6266, %v6544
      %v6547 = vunpack.c.l.s4 1983009808
      %v6548 = vunpack.c.0.s8 %v6547
      %v6549 = vlaneseq
      %v6550 = vshrl.u32 %v6549, 7
      %v6551 = vsub.s32 %v6548, %v6550
      %v6552 = vrot.slane %v6538, %v6551
      %v6553 = vcombine.high %v6545, %v6545
      %v6554 = vcombine.high %v6552, %v6552
      %v6619 = vsel %vm3260, %v6290, -inf
      %v6620 = vrot.slane %v6619, 4
      %v6621 = vmax.f32 %v6619, %v6620
      %v6622 = vrot.slane %v6621, 2
      %v6623 = vmax.f32 %v6621, %v6622
      %v6624 = vrot.slane %v6623, 1
      %v6625 = vmax.f32 %v6623, %v6624
      %v6626 = vsel %vm3260, %v6298, -inf
      %v6627 = vrot.slane %v6626, 4
      %v6628 = vmax.f32 %v6626, %v6627
      %v6629 = vrot.slane %v6628, 2
      %v6630 = vmax.f32 %v6628, %v6629
      %v6631 = vrot.slane %v6630, 1
      %v6632 = vmax.f32 %v6630, %v6631
      %v6633 = vsel %vm3260, %v6297, -inf
      %v6634 = vrot.slane %v6633, 4
      %v6635 = vmax.f32 %v6633, %v6634
      %v6636 = vrot.slane %v6635, 2
      %v6637 = vmax.f32 %v6635, %v6636
      %v6638 = vrot.slane %v6637, 1
      %v6639 = vmax.f32 %v6637, %v6638
      %v6640 = vsel %vm3260, %v6299, -inf
      %v6641 = vrot.slane %v6640, 4
      %v6642 = vmax.f32 %v6640, %v6641
      %v6643 = vrot.slane %v6642, 2
      %v6644 = vmax.f32 %v6642, %v6643
      %v6645 = vrot.slane %v6644, 1
      %v6646 = vmax.f32 %v6644, %v6645
      %v6647 = vsel %vm3260, %v6307, -inf
      %v6648 = vrot.slane %v6647, 4
      %v6649 = vmax.f32 %v6647, %v6648
      %v6650 = vrot.slane %v6649, 2
      %v6651 = vmax.f32 %v6649, %v6650
      %v6652 = vrot.slane %v6651, 1
      %v6653 = vmax.f32 %v6651, %v6652
      %v6654 = vsel %vm3260, %v6315, -inf
      %v6655 = vrot.slane %v6654, 4
      %v6656 = vmax.f32 %v6654, %v6655
      %v6657 = vrot.slane %v6656, 2
      %v6658 = vmax.f32 %v6656, %v6657
      %v6659 = vrot.slane %v6658, 1
      %v6660 = vmax.f32 %v6658, %v6659
      %v6661 = vsel %vm3260, %v6314, -inf
      %v6662 = vrot.slane %v6661, 4
      %v6663 = vmax.f32 %v6661, %v6662
      %v6664 = vrot.slane %v6663, 2
      %v6665 = vmax.f32 %v6663, %v6664
      %v6666 = vrot.slane %v6665, 1
      %v6667 = vmax.f32 %v6665, %v6666
      %v6668 = vsel %vm3260, %v6316, -inf
      %v6669 = vrot.slane %v6668, 4
      %v6670 = vmax.f32 %v6668, %v6669
      %v6671 = vrot.slane %v6670, 2
      %v6672 = vmax.f32 %v6670, %v6671
      %v6673 = vrot.slane %v6672, 1
      %v6674 = vmax.f32 %v6672, %v6673
      %v6675 = vsel %vm3260, %v6324, -inf
      %v6676 = vrot.slane %v6675, 4
      %v6677 = vmax.f32 %v6675, %v6676
      %v6678 = vrot.slane %v6677, 2
      %v6679 = vmax.f32 %v6677, %v6678
      %v6680 = vrot.slane %v6679, 1
      %v6681 = vmax.f32 %v6679, %v6680
      %v6682 = vsel %vm3260, %v6332, -inf
      %v6683 = vrot.slane %v6682, 4
      %v6684 = vmax.f32 %v6682, %v6683
      %v6685 = vrot.slane %v6684, 2
      %v6686 = vmax.f32 %v6684, %v6685
      %v6687 = vrot.slane %v6686, 1
      %v6688 = vmax.f32 %v6686, %v6687
      %v6689 = vsel %vm3260, %v6331, -inf
      %v6690 = vrot.slane %v6689, 4
      %v6691 = vmax.f32 %v6689, %v6690
      %v6692 = vrot.slane %v6691, 2
      %v6693 = vmax.f32 %v6691, %v6692
      %v6694 = vrot.slane %v6693, 1
      %v6695 = vmax.f32 %v6693, %v6694
      %v6696 = vsel %vm3260, %v6333, -inf
      %v6697 = vrot.slane %v6696, 4
      %v6698 = vmax.f32 %v6696, %v6697
      %v6699 = vrot.slane %v6698, 2
      %v6700 = vmax.f32 %v6698, %v6699
      %v6701 = vrot.slane %v6700, 1
      %v6702 = vmax.f32 %v6700, %v6701
      %v6703 = vsel %vm3260, %v6341, -inf
      %v6704 = vrot.slane %v6703, 4
      %v6705 = vmax.f32 %v6703, %v6704
      %v6706 = vrot.slane %v6705, 2
      %v6707 = vmax.f32 %v6705, %v6706
      %v6708 = vrot.slane %v6707, 1
      %v6709 = vmax.f32 %v6707, %v6708
      %v6710 = vsel %vm3260, %v6349, -inf
      %v6711 = vrot.slane %v6710, 4
      %v6712 = vmax.f32 %v6710, %v6711
      %v6713 = vrot.slane %v6712, 2
      %v6714 = vmax.f32 %v6712, %v6713
      %v6715 = vrot.slane %v6714, 1
      %v6716 = vmax.f32 %v6714, %v6715
      %v6717 = vsel %vm3260, %v6348, -inf
      %v6718 = vrot.slane %v6717, 4
      %v6719 = vmax.f32 %v6717, %v6718
      %v6720 = vrot.slane %v6719, 2
      %v6721 = vmax.f32 %v6719, %v6720
      %v6722 = vrot.slane %v6721, 1
      %v6723 = vmax.f32 %v6721, %v6722
      %v6724 = vsel %vm3260, %v6350, -inf
      %v6725 = vrot.slane %v6724, 4
      %v6726 = vmax.f32 %v6724, %v6725
      %v6727 = vrot.slane %v6726, 2
      %v6728 = vmax.f32 %v6726, %v6727
      %v6729 = vrot.slane %v6728, 1
      %v6730 = vmax.f32 %v6728, %v6729
      %v6731 = vsel %vm3260, %v6358, -inf
      %v6732 = vrot.slane %v6731, 4
      %v6733 = vmax.f32 %v6731, %v6732
      %v6734 = vrot.slane %v6733, 2
      %v6735 = vmax.f32 %v6733, %v6734
      %v6736 = vrot.slane %v6735, 1
      %v6737 = vmax.f32 %v6735, %v6736
      %v6738 = vsel %vm3260, %v6366, -inf
      %v6739 = vrot.slane %v6738, 4
      %v6740 = vmax.f32 %v6738, %v6739
      %v6741 = vrot.slane %v6740, 2
      %v6742 = vmax.f32 %v6740, %v6741
      %v6743 = vrot.slane %v6742, 1
      %v6744 = vmax.f32 %v6742, %v6743
      %v6745 = vsel %vm3260, %v6365, -inf
      %v6746 = vrot.slane %v6745, 4
      %v6747 = vmax.f32 %v6745, %v6746
      %v6748 = vrot.slane %v6747, 2
      %v6749 = vmax.f32 %v6747, %v6748
      %v6750 = vrot.slane %v6749, 1
      %v6751 = vmax.f32 %v6749, %v6750
      %v6752 = vsel %vm3260, %v6367, -inf
      %v6753 = vrot.slane %v6752, 4
      %v6754 = vmax.f32 %v6752, %v6753
      %v6755 = vrot.slane %v6754, 2
      %v6756 = vmax.f32 %v6754, %v6755
      %v6757 = vrot.slane %v6756, 1
      %v6758 = vmax.f32 %v6756, %v6757
      %v6759 = vsel %vm3260, %v6375, -inf
      %v6760 = vrot.slane %v6759, 4
      %v6761 = vmax.f32 %v6759, %v6760
      %v6762 = vrot.slane %v6761, 2
      %v6763 = vmax.f32 %v6761, %v6762
      %v6764 = vrot.slane %v6763, 1
      %v6765 = vmax.f32 %v6763, %v6764
      %v6766 = vsel %vm3260, %v6383, -inf
      %v6767 = vrot.slane %v6766, 4
      %v6768 = vmax.f32 %v6766, %v6767
      %v6769 = vrot.slane %v6768, 2
      %v6770 = vmax.f32 %v6768, %v6769
      %v6771 = vrot.slane %v6770, 1
      %v6772 = vmax.f32 %v6770, %v6771
      %v6773 = vsel %vm3260, %v6382, -inf
      %v6774 = vrot.slane %v6773, 4
      %v6775 = vmax.f32 %v6773, %v6774
      %v6776 = vrot.slane %v6775, 2
      %v6777 = vmax.f32 %v6775, %v6776
      %v6778 = vrot.slane %v6777, 1
      %v6779 = vmax.f32 %v6777, %v6778
      %v6780 = vsel %vm3260, %v6384, -inf
      %v6781 = vrot.slane %v6780, 4
      %v6782 = vmax.f32 %v6780, %v6781
      %v6783 = vrot.slane %v6782, 2
      %v6784 = vmax.f32 %v6782, %v6783
      %v6785 = vrot.slane %v6784, 1
      %v6786 = vmax.f32 %v6784, %v6785
      %v6787 = vsel %vm3260, %v6392, -inf
      %v6788 = vrot.slane %v6787, 4
      %v6789 = vmax.f32 %v6787, %v6788
      %v6790 = vrot.slane %v6789, 2
      %v6791 = vmax.f32 %v6789, %v6790
      %v6792 = vrot.slane %v6791, 1
      %v6793 = vmax.f32 %v6791, %v6792
      %v6794 = vsel %vm3260, %v6400, -inf
      %v6795 = vrot.slane %v6794, 4
      %v6796 = vmax.f32 %v6794, %v6795
      %v6797 = vrot.slane %v6796, 2
      %v6798 = vmax.f32 %v6796, %v6797
      %v6799 = vrot.slane %v6798, 1
      %v6800 = vmax.f32 %v6798, %v6799
      %v6801 = vsel %vm3260, %v6399, -inf
      %v6802 = vrot.slane %v6801, 4
      %v6803 = vmax.f32 %v6801, %v6802
      %v6804 = vrot.slane %v6803, 2
      %v6805 = vmax.f32 %v6803, %v6804
      %v6806 = vrot.slane %v6805, 1
      %v6807 = vmax.f32 %v6805, %v6806
      %v6808 = vsel %vm3260, %v6401, -inf
      %v6809 = vrot.slane %v6808, 4
      %v6810 = vmax.f32 %v6808, %v6809
      %v6811 = vrot.slane %v6810, 2
      %v6812 = vmax.f32 %v6810, %v6811
      %v6813 = vrot.slane %v6812, 1
      %v6814 = vmax.f32 %v6812, %v6813
      %v6815 = vsel %vm3260, %v6409, -inf
      %v6816 = vrot.slane %v6815, 4
      %v6817 = vmax.f32 %v6815, %v6816
      %v6818 = vrot.slane %v6817, 2
      %v6819 = vmax.f32 %v6817, %v6818
      %v6820 = vrot.slane %v6819, 1
      %v6821 = vmax.f32 %v6819, %v6820
      %v6822 = vsel %vm3260, %v6417, -inf
      %v6823 = vrot.slane %v6822, 4
      %v6824 = vmax.f32 %v6822, %v6823
      %v6825 = vrot.slane %v6824, 2
      %v6826 = vmax.f32 %v6824, %v6825
      %v6827 = vrot.slane %v6826, 1
      %v6828 = vmax.f32 %v6826, %v6827
      %v6829 = vsel %vm3260, %v6416, -inf
      %v6830 = vrot.slane %v6829, 4
      %v6831 = vmax.f32 %v6829, %v6830
      %v6832 = vrot.slane %v6831, 2
      %v6833 = vmax.f32 %v6831, %v6832
      %v6834 = vrot.slane %v6833, 1
      %v6835 = vmax.f32 %v6833, %v6834
      %v6836 = vsel %vm3260, %v6418, -inf
      %v6837 = vrot.slane %v6836, 4
      %v6838 = vmax.f32 %v6836, %v6837
      %v6839 = vrot.slane %v6838, 2
      %v6840 = vmax.f32 %v6838, %v6839
      %v6841 = vrot.slane %v6840, 1
      %v6842 = vmax.f32 %v6840, %v6841
      %v6843 = vsel %vm3260, %v6426, -inf
      %v6844 = vrot.slane %v6843, 4
      %v6845 = vmax.f32 %v6843, %v6844
      %v6846 = vrot.slane %v6845, 2
      %v6847 = vmax.f32 %v6845, %v6846
      %v6848 = vrot.slane %v6847, 1
      %v6849 = vmax.f32 %v6847, %v6848
      %v6850 = vsel %vm3260, %v6434, -inf
      %v6851 = vrot.slane %v6850, 4
      %v6852 = vmax.f32 %v6850, %v6851
      %v6853 = vrot.slane %v6852, 2
      %v6854 = vmax.f32 %v6852, %v6853
      %v6855 = vrot.slane %v6854, 1
      %v6856 = vmax.f32 %v6854, %v6855
      %v6857 = vsel %vm3260, %v6433, -inf
      %v6858 = vrot.slane %v6857, 4
      %v6859 = vmax.f32 %v6857, %v6858
      %v6860 = vrot.slane %v6859, 2
      %v6861 = vmax.f32 %v6859, %v6860
      %v6862 = vrot.slane %v6861, 1
      %v6863 = vmax.f32 %v6861, %v6862
      %v6864 = vsel %vm3260, %v6435, -inf
      %v6865 = vrot.slane %v6864, 4
      %v6866 = vmax.f32 %v6864, %v6865
      %v6867 = vrot.slane %v6866, 2
      %v6868 = vmax.f32 %v6866, %v6867
      %v6869 = vrot.slane %v6868, 1
      %v6870 = vmax.f32 %v6868, %v6869
      %v6871 = vsel %vm3260, %v6443, -inf
      %v6872 = vrot.slane %v6871, 4
      %v6873 = vmax.f32 %v6871, %v6872
      %v6874 = vrot.slane %v6873, 2
      %v6875 = vmax.f32 %v6873, %v6874
      %v6876 = vrot.slane %v6875, 1
      %v6877 = vmax.f32 %v6875, %v6876
      %v6878 = vsel %vm3260, %v6451, -inf
      %v6879 = vrot.slane %v6878, 4
      %v6880 = vmax.f32 %v6878, %v6879
      %v6881 = vrot.slane %v6880, 2
      %v6882 = vmax.f32 %v6880, %v6881
      %v6883 = vrot.slane %v6882, 1
      %v6884 = vmax.f32 %v6882, %v6883
      %v6885 = vsel %vm3260, %v6450, -inf
      %v6886 = vrot.slane %v6885, 4
      %v6887 = vmax.f32 %v6885, %v6886
      %v6888 = vrot.slane %v6887, 2
      %v6889 = vmax.f32 %v6887, %v6888
      %v6890 = vrot.slane %v6889, 1
      %v6891 = vmax.f32 %v6889, %v6890
      %v6892 = vsel %vm3260, %v6452, -inf
      %v6893 = vrot.slane %v6892, 4
      %v6894 = vmax.f32 %v6892, %v6893
      %v6895 = vrot.slane %v6894, 2
      %v6896 = vmax.f32 %v6894, %v6895
      %v6897 = vrot.slane %v6896, 1
      %v6898 = vmax.f32 %v6896, %v6897
      %v6899 = vsel %vm3260, %v6460, -inf
      %v6900 = vrot.slane %v6899, 4
      %v6901 = vmax.f32 %v6899, %v6900
      %v6902 = vrot.slane %v6901, 2
      %v6903 = vmax.f32 %v6901, %v6902
      %v6904 = vrot.slane %v6903, 1
      %v6905 = vmax.f32 %v6903, %v6904
      %v6906 = vsel %vm3260, %v6468, -inf
      %v6907 = vrot.slane %v6906, 4
      %v6908 = vmax.f32 %v6906, %v6907
      %v6909 = vrot.slane %v6908, 2
      %v6910 = vmax.f32 %v6908, %v6909
      %v6911 = vrot.slane %v6910, 1
      %v6912 = vmax.f32 %v6910, %v6911
      %v6913 = vsel %vm3260, %v6467, -inf
      %v6914 = vrot.slane %v6913, 4
      %v6915 = vmax.f32 %v6913, %v6914
      %v6916 = vrot.slane %v6915, 2
      %v6917 = vmax.f32 %v6915, %v6916
      %v6918 = vrot.slane %v6917, 1
      %v6919 = vmax.f32 %v6917, %v6918
      %v6920 = vsel %vm3260, %v6469, -inf
      %v6921 = vrot.slane %v6920, 4
      %v6922 = vmax.f32 %v6920, %v6921
      %v6923 = vrot.slane %v6922, 2
      %v6924 = vmax.f32 %v6922, %v6923
      %v6925 = vrot.slane %v6924, 1
      %v6926 = vmax.f32 %v6924, %v6925
      %v6927 = vsel %vm3260, %v6477, -inf
      %v6928 = vrot.slane %v6927, 4
      %v6929 = vmax.f32 %v6927, %v6928
      %v6930 = vrot.slane %v6929, 2
      %v6931 = vmax.f32 %v6929, %v6930
      %v6932 = vrot.slane %v6931, 1
      %v6933 = vmax.f32 %v6931, %v6932
      %v6934 = vsel %vm3260, %v6485, -inf
      %v6935 = vrot.slane %v6934, 4
      %v6936 = vmax.f32 %v6934, %v6935
      %v6937 = vrot.slane %v6936, 2
      %v6938 = vmax.f32 %v6936, %v6937
      %v6939 = vrot.slane %v6938, 1
      %v6940 = vmax.f32 %v6938, %v6939
      %v6941 = vsel %vm3260, %v6484, -inf
      %v6942 = vrot.slane %v6941, 4
      %v6943 = vmax.f32 %v6941, %v6942
      %v6944 = vrot.slane %v6943, 2
      %v6945 = vmax.f32 %v6943, %v6944
      %v6946 = vrot.slane %v6945, 1
      %v6947 = vmax.f32 %v6945, %v6946
      %v6948 = vsel %vm3260, %v6486, -inf
      %v6949 = vrot.slane %v6948, 4
      %v6950 = vmax.f32 %v6948, %v6949
      %v6951 = vrot.slane %v6950, 2
      %v6952 = vmax.f32 %v6950, %v6951
      %v6953 = vrot.slane %v6952, 1
      %v6954 = vmax.f32 %v6952, %v6953
      %v6955 = vsel %vm3260, %v6494, -inf
      %v6956 = vrot.slane %v6955, 4
      %v6957 = vmax.f32 %v6955, %v6956
      %v6958 = vrot.slane %v6957, 2
      %v6959 = vmax.f32 %v6957, %v6958
      %v6960 = vrot.slane %v6959, 1
      %v6961 = vmax.f32 %v6959, %v6960
      %v6962 = vsel %vm3260, %v6502, -inf
      %v6963 = vrot.slane %v6962, 4
      %v6964 = vmax.f32 %v6962, %v6963
      %v6965 = vrot.slane %v6964, 2
      %v6966 = vmax.f32 %v6964, %v6965
      %v6967 = vrot.slane %v6966, 1
      %v6968 = vmax.f32 %v6966, %v6967
      %v6969 = vsel %vm3260, %v6501, -inf
      %v6970 = vrot.slane %v6969, 4
      %v6971 = vmax.f32 %v6969, %v6970
      %v6972 = vrot.slane %v6971, 2
      %v6973 = vmax.f32 %v6971, %v6972
      %v6974 = vrot.slane %v6973, 1
      %v6975 = vmax.f32 %v6973, %v6974
      %v6976 = vsel %vm3260, %v6503, -inf
      %v6977 = vrot.slane %v6976, 4
      %v6978 = vmax.f32 %v6976, %v6977
      %v6979 = vrot.slane %v6978, 2
      %v6980 = vmax.f32 %v6978, %v6979
      %v6981 = vrot.slane %v6980, 1
      %v6982 = vmax.f32 %v6980, %v6981
      %v6983 = vsel %vm3260, %v6511, -inf
      %v6984 = vrot.slane %v6983, 4
      %v6985 = vmax.f32 %v6983, %v6984
      %v6986 = vrot.slane %v6985, 2
      %v6987 = vmax.f32 %v6985, %v6986
      %v6988 = vrot.slane %v6987, 1
      %v6989 = vmax.f32 %v6987, %v6988
      %v6990 = vsel %vm3260, %v6519, -inf
      %v6991 = vrot.slane %v6990, 4
      %v6992 = vmax.f32 %v6990, %v6991
      %v6993 = vrot.slane %v6992, 2
      %v6994 = vmax.f32 %v6992, %v6993
      %v6995 = vrot.slane %v6994, 1
      %v6996 = vmax.f32 %v6994, %v6995
      %v6997 = vsel %vm3260, %v6518, -inf
      %v6998 = vrot.slane %v6997, 4
      %v6999 = vmax.f32 %v6997, %v6998
      %v7000 = vrot.slane %v6999, 2
      %v7001 = vmax.f32 %v6999, %v7000
      %v7002 = vrot.slane %v7001, 1
      %v7003 = vmax.f32 %v7001, %v7002
      %v7004 = vsel %vm3260, %v6520, -inf
      %v7005 = vrot.slane %v7004, 4
      %v7006 = vmax.f32 %v7004, %v7005
      %v7007 = vrot.slane %v7006, 2
      %v7008 = vmax.f32 %v7006, %v7007
      %v7009 = vrot.slane %v7008, 1
      %v7010 = vmax.f32 %v7008, %v7009
      %v7011 = vsel %vm3260, %v6528, -inf
      %v7012 = vrot.slane %v7011, 4
      %v7013 = vmax.f32 %v7011, %v7012
      %v7014 = vrot.slane %v7013, 2
      %v7015 = vmax.f32 %v7013, %v7014
      %v7016 = vrot.slane %v7015, 1
      %v7017 = vmax.f32 %v7015, %v7016
      %v7018 = vsel %vm3260, %v6536, -inf
      %v7019 = vrot.slane %v7018, 4
      %v7020 = vmax.f32 %v7018, %v7019
      %v7021 = vrot.slane %v7020, 2
      %v7022 = vmax.f32 %v7020, %v7021
      %v7023 = vrot.slane %v7022, 1
      %v7024 = vmax.f32 %v7022, %v7023
      %v7025 = vsel %vm3260, %v6535, -inf
      %v7026 = vrot.slane %v7025, 4
      %v7027 = vmax.f32 %v7025, %v7026
      %v7028 = vrot.slane %v7027, 2
      %v7029 = vmax.f32 %v7027, %v7028
      %v7030 = vrot.slane %v7029, 1
      %v7031 = vmax.f32 %v7029, %v7030
      %v7032 = vsel %vm3260, %v6537, -inf
      %v7033 = vrot.slane %v7032, 4
      %v7034 = vmax.f32 %v7032, %v7033
      %v7035 = vrot.slane %v7034, 2
      %v7036 = vmax.f32 %v7034, %v7035
      %v7037 = vrot.slane %v7036, 1
      %v7038 = vmax.f32 %v7036, %v7037
      %v7039 = vsel %vm3260, %v6545, -inf
      %v7040 = vrot.slane %v7039, 4
      %v7041 = vmax.f32 %v7039, %v7040
      %v7042 = vrot.slane %v7041, 2
      %v7043 = vmax.f32 %v7041, %v7042
      %v7044 = vrot.slane %v7043, 1
      %v7045 = vmax.f32 %v7043, %v7044
      %v7046 = vsel %vm3260, %v6553, -inf
      %v7047 = vrot.slane %v7046, 4
      %v7048 = vmax.f32 %v7046, %v7047
      %v7049 = vrot.slane %v7048, 2
      %v7050 = vmax.f32 %v7048, %v7049
      %v7051 = vrot.slane %v7050, 1
      %v7052 = vmax.f32 %v7050, %v7051
      %v7053 = vsel %vm3260, %v6552, -inf
      %v7054 = vrot.slane %v7053, 4
      %v7055 = vmax.f32 %v7053, %v7054
      %v7056 = vrot.slane %v7055, 2
      %v7057 = vmax.f32 %v7055, %v7056
      %v7058 = vrot.slane %v7057, 1
      %v7059 = vmax.f32 %v7057, %v7058
      %v7060 = vsel %vm3260, %v6554, -inf
      %v7061 = vrot.slane %v7060, 4
      %v7062 = vmax.f32 %v7060, %v7061
      %v7063 = vrot.slane %v7062, 2
      %v7064 = vmax.f32 %v7062, %v7063
      %v7065 = vrot.slane %v7064, 1
      %v7066 = vmax.f32 %v7064, %v7065
      %vm7131 = vcmask 1041409
      %v7132 = vsel %vm7131, %v6632, %v6625
      %vm7133 = vcmask 1042434
      %v7134 = vsel %vm7133, %v6639, %v7132
      %vm7135 = vcmask 1043459
      %v7136 = vsel %vm7135, %v6646, %v7134
      %vm7137 = vcmask 1044484
      %v7138 = vsel %vm7137, %v6653, %v7136
      %vm7139 = vcmask 1045509
      %v7140 = vsel %vm7139, %v6660, %v7138
      %vm7141 = vcmask 1046534
      %v7142 = vsel %vm7141, %v6667, %v7140
      %vm7143 = vcmask 1047559
      %v7144 = vsel %vm7143, %v6674, %v7142
      %v7145 = vsel %vm7131, %v6688, %v6681
      %v7146 = vsel %vm7133, %v6695, %v7145
      %v7147 = vsel %vm7135, %v6702, %v7146
      %v7148 = vsel %vm7137, %v6709, %v7147
      %v7149 = vsel %vm7139, %v6716, %v7148
      %v7150 = vsel %vm7141, %v6723, %v7149
      %v7151 = vsel %vm7143, %v6730, %v7150
      %v7152 = vsel %vm7131, %v6744, %v6737
      %v7153 = vsel %vm7133, %v6751, %v7152
      %v7154 = vsel %vm7135, %v6758, %v7153
      %v7155 = vsel %vm7137, %v6765, %v7154
      %v7156 = vsel %vm7139, %v6772, %v7155
      %v7157 = vsel %vm7141, %v6779, %v7156
      %v7158 = vsel %vm7143, %v6786, %v7157
      %v7159 = vsel %vm7131, %v6800, %v6793
      %v7160 = vsel %vm7133, %v6807, %v7159
      %v7161 = vsel %vm7135, %v6814, %v7160
      %v7162 = vsel %vm7137, %v6821, %v7161
      %v7163 = vsel %vm7139, %v6828, %v7162
      %v7164 = vsel %vm7141, %v6835, %v7163
      %v7165 = vsel %vm7143, %v6842, %v7164
      %v7166 = vsel %vm7131, %v6856, %v6849
      %v7167 = vsel %vm7133, %v6863, %v7166
      %v7168 = vsel %vm7135, %v6870, %v7167
      %v7169 = vsel %vm7137, %v6877, %v7168
      %v7170 = vsel %vm7139, %v6884, %v7169
      %v7171 = vsel %vm7141, %v6891, %v7170
      %v7172 = vsel %vm7143, %v6898, %v7171
      %v7173 = vsel %vm7131, %v6912, %v6905
      %v7174 = vsel %vm7133, %v6919, %v7173
      %v7175 = vsel %vm7135, %v6926, %v7174
      %v7176 = vsel %vm7137, %v6933, %v7175
      %v7177 = vsel %vm7139, %v6940, %v7176
      %v7178 = vsel %vm7141, %v6947, %v7177
      %v7179 = vsel %vm7143, %v6954, %v7178
      %v7180 = vsel %vm7131, %v6968, %v6961
      %v7181 = vsel %vm7133, %v6975, %v7180
      %v7182 = vsel %vm7135, %v6982, %v7181
      %v7183 = vsel %vm7137, %v6989, %v7182
      %v7184 = vsel %vm7139, %v6996, %v7183
      %v7185 = vsel %vm7141, %v7003, %v7184
      %v7186 = vsel %vm7143, %v7010, %v7185
      %v7187 = vsel %vm7131, %v7024, %v7017
      %v7188 = vsel %vm7133, %v7031, %v7187
      %v7189 = vsel %vm7135, %v7038, %v7188
      %v7190 = vsel %vm7137, %v7045, %v7189
      %v7191 = vsel %vm7139, %v7052, %v7190
      %v7192 = vsel %vm7141, %v7059, %v7191
      %v7193 = vsel %vm7143, %v7066, %v7192
      %7202 = vst.msk [vmem:[%s264] sm:$0xff] %vm3257, %v7144
      %7203 = vst.msk [vmem:[%s264 + $0x8] sm:$0xff] %vm3257, %v7151
      %7204 = vst.msk [vmem:[%s264 + $0x10] sm:$0xff] %vm3257, %v7158
      %7205 = vst.msk [vmem:[%s264 + $0x18] sm:$0xff] %vm3257, %v7165
      %7206 = vst.msk [vmem:[%s264 + $0x20] sm:$0xff] %vm3257, %v7172
      %7207 = vst.msk [vmem:[%s264 + $0x28] sm:$0xff] %vm3257, %v7179
      %7208 = vst.msk [vmem:[%s264 + $0x30] sm:$0xff] %vm3257, %v7186
      %7209 = vst.msk [vmem:[%s264 + $0x38] sm:$0xff] %vm3257, %v7193
      %p7210 = scmp.lt.s32.totalorder %s18, 1
      %s7211 = scalar_select %p7210, %s18, 1
      %s7212 = smul.addr %s7211, 32
      %s7213 = smul.addr %s7212, 8
      %s7214 = scalar_lea.vmem %s5, %s7213
      %p7215 = scmp.lt.s32.totalorder %s18, 1
      %s7216 = scalar_select %p7215, %s18, 1
      %s7217 = smul.addr %s7216, 8
      %s7218 = smul.addr %s7217, 8
      %s7219 = scalar_lea.vmem %s6, %s7218
      // Predicated region
      $region41: #{encoder_block_forward.1} parent=39 // pred_check
        %p7220 = pneg %p146
      $region42: #{encoder_block_forward.1} parent=39 // pred_check_branch
        %7222 = sbr.rel (%p7220) target = $region44
      $region43: #{encoder_block_forward.1} parent=39 // pred_region
        _
      $region44: #{encoder_block_forward.1} parent=39 // pred_fallthru
        _
      // Predicated region
      $region45: #{encoder_block_forward.1} parent=39 // pred_check
        %p7223 = pneg %p172
      $region46: #{encoder_block_forward.1} parent=39 // pred_check_branch
        %7225 = sbr.rel (%p7223) target = $region48
      $region47: #{encoder_block_forward.1} parent=39 // pred_region
        _
      $region48: #{encoder_block_forward.1} parent=39 // pred_fallthru
        _
    $region40: #{encoder_block_forward.1} parent=5 // pred_fallthru
      _
    %p7226 = scmp.le.s32.totalorder 2, %s13
    // Predicated region
    $region49: #{encoder_block_forward.1} parent=5 // pred_check
      %p7227 = pneg %p7226
    $region50: #{encoder_block_forward.1} parent=5 // pred_check_branch
      %7229 = sbr.rel (%p7227) target = $region52
    $region51: #{encoder_block_forward.1} parent=5 // pred_region
      %s7230 = ssub.s32 %s13, 2
      // Predicated region
      $region53: #{encoder_block_forward.1} parent=51 // pred_check
        %p7231 = pneg %p152
      $region54: #{encoder_block_forward.1} parent=51 // pred_check_branch
        %7233 = sbr.rel (%p7231) target = $region56
      $region55: #{encoder_block_forward.1} parent=51 // pred_region
        %p7234 = scmp.lt.s32.totalorder %s19, 1
        %s7235 = scalar_select %p7234, %s19, 1
        %s7236 = smul.addr %s7235, 32
        %s7237 = smul.addr %s7236, 8
        %s7238 = scalar_lea.vmem %s5, %s7237
      $region56: #{encoder_block_forward.1} parent=51 // pred_fallthru
        _
      // Predicated region
      $region57: #{encoder_block_forward.1} parent=51 // pred_check
        %p7239 = pneg %p178
      $region58: #{encoder_block_forward.1} parent=51 // pred_check_branch
        %7241 = sbr.rel (%p7239) target = $region60
      $region59: #{encoder_block_forward.1} parent=51 // pred_region
        %p7242 = scmp.lt.s32.totalorder %s19, 1
        %s7243 = scalar_select %p7242, %s19, 1
        %s7244 = smul.addr %s7243, 8
        %s7245 = smul.addr %s7244, 8
        %s7246 = scalar_lea.vmem %s6, %s7245
      $region60: #{encoder_block_forward.1} parent=51 // pred_fallthru
        _
    $region52: #{encoder_block_forward.1} parent=5 // pred_fallthru
      _
  $region6: #{encoder_block_forward.1} parent=0 // loop_footer
    %s17 = sadd.s32 1, %s13
  $region7: #{encoder_block_forward.1} parent=0 // loop_footer_branch
    %12 = sbr.rel target = $region3
  $region8: #{encoder_block_forward.1} parent=0 // loop_exit
    _

</llo_original>
